<compile_context>
chip_gen: v5e
topology: v5e:2x2
jax: 0.10.0
libtpu: 0.0.40
codegen_flags: <defaults>
</compile_context>

<pallas_src>
import functools

import numpy as np
import jax
import jax.numpy as jnp
from jax.experimental import pallas as pl
from jax.experimental.pallas import tpu as pltpu

_BN_EPS = 1e-5
_VMEM = pl.BlockSpec(memory_space=pltpu.MemorySpace.VMEM)


# ----------------------------- Pallas kernels ------------------------------ #

def _stem_kernel(x_ref, w_ref, s_ref, b_ref, o_ref, xpad_ref):
    """3x3 conv (stride 1, pad 1) + folded BN + ReLU, one batch sample.

    x_ref:    (1, H, W*Cin)       f32
    w_ref:    (3, W*Cin, W*Cout)  bf16  row-tap banded weights
    s/b_ref:  (1, W*Cout)         f32   folded BatchNorm scale / bias
    o_ref:    (1, H, W*Cout)      f32
    xpad_ref: (H+2, W*Cin)        bf16  H-padded input (scratch)
    """
    h = x_ref.shape[1]
    n = w_ref.shape[2]
    xpad_ref[...] = jnp.zeros(xpad_ref.shape, xpad_ref.dtype)
    xpad_ref[1:h + 1, :] = x_ref[0].astype(xpad_ref.dtype)
    acc = jnp.zeros((h, n), jnp.float32)
    for i in range(3):
        acc += jnp.dot(xpad_ref[i:i + h, :], w_ref[i],
                       preferred_element_type=jnp.float32)
    o_ref[0] = jnp.maximum(acc * s_ref[...] + b_ref[...], 0.0)


def _block_s1_kernel(x_ref, w1_ref, s1_ref, b1_ref, w2_ref, s2_ref, b2_ref,
                     o_ref, xpad_ref, mpad_ref):
    """Stride-1 BasicBlock (identity shortcut), fully fused, one sample."""
    h = x_ref.shape[1]
    n = w1_ref.shape[2]

    # conv1 + BN1 + ReLU
    xpad_ref[...] = jnp.zeros(xpad_ref.shape, xpad_ref.dtype)
    xpad_ref[1:h + 1, :] = x_ref[0].astype(xpad_ref.dtype)
    acc = jnp.zeros((h, n), jnp.float32)
    for i in range(3):
        acc += jnp.dot(xpad_ref[i:i + h, :], w1_ref[i],
                       preferred_element_type=jnp.float32)
    mid = jnp.maximum(acc * s1_ref[...] + b1_ref[...], 0.0)

    # conv2 + BN2
    mpad_ref[...] = jnp.zeros(mpad_ref.shape, mpad_ref.dtype)
    mpad_ref[1:h + 1, :] = mid.astype(mpad_ref.dtype)
    acc2 = jnp.zeros((h, n), jnp.float32)
    for i in range(3):
        acc2 += jnp.dot(mpad_ref[i:i + h, :], w2_ref[i],
                        preferred_element_type=jnp.float32)

    # fused epilogue: BN2 + identity residual + ReLU
    out = acc2 * s2_ref[...] + b2_ref[...] + x_ref[0]
    o_ref[0] = jnp.maximum(out, 0.0)


def _block_s2_kernel(pe_ref, po_ref, w1_ref, s1_ref, b1_ref,
                     w2_ref, s2_ref, b2_ref, esc_ref, o_ref, mpad_ref):
    """Stride-2 BasicBlock (option-'A' shortcut), fully fused, one sample.

    pe/po_ref: (1, Ho+1, W*Cin)       f32  even / odd row phases of H-padded x
    w1_ref:    (3, W*Cin,  Wo*planes) bf16 stride-2 row-tap weights
    w2_ref:    (3, Wo*planes, Wo*planes) bf16
    esc_ref:   (W*Cin, Wo*planes)     f32  0/1 shortcut (subsample + ch-pad)
    o_ref:     (1, Ho, Wo*planes)     f32
    mpad_ref:  (Ho+2, Wo*planes)      bf16 (scratch)
    """
    ho = o_ref.shape[1]
    n = w1_ref.shape[2]
    pe = pe_ref[0]
    po = po_ref[0]
    pe_b = pe.astype(jnp.bfloat16)
    po_b = po.astype(jnp.bfloat16)

    # conv1 (stride 2) + BN1 + ReLU.  Padded row (2*ho + i) is:
    #   i=0 -> even-phase row ho, i=1 -> odd-phase row ho, i=2 -> even row ho+1
    acc = jnp.dot(pe_b[0:ho, :], w1_ref[0], preferred_element_type=jnp.float32)
    acc += jnp.dot(po_b[0:ho, :], w1_ref[1],
                   preferred_element_type=jnp.float32)
    acc += jnp.dot(pe_b[1:ho + 1, :], w1_ref[2],
                   preferred_element_type=jnp.float32)
    mid = jnp.maximum(acc * s1_ref[...] + b1_ref[...], 0.0)

    # conv2 (stride 1) + BN2
    mpad_ref[...] = jnp.zeros(mpad_ref.shape, mpad_ref.dtype)
    mpad_ref[1:ho + 1, :] = mid.astype(mpad_ref.dtype)
    acc2 = jnp.zeros((ho, n), jnp.float32)
    for i in range(3):
        acc2 += jnp.dot(mpad_ref[i:i + ho, :], w2_ref[i],
                        preferred_element_type=jnp.float32)

    # fused epilogue: BN2 + option-'A' shortcut (x[:, ::2, ::2, :] zero-padded
    # on channels == one 0/1 selection matmul) + ReLU.
    shortcut = jnp.dot(po[0:ho, :], esc_ref[...],
                       preferred_element_type=jnp.float32)
    out = acc2 * s2_ref[...] + b2_ref[...] + shortcut
    o_ref[0] = jnp.maximum(out, 0.0)


def _head_kernel(x_ref, w_ref, b_ref, o_ref):
    """AdaptiveAvgPool2d((1,1)) + Linear, fused.  The 1/(Ho*Wo) mean factor and
    the Wo lane-group reduction are folded into the (tiled, scaled) fc weight,
    so the kernel is: row-sum -> one GEMM -> +bias."""
    pooled = jnp.sum(x_ref[...], axis=1)                      # (B, Wo*C)
    o_ref[...] = jnp.dot(pooled, w_ref[...],
                         preferred_element_type=jnp.float32) + b_ref[...]


# ------------------------------ pallas wrappers ----------------------------- #

_PARALLEL = pltpu.CompilerParams(dimension_semantics=("parallel",))


def stem_forward(x3, params):
    b, h, wc_in = x3.shape
    wc_out = params["conv1_w"].shape[2]
    sample = lambda i: (i, 0, 0)
    const3 = lambda i: (0, 0, 0)
    const2 = lambda i: (0, 0)
    return pl.pallas_call(
        _stem_kernel,
        out_shape=jax.ShapeDtypeStruct((b, h, wc_out), jnp.float32),
        grid_spec=pltpu.PrefetchScalarGridSpec(
            num_scalar_prefetch=0,
            grid=(b,),
            in_specs=[
                pl.BlockSpec((1, h, wc_in), sample),
                pl.BlockSpec((3, wc_in, wc_out), const3),
                pl.BlockSpec((1, wc_out), const2),
                pl.BlockSpec((1, wc_out), const2),
            ],
            out_specs=pl.BlockSpec((1, h, wc_out), sample),
            scratch_shapes=[pltpu.VMEM((h + 2, wc_in), jnp.bfloat16)],
        ),
        compiler_params=_PARALLEL,
    )(x3, params["conv1_w"], params["bn1_scale"], params["bn1_bias"])


def basic_block_s1(x3, blk):
    b, h, wc = x3.shape
    sample = lambda i: (i, 0, 0)
    const3 = lambda i: (0, 0, 0)
    const2 = lambda i: (0, 0)
    return pl.pallas_call(
        _block_s1_kernel,
        out_shape=jax.ShapeDtypeStruct((b, h, wc), jnp.float32),
        grid_spec=pltpu.PrefetchScalarGridSpec(
            num_scalar_prefetch=0,
            grid=(b,),
            in_specs=[
                pl.BlockSpec((1, h, wc), sample),
                pl.BlockSpec((3, wc, wc), const3),
                pl.BlockSpec((1, wc), const2),
                pl.BlockSpec((1, wc), const2),
                pl.BlockSpec((3, wc, wc), const3),
                pl.BlockSpec((1, wc), const2),
                pl.BlockSpec((1, wc), const2),
            ],
            out_specs=pl.BlockSpec((1, h, wc), sample),
            scratch_shapes=[
                pltpu.VMEM((h + 2, wc), jnp.bfloat16),
                pltpu.VMEM((h + 2, wc), jnp.bfloat16),
            ],
        ),
        compiler_params=_PARALLEL,
    )(x3, blk["w1"], blk["s1"], blk["b1"], blk["w2"], blk["s2"], blk["b2"])


def basic_block_s2(x3, blk):
    b, h, wc_in = x3.shape
    ho = h // 2
    n_out = blk["w1"].shape[2]                       # Wo * planes
    # even / odd ROW phases of the H-padded input (XLA; data-volume-neutral)
    xp = jnp.pad(x3, ((0, 0), (1, 1), (0, 0)))
    pe = xp[:, 0::2, :]                              # (B, Ho+1, W*Cin)
    po = xp[:, 1::2, :]                              # (B, Ho+1, W*Cin)
    sample = lambda i: (i, 0, 0)
    const3 = lambda i: (0, 0, 0)
    const2 = lambda i: (0, 0)
    return pl.pallas_call(
        _block_s2_kernel,
        out_shape=jax.ShapeDtypeStruct((b, ho, n_out), jnp.float32),
        grid_spec=pltpu.PrefetchScalarGridSpec(
            num_scalar_prefetch=0,
            grid=(b,),
            in_specs=[
                pl.BlockSpec((1, ho + 1, wc_in), sample),
                pl.BlockSpec((1, ho + 1, wc_in), sample),
                pl.BlockSpec((3, wc_in, n_out), const3),
                pl.BlockSpec((1, n_out), const2),
                pl.BlockSpec((1, n_out), const2),
                pl.BlockSpec((3, n_out, n_out), const3),
                pl.BlockSpec((1, n_out), const2),
                pl.BlockSpec((1, n_out), const2),
                pl.BlockSpec((wc_in, n_out), const2),
            ],
            out_specs=pl.BlockSpec((1, ho, n_out), sample),
            scratch_shapes=[pltpu.VMEM((ho + 2, n_out), jnp.bfloat16)],
        ),
        compiler_params=_PARALLEL,
    )(pe, po, blk["w1"], blk["s1"], blk["b1"],
      blk["w2"], blk["s2"], blk["b2"], blk["esc"])


def head_forward(x3, params):
    b = x3.shape[0]
    nc = params["fc_w_rep"].shape[1]
    return pl.pallas_call(
        _head_kernel,
        out_shape=jax.ShapeDtypeStruct((b, nc), jnp.float32),
        in_specs=[_VMEM, _VMEM, _VMEM],
        out_specs=_VMEM,
    )(x3, params["fc_w_rep"], params["fc_b"])


def resnet_forward(params, x_nchw, *, strides):
    # NCHW -> NHWC -> fused-lane layout (B, H, W*C)
    x = jnp.transpose(x_nchw, (0, 2, 3, 1)).astype(jnp.float32)
    b, h, w, c = x.shape
    x3 = x.reshape(b, h, w * c)
    x3 = stem_forward(x3, params)
    for blk, s in zip(params["blocks"], strides):
        x3 = basic_block_s1(x3, blk) if s == 1 else basic_block_s2(x3, blk)
    return head_forward(x3, params)                  # (B, num_classes)


# ---------------------------- parameter creation ---------------------------- #

def _kaiming(key, shape, fan_in):
    return jax.random.normal(key, shape, jnp.float32) * jnp.sqrt(2.0 / fan_in)


def _bn_scale_bias(c, w_rep):
    # gamma=1, beta=0, running stats (0, 1): PyTorch defaults, folded into
    # inference-mode scale/bias, tiled to the fused-lane width (W_out * C).
    gamma = jnp.ones((c,), jnp.float32)
    beta = jnp.zeros((c,), jnp.float32)
    mean = jnp.zeros((c,), jnp.float32)
    var = jnp.ones((c,), jnp.float32)
    scale = gamma / jnp.sqrt(var + _BN_EPS)
    bias = beta - mean * scale
    return (jnp.tile(scale, w_rep).reshape(1, w_rep * c),
            jnp.tile(bias, w_rep).reshape(1, w_rep * c))


def _row_tap_weights(key, cout, cin, w_in, w_out, stride):
    """Kaiming-init a (cout, cin, 3, 3) conv kernel and fold the 3 horizontal
    taps + W zero-padding + W-stride into 3 banded (w_in*cin, w_out*cout)
    matrices (one per vertical offset i), in fused-lane layout."""
    w = _kaiming(key, (cout, cin, 3, 3), cin * 9)
    w_ij = jnp.transpose(w, (2, 3, 1, 0))            # (3, 3, cin, cout)
    wi = np.arange(w_in)[:, None]
    wo = np.arange(w_out)[None, :]
    mats = []
    for i in range(3):
        m = jnp.zeros((w_in, cin, w_out, cout), jnp.float32)
        for j in range(3):
            mask = jnp.asarray((wi == stride * wo + j - 1).astype(np.float32))
            m = m + mask[:, None, :, None] * w_ij[i, j][None, :, None, :]
        mats.append(m.reshape(w_in * cin, w_out * cout))
    return jnp.stack(mats).astype(jnp.bfloat16)      # (3, w_in*cin, w_out*cout)


def _shortcut_matrix(cin, planes, w_in, w_out):
    """Option-'A' shortcut (W-subsample by 2 + planes//4 zero channel padding
    on each side) as one 0/1 selection matrix in fused-lane layout."""
    pad = planes // 4
    emb = np.zeros((cin, planes), np.float32)
    emb[np.arange(cin), pad + np.arange(cin)] = 1.0
    wi = np.arange(w_in)[:, None]
    wo = np.arange(w_out)[None, :]
    mask = (wi == 2 * wo).astype(np.float32)
    m = mask[:, None, :, None] * emb[None, :, None, :]
    return jnp.asarray(m.reshape(w_in * cin, w_out * planes))


def init_params(key, num_blocks=(1, 1, 1), num_classes=10, image_hw=16):
    assert image_hw % 4 == 0
    keys = iter(jax.random.split(key, 64))
    hw = image_hw
    params = {}

    # stem: Conv2d(3, 16, k=3, s=1, p=1, bias=False) + BatchNorm2d(16) + ReLU
    params["conv1_w"] = _row_tap_weights(next(keys), 16, 3, hw, hw, 1)
    params["bn1_scale"], params["bn1_bias"] = _bn_scale_bias(16, hw)

    blocks, strides = [], []
    in_planes, w_cur = 16, hw
    for planes, nblk, first_stride in zip((16, 32, 64), num_blocks, (1, 2, 2)):
        for stride in [first_stride] + [1] * (nblk - 1):
            if stride == 1:
                assert in_planes == planes
            w_out = w_cur // stride
            blk = {}
            blk["w1"] = _row_tap_weights(next(keys), planes, in_planes,
                                         w_cur, w_out, stride)
            blk["s1"], blk["b1"] = _bn_scale_bias(planes, w_out)
            blk["w2"] = _row_tap_weights(next(keys), planes, planes,
                                         w_out, w_out, 1)
            blk["s2"], blk["b2"] = _bn_scale_bias(planes, w_out)
            if stride != 1:
                blk["esc"] = _shortcut_matrix(in_planes, planes, w_cur, w_out)
            blocks.append(blk)
            strides.append(stride)
            in_planes, w_cur = planes, w_out
    params["blocks"] = blocks

    # Linear(64, num_classes); the avg-pool mean and the Wo lane-group
    # reduction are folded into a tiled + scaled weight matrix.
    fc_w = _kaiming(next(keys), (num_classes, 64), 64).T          # (64, nc)
    fc_b = (jax.random.uniform(next(keys), (1, num_classes), jnp.float32,
                               minval=-1.0, maxval=1.0) / np.sqrt(64.0))
    ho = wo = w_cur
    params["fc_w_rep"] = jnp.tile(fc_w, (wo, 1)) / float(ho * wo)
    params["fc_b"] = fc_b
    return params, tuple(strides)


# ----------------------------------- main ----------------------------------- #

if __name__ == "__main__":
    key = jax.random.PRNGKey(0)
    k_param, k_x = jax.random.split(key)

    params, strides = init_params(k_param, num_blocks=(1, 1, 1),
                                  num_classes=10, image_hw=16)

    # Small CIFAR-like input: batch=2, 3 channels, 16x16 spatial (NCHW).
    x = jax.random.normal(k_x, (2, 3, 16, 16), dtype=jnp.float32)

    fwd = jax.jit(functools.partial(resnet_forward, strides=strides))
    logits = jax.block_until_ready(fwd(params, x))

    assert logits.shape == (2, 10), logits.shape
    assert bool(jnp.all(jnp.isfinite(logits)))
    print("KERNEL_OK")
</pallas_src>

<mosaic_0001>
module attributes {stable_mosaic.version = 11 : i64} {
  func.func @_block_s1_kernel(%arg0: i32, %arg1: memref<1x16x256xf32, #tpu.memory_space<vmem>>, %arg2: memref<3x256x256xbf16, #tpu.memory_space<vmem>>, %arg3: memref<1x256xf32, #tpu.memory_space<vmem>>, %arg4: memref<1x256xf32, #tpu.memory_space<vmem>>, %arg5: memref<3x256x256xbf16, #tpu.memory_space<vmem>>, %arg6: memref<1x256xf32, #tpu.memory_space<vmem>>, %arg7: memref<1x256xf32, #tpu.memory_space<vmem>>, %arg8: memref<1x16x256xf32, #tpu.memory_space<vmem>>, %arg9: memref<18x256xbf16, #tpu.memory_space<vmem>>, %arg10: memref<18x256xbf16, #tpu.memory_space<vmem>>) attributes {dimension_semantics = [#tpu.dimension_semantics<parallel>], iteration_bounds = array<i64: 2>, scalar_prefetch = 0 : i64, scratch_operands = 2 : i64, tpu.core_type = #tpu.core_type<tc>, window_params = [{transform_indices = @transform_0, window_bounds = array<i64: 1, 16, 256>}, {pipeline_mode = #tpu.pipeline_mode<synchronous>, transform_indices = @transform_1, window_bounds = array<i64: 3, 256, 256>}, {pipeline_mode = #tpu.pipeline_mode<synchronous>, transform_indices = @transform_2, window_bounds = array<i64: 1, 256>}, {pipeline_mode = #tpu.pipeline_mode<synchronous>, transform_indices = @transform_3, window_bounds = array<i64: 1, 256>}, {pipeline_mode = #tpu.pipeline_mode<synchronous>, transform_indices = @transform_4, window_bounds = array<i64: 3, 256, 256>}, {pipeline_mode = #tpu.pipeline_mode<synchronous>, transform_indices = @transform_5, window_bounds = array<i64: 1, 256>}, {pipeline_mode = #tpu.pipeline_mode<synchronous>, transform_indices = @transform_6, window_bounds = array<i64: 1, 256>}, {transform_indices = @transform_7, window_bounds = array<i64: 1, 16, 256>}]} {
    %cst = arith.constant 0.000000e+00 : bf16
    %0 = vector.broadcast %cst : bf16 to vector<18x256xbf16>
    %c0 = arith.constant 0 : index
    %c0_0 = arith.constant 0 : index
    %1 = vector.load %arg9[%c0, %c0_0] : memref<18x256xbf16, #tpu.memory_space<vmem>>, vector<18x256xbf16>
    tpu.vector_store %arg9[%c0, %c0_0], %0 {strides = array<i32>} : memref<18x256xbf16, #tpu.memory_space<vmem>>, vector<18x256xbf16>,
    %c0_1 = arith.constant 0 : index
    %c0_2 = arith.constant 0 : index
    %c0_3 = arith.constant 0 : index
    %2 = vector.load %arg1[%c0_1, %c0_2, %c0_3] : memref<1x16x256xf32, #tpu.memory_space<vmem>>, vector<1x16x256xf32>
    %3 = vector.shape_cast %2 : vector<1x16x256xf32> to vector<16x256xf32>
    %4 = arith.truncf %3 : vector<16x256xf32> to vector<16x256xbf16>
    %c1 = arith.constant 1 : index
    %c0_4 = arith.constant 0 : index
    %5 = vector.load %arg9[%c1, %c0_4] : memref<18x256xbf16, #tpu.memory_space<vmem>>, vector<16x256xbf16>
    tpu.vector_store %arg9[%c1, %c0_4], %4 {strides = array<i32>} : memref<18x256xbf16, #tpu.memory_space<vmem>>, vector<16x256xbf16>,
    %cst_5 = arith.constant 0.000000e+00 : f32
    %6 = vector.broadcast %cst_5 : f32 to vector<16x256xf32>
    %c0_6 = arith.constant 0 : index
    %c0_7 = arith.constant 0 : index
    %7 = vector.load %arg9[%c0_6, %c0_7] : memref<18x256xbf16, #tpu.memory_space<vmem>>, vector<16x256xbf16>
    %c0_8 = arith.constant 0 : index
    %c0_9 = arith.constant 0 : index
    %c0_10 = arith.constant 0 : index
    %8 = vector.load %arg2[%c0_8, %c0_9, %c0_10] : memref<3x256x256xbf16, #tpu.memory_space<vmem>>, vector<1x256x256xbf16>
    %9 = vector.shape_cast %8 : vector<1x256x256xbf16> to vector<256x256xbf16>
    %cst_11 = arith.constant dense<0.000000e+00> : vector<16x256xf32>
    %10 = tpu.matmul %7, %9, %cst_11 {dimension_numbers = #tpu.dot_dimension_numbers<[1], [0], [0], [1], [0, 0, 1, 1], [], []>} : vector<16x256xbf16>, vector<256x256xbf16>, vector<16x256xf32> -> vector<16x256xf32>
    %11 = arith.addf %6, %10 : vector<16x256xf32>
    %c1_12 = arith.constant 1 : index
    %c0_13 = arith.constant 0 : index
    %12 = vector.load %arg9[%c1_12, %c0_13] : memref<18x256xbf16, #tpu.memory_space<vmem>>, vector<16x256xbf16>
    %c1_14 = arith.constant 1 : index
    %c0_15 = arith.constant 0 : index
    %c0_16 = arith.constant 0 : index
    %13 = vector.load %arg2[%c1_14, %c0_15, %c0_16] : memref<3x256x256xbf16, #tpu.memory_space<vmem>>, vector<1x256x256xbf16>
    %14 = vector.shape_cast %13 : vector<1x256x256xbf16> to vector<256x256xbf16>
    %cst_17 = arith.constant dense<0.000000e+00> : vector<16x256xf32>
    %15 = tpu.matmul %12, %14, %cst_17 {dimension_numbers = #tpu.dot_dimension_numbers<[1], [0], [0], [1], [0, 0, 1, 1], [], []>} : vector<16x256xbf16>, vector<256x256xbf16>, vector<16x256xf32> -> vector<16x256xf32>
    %16 = arith.addf %11, %15 : vector<16x256xf32>
    %c2 = arith.constant 2 : index
    %c0_18 = arith.constant 0 : index
    %17 = vector.load %arg9[%c2, %c0_18] : memref<18x256xbf16, #tpu.memory_space<vmem>>, vector<16x256xbf16>
    %c2_19 = arith.constant 2 : index
    %c0_20 = arith.constant 0 : index
    %c0_21 = arith.constant 0 : index
    %18 = vector.load %arg2[%c2_19, %c0_20, %c0_21] : memref<3x256x256xbf16, #tpu.memory_space<vmem>>, vector<1x256x256xbf16>
    %19 = vector.shape_cast %18 : vector<1x256x256xbf16> to vector<256x256xbf16>
    %cst_22 = arith.constant dense<0.000000e+00> : vector<16x256xf32>
    %20 = tpu.matmul %17, %19, %cst_22 {dimension_numbers = #tpu.dot_dimension_numbers<[1], [0], [0], [1], [0, 0, 1, 1], [], []>} : vector<16x256xbf16>, vector<256x256xbf16>, vector<16x256xf32> -> vector<16x256xf32>
    %21 = arith.addf %16, %20 : vector<16x256xf32>
    %c0_23 = arith.constant 0 : index
    %c0_24 = arith.constant 0 : index
    %22 = vector.load %arg3[%c0_23, %c0_24] : memref<1x256xf32, #tpu.memory_space<vmem>>, vector<1x256xf32>
    %23 = vector.broadcast %22 : vector<1x256xf32> to vector<16x256xf32>
    %24 = arith.mulf %21, %23 : vector<16x256xf32>
    %c0_25 = arith.constant 0 : index
    %c0_26 = arith.constant 0 : index
    %25 = vector.load %arg4[%c0_25, %c0_26] : memref<1x256xf32, #tpu.memory_space<vmem>>, vector<1x256xf32>
    %26 = vector.broadcast %25 : vector<1x256xf32> to vector<16x256xf32>
    %27 = arith.addf %24, %26 : vector<16x256xf32>
    %cst_27 = arith.constant 0.000000e+00 : f32
    %28 = vector.broadcast %cst_27 : f32 to vector<16x256xf32>
    %29 = arith.maximumf %27, %28 : vector<16x256xf32>
    %cst_28 = arith.constant 0.000000e+00 : bf16
    %30 = vector.broadcast %cst_28 : bf16 to vector<18x256xbf16>
    %c0_29 = arith.constant 0 : index
    %c0_30 = arith.constant 0 : index
    %31 = vector.load %arg10[%c0_29, %c0_30] : memref<18x256xbf16, #tpu.memory_space<vmem>>, vector<18x256xbf16>
    tpu.vector_store %arg10[%c0_29, %c0_30], %30 {strides = array<i32>} : memref<18x256xbf16, #tpu.memory_space<vmem>>, vector<18x256xbf16>,
    %32 = arith.truncf %29 : vector<16x256xf32> to vector<16x256xbf16>
    %c1_31 = arith.constant 1 : index
    %c0_32 = arith.constant 0 : index
    %33 = vector.load %arg10[%c1_31, %c0_32] : memref<18x256xbf16, #tpu.memory_space<vmem>>, vector<16x256xbf16>
    tpu.vector_store %arg10[%c1_31, %c0_32], %32 {strides = array<i32>} : memref<18x256xbf16, #tpu.memory_space<vmem>>, vector<16x256xbf16>,
    %cst_33 = arith.constant 0.000000e+00 : f32
    %34 = vector.broadcast %cst_33 : f32 to vector<16x256xf32>
    %c0_34 = arith.constant 0 : index
    %c0_35 = arith.constant 0 : index
    %35 = vector.load %arg10[%c0_34, %c0_35] : memref<18x256xbf16, #tpu.memory_space<vmem>>, vector<16x256xbf16>
    %c0_36 = arith.constant 0 : index
    %c0_37 = arith.constant 0 : index
    %c0_38 = arith.constant 0 : index
    %36 = vector.load %arg5[%c0_36, %c0_37, %c0_38] : memref<3x256x256xbf16, #tpu.memory_space<vmem>>, vector<1x256x256xbf16>
    %37 = vector.shape_cast %36 : vector<1x256x256xbf16> to vector<256x256xbf16>
    %cst_39 = arith.constant dense<0.000000e+00> : vector<16x256xf32>
    %38 = tpu.matmul %35, %37, %cst_39 {dimension_numbers = #tpu.dot_dimension_numbers<[1], [0], [0], [1], [0, 0, 1, 1], [], []>} : vector<16x256xbf16>, vector<256x256xbf16>, vector<16x256xf32> -> vector<16x256xf32>
    %39 = arith.addf %34, %38 : vector<16x256xf32>
    %c1_40 = arith.constant 1 : index
    %c0_41 = arith.constant 0 : index
    %40 = vector.load %arg10[%c1_40, %c0_41] : memref<18x256xbf16, #tpu.memory_space<vmem>>, vector<16x256xbf16>
    %c1_42 = arith.constant 1 : index
    %c0_43 = arith.constant 0 : index
    %c0_44 = arith.constant 0 : index
    %41 = vector.load %arg5[%c1_42, %c0_43, %c0_44] : memref<3x256x256xbf16, #tpu.memory_space<vmem>>, vector<1x256x256xbf16>
    %42 = vector.shape_cast %41 : vector<1x256x256xbf16> to vector<256x256xbf16>
    %cst_45 = arith.constant dense<0.000000e+00> : vector<16x256xf32>
    %43 = tpu.matmul %40, %42, %cst_45 {dimension_numbers = #tpu.dot_dimension_numbers<[1], [0], [0], [1], [0, 0, 1, 1], [], []>} : vector<16x256xbf16>, vector<256x256xbf16>, vector<16x256xf32> -> vector<16x256xf32>
    %44 = arith.addf %39, %43 : vector<16x256xf32>
    %c2_46 = arith.constant 2 : index
    %c0_47 = arith.constant 0 : index
    %45 = vector.load %arg10[%c2_46, %c0_47] : memref<18x256xbf16, #tpu.memory_space<vmem>>, vector<16x256xbf16>
    %c2_48 = arith.constant 2 : index
    %c0_49 = arith.constant 0 : index
    %c0_50 = arith.constant 0 : index
    %46 = vector.load %arg5[%c2_48, %c0_49, %c0_50] : memref<3x256x256xbf16, #tpu.memory_space<vmem>>, vector<1x256x256xbf16>
    %47 = vector.shape_cast %46 : vector<1x256x256xbf16> to vector<256x256xbf16>
    %cst_51 = arith.constant dense<0.000000e+00> : vector<16x256xf32>
    %48 = tpu.matmul %45, %47, %cst_51 {dimension_numbers = #tpu.dot_dimension_numbers<[1], [0], [0], [1], [0, 0, 1, 1], [], []>} : vector<16x256xbf16>, vector<256x256xbf16>, vector<16x256xf32> -> vector<16x256xf32>
    %49 = arith.addf %44, %48 : vector<16x256xf32>
    %c0_52 = arith.constant 0 : index
    %c0_53 = arith.constant 0 : index
    %50 = vector.load %arg6[%c0_52, %c0_53] : memref<1x256xf32, #tpu.memory_space<vmem>>, vector<1x256xf32>
    %51 = vector.broadcast %50 : vector<1x256xf32> to vector<16x256xf32>
    %52 = arith.mulf %49, %51 : vector<16x256xf32>
    %c0_54 = arith.constant 0 : index
    %c0_55 = arith.constant 0 : index
    %53 = vector.load %arg7[%c0_54, %c0_55] : memref<1x256xf32, #tpu.memory_space<vmem>>, vector<1x256xf32>
    %54 = vector.broadcast %53 : vector<1x256xf32> to vector<16x256xf32>
    %55 = arith.addf %52, %54 : vector<16x256xf32>
    %c0_56 = arith.constant 0 : index
    %c0_57 = arith.constant 0 : index
    %c0_58 = arith.constant 0 : index
    %56 = vector.load %arg1[%c0_56, %c0_57, %c0_58] : memref<1x16x256xf32, #tpu.memory_space<vmem>>, vector<1x16x256xf32>
    %57 = vector.shape_cast %56 : vector<1x16x256xf32> to vector<16x256xf32>
    %58 = arith.addf %55, %57 : vector<16x256xf32>
    %cst_59 = arith.constant 0.000000e+00 : f32
    %59 = vector.broadcast %cst_59 : f32 to vector<16x256xf32>
    %60 = arith.maximumf %58, %59 : vector<16x256xf32>
    %c0_60 = arith.constant 0 : index
    %c0_61 = arith.constant 0 : index
    %c0_62 = arith.constant 0 : index
    %61 = vector.load %arg8[%c0_60, %c0_61, %c0_62] : memref<1x16x256xf32, #tpu.memory_space<vmem>>, vector<1x16x256xf32>
    %62 = vector.shape_cast %61 : vector<1x16x256xf32> to vector<16x256xf32>
    %63 = vector.shape_cast %60 : vector<16x256xf32> to vector<1x16x256xf32>
    tpu.vector_store %arg8[%c0_60, %c0_61, %c0_62], %63 {strides = array<i32>} : memref<1x16x256xf32, #tpu.memory_space<vmem>>, vector<1x16x256xf32>,
    return
  }
  func.func @transform_0(%arg0: i32) -> (i32, i32, i32) {
    %c0_i32 = arith.constant 0 : i32
    %c0_i32_0 = arith.constant 0 : i32
    %c0_i32_1 = arith.constant 0 : i32
    return %arg0, %c0_i32, %c0_i32_0 : i32, i32, i32
  }
  func.func @transform_1(%arg0: i32) -> (i32, i32, i32) {
    %c0_i32 = arith.constant 0 : i32
    %c0_i32_0 = arith.constant 0 : i32
    %c0_i32_1 = arith.constant 0 : i32
    %c0_i32_2 = arith.constant 0 : i32
    return %c0_i32, %c0_i32_0, %c0_i32_1 : i32, i32, i32
  }
  func.func @transform_2(%arg0: i32) -> (i32, i32) {
    %c0_i32 = arith.constant 0 : i32
    %c0_i32_0 = arith.constant 0 : i32
    %c0_i32_1 = arith.constant 0 : i32
    return %c0_i32, %c0_i32_0 : i32, i32
  }
  func.func @transform_3(%arg0: i32) -> (i32, i32) {
    %c0_i32 = arith.constant 0 : i32
    %c0_i32_0 = arith.constant 0 : i32
    %c0_i32_1 = arith.constant 0 : i32
    return %c0_i32, %c0_i32_0 : i32, i32
  }
  func.func @transform_4(%arg0: i32) -> (i32, i32, i32) {
    %c0_i32 = arith.constant 0 : i32
    %c0_i32_0 = arith.constant 0 : i32
    %c0_i32_1 = arith.constant 0 : i32
    %c0_i32_2 = arith.constant 0 : i32
    return %c0_i32, %c0_i32_0, %c0_i32_1 : i32, i32, i32
  }
  func.func @transform_5(%arg0: i32) -> (i32, i32) {
    %c0_i32 = arith.constant 0 : i32
    %c0_i32_0 = arith.constant 0 : i32
    %c0_i32_1 = arith.constant 0 : i32
    return %c0_i32, %c0_i32_0 : i32, i32
  }
  func.func @transform_6(%arg0: i32) -> (i32, i32) {
    %c0_i32 = arith.constant 0 : i32
    %c0_i32_0 = arith.constant 0 : i32
    %c0_i32_1 = arith.constant 0 : i32
    return %c0_i32, %c0_i32_0 : i32, i32
  }
  func.func @transform_7(%arg0: i32) -> (i32, i32, i32) {
    %c0_i32 = arith.constant 0 : i32
    %c0_i32_0 = arith.constant 0 : i32
    %c0_i32_1 = arith.constant 0 : i32
    return %arg0, %c0_i32, %c0_i32_0 : i32, i32, i32
  }
}

module attributes {stable_mosaic.version = 11 : i64} {
  func.func @_stem_kernel(%arg0: i32, %arg1: memref<1x16x48xf32, #tpu.memory_space<vmem>>, %arg2: memref<3x48x256xbf16, #tpu.memory_space<vmem>>, %arg3: memref<1x256xf32, #tpu.memory_space<vmem>>, %arg4: memref<1x256xf32, #tpu.memory_space<vmem>>, %arg5: memref<1x16x256xf32, #tpu.memory_space<vmem>>, %arg6: memref<18x48xbf16, #tpu.memory_space<vmem>>) attributes {dimension_semantics = [#tpu.dimension_semantics<parallel>], iteration_bounds = array<i64: 2>, scalar_prefetch = 0 : i64, scratch_operands = 1 : i64, tpu.core_type = #tpu.core_type<tc>, window_params = [{transform_indices = @transform_0, window_bounds = array<i64: 1, 16, 48>}, {pipeline_mode = #tpu.pipeline_mode<synchronous>, transform_indices = @transform_1, window_bounds = array<i64: 3, 48, 256>}, {pipeline_mode = #tpu.pipeline_mode<synchronous>, transform_indices = @transform_2, window_bounds = array<i64: 1, 256>}, {pipeline_mode = #tpu.pipeline_mode<synchronous>, transform_indices = @transform_3, window_bounds = array<i64: 1, 256>}, {transform_indices = @transform_4, window_bounds = array<i64: 1, 16, 256>}]} {
    %cst = arith.constant 0.000000e+00 : bf16
    %0 = vector.broadcast %cst : bf16 to vector<18x48xbf16>
    %c0 = arith.constant 0 : index
    %c0_0 = arith.constant 0 : index
    %1 = vector.load %arg6[%c0, %c0_0] : memref<18x48xbf16, #tpu.memory_space<vmem>>, vector<18x48xbf16>
    tpu.vector_store %arg6[%c0, %c0_0], %0 {strides = array<i32>} : memref<18x48xbf16, #tpu.memory_space<vmem>>, vector<18x48xbf16>,
    %c0_1 = arith.constant 0 : index
    %c0_2 = arith.constant 0 : index
    %c0_3 = arith.constant 0 : index
    %2 = vector.load %arg1[%c0_1, %c0_2, %c0_3] : memref<1x16x48xf32, #tpu.memory_space<vmem>>, vector<1x16x48xf32>
    %3 = vector.shape_cast %2 : vector<1x16x48xf32> to vector<16x48xf32>
    %4 = arith.truncf %3 : vector<16x48xf32> to vector<16x48xbf16>
    %c1 = arith.constant 1 : index
    %c0_4 = arith.constant 0 : index
    %5 = vector.load %arg6[%c1, %c0_4] : memref<18x48xbf16, #tpu.memory_space<vmem>>, vector<16x48xbf16>
    tpu.vector_store %arg6[%c1, %c0_4], %4 {strides = array<i32>} : memref<18x48xbf16, #tpu.memory_space<vmem>>, vector<16x48xbf16>,
    %cst_5 = arith.constant 0.000000e+00 : f32
    %6 = vector.broadcast %cst_5 : f32 to vector<16x256xf32>
    %c0_6 = arith.constant 0 : index
    %c0_7 = arith.constant 0 : index
    %7 = vector.load %arg6[%c0_6, %c0_7] : memref<18x48xbf16, #tpu.memory_space<vmem>>, vector<16x48xbf16>
    %c0_8 = arith.constant 0 : index
    %c0_9 = arith.constant 0 : index
    %c0_10 = arith.constant 0 : index
    %8 = vector.load %arg2[%c0_8, %c0_9, %c0_10] : memref<3x48x256xbf16, #tpu.memory_space<vmem>>, vector<1x48x256xbf16>
    %9 = vector.shape_cast %8 : vector<1x48x256xbf16> to vector<48x256xbf16>
    %cst_11 = arith.constant dense<0.000000e+00> : vector<16x256xf32>
    %10 = tpu.matmul %7, %9, %cst_11 {dimension_numbers = #tpu.dot_dimension_numbers<[1], [0], [0], [1], [0, 0, 1, 1], [], []>} : vector<16x48xbf16>, vector<48x256xbf16>, vector<16x256xf32> -> vector<16x256xf32>
    %11 = arith.addf %6, %10 : vector<16x256xf32>
    %c1_12 = arith.constant 1 : index
    %c0_13 = arith.constant 0 : index
    %12 = vector.load %arg6[%c1_12, %c0_13] : memref<18x48xbf16, #tpu.memory_space<vmem>>, vector<16x48xbf16>
    %c1_14 = arith.constant 1 : index
    %c0_15 = arith.constant 0 : index
    %c0_16 = arith.constant 0 : index
    %13 = vector.load %arg2[%c1_14, %c0_15, %c0_16] : memref<3x48x256xbf16, #tpu.memory_space<vmem>>, vector<1x48x256xbf16>
    %14 = vector.shape_cast %13 : vector<1x48x256xbf16> to vector<48x256xbf16>
    %cst_17 = arith.constant dense<0.000000e+00> : vector<16x256xf32>
    %15 = tpu.matmul %12, %14, %cst_17 {dimension_numbers = #tpu.dot_dimension_numbers<[1], [0], [0], [1], [0, 0, 1, 1], [], []>} : vector<16x48xbf16>, vector<48x256xbf16>, vector<16x256xf32> -> vector<16x256xf32>
    %16 = arith.addf %11, %15 : vector<16x256xf32>
    %c2 = arith.constant 2 : index
    %c0_18 = arith.constant 0 : index
    %17 = vector.load %arg6[%c2, %c0_18] : memref<18x48xbf16, #tpu.memory_space<vmem>>, vector<16x48xbf16>
    %c2_19 = arith.constant 2 : index
    %c0_20 = arith.constant 0 : index
    %c0_21 = arith.constant 0 : index
    %18 = vector.load %arg2[%c2_19, %c0_20, %c0_21] : memref<3x48x256xbf16, #tpu.memory_space<vmem>>, vector<1x48x256xbf16>
    %19 = vector.shape_cast %18 : vector<1x48x256xbf16> to vector<48x256xbf16>
    %cst_22 = arith.constant dense<0.000000e+00> : vector<16x256xf32>
    %20 = tpu.matmul %17, %19, %cst_22 {dimension_numbers = #tpu.dot_dimension_numbers<[1], [0], [0], [1], [0, 0, 1, 1], [], []>} : vector<16x48xbf16>, vector<48x256xbf16>, vector<16x256xf32> -> vector<16x256xf32>
    %21 = arith.addf %16, %20 : vector<16x256xf32>
    %c0_23 = arith.constant 0 : index
    %c0_24 = arith.constant 0 : index
    %22 = vector.load %arg3[%c0_23, %c0_24] : memref<1x256xf32, #tpu.memory_space<vmem>>, vector<1x256xf32>
    %23 = vector.broadcast %22 : vector<1x256xf32> to vector<16x256xf32>
    %24 = arith.mulf %21, %23 : vector<16x256xf32>
    %c0_25 = arith.constant 0 : index
    %c0_26 = arith.constant 0 : index
    %25 = vector.load %arg4[%c0_25, %c0_26] : memref<1x256xf32, #tpu.memory_space<vmem>>, vector<1x256xf32>
    %26 = vector.broadcast %25 : vector<1x256xf32> to vector<16x256xf32>
    %27 = arith.addf %24, %26 : vector<16x256xf32>
    %cst_27 = arith.constant 0.000000e+00 : f32
    %28 = vector.broadcast %cst_27 : f32 to vector<16x256xf32>
    %29 = arith.maximumf %27, %28 : vector<16x256xf32>
    %c0_28 = arith.constant 0 : index
    %c0_29 = arith.constant 0 : index
    %c0_30 = arith.constant 0 : index
    %30 = vector.load %arg5[%c0_28, %c0_29, %c0_30] : memref<1x16x256xf32, #tpu.memory_space<vmem>>, vector<1x16x256xf32>
    %31 = vector.shape_cast %30 : vector<1x16x256xf32> to vector<16x256xf32>
    %32 = vector.shape_cast %29 : vector<16x256xf32> to vector<1x16x256xf32>
    tpu.vector_store %arg5[%c0_28, %c0_29, %c0_30], %32 {strides = array<i32>} : memref<1x16x256xf32, #tpu.memory_space<vmem>>, vector<1x16x256xf32>,
    return
  }
  func.func @transform_0(%arg0: i32) -> (i32, i32, i32) {
    %c0_i32 = arith.constant 0 : i32
    %c0_i32_0 = arith.constant 0 : i32
    %c0_i32_1 = arith.constant 0 : i32
    return %arg0, %c0_i32, %c0_i32_0 : i32, i32, i32
  }
  func.func @transform_1(%arg0: i32) -> (i32, i32, i32) {
    %c0_i32 = arith.constant 0 : i32
    %c0_i32_0 = arith.constant 0 : i32
    %c0_i32_1 = arith.constant 0 : i32
    %c0_i32_2 = arith.constant 0 : i32
    return %c0_i32, %c0_i32_0, %c0_i32_1 : i32, i32, i32
  }
  func.func @transform_2(%arg0: i32) -> (i32, i32) {
    %c0_i32 = arith.constant 0 : i32
    %c0_i32_0 = arith.constant 0 : i32
    %c0_i32_1 = arith.constant 0 : i32
    return %c0_i32, %c0_i32_0 : i32, i32
  }
  func.func @transform_3(%arg0: i32) -> (i32, i32) {
    %c0_i32 = arith.constant 0 : i32
    %c0_i32_0 = arith.constant 0 : i32
    %c0_i32_1 = arith.constant 0 : i32
    return %c0_i32, %c0_i32_0 : i32, i32
  }
  func.func @transform_4(%arg0: i32) -> (i32, i32, i32) {
    %c0_i32 = arith.constant 0 : i32
    %c0_i32_0 = arith.constant 0 : i32
    %c0_i32_1 = arith.constant 0 : i32
    return %arg0, %c0_i32, %c0_i32_0 : i32, i32, i32
  }
}

module attributes {stable_mosaic.version = 11 : i64} {
  func.func @_block_s2_kernel(%arg0: i32, %arg1: memref<1x9x256xf32, #tpu.memory_space<vmem>>, %arg2: memref<1x9x256xf32, #tpu.memory_space<vmem>>, %arg3: memref<3x256x256xbf16, #tpu.memory_space<vmem>>, %arg4: memref<1x256xf32, #tpu.memory_space<vmem>>, %arg5: memref<1x256xf32, #tpu.memory_space<vmem>>, %arg6: memref<3x256x256xbf16, #tpu.memory_space<vmem>>, %arg7: memref<1x256xf32, #tpu.memory_space<vmem>>, %arg8: memref<1x256xf32, #tpu.memory_space<vmem>>, %arg9: memref<256x256xf32, #tpu.memory_space<vmem>>, %arg10: memref<1x8x256xf32, #tpu.memory_space<vmem>>, %arg11: memref<10x256xbf16, #tpu.memory_space<vmem>>) attributes {dimension_semantics = [#tpu.dimension_semantics<parallel>], iteration_bounds = array<i64: 2>, scalar_prefetch = 0 : i64, scratch_operands = 1 : i64, tpu.core_type = #tpu.core_type<tc>, window_params = [{transform_indices = @transform_0, window_bounds = array<i64: 1, 9, 256>}, {transform_indices = @transform_1, window_bounds = array<i64: 1, 9, 256>}, {pipeline_mode = #tpu.pipeline_mode<synchronous>, transform_indices = @transform_2, window_bounds = array<i64: 3, 256, 256>}, {pipeline_mode = #tpu.pipeline_mode<synchronous>, transform_indices = @transform_3, window_bounds = array<i64: 1, 256>}, {pipeline_mode = #tpu.pipeline_mode<synchronous>, transform_indices = @transform_4, window_bounds = array<i64: 1, 256>}, {pipeline_mode = #tpu.pipeline_mode<synchronous>, transform_indices = @transform_5, window_bounds = array<i64: 3, 256, 256>}, {pipeline_mode = #tpu.pipeline_mode<synchronous>, transform_indices = @transform_6, window_bounds = array<i64: 1, 256>}, {pipeline_mode = #tpu.pipeline_mode<synchronous>, transform_indices = @transform_7, window_bounds = array<i64: 1, 256>}, {pipeline_mode = #tpu.pipeline_mode<synchronous>, transform_indices = @transform_8, window_bounds = array<i64: 256, 256>}, {transform_indices = @transform_9, window_bounds = array<i64: 1, 8, 256>}]} {
    %c0 = arith.constant 0 : index
    %c0_0 = arith.constant 0 : index
    %c0_1 = arith.constant 0 : index
    %0 = vector.load %arg1[%c0, %c0_0, %c0_1] : memref<1x9x256xf32, #tpu.memory_space<vmem>>, vector<1x9x256xf32>
    %1 = vector.shape_cast %0 : vector<1x9x256xf32> to vector<9x256xf32>
    %c0_2 = arith.constant 0 : index
    %c0_3 = arith.constant 0 : index
    %c0_4 = arith.constant 0 : index
    %2 = vector.load %arg2[%c0_2, %c0_3, %c0_4] : memref<1x9x256xf32, #tpu.memory_space<vmem>>, vector<1x9x256xf32>
    %3 = vector.shape_cast %2 : vector<1x9x256xf32> to vector<9x256xf32>
    %4 = arith.truncf %1 : vector<9x256xf32> to vector<9x256xbf16>
    %5 = arith.truncf %3 : vector<9x256xf32> to vector<9x256xbf16>
    %6 = vector.extract_strided_slice %4 {offsets = [0, 0], sizes = [8, 256], strides = [1, 1]} : vector<9x256xbf16> to vector<8x256xbf16>
    %c0_5 = arith.constant 0 : index
    %c0_6 = arith.constant 0 : index
    %c0_7 = arith.constant 0 : index
    %7 = vector.load %arg3[%c0_5, %c0_6, %c0_7] : memref<3x256x256xbf16, #tpu.memory_space<vmem>>, vector<1x256x256xbf16>
    %8 = vector.shape_cast %7 : vector<1x256x256xbf16> to vector<256x256xbf16>
    %cst = arith.constant dense<0.000000e+00> : vector<8x256xf32>
    %9 = tpu.matmul %6, %8, %cst {dimension_numbers = #tpu.dot_dimension_numbers<[1], [0], [0], [1], [0, 0, 1, 1], [], []>} : vector<8x256xbf16>, vector<256x256xbf16>, vector<8x256xf32> -> vector<8x256xf32>
    %10 = vector.extract_strided_slice %5 {offsets = [0, 0], sizes = [8, 256], strides = [1, 1]} : vector<9x256xbf16> to vector<8x256xbf16>
    %c1 = arith.constant 1 : index
    %c0_8 = arith.constant 0 : index
    %c0_9 = arith.constant 0 : index
    %11 = vector.load %arg3[%c1, %c0_8, %c0_9] : memref<3x256x256xbf16, #tpu.memory_space<vmem>>, vector<1x256x256xbf16>
    %12 = vector.shape_cast %11 : vector<1x256x256xbf16> to vector<256x256xbf16>
    %cst_10 = arith.constant dense<0.000000e+00> : vector<8x256xf32>
    %13 = tpu.matmul %10, %12, %cst_10 {dimension_numbers = #tpu.dot_dimension_numbers<[1], [0], [0], [1], [0, 0, 1, 1], [], []>} : vector<8x256xbf16>, vector<256x256xbf16>, vector<8x256xf32> -> vector<8x256xf32>
    %14 = arith.addf %9, %13 : vector<8x256xf32>
    %15 = vector.extract_strided_slice %4 {offsets = [1, 0], sizes = [8, 256], strides = [1, 1]} : vector<9x256xbf16> to vector<8x256xbf16>
    %c2 = arith.constant 2 : index
    %c0_11 = arith.constant 0 : index
    %c0_12 = arith.constant 0 : index
    %16 = vector.load %arg3[%c2, %c0_11, %c0_12] : memref<3x256x256xbf16, #tpu.memory_space<vmem>>, vector<1x256x256xbf16>
    %17 = vector.shape_cast %16 : vector<1x256x256xbf16> to vector<256x256xbf16>
    %cst_13 = arith.constant dense<0.000000e+00> : vector<8x256xf32>
    %18 = tpu.matmul %15, %17, %cst_13 {dimension_numbers = #tpu.dot_dimension_numbers<[1], [0], [0], [1], [0, 0, 1, 1], [], []>} : vector<8x256xbf16>, vector<256x256xbf16>, vector<8x256xf32> -> vector<8x256xf32>
    %19 = arith.addf %14, %18 : vector<8x256xf32>
    %c0_14 = arith.constant 0 : index
    %c0_15 = arith.constant 0 : index
    %20 = vector.load %arg4[%c0_14, %c0_15] : memref<1x256xf32, #tpu.memory_space<vmem>>, vector<1x256xf32>
    %21 = vector.broadcast %20 : vector<1x256xf32> to vector<8x256xf32>
    %22 = arith.mulf %19, %21 : vector<8x256xf32>
    %c0_16 = arith.constant 0 : index
    %c0_17 = arith.constant 0 : index
    %23 = vector.load %arg5[%c0_16, %c0_17] : memref<1x256xf32, #tpu.memory_space<vmem>>, vector<1x256xf32>
    %24 = vector.broadcast %23 : vector<1x256xf32> to vector<8x256xf32>
    %25 = arith.addf %22, %24 : vector<8x256xf32>
    %cst_18 = arith.constant 0.000000e+00 : f32
    %26 = vector.broadcast %cst_18 : f32 to vector<8x256xf32>
    %27 = arith.maximumf %25, %26 : vector<8x256xf32>
    %cst_19 = arith.constant 0.000000e+00 : bf16
    %28 = vector.broadcast %cst_19 : bf16 to vector<10x256xbf16>
    %c0_20 = arith.constant 0 : index
    %c0_21 = arith.constant 0 : index
    %29 = vector.load %arg11[%c0_20, %c0_21] : memref<10x256xbf16, #tpu.memory_space<vmem>>, vector<10x256xbf16>
    tpu.vector_store %arg11[%c0_20, %c0_21], %28 {strides = array<i32>} : memref<10x256xbf16, #tpu.memory_space<vmem>>, vector<10x256xbf16>,
    %30 = arith.truncf %27 : vector<8x256xf32> to vector<8x256xbf16>
    %c1_22 = arith.constant 1 : index
    %c0_23 = arith.constant 0 : index
    %31 = vector.load %arg11[%c1_22, %c0_23] : memref<10x256xbf16, #tpu.memory_space<vmem>>, vector<8x256xbf16>
    tpu.vector_store %arg11[%c1_22, %c0_23], %30 {strides = array<i32>} : memref<10x256xbf16, #tpu.memory_space<vmem>>, vector<8x256xbf16>,
    %cst_24 = arith.constant 0.000000e+00 : f32
    %32 = vector.broadcast %cst_24 : f32 to vector<8x256xf32>
    %c0_25 = arith.constant 0 : index
    %c0_26 = arith.constant 0 : index
    %33 = vector.load %arg11[%c0_25, %c0_26] : memref<10x256xbf16, #tpu.memory_space<vmem>>, vector<8x256xbf16>
    %c0_27 = arith.constant 0 : index
    %c0_28 = arith.constant 0 : index
    %c0_29 = arith.constant 0 : index
    %34 = vector.load %arg6[%c0_27, %c0_28, %c0_29] : memref<3x256x256xbf16, #tpu.memory_space<vmem>>, vector<1x256x256xbf16>
    %35 = vector.shape_cast %34 : vector<1x256x256xbf16> to vector<256x256xbf16>
    %cst_30 = arith.constant dense<0.000000e+00> : vector<8x256xf32>
    %36 = tpu.matmul %33, %35, %cst_30 {dimension_numbers = #tpu.dot_dimension_numbers<[1], [0], [0], [1], [0, 0, 1, 1], [], []>} : vector<8x256xbf16>, vector<256x256xbf16>, vector<8x256xf32> -> vector<8x256xf32>
    %37 = arith.addf %32, %36 : vector<8x256xf32>
    %c1_31 = arith.constant 1 : index
    %c0_32 = arith.constant 0 : index
    %38 = vector.load %arg11[%c1_31, %c0_32] : memref<10x256xbf16, #tpu.memory_space<vmem>>, vector<8x256xbf16>
    %c1_33 = arith.constant 1 : index
    %c0_34 = arith.constant 0 : index
    %c0_35 = arith.constant 0 : index
    %39 = vector.load %arg6[%c1_33, %c0_34, %c0_35] : memref<3x256x256xbf16, #tpu.memory_space<vmem>>, vector<1x256x256xbf16>
    %40 = vector.shape_cast %39 : vector<1x256x256xbf16> to vector<256x256xbf16>
    %cst_36 = arith.constant dense<0.000000e+00> : vector<8x256xf32>
    %41 = tpu.matmul %38, %40, %cst_36 {dimension_numbers = #tpu.dot_dimension_numbers<[1], [0], [0], [1], [0, 0, 1, 1], [], []>} : vector<8x256xbf16>, vector<256x256xbf16>, vector<8x256xf32> -> vector<8x256xf32>
    %42 = arith.addf %37, %41 : vector<8x256xf32>
    %c2_37 = arith.constant 2 : index
    %c0_38 = arith.constant 0 : index
    %43 = vector.load %arg11[%c2_37, %c0_38] : memref<10x256xbf16, #tpu.memory_space<vmem>>, vector<8x256xbf16>
    %c2_39 = arith.constant 2 : index
    %c0_40 = arith.constant 0 : index
    %c0_41 = arith.constant 0 : index
    %44 = vector.load %arg6[%c2_39, %c0_40, %c0_41] : memref<3x256x256xbf16, #tpu.memory_space<vmem>>, vector<1x256x256xbf16>
    %45 = vector.shape_cast %44 : vector<1x256x256xbf16> to vector<256x256xbf16>
    %cst_42 = arith.constant dense<0.000000e+00> : vector<8x256xf32>
    %46 = tpu.matmul %43, %45, %cst_42 {dimension_numbers = #tpu.dot_dimension_numbers<[1], [0], [0], [1], [0, 0, 1, 1], [], []>} : vector<8x256xbf16>, vector<256x256xbf16>, vector<8x256xf32> -> vector<8x256xf32>
    %47 = arith.addf %42, %46 : vector<8x256xf32>
    %48 = vector.extract_strided_slice %3 {offsets = [0, 0], sizes = [8, 256], strides = [1, 1]} : vector<9x256xf32> to vector<8x256xf32>
    %c0_43 = arith.constant 0 : index
    %c0_44 = arith.constant 0 : index
    %49 = vector.load %arg9[%c0_43, %c0_44] : memref<256x256xf32, #tpu.memory_space<vmem>>, vector<256x256xf32>
    %cst_45 = arith.constant dense<0.000000e+00> : vector<8x256xf32>
    %50 = tpu.matmul %48, %49, %cst_45 {dimension_numbers = #tpu.dot_dimension_numbers<[1], [0], [0], [1], [0, 0, 1, 1], [], []>} : vector<8x256xf32>, vector<256x256xf32>, vector<8x256xf32> -> vector<8x256xf32>
    %c0_46 = arith.constant 0 : index
    %c0_47 = arith.constant 0 : index
    %51 = vector.load %arg7[%c0_46, %c0_47] : memref<1x256xf32, #tpu.memory_space<vmem>>, vector<1x256xf32>
    %52 = vector.broadcast %51 : vector<1x256xf32> to vector<8x256xf32>
    %53 = arith.mulf %47, %52 : vector<8x256xf32>
    %c0_48 = arith.constant 0 : index
    %c0_49 = arith.constant 0 : index
    %54 = vector.load %arg8[%c0_48, %c0_49] : memref<1x256xf32, #tpu.memory_space<vmem>>, vector<1x256xf32>
    %55 = vector.broadcast %54 : vector<1x256xf32> to vector<8x256xf32>
    %56 = arith.addf %53, %55 : vector<8x256xf32>
    %57 = arith.addf %56, %50 : vector<8x256xf32>
    %cst_50 = arith.constant 0.000000e+00 : f32
    %58 = vector.broadcast %cst_50 : f32 to vector<8x256xf32>
    %59 = arith.maximumf %57, %58 : vector<8x256xf32>
    %c0_51 = arith.constant 0 : index
    %c0_52 = arith.constant 0 : index
    %c0_53 = arith.constant 0 : index
    %60 = vector.load %arg10[%c0_51, %c0_52, %c0_53] : memref<1x8x256xf32, #tpu.memory_space<vmem>>, vector<1x8x256xf32>
    %61 = vector.shape_cast %60 : vector<1x8x256xf32> to vector<8x256xf32>
    %62 = vector.shape_cast %59 : vector<8x256xf32> to vector<1x8x256xf32>
    tpu.vector_store %arg10[%c0_51, %c0_52, %c0_53], %62 {strides = array<i32>} : memref<1x8x256xf32, #tpu.memory_space<vmem>>, vector<1x8x256xf32>,
    return
  }
  func.func @transform_0(%arg0: i32) -> (i32, i32, i32) {
    %c0_i32 = arith.constant 0 : i32
    %c0_i32_0 = arith.constant 0 : i32
    %c0_i32_1 = arith.constant 0 : i32
    return %arg0, %c0_i32, %c0_i32_0 : i32, i32, i32
  }
  func.func @transform_1(%arg0: i32) -> (i32, i32, i32) {
    %c0_i32 = arith.constant 0 : i32
    %c0_i32_0 = arith.constant 0 : i32
    %c0_i32_1 = arith.constant 0 : i32
    return %arg0, %c0_i32, %c0_i32_0 : i32, i32, i32
  }
  func.func @transform_2(%arg0: i32) -> (i32, i32, i32) {
    %c0_i32 = arith.constant 0 : i32
    %c0_i32_0 = arith.constant 0 : i32
    %c0_i32_1 = arith.constant 0 : i32
    %c0_i32_2 = arith.constant 0 : i32
    return %c0_i32, %c0_i32_0, %c0_i32_1 : i32, i32, i32
  }
  func.func @transform_3(%arg0: i32) -> (i32, i32) {
    %c0_i32 = arith.constant 0 : i32
    %c0_i32_0 = arith.constant 0 : i32
    %c0_i32_1 = arith.constant 0 : i32
    return %c0_i32, %c0_i32_0 : i32, i32
  }
  func.func @transform_4(%arg0: i32) -> (i32, i32) {
    %c0_i32 = arith.constant 0 : i32
    %c0_i32_0 = arith.constant 0 : i32
    %c0_i32_1 = arith.constant 0 : i32
    return %c0_i32, %c0_i32_0 : i32, i32
  }
  func.func @transform_5(%arg0: i32) -> (i32, i32, i32) {
    %c0_i32 = arith.constant 0 : i32
    %c0_i32_0 = arith.constant 0 : i32
    %c0_i32_1 = arith.constant 0 : i32
    %c0_i32_2 = arith.constant 0 : i32
    return %c0_i32, %c0_i32_0, %c0_i32_1 : i32, i32, i32
  }
  func.func @transform_6(%arg0: i32) -> (i32, i32) {
    %c0_i32 = arith.constant 0 : i32
    %c0_i32_0 = arith.constant 0 : i32
    %c0_i32_1 = arith.constant 0 : i32
    return %c0_i32, %c0_i32_0 : i32, i32
  }
  func.func @transform_7(%arg0: i32) -> (i32, i32) {
    %c0_i32 = arith.constant 0 : i32
    %c0_i32_0 = arith.constant 0 : i32
    %c0_i32_1 = arith.constant 0 : i32
    return %c0_i32, %c0_i32_0 : i32, i32
  }
  func.func @transform_8(%arg0: i32) -> (i32, i32) {
    %c0_i32 = arith.constant 0 : i32
    %c0_i32_0 = arith.constant 0 : i32
    %c0_i32_1 = arith.constant 0 : i32
    return %c0_i32, %c0_i32_0 : i32, i32
  }
  func.func @transform_9(%arg0: i32) -> (i32, i32, i32) {
    %c0_i32 = arith.constant 0 : i32
    %c0_i32_0 = arith.constant 0 : i32
    %c0_i32_1 = arith.constant 0 : i32
    return %arg0, %c0_i32, %c0_i32_0 : i32, i32, i32
  }
}

module attributes {stable_mosaic.version = 11 : i64} {
  func.func @_block_s2_kernel(%arg0: i32, %arg1: memref<1x5x256xf32, #tpu.memory_space<vmem>>, %arg2: memref<1x5x256xf32, #tpu.memory_space<vmem>>, %arg3: memref<3x256x256xbf16, #tpu.memory_space<vmem>>, %arg4: memref<1x256xf32, #tpu.memory_space<vmem>>, %arg5: memref<1x256xf32, #tpu.memory_space<vmem>>, %arg6: memref<3x256x256xbf16, #tpu.memory_space<vmem>>, %arg7: memref<1x256xf32, #tpu.memory_space<vmem>>, %arg8: memref<1x256xf32, #tpu.memory_space<vmem>>, %arg9: memref<256x256xf32, #tpu.memory_space<vmem>>, %arg10: memref<1x4x256xf32, #tpu.memory_space<vmem>>, %arg11: memref<6x256xbf16, #tpu.memory_space<vmem>>) attributes {dimension_semantics = [#tpu.dimension_semantics<parallel>], iteration_bounds = array<i64: 2>, scalar_prefetch = 0 : i64, scratch_operands = 1 : i64, tpu.core_type = #tpu.core_type<tc>, window_params = [{transform_indices = @transform_0, window_bounds = array<i64: 1, 5, 256>}, {transform_indices = @transform_1, window_bounds = array<i64: 1, 5, 256>}, {pipeline_mode = #tpu.pipeline_mode<synchronous>, transform_indices = @transform_2, window_bounds = array<i64: 3, 256, 256>}, {pipeline_mode = #tpu.pipeline_mode<synchronous>, transform_indices = @transform_3, window_bounds = array<i64: 1, 256>}, {pipeline_mode = #tpu.pipeline_mode<synchronous>, transform_indices = @transform_4, window_bounds = array<i64: 1, 256>}, {pipeline_mode = #tpu.pipeline_mode<synchronous>, transform_indices = @transform_5, window_bounds = array<i64: 3, 256, 256>}, {pipeline_mode = #tpu.pipeline_mode<synchronous>, transform_indices = @transform_6, window_bounds = array<i64: 1, 256>}, {pipeline_mode = #tpu.pipeline_mode<synchronous>, transform_indices = @transform_7, window_bounds = array<i64: 1, 256>}, {pipeline_mode = #tpu.pipeline_mode<synchronous>, transform_indices = @transform_8, window_bounds = array<i64: 256, 256>}, {transform_indices = @transform_9, window_bounds = array<i64: 1, 4, 256>}]} {
    %c0 = arith.constant 0 : index
    %c0_0 = arith.constant 0 : index
    %c0_1 = arith.constant 0 : index
    %0 = vector.load %arg1[%c0, %c0_0, %c0_1] : memref<1x5x256xf32, #tpu.memory_space<vmem>>, vector<1x5x256xf32>
    %1 = vector.shape_cast %0 : vector<1x5x256xf32> to vector<5x256xf32>
    %c0_2 = arith.constant 0 : index
    %c0_3 = arith.constant 0 : index
    %c0_4 = arith.constant 0 : index
    %2 = vector.load %arg2[%c0_2, %c0_3, %c0_4] : memref<1x5x256xf32, #tpu.memory_space<vmem>>, vector<1x5x256xf32>
    %3 = vector.shape_cast %2 : vector<1x5x256xf32> to vector<5x256xf32>
    %4 = arith.truncf %1 : vector<5x256xf32> to vector<5x256xbf16>
    %5 = arith.truncf %3 : vector<5x256xf32> to vector<5x256xbf16>
    %6 = vector.extract_strided_slice %4 {offsets = [0, 0], sizes = [4, 256], strides = [1, 1]} : vector<5x256xbf16> to vector<4x256xbf16>
    %c0_5 = arith.constant 0 : index
    %c0_6 = arith.constant 0 : index
    %c0_7 = arith.constant 0 : index
    %7 = vector.load %arg3[%c0_5, %c0_6, %c0_7] : memref<3x256x256xbf16, #tpu.memory_space<vmem>>, vector<1x256x256xbf16>
    %8 = vector.shape_cast %7 : vector<1x256x256xbf16> to vector<256x256xbf16>
    %cst = arith.constant dense<0.000000e+00> : vector<4x256xf32>
    %9 = tpu.matmul %6, %8, %cst {dimension_numbers = #tpu.dot_dimension_numbers<[1], [0], [0], [1], [0, 0, 1, 1], [], []>} : vector<4x256xbf16>, vector<256x256xbf16>, vector<4x256xf32> -> vector<4x256xf32>
    %10 = vector.extract_strided_slice %5 {offsets = [0, 0], sizes = [4, 256], strides = [1, 1]} : vector<5x256xbf16> to vector<4x256xbf16>
    %c1 = arith.constant 1 : index
    %c0_8 = arith.constant 0 : index
    %c0_9 = arith.constant 0 : index
    %11 = vector.load %arg3[%c1, %c0_8, %c0_9] : memref<3x256x256xbf16, #tpu.memory_space<vmem>>, vector<1x256x256xbf16>
    %12 = vector.shape_cast %11 : vector<1x256x256xbf16> to vector<256x256xbf16>
    %cst_10 = arith.constant dense<0.000000e+00> : vector<4x256xf32>
    %13 = tpu.matmul %10, %12, %cst_10 {dimension_numbers = #tpu.dot_dimension_numbers<[1], [0], [0], [1], [0, 0, 1, 1], [], []>} : vector<4x256xbf16>, vector<256x256xbf16>, vector<4x256xf32> -> vector<4x256xf32>
    %14 = arith.addf %9, %13 : vector<4x256xf32>
    %15 = vector.extract_strided_slice %4 {offsets = [1, 0], sizes = [4, 256], strides = [1, 1]} : vector<5x256xbf16> to vector<4x256xbf16>
    %c2 = arith.constant 2 : index
    %c0_11 = arith.constant 0 : index
    %c0_12 = arith.constant 0 : index
    %16 = vector.load %arg3[%c2, %c0_11, %c0_12] : memref<3x256x256xbf16, #tpu.memory_space<vmem>>, vector<1x256x256xbf16>
    %17 = vector.shape_cast %16 : vector<1x256x256xbf16> to vector<256x256xbf16>
    %cst_13 = arith.constant dense<0.000000e+00> : vector<4x256xf32>
    %18 = tpu.matmul %15, %17, %cst_13 {dimension_numbers = #tpu.dot_dimension_numbers<[1], [0], [0], [1], [0, 0, 1, 1], [], []>} : vector<4x256xbf16>, vector<256x256xbf16>, vector<4x256xf32> -> vector<4x256xf32>
    %19 = arith.addf %14, %18 : vector<4x256xf32>
    %c0_14 = arith.constant 0 : index
    %c0_15 = arith.constant 0 : index
    %20 = vector.load %arg4[%c0_14, %c0_15] : memref<1x256xf32, #tpu.memory_space<vmem>>, vector<1x256xf32>
    %21 = vector.broadcast %20 : vector<1x256xf32> to vector<4x256xf32>
    %22 = arith.mulf %19, %21 : vector<4x256xf32>
    %c0_16 = arith.constant 0 : index
    %c0_17 = arith.constant 0 : index
    %23 = vector.load %arg5[%c0_16, %c0_17] : memref<1x256xf32, #tpu.memory_space<vmem>>, vector<1x256xf32>
    %24 = vector.broadcast %23 : vector<1x256xf32> to vector<4x256xf32>
    %25 = arith.addf %22, %24 : vector<4x256xf32>
    %cst_18 = arith.constant 0.000000e+00 : f32
    %26 = vector.broadcast %cst_18 : f32 to vector<4x256xf32>
    %27 = arith.maximumf %25, %26 : vector<4x256xf32>
    %cst_19 = arith.constant 0.000000e+00 : bf16
    %28 = vector.broadcast %cst_19 : bf16 to vector<6x256xbf16>
    %c0_20 = arith.constant 0 : index
    %c0_21 = arith.constant 0 : index
    %29 = vector.load %arg11[%c0_20, %c0_21] : memref<6x256xbf16, #tpu.memory_space<vmem>>, vector<6x256xbf16>
    tpu.vector_store %arg11[%c0_20, %c0_21], %28 {strides = array<i32>} : memref<6x256xbf16, #tpu.memory_space<vmem>>, vector<6x256xbf16>,
    %30 = arith.truncf %27 : vector<4x256xf32> to vector<4x256xbf16>
    %c1_22 = arith.constant 1 : index
    %c0_23 = arith.constant 0 : index
    %31 = vector.load %arg11[%c1_22, %c0_23] : memref<6x256xbf16, #tpu.memory_space<vmem>>, vector<4x256xbf16>
    tpu.vector_store %arg11[%c1_22, %c0_23], %30 {strides = array<i32>} : memref<6x256xbf16, #tpu.memory_space<vmem>>, vector<4x256xbf16>,
    %cst_24 = arith.constant 0.000000e+00 : f32
    %32 = vector.broadcast %cst_24 : f32 to vector<4x256xf32>
    %c0_25 = arith.constant 0 : index
    %c0_26 = arith.constant 0 : index
    %33 = vector.load %arg11[%c0_25, %c0_26] : memref<6x256xbf16, #tpu.memory_space<vmem>>, vector<4x256xbf16>
    %c0_27 = arith.constant 0 : index
    %c0_28 = arith.constant 0 : index
    %c0_29 = arith.constant 0 : index
    %34 = vector.load %arg6[%c0_27, %c0_28, %c0_29] : memref<3x256x256xbf16, #tpu.memory_space<vmem>>, vector<1x256x256xbf16>
    %35 = vector.shape_cast %34 : vector<1x256x256xbf16> to vector<256x256xbf16>
    %cst_30 = arith.constant dense<0.000000e+00> : vector<4x256xf32>
    %36 = tpu.matmul %33, %35, %cst_30 {dimension_numbers = #tpu.dot_dimension_numbers<[1], [0], [0], [1], [0, 0, 1, 1], [], []>} : vector<4x256xbf16>, vector<256x256xbf16>, vector<4x256xf32> -> vector<4x256xf32>
    %37 = arith.addf %32, %36 : vector<4x256xf32>
    %c1_31 = arith.constant 1 : index
    %c0_32 = arith.constant 0 : index
    %38 = vector.load %arg11[%c1_31, %c0_32] : memref<6x256xbf16, #tpu.memory_space<vmem>>, vector<4x256xbf16>
    %c1_33 = arith.constant 1 : index
    %c0_34 = arith.constant 0 : index
    %c0_35 = arith.constant 0 : index
    %39 = vector.load %arg6[%c1_33, %c0_34, %c0_35] : memref<3x256x256xbf16, #tpu.memory_space<vmem>>, vector<1x256x256xbf16>
    %40 = vector.shape_cast %39 : vector<1x256x256xbf16> to vector<256x256xbf16>
    %cst_36 = arith.constant dense<0.000000e+00> : vector<4x256xf32>
    %41 = tpu.matmul %38, %40, %cst_36 {dimension_numbers = #tpu.dot_dimension_numbers<[1], [0], [0], [1], [0, 0, 1, 1], [], []>} : vector<4x256xbf16>, vector<256x256xbf16>, vector<4x256xf32> -> vector<4x256xf32>
    %42 = arith.addf %37, %41 : vector<4x256xf32>
    %c2_37 = arith.constant 2 : index
    %c0_38 = arith.constant 0 : index
    %43 = vector.load %arg11[%c2_37, %c0_38] : memref<6x256xbf16, #tpu.memory_space<vmem>>, vector<4x256xbf16>
    %c2_39 = arith.constant 2 : index
    %c0_40 = arith.constant 0 : index
    %c0_41 = arith.constant 0 : index
    %44 = vector.load %arg6[%c2_39, %c0_40, %c0_41] : memref<3x256x256xbf16, #tpu.memory_space<vmem>>, vector<1x256x256xbf16>
    %45 = vector.shape_cast %44 : vector<1x256x256xbf16> to vector<256x256xbf16>
    %cst_42 = arith.constant dense<0.000000e+00> : vector<4x256xf32>
    %46 = tpu.matmul %43, %45, %cst_42 {dimension_numbers = #tpu.dot_dimension_numbers<[1], [0], [0], [1], [0, 0, 1, 1], [], []>} : vector<4x256xbf16>, vector<256x256xbf16>, vector<4x256xf32> -> vector<4x256xf32>
    %47 = arith.addf %42, %46 : vector<4x256xf32>
    %48 = vector.extract_strided_slice %3 {offsets = [0, 0], sizes = [4, 256], strides = [1, 1]} : vector<5x256xf32> to vector<4x256xf32>
    %c0_43 = arith.constant 0 : index
    %c0_44 = arith.constant 0 : index
    %49 = vector.load %arg9[%c0_43, %c0_44] : memref<256x256xf32, #tpu.memory_space<vmem>>, vector<256x256xf32>
    %cst_45 = arith.constant dense<0.000000e+00> : vector<4x256xf32>
    %50 = tpu.matmul %48, %49, %cst_45 {dimension_numbers = #tpu.dot_dimension_numbers<[1], [0], [0], [1], [0, 0, 1, 1], [], []>} : vector<4x256xf32>, vector<256x256xf32>, vector<4x256xf32> -> vector<4x256xf32>
    %c0_46 = arith.constant 0 : index
    %c0_47 = arith.constant 0 : index
    %51 = vector.load %arg7[%c0_46, %c0_47] : memref<1x256xf32, #tpu.memory_space<vmem>>, vector<1x256xf32>
    %52 = vector.broadcast %51 : vector<1x256xf32> to vector<4x256xf32>
    %53 = arith.mulf %47, %52 : vector<4x256xf32>
    %c0_48 = arith.constant 0 : index
    %c0_49 = arith.constant 0 : index
    %54 = vector.load %arg8[%c0_48, %c0_49] : memref<1x256xf32, #tpu.memory_space<vmem>>, vector<1x256xf32>
    %55 = vector.broadcast %54 : vector<1x256xf32> to vector<4x256xf32>
    %56 = arith.addf %53, %55 : vector<4x256xf32>
    %57 = arith.addf %56, %50 : vector<4x256xf32>
    %cst_50 = arith.constant 0.000000e+00 : f32
    %58 = vector.broadcast %cst_50 : f32 to vector<4x256xf32>
    %59 = arith.maximumf %57, %58 : vector<4x256xf32>
    %c0_51 = arith.constant 0 : index
    %c0_52 = arith.constant 0 : index
    %c0_53 = arith.constant 0 : index
    %60 = vector.load %arg10[%c0_51, %c0_52, %c0_53] : memref<1x4x256xf32, #tpu.memory_space<vmem>>, vector<1x4x256xf32>
    %61 = vector.shape_cast %60 : vector<1x4x256xf32> to vector<4x256xf32>
    %62 = vector.shape_cast %59 : vector<4x256xf32> to vector<1x4x256xf32>
    tpu.vector_store %arg10[%c0_51, %c0_52, %c0_53], %62 {strides = array<i32>} : memref<1x4x256xf32, #tpu.memory_space<vmem>>, vector<1x4x256xf32>,
    return
  }
  func.func @transform_0(%arg0: i32) -> (i32, i32, i32) {
    %c0_i32 = arith.constant 0 : i32
    %c0_i32_0 = arith.constant 0 : i32
    %c0_i32_1 = arith.constant 0 : i32
    return %arg0, %c0_i32, %c0_i32_0 : i32, i32, i32
  }
  func.func @transform_1(%arg0: i32) -> (i32, i32, i32) {
    %c0_i32 = arith.constant 0 : i32
    %c0_i32_0 = arith.constant 0 : i32
    %c0_i32_1 = arith.constant 0 : i32
    return %arg0, %c0_i32, %c0_i32_0 : i32, i32, i32
  }
  func.func @transform_2(%arg0: i32) -> (i32, i32, i32) {
    %c0_i32 = arith.constant 0 : i32
    %c0_i32_0 = arith.constant 0 : i32
    %c0_i32_1 = arith.constant 0 : i32
    %c0_i32_2 = arith.constant 0 : i32
    return %c0_i32, %c0_i32_0, %c0_i32_1 : i32, i32, i32
  }
  func.func @transform_3(%arg0: i32) -> (i32, i32) {
    %c0_i32 = arith.constant 0 : i32
    %c0_i32_0 = arith.constant 0 : i32
    %c0_i32_1 = arith.constant 0 : i32
    return %c0_i32, %c0_i32_0 : i32, i32
  }
  func.func @transform_4(%arg0: i32) -> (i32, i32) {
    %c0_i32 = arith.constant 0 : i32
    %c0_i32_0 = arith.constant 0 : i32
    %c0_i32_1 = arith.constant 0 : i32
    return %c0_i32, %c0_i32_0 : i32, i32
  }
  func.func @transform_5(%arg0: i32) -> (i32, i32, i32) {
    %c0_i32 = arith.constant 0 : i32
    %c0_i32_0 = arith.constant 0 : i32
    %c0_i32_1 = arith.constant 0 : i32
    %c0_i32_2 = arith.constant 0 : i32
    return %c0_i32, %c0_i32_0, %c0_i32_1 : i32, i32, i32
  }
  func.func @transform_6(%arg0: i32) -> (i32, i32) {
    %c0_i32 = arith.constant 0 : i32
    %c0_i32_0 = arith.constant 0 : i32
    %c0_i32_1 = arith.constant 0 : i32
    return %c0_i32, %c0_i32_0 : i32, i32
  }
  func.func @transform_7(%arg0: i32) -> (i32, i32) {
    %c0_i32 = arith.constant 0 : i32
    %c0_i32_0 = arith.constant 0 : i32
    %c0_i32_1 = arith.constant 0 : i32
    return %c0_i32, %c0_i32_0 : i32, i32
  }
  func.func @transform_8(%arg0: i32) -> (i32, i32) {
    %c0_i32 = arith.constant 0 : i32
    %c0_i32_0 = arith.constant 0 : i32
    %c0_i32_1 = arith.constant 0 : i32
    return %c0_i32, %c0_i32_0 : i32, i32
  }
  func.func @transform_9(%arg0: i32) -> (i32, i32, i32) {
    %c0_i32 = arith.constant 0 : i32
    %c0_i32_0 = arith.constant 0 : i32
    %c0_i32_1 = arith.constant 0 : i32
    return %arg0, %c0_i32, %c0_i32_0 : i32, i32, i32
  }
}

module attributes {stable_mosaic.version = 11 : i64} {
  func.func @_head_kernel(%arg0: memref<2x4x256xf32, #tpu.memory_space<vmem>>, %arg1: memref<256x10xf32, #tpu.memory_space<vmem>>, %arg2: memref<1x10xf32, #tpu.memory_space<vmem>>, %arg3: memref<2x10xf32, #tpu.memory_space<vmem>>) attributes {dimension_semantics = [], scalar_prefetch = 0 : i64, scratch_operands = 0 : i64, tpu.core_type = #tpu.core_type<tc>} {
    %c0 = arith.constant 0 : index
    %c0_0 = arith.constant 0 : index
    %c0_1 = arith.constant 0 : index
    %0 = vector.load %arg0[%c0, %c0_0, %c0_1] : memref<2x4x256xf32, #tpu.memory_space<vmem>>, vector<2x4x256xf32>
    %cst = arith.constant dense<0.000000e+00> : vector<2x256xf32>
    %1 = vector.multi_reduction <add>, %0, %cst [1] : vector<2x4x256xf32> to vector<2x256xf32>
    %c0_2 = arith.constant 0 : index
    %c0_3 = arith.constant 0 : index
    %2 = vector.load %arg1[%c0_2, %c0_3] : memref<256x10xf32, #tpu.memory_space<vmem>>, vector<256x10xf32>
    %cst_4 = arith.constant dense<0.000000e+00> : vector<2x10xf32>
    %3 = tpu.matmul %1, %2, %cst_4 {dimension_numbers = #tpu.dot_dimension_numbers<[1], [0], [0], [1], [0, 0, 1, 1], [], []>} : vector<2x256xf32>, vector<256x10xf32>, vector<2x10xf32> -> vector<2x10xf32>
    %c0_5 = arith.constant 0 : index
    %c0_6 = arith.constant 0 : index
    %4 = vector.load %arg2[%c0_5, %c0_6] : memref<1x10xf32, #tpu.memory_space<vmem>>, vector<1x10xf32>
    %5 = vector.broadcast %4 : vector<1x10xf32> to vector<2x10xf32>
    %6 = arith.addf %3, %5 : vector<2x10xf32>
    %c0_7 = arith.constant 0 : index
    %c0_8 = arith.constant 0 : index
    %7 = vector.load %arg3[%c0_7, %c0_8] : memref<2x10xf32, #tpu.memory_space<vmem>>, vector<2x10xf32>
    tpu.vector_store %arg3[%c0_7, %c0_8], %6 {strides = array<i32>} : memref<2x10xf32, #tpu.memory_space<vmem>>, vector<2x10xf32>,
    return
  }
}

</mosaic_0001>

<llo_original>
// kernel: resnet_forward.5
$region0: #{resnet_forward.5}
  #allocation0 [shape = 'u32[]', space=smem, size = 0x4, offset = 0x4, fixed_abs, tag = 'smem constant byte address 0x4 - core index']
  #allocation1 [shape = 'u32[72,128]{1,0:T(1,128)}', space=vmem, size = 0x9000, scoped, tag = 'internal scratch']
  #allocation2 [shape = 'bf16[18,48]{1,0:T(8,128)(2,1)}', space=vmem, size = 0x1800, scoped, tag = 'scratch operand']
  %s0 = inlined_call_operand.vmem [shape: f32[2,16,48], index: 0, kind: input, shape index: {}]
  %s1 = inlined_call_operand.vmem [shape: bf16[3,48,256], index: 1, kind: input, shape index: {}]
  %s2 = inlined_call_operand.vmem [shape: f32[1,256], index: 2, kind: input, shape index: {}]
  %s3 = inlined_call_operand.vmem [shape: f32[1,256], index: 3, kind: input, shape index: {}]
  %s4 = inlined_call_operand.vmem [shape: f32[2,16,256], index: 4, kind: output, shape index: {}]
  %s5 = sld [smem:[#allocation0]]
  $region49: #{resnet_forward.5} parent=0
    _
  %s7 = ssub.s32 1, %s5
  %s8 = scalar_select 0, %s7, %s5
  loop: start=0, step=1, limit=4
  $region2: #{resnet_forward.5} parent=0 // loop_pre_header
    _
  $region3: #{resnet_forward.5} parent=0 // loop_header
    %s10 = sphi 0, %s14
    %p11 = scmp.ge.s32.totalorder %s10, 4
    %s20 = sphi 0, %s22
    %s23 = sphi 0, %s20
    %s24 = sphi 0, %s23
    %s40 = sphi 0, %s24
    %s44 = sphi 0, %s44
    %s46 = sphi 0, %s44
    %s47 = sphi 0, %s46
    %s61 = sphi 0, %s47
    %s65 = sphi 0, %s65
    %s67 = sphi 0, %s65
    %s68 = sphi 0, %s67
    %s82 = sphi 0, %s68
    %s86 = sphi 0, %s86
    %s88 = sphi 0, %s86
    %s89 = sphi 0, %s88
    %s103 = sphi 0, %s89
    %s109 = sphi 0, %s111
    %s112 = sphi 0, %s109
    %s113 = sphi 0, %s112
    %s129 = sphi 0, %s113
  $region4: #{resnet_forward.5} parent=0 // loop_header_branch
    %13 = sbr.rel (%p11) target = $region8
  $region5: #{resnet_forward.5} parent=0 // loop_body
    %s15 = ssub.s32 %s10, 1
    %s16 = ssub.s32 %s10, 2
    %s17 = sadd.s32 %s10, 1
    %s18 = ssub.s32 %s10, %s17
    %p19 = scmp.eq.s32.totalorder %s18, 0
    %s21 = sadd.s32 %s20, 1
    %s22 = scalar_select %p19, %s20, %s21
    %p25 = pneg %p19
    %p26 = scmp.eq.s32.totalorder %s10, 1
    %p27 = por %p25, %p26
    %p28 = scmp.ne.s32.totalorder %s20, %s23
    %p29 = scmp.eq.s32.totalorder %s10, 0
    %p30 = por %p28, %p29
    %p31 = scmp.ne.s32.totalorder %s20, %s23
    %p32 = scmp.eq.s32.totalorder %s15, 1
    %p33 = por %p31, %p32
    %p34 = scmp.ne.s32.totalorder %s23, %s24
    %p35 = scmp.eq.s32.totalorder %s15, 0
    %p36 = por %p34, %p35
    %p37 = scmp.ne.s32.totalorder %s23, %s24
    %p38 = scmp.eq.s32.totalorder %s16, 1
    %p39 = por %p37, %p38
    %p41 = scmp.ne.s32.totalorder %s24, %s40
    %p42 = scmp.eq.s32.totalorder %s16, 0
    %p43 = por %p41, %p42
    %s45 = sadd.s32 %s44, 1
    %p48 = scmp.eq.s32.totalorder %s10, 1
    %p49 = scmp.ne.s32.totalorder %s44, %s46
    %p50 = scmp.eq.s32.totalorder %s10, 0
    %p51 = por %p49, %p50
    %p52 = scmp.ne.s32.totalorder %s44, %s46
    %p53 = scmp.eq.s32.totalorder %s15, 1
    %p54 = por %p52, %p53
    %p55 = scmp.ne.s32.totalorder %s46, %s47
    %p56 = scmp.eq.s32.totalorder %s15, 0
    %p57 = por %p55, %p56
    %p58 = scmp.ne.s32.totalorder %s46, %s47
    %p59 = scmp.eq.s32.totalorder %s16, 1
    %p60 = por %p58, %p59
    %p62 = scmp.ne.s32.totalorder %s47, %s61
    %p63 = scmp.eq.s32.totalorder %s16, 0
    %p64 = por %p62, %p63
    %s66 = sadd.s32 %s65, 1
    %p69 = scmp.eq.s32.totalorder %s10, 1
    %p70 = scmp.ne.s32.totalorder %s65, %s67
    %p71 = scmp.eq.s32.totalorder %s10, 0
    %p72 = por %p70, %p71
    %p73 = scmp.ne.s32.totalorder %s65, %s67
    %p74 = scmp.eq.s32.totalorder %s15, 1
    %p75 = por %p73, %p74
    %p76 = scmp.ne.s32.totalorder %s67, %s68
    %p77 = scmp.eq.s32.totalorder %s15, 0
    %p78 = por %p76, %p77
    %p79 = scmp.ne.s32.totalorder %s67, %s68
    %p80 = scmp.eq.s32.totalorder %s16, 1
    %p81 = por %p79, %p80
    %p83 = scmp.ne.s32.totalorder %s68, %s82
    %p84 = scmp.eq.s32.totalorder %s16, 0
    %p85 = por %p83, %p84
    %s87 = sadd.s32 %s86, 1
    %p90 = scmp.eq.s32.totalorder %s10, 1
    %p91 = scmp.ne.s32.totalorder %s86, %s88
    %p92 = scmp.eq.s32.totalorder %s10, 0
    %p93 = por %p91, %p92
    %p94 = scmp.ne.s32.totalorder %s86, %s88
    %p95 = scmp.eq.s32.totalorder %s15, 1
    %p96 = por %p94, %p95
    %p97 = scmp.ne.s32.totalorder %s88, %s89
    %p98 = scmp.eq.s32.totalorder %s15, 0
    %p99 = por %p97, %p98
    %p100 = scmp.ne.s32.totalorder %s88, %s89
    %p101 = scmp.eq.s32.totalorder %s16, 1
    %p102 = por %p100, %p101
    %p104 = scmp.ne.s32.totalorder %s89, %s103
    %p105 = scmp.eq.s32.totalorder %s16, 0
    %p106 = por %p104, %p105
    %s107 = ssub.s32 %s10, %s17
    %p108 = scmp.eq.s32.totalorder %s107, 0
    %s110 = sadd.s32 %s109, 1
    %s111 = scalar_select %p108, %s109, %s110
    %p114 = pneg %p108
    %p115 = scmp.eq.s32.totalorder %s10, 1
    %p116 = por %p114, %p115
    %p117 = scmp.ne.s32.totalorder %s109, %s112
    %p118 = scmp.eq.s32.totalorder %s10, 0
    %p119 = por %p117, %p118
    %p120 = scmp.ne.s32.totalorder %s109, %s112
    %p121 = scmp.eq.s32.totalorder %s15, 1
    %p122 = por %p120, %p121
    %p123 = scmp.ne.s32.totalorder %s112, %s113
    %p124 = scmp.eq.s32.totalorder %s15, 0
    %p125 = por %p123, %p124
    %p126 = scmp.ne.s32.totalorder %s112, %s113
    %p127 = scmp.eq.s32.totalorder %s16, 1
    %p128 = por %p126, %p127
    %p130 = scmp.ne.s32.totalorder %s113, %s129
    %p131 = scmp.eq.s32.totalorder %s16, 0
    %p132 = por %p130, %p131
    %p133 = scmp.le.s32.totalorder 1, %s10
    %p134 = scmp.lt.s32.totalorder %s10, 3
    %p135 = pnand %p133, %p134
    %p136 = pneg %p135
    // Predicated region
    $region9: #{resnet_forward.5} parent=5 // pred_check
      _
    $region10: #{resnet_forward.5} parent=5 // pred_check_branch
      %138 = sbr.rel (%p135) target = $region12
    $region11: #{resnet_forward.5} parent=5 // pred_region
      %s139 = ssub.s32 %s10, 1
      // Predicated region
      $region13: #{resnet_forward.5} parent=11 // pred_check
        %p140 = pneg %p57
      $region14: #{resnet_forward.5} parent=11 // pred_check_branch
        %142 = sbr.rel (%p140) target = $region16
      $region15: #{resnet_forward.5} parent=11 // pred_region
        _
      $region16: #{resnet_forward.5} parent=11 // pred_fallthru
        _
      // Predicated region
      $region17: #{resnet_forward.5} parent=11 // pred_check
        %p143 = pneg %p78
      $region18: #{resnet_forward.5} parent=11 // pred_check_branch
        %145 = sbr.rel (%p143) target = $region20
      $region19: #{resnet_forward.5} parent=11 // pred_region
        _
      $region20: #{resnet_forward.5} parent=11 // pred_fallthru
        _
      // Predicated region
      $region21: #{resnet_forward.5} parent=11 // pred_check
        %p146 = pneg %p99
      $region22: #{resnet_forward.5} parent=11 // pred_check_branch
        %148 = sbr.rel (%p146) target = $region24
      $region23: #{resnet_forward.5} parent=11 // pred_region
        _
      $region24: #{resnet_forward.5} parent=11 // pred_fallthru
        _
    $region12: #{resnet_forward.5} parent=5 // pred_fallthru
      _
    %p149 = scmp.lt.s32.totalorder %s10, 2
    // Predicated region
    $region25: #{resnet_forward.5} parent=5 // pred_check
      %p150 = pneg %p149
    $region26: #{resnet_forward.5} parent=5 // pred_check_branch
      %152 = sbr.rel (%p150) target = $region28
    $region27: #{resnet_forward.5} parent=5 // pred_region
      // Predicated region
      $region29: #{resnet_forward.5} parent=27 // pred_check
        %p153 = pneg %p30
      $region30: #{resnet_forward.5} parent=27 // pred_check_branch
        %155 = sbr.rel (%p153) target = $region32
      $region31: #{resnet_forward.5} parent=27 // pred_region
        %p156 = scmp.lt.s32.totalorder %s10, 1
        %s157 = scalar_select %p156, %s10, 1
        %s158 = smul.addr %s157, 2
        %s159 = smul.addr %s158, 8
        %s160 = scalar_lea.vmem %s0, %s159
      $region32: #{resnet_forward.5} parent=27 // pred_fallthru
        _
    $region28: #{resnet_forward.5} parent=5 // pred_fallthru
      _
    %p161 = scmp.le.s32.totalorder 1, %s10
    %p162 = scmp.lt.s32.totalorder %s10, 3
    %p163 = pnand %p161, %p162
    %p164 = pneg %p163
    // Predicated region
    $region33: #{resnet_forward.5} parent=5 // pred_check
      _
    $region34: #{resnet_forward.5} parent=5 // pred_check_branch
      %166 = sbr.rel (%p163) target = $region36
    $region35: #{resnet_forward.5} parent=5 // pred_region
      %s167 = ssub.s32 %s10, 1
      %p168 = scmp.lt.s32.totalorder %s15, 1
      %s169 = scalar_select %p168, %s15, 1
      %s170 = smul.addr %s169, 2
      %s171 = smul.addr %s170, 8
      %s172 = scalar_lea.vmem %s0, %s171
      %p173 = pneg %p36
      %p174 = pneg %p33
      %p175 = pneg %p57
      %p176 = pneg %p54
      %p177 = pneg %p78
      %p178 = pneg %p75
      %p179 = pneg %p99
      %p180 = pneg %p96
      %p181 = pneg %p125
      %p182 = pneg %p122
      %p183 = scmp.lt.s32.totalorder %s15, 1
      %s184 = scalar_select %p183, %s15, 1
      %s185 = smul.addr %s184, 4
      %s186 = smul.addr %s185, 8
      %s187 = scalar_lea.vmem %s4, %s186
      %p188 = scmp.lt.s32.totalorder %s15, 1
      %s189 = scalar_select %p188, %s15, 1
      %s190 = smul.addr %s189, 2
      %s191 = smul.addr %s190, 8
      %s192 = scalar_lea.vmem %s0, %s191
      %p193 = scmp.lt.s32.totalorder %s15, 1
      %s194 = scalar_select %p193, %s15, 1
      %s195 = smul.addr %s194, 4
      %s196 = smul.addr %s195, 8
      %s197 = scalar_lea.vmem %s4, %s196
      %vm199 = vcmask 388096
      %200 = vst.msk [vmem:[#allocation2] sm:$0xf] %vm199, 0
      %201 = vst.msk [vmem:[#allocation2 + $0x4] sm:$0xf] %vm199, 0
      %vm202 = vcmask 385024
      %203 = vst.msk [vmem:[#allocation2 + $0x8] sm:$0x1] %vm202, 0
      %v204 = vld [vmem:[%s192] sm:$0xff]
      %v205 = vld [vmem:[%s192 + $0x8] sm:$0xff]
      %v206 = vpack.c.bf16 %v204, %v204
      %v207 = vpack.c.bf16 %v205, %v205
      %vm208 = vsmask.f32 256
      %vm209 = vsmask.f32 4368
      %vm210 = vmor %vm208, %vm209
      %v212 = vshrl.u32 %v206, 16
      %v214 = vrot.slane %v212, 7
      %v215 = vshll.u32 %v206, 16
      %v217 = vor.u32 %v214, %v215
      %v218 = vrot.slane %v214, 4
      %v220 = vshrl.u32 %v207, 16
      %v222 = vrot.slane %v220, 7
      %v223 = vshll.u32 %v207, 16
      %v225 = vor.u32 %v222, %v223
      %v226 = vsel %vm210, %v218, %v225
      %v227 = vrot.slane %v222, 4
      %vm231 = vcmask 388096
      %vm232 = vsmask.f32 7938
      %vm233 = vmand %vm231, %vm232
      %v234 = vld [vmem:[#allocation2] sm:$0xf]
      %v235 = vsel %vm233, %v217, %v234
      %236 = vst [vmem:[#allocation2] sm:$0xf] %v235
      %237 = vst.msk [vmem:[#allocation2 + $0x4] sm:$0xf] %vm199, %v226
      %vm238 = vcmask 385024
      %vm239 = vmand %vm238, %vm208
      %v240 = vld [vmem:[#allocation2 + $0x8] sm:$0x1]
      %v241 = vsel %vm239, %v227, %v240
      %242 = vst [vmem:[#allocation2 + $0x8] sm:$0x1] %v241
      %v243 = vld [vmem:[#allocation2] sm:$0xf]
      %v244 = vld [vmem:[#allocation2 + $0x4] sm:$0xf]
      %v245 = vld [vmem:[%s1] sm:$0xff]
      %v246 = vld [vmem:[%s1 + $0x8] sm:$0xff]
      %v247 = vld [vmem:[%s1 + $0x10] sm:$0xff]
      %v248 = vld [vmem:[%s1 + $0x18] sm:$0xff]
      %v249 = vld [vmem:[%s1 + $0x20] sm:$0xff]
      %v250 = vld [vmem:[%s1 + $0x28] sm:$0xff]
      %v251 = vld [vmem:[#allocation2 + $0x8] sm:$0x1]
      %s252 = scalar_lea.vmem %s1, 48
      %v253 = vld [vmem:[%s252] sm:$0xff]
      %v254 = vld [vmem:[%s252 + $0x8] sm:$0xff]
      %v255 = vld [vmem:[%s252 + $0x10] sm:$0xff]
      %v256 = vld [vmem:[%s252 + $0x18] sm:$0xff]
      %v257 = vld [vmem:[%s252 + $0x20] sm:$0xff]
      %v258 = vld [vmem:[%s252 + $0x28] sm:$0xff]
      %v262 = vunpack.c.l.b16 %v243
      %v263 = vunpack.c.l.b16 %v244
      %v264 = vunpack.c.l.b16 %v251
      %v265 = vpack.c.b16 %v263, %v262
      %v266 = vpack.c.b16 %v264, %v264
      %vm267 = vsmask.f32 7424
      %v269 = vshrl.u32 %v265, 16
      %v271 = vshll.u32 %v265, 16
      %v273 = vrot.slane %v271, 1
      %v274 = vor.u32 %v269, %v273
      %v276 = vshll.u32 %v266, 16
      %v278 = vrot.slane %v276, 1
      %v279 = vsel %vm267, %v274, %v278
      %v286 = vunpack.c.l.b16 %v253
      %v287 = vunpack.c.h.b16 %v253
      %v288 = vunpack.c.l.b16 %v254
      %v289 = vunpack.c.h.b16 %v254
      %v290 = vunpack.c.l.b16 %v255
      %v291 = vunpack.c.h.b16 %v255
      %v292 = vunpack.c.l.b16 %v256
      %v293 = vunpack.c.h.b16 %v256
      %v294 = vunpack.c.l.b16 %v257
      %v295 = vunpack.c.h.b16 %v257
      %v296 = vunpack.c.l.b16 %v258
      %v297 = vunpack.c.h.b16 %v258
      %v298 = vpack.c.b16 %v288, %v286
      %v299 = vpack.c.b16 %v289, %v287
      %v300 = vpack.c.b16 %v292, %v290
      %v301 = vpack.c.b16 %v293, %v291
      %v302 = vpack.c.b16 %v296, %v294
      %v303 = vpack.c.b16 %v297, %v295
      %vm310 = vcmask 392192
      %v312 = vsel %vm310, %v279, 0
      %314 = vmatpush.bf16.msra.mxu0 0
      %315 = vmatpush.bf16.msra.mxu0 0
      %316 = vmatpush.bf16.msra.mxu0 0
      %317 = vmatpush.bf16.msra.mxu0 0
      %318 = vmatpush.bf16.msra.mxu0 0
      %319 = vmatpush.bf16.msra.mxu0 %v302
      %320 = vmatpush.bf16.msra.mxu0 %v300
      %321 = vmatpush.bf16.msra.mxu0 %v298
      %322 = vmatmul.bf16.gmra.mxu0 %v312
      %v323 = vpop.f32.mrf.mxu0
      %v324 = vadd.f32 0.0, %v323
      %v325 = vpop.f32.mrf.mxu0
      %v326 = vadd.f32 0.0, %v325
      %327 = vdwg.mxu0
      %328 = vmatpush.bf16.msra.mxu0 0
      %329 = vmatpush.bf16.msra.mxu0 0
      %330 = vmatpush.bf16.msra.mxu0 0
      %331 = vmatpush.bf16.msra.mxu0 0
      %332 = vmatpush.bf16.msra.mxu0 0
      %333 = vmatpush.bf16.msra.mxu0 %v303
      %334 = vmatpush.bf16.msra.mxu0 %v301
      %335 = vmatpush.bf16.msra.mxu0 %v299
      %336 = vmatmul.bf16.gmra.mxu0 %v312
      %v337 = vpop.f32.mrf.mxu0
      %v338 = vadd.f32 0.0, %v337
      %v339 = vpop.f32.mrf.mxu0
      %v340 = vadd.f32 0.0, %v339
      %341 = vdwg.mxu0
      %v348 = vunpack.c.l.b16 %v245
      %v349 = vunpack.c.h.b16 %v245
      %v350 = vunpack.c.l.b16 %v246
      %v351 = vunpack.c.h.b16 %v246
      %v352 = vunpack.c.l.b16 %v247
      %v353 = vunpack.c.h.b16 %v247
      %v354 = vunpack.c.l.b16 %v248
      %v355 = vunpack.c.h.b16 %v248
      %v356 = vunpack.c.l.b16 %v249
      %v357 = vunpack.c.h.b16 %v249
      %v358 = vunpack.c.l.b16 %v250
      %v359 = vunpack.c.h.b16 %v250
      %v360 = vpack.c.b16 %v350, %v348
      %v361 = vpack.c.b16 %v351, %v349
      %v362 = vpack.c.b16 %v354, %v352
      %v363 = vpack.c.b16 %v355, %v353
      %v364 = vpack.c.b16 %v358, %v356
      %v365 = vpack.c.b16 %v359, %v357
      %v372 = vsel %vm310, %v265, 0
      %374 = vmatpush.bf16.msra.mxu0 0
      %375 = vmatpush.bf16.msra.mxu0 0
      %376 = vmatpush.bf16.msra.mxu0 0
      %377 = vmatpush.bf16.msra.mxu0 0
      %378 = vmatpush.bf16.msra.mxu0 0
      %379 = vmatpush.bf16.msra.mxu0 %v364
      %380 = vmatpush.bf16.msra.mxu0 %v362
      %381 = vmatpush.bf16.msra.mxu0 %v360
      %382 = vmatmul.bf16.gmra.mxu0 %v372
      %v383 = vpop.f32.mrf.mxu0
      %v384 = vadd.f32 %v324, %v383
      %v385 = vpop.f32.mrf.mxu0
      %v386 = vadd.f32 %v326, %v385
      %387 = vdwg.mxu0
      %388 = vmatpush.bf16.msra.mxu0 0
      %389 = vmatpush.bf16.msra.mxu0 0
      %390 = vmatpush.bf16.msra.mxu0 0
      %391 = vmatpush.bf16.msra.mxu0 0
      %392 = vmatpush.bf16.msra.mxu0 0
      %393 = vmatpush.bf16.msra.mxu0 %v365
      %394 = vmatpush.bf16.msra.mxu0 %v363
      %395 = vmatpush.bf16.msra.mxu0 %v361
      %396 = vmatmul.bf16.gmra.mxu0 %v372
      %v397 = vpop.f32.mrf.mxu0
      %v398 = vadd.f32 %v338, %v397
      %v399 = vpop.f32.mrf.mxu0
      %v400 = vadd.f32 %v340, %v399
      %401 = vdwg.mxu0
      %v402 = vld [vmem:[#allocation2] sm:$0xe]
      %s403 = scalar_lea.vmem %s1, 96
      %v404 = vld [vmem:[%s403] sm:$0xff]
      %v405 = vld [vmem:[%s403 + $0x8] sm:$0xff]
      %v406 = vld [vmem:[%s403 + $0x10] sm:$0xff]
      %v407 = vld [vmem:[%s403 + $0x18] sm:$0xff]
      %v408 = vld [vmem:[%s403 + $0x20] sm:$0xff]
      %v409 = vld [vmem:[%s403 + $0x28] sm:$0xff]
      %v411 = vunpack.c.l.b16 %v402
      %v412 = vpack.c.b16 %v263, %v411
      %vm413 = vcmask 1046528
      %v414 = vrot.slane %v412, 1
      %v415 = vrot.slane %v266, 1
      %v416 = vsel %vm413, %v414, %v415
      %v423 = vunpack.c.l.b16 %v404
      %v424 = vunpack.c.h.b16 %v404
      %v425 = vunpack.c.l.b16 %v405
      %v426 = vunpack.c.h.b16 %v405
      %v427 = vunpack.c.l.b16 %v406
      %v428 = vunpack.c.h.b16 %v406
      %v429 = vunpack.c.l.b16 %v407
      %v430 = vunpack.c.h.b16 %v407
      %v431 = vunpack.c.l.b16 %v408
      %v432 = vunpack.c.h.b16 %v408
      %v433 = vunpack.c.l.b16 %v409
      %v434 = vunpack.c.h.b16 %v409
      %v435 = vpack.c.b16 %v425, %v423
      %v436 = vpack.c.b16 %v426, %v424
      %v437 = vpack.c.b16 %v429, %v427
      %v438 = vpack.c.b16 %v430, %v428
      %v439 = vpack.c.b16 %v433, %v431
      %v440 = vpack.c.b16 %v434, %v432
      %v448 = vsel %vm310, %v416, 0
      %450 = vmatpush.bf16.msra.mxu0 0
      %451 = vmatpush.bf16.msra.mxu0 0
      %452 = vmatpush.bf16.msra.mxu0 0
      %453 = vmatpush.bf16.msra.mxu0 0
      %454 = vmatpush.bf16.msra.mxu0 0
      %455 = vmatpush.bf16.msra.mxu0 %v439
      %456 = vmatpush.bf16.msra.mxu0 %v437
      %457 = vmatpush.bf16.msra.mxu0 %v435
      %458 = vmatmul.bf16.gmra.mxu0 %v448
      %v459 = vpop.f32.mrf.mxu0
      %v460 = vadd.f32 0.0, %v459
      %v461 = vpop.f32.mrf.mxu0
      %v462 = vadd.f32 0.0, %v461
      %463 = vdwg.mxu0
      %464 = vmatpush.bf16.msra.mxu0 0
      %465 = vmatpush.bf16.msra.mxu0 0
      %466 = vmatpush.bf16.msra.mxu0 0
      %467 = vmatpush.bf16.msra.mxu0 0
      %468 = vmatpush.bf16.msra.mxu0 0
      %469 = vmatpush.bf16.msra.mxu0 %v440
      %470 = vmatpush.bf16.msra.mxu0 %v438
      %471 = vmatpush.bf16.msra.mxu0 %v436
      %472 = vmatmul.bf16.gmra.mxu0 %v448
      %v473 = vpop.f32.mrf.mxu0
      %v474 = vadd.f32 0.0, %v473
      %v475 = vpop.f32.mrf.mxu0
      %v476 = vadd.f32 0.0, %v475
      %477 = vdwg.mxu0
      %v478 = vadd.f32 %v384, %v460
      %v479 = vadd.f32 %v398, %v474
      %v480 = vadd.f32 %v386, %v462
      %v481 = vadd.f32 %v400, %v476
      %v482 = vld [vmem:[%s2] sm:$0x3]
      %v484 = vperm.slane %v482, 0
      %v485 = vperm.slane %v482, 1
      %v488 = vmul.f32 %v478, %v484
      %v489 = vmul.f32 %v479, %v485
      %v490 = vmul.f32 %v480, %v484
      %v491 = vmul.f32 %v481, %v485
      %v492 = vld [vmem:[%s3] sm:$0x3]
      %v494 = vperm.slane %v492, 0
      %v495 = vperm.slane %v492, 1
      %v498 = vadd.f32 %v488, %v494
      %v499 = vadd.f32 %v489, %v495
      %v500 = vadd.f32 %v490, %v494
      %v501 = vadd.f32 %v491, %v495
      %v502 = vmax.f32 %v498, 0.0
      %v503 = vmax.f32 %v499, 0.0
      %v504 = vmax.f32 %v500, 0.0
      %v505 = vmax.f32 %v501, 0.0
      %506 = vst [vmem:[%s197] sm:$0xff] %v502
      %507 = vst [vmem:[%s197 + $0x8] sm:$0xff] %v503
      %508 = vst [vmem:[%s197 + $0x10] sm:$0xff] %v504
      %509 = vst [vmem:[%s197 + $0x18] sm:$0xff] %v505
      %p510 = scmp.lt.s32.totalorder %s15, 1
      %s511 = scalar_select %p510, %s15, 1
      %s512 = smul.addr %s511, 4
      %s513 = smul.addr %s512, 8
      %s514 = scalar_lea.vmem %s4, %s513
      // Predicated region
      $region37: #{resnet_forward.5} parent=35 // pred_check
        %p515 = pneg %p122
      $region38: #{resnet_forward.5} parent=35 // pred_check_branch
        %517 = sbr.rel (%p515) target = $region40
      $region39: #{resnet_forward.5} parent=35 // pred_region
        _
      $region40: #{resnet_forward.5} parent=35 // pred_fallthru
        _
    $region36: #{resnet_forward.5} parent=5 // pred_fallthru
      _
    %p518 = scmp.le.s32.totalorder 2, %s10
    // Predicated region
    $region41: #{resnet_forward.5} parent=5 // pred_check
      %p519 = pneg %p518
    $region42: #{resnet_forward.5} parent=5 // pred_check_branch
      %521 = sbr.rel (%p519) target = $region44
    $region43: #{resnet_forward.5} parent=5 // pred_region
      %s522 = ssub.s32 %s10, 2
      // Predicated region
      $region45: #{resnet_forward.5} parent=43 // pred_check
        %p523 = pneg %p128
      $region46: #{resnet_forward.5} parent=43 // pred_check_branch
        %525 = sbr.rel (%p523) target = $region48
      $region47: #{resnet_forward.5} parent=43 // pred_region
        %p526 = scmp.lt.s32.totalorder %s16, 1
        %s527 = scalar_select %p526, %s16, 1
        %s528 = smul.addr %s527, 4
        %s529 = smul.addr %s528, 8
        %s530 = scalar_lea.vmem %s4, %s529
      $region48: #{resnet_forward.5} parent=43 // pred_fallthru
        _
    $region44: #{resnet_forward.5} parent=5 // pred_fallthru
      _
  $region6: #{resnet_forward.5} parent=0 // loop_footer
    %s14 = sadd.s32 1, %s10
  $region7: #{resnet_forward.5} parent=0 // loop_footer_branch
    %9 = sbr.rel target = $region3
  $region8: #{resnet_forward.5} parent=0 // loop_exit
    _

// kernel: resnet_forward.6
$region0: #{resnet_forward.6}
  #allocation0 [shape = 'u32[]', space=smem, size = 0x4, offset = 0x4, fixed_abs, tag = 'smem constant byte address 0x4 - core index']
  #allocation1 [shape = 'u32[72,128]{1,0:T(1,128)}', space=vmem, size = 0x9000, scoped, tag = 'internal scratch']
  #allocation2 [shape = 'bf16[18,256]{1,0:T(8,128)(2,1)}', space=vmem, size = 0x3000, scoped, tag = 'scratch operand']
  #allocation3 [shape = 'bf16[18,256]{1,0:T(8,128)(2,1)}', space=vmem, size = 0x3000, scoped, tag = 'scratch operand']
  %s0 = inlined_call_operand.vmem [shape: f32[2,16,256], index: 0, kind: input, shape index: {}]
  %s1 = inlined_call_operand.hbm [shape: bf16[3,256,256], index: 1, kind: input, shape index: {}]
  %s2 = inlined_call_operand.hbm [shape: f32[1,256], index: 2, kind: input, shape index: {}]
  %s3 = inlined_call_operand.hbm [shape: f32[1,256], index: 3, kind: input, shape index: {}]
  %s4 = inlined_call_operand.hbm [shape: bf16[3,256,256], index: 4, kind: input, shape index: {}]
  %s5 = inlined_call_operand.hbm [shape: f32[1,256], index: 5, kind: input, shape index: {}]
  %s6 = inlined_call_operand.hbm [shape: f32[1,256], index: 6, kind: input, shape index: {}]
  %s7 = inlined_call_operand.vmem [shape: f32[2,16,256], index: 7, kind: output, shape index: {}]
  %s8 = sld [smem:[#allocation0]]
  $region85: #{resnet_forward.6} parent=0
    _
  %s10 = ssub.s32 1, %s8
  %s11 = scalar_select 0, %s10, %s8
  $region1: #{resnet_forward.6} parent=0
    #allocation4 [shape = 'u8[393216]{0}', space=vmem, size = 0x60000, scoped, tag = 'input window, operand 1, single buffered']
    #allocation5 [shape = 's32[2]{0}', space=sflag, size = 0x8, scoped, tag = 'scoped memory for resnet_forward.6']
    #allocation6 [shape = 'u8[1024]{0}', space=vmem, size = 0x400, scoped, tag = 'input window, operand 2, single buffered']
    #allocation7 [shape = 's32[1]{0}', space=sflag, size = 0x4, scoped, tag = 'scoped memory for resnet_forward.6']
    #allocation8 [shape = 'u8[1024]{0}', space=vmem, size = 0x400, scoped, tag = 'input window, operand 3, single buffered']
    #allocation9 [shape = 'u8[393216]{0}', space=vmem, size = 0x60000, scoped, tag = 'input window, operand 4, single buffered']
    #allocation10 [shape = 's32[1]{0}', space=sflag, size = 0x4, scoped, tag = 'scoped memory for resnet_forward.6']
    #allocation11 [shape = 'u8[1024]{0}', space=vmem, size = 0x400, scoped, tag = 'input window, operand 5, single buffered']
    #allocation12 [shape = 'u8[1024]{0}', space=vmem, size = 0x400, scoped, tag = 'input window, operand 6, single buffered']
    #allocation13 [shape = 's32[1]{0}', space=sflag, size = 0x4, scoped, tag = 'scoped memory for resnet_forward.6']
    %12 = vsyncpa [#allocation5], 0
    %13 = vsyncpa [#allocation7], 0
    %14 = vsyncpa [#allocation10], 0
    %15 = vsyncpa [#allocation13], 0
    loop: start=0, step=1, limit=4
    $region2: #{resnet_forward.6} parent=1 // loop_pre_header
      _
    $region3: #{resnet_forward.6} parent=1 // loop_header
      %s17 = sphi 0, %s21
      %p18 = scmp.ge.s32.totalorder %s17, 4
      %s27 = sphi 0, %s29
      %s30 = sphi 0, %s27
      %s31 = sphi 0, %s30
      %s47 = sphi 0, %s31
      %s51 = sphi 0, %s51
      %s53 = sphi 0, %s51
      %s54 = sphi 0, %s53
      %s68 = sphi 0, %s54
      %s72 = sphi 0, %s72
      %s74 = sphi 0, %s72
      %s75 = sphi 0, %s74
      %s89 = sphi 0, %s75
      %s93 = sphi 0, %s93
      %s95 = sphi 0, %s93
      %s96 = sphi 0, %s95
      %s110 = sphi 0, %s96
      %s114 = sphi 0, %s114
      %s116 = sphi 0, %s114
      %s117 = sphi 0, %s116
      %s131 = sphi 0, %s117
      %s135 = sphi 0, %s135
      %s137 = sphi 0, %s135
      %s138 = sphi 0, %s137
      %s152 = sphi 0, %s138
      %s156 = sphi 0, %s156
      %s158 = sphi 0, %s156
      %s159 = sphi 0, %s158
      %s173 = sphi 0, %s159
      %s179 = sphi 0, %s181
      %s182 = sphi 0, %s179
      %s183 = sphi 0, %s182
      %s199 = sphi 0, %s183
    $region4: #{resnet_forward.6} parent=1 // loop_header_branch
      %20 = sbr.rel (%p18) target = $region8
    $region5: #{resnet_forward.6} parent=1 // loop_body
      %s22 = ssub.s32 %s17, 1
      %s23 = ssub.s32 %s17, 2
      %s24 = sadd.s32 %s17, 1
      %s25 = ssub.s32 %s17, %s24
      %p26 = scmp.eq.s32.totalorder %s25, 0
      %s28 = sadd.s32 %s27, 1
      %s29 = scalar_select %p26, %s27, %s28
      %p32 = pneg %p26
      %p33 = scmp.eq.s32.totalorder %s17, 1
      %p34 = por %p32, %p33
      %p35 = scmp.ne.s32.totalorder %s27, %s30
      %p36 = scmp.eq.s32.totalorder %s17, 0
      %p37 = por %p35, %p36
      %p38 = scmp.ne.s32.totalorder %s27, %s30
      %p39 = scmp.eq.s32.totalorder %s22, 1
      %p40 = por %p38, %p39
      %p41 = scmp.ne.s32.totalorder %s30, %s31
      %p42 = scmp.eq.s32.totalorder %s22, 0
      %p43 = por %p41, %p42
      %p44 = scmp.ne.s32.totalorder %s30, %s31
      %p45 = scmp.eq.s32.totalorder %s23, 1
      %p46 = por %p44, %p45
      %p48 = scmp.ne.s32.totalorder %s31, %s47
      %p49 = scmp.eq.s32.totalorder %s23, 0
      %p50 = por %p48, %p49
      %s52 = sadd.s32 %s51, 1
      %p55 = scmp.eq.s32.totalorder %s17, 1
      %p56 = scmp.ne.s32.totalorder %s51, %s53
      %p57 = scmp.eq.s32.totalorder %s17, 0
      %p58 = por %p56, %p57
      %p59 = scmp.ne.s32.totalorder %s51, %s53
      %p60 = scmp.eq.s32.totalorder %s22, 1
      %p61 = por %p59, %p60
      %p62 = scmp.ne.s32.totalorder %s53, %s54
      %p63 = scmp.eq.s32.totalorder %s22, 0
      %p64 = por %p62, %p63
      %p65 = scmp.ne.s32.totalorder %s53, %s54
      %p66 = scmp.eq.s32.totalorder %s23, 1
      %p67 = por %p65, %p66
      %p69 = scmp.ne.s32.totalorder %s54, %s68
      %p70 = scmp.eq.s32.totalorder %s23, 0
      %p71 = por %p69, %p70
      %s73 = sadd.s32 %s72, 1
      %p76 = scmp.eq.s32.totalorder %s17, 1
      %p77 = scmp.ne.s32.totalorder %s72, %s74
      %p78 = scmp.eq.s32.totalorder %s17, 0
      %p79 = por %p77, %p78
      %p80 = scmp.ne.s32.totalorder %s72, %s74
      %p81 = scmp.eq.s32.totalorder %s22, 1
      %p82 = por %p80, %p81
      %p83 = scmp.ne.s32.totalorder %s74, %s75
      %p84 = scmp.eq.s32.totalorder %s22, 0
      %p85 = por %p83, %p84
      %p86 = scmp.ne.s32.totalorder %s74, %s75
      %p87 = scmp.eq.s32.totalorder %s23, 1
      %p88 = por %p86, %p87
      %p90 = scmp.ne.s32.totalorder %s75, %s89
      %p91 = scmp.eq.s32.totalorder %s23, 0
      %p92 = por %p90, %p91
      %s94 = sadd.s32 %s93, 1
      %p97 = scmp.eq.s32.totalorder %s17, 1
      %p98 = scmp.ne.s32.totalorder %s93, %s95
      %p99 = scmp.eq.s32.totalorder %s17, 0
      %p100 = por %p98, %p99
      %p101 = scmp.ne.s32.totalorder %s93, %s95
      %p102 = scmp.eq.s32.totalorder %s22, 1
      %p103 = por %p101, %p102
      %p104 = scmp.ne.s32.totalorder %s95, %s96
      %p105 = scmp.eq.s32.totalorder %s22, 0
      %p106 = por %p104, %p105
      %p107 = scmp.ne.s32.totalorder %s95, %s96
      %p108 = scmp.eq.s32.totalorder %s23, 1
      %p109 = por %p107, %p108
      %p111 = scmp.ne.s32.totalorder %s96, %s110
      %p112 = scmp.eq.s32.totalorder %s23, 0
      %p113 = por %p111, %p112
      %s115 = sadd.s32 %s114, 1
      %p118 = scmp.eq.s32.totalorder %s17, 1
      %p119 = scmp.ne.s32.totalorder %s114, %s116
      %p120 = scmp.eq.s32.totalorder %s17, 0
      %p121 = por %p119, %p120
      %p122 = scmp.ne.s32.totalorder %s114, %s116
      %p123 = scmp.eq.s32.totalorder %s22, 1
      %p124 = por %p122, %p123
      %p125 = scmp.ne.s32.totalorder %s116, %s117
      %p126 = scmp.eq.s32.totalorder %s22, 0
      %p127 = por %p125, %p126
      %p128 = scmp.ne.s32.totalorder %s116, %s117
      %p129 = scmp.eq.s32.totalorder %s23, 1
      %p130 = por %p128, %p129
      %p132 = scmp.ne.s32.totalorder %s117, %s131
      %p133 = scmp.eq.s32.totalorder %s23, 0
      %p134 = por %p132, %p133
      %s136 = sadd.s32 %s135, 1
      %p139 = scmp.eq.s32.totalorder %s17, 1
      %p140 = scmp.ne.s32.totalorder %s135, %s137
      %p141 = scmp.eq.s32.totalorder %s17, 0
      %p142 = por %p140, %p141
      %p143 = scmp.ne.s32.totalorder %s135, %s137
      %p144 = scmp.eq.s32.totalorder %s22, 1
      %p145 = por %p143, %p144
      %p146 = scmp.ne.s32.totalorder %s137, %s138
      %p147 = scmp.eq.s32.totalorder %s22, 0
      %p148 = por %p146, %p147
      %p149 = scmp.ne.s32.totalorder %s137, %s138
      %p150 = scmp.eq.s32.totalorder %s23, 1
      %p151 = por %p149, %p150
      %p153 = scmp.ne.s32.totalorder %s138, %s152
      %p154 = scmp.eq.s32.totalorder %s23, 0
      %p155 = por %p153, %p154
      %s157 = sadd.s32 %s156, 1
      %p160 = scmp.eq.s32.totalorder %s17, 1
      %p161 = scmp.ne.s32.totalorder %s156, %s158
      %p162 = scmp.eq.s32.totalorder %s17, 0
      %p163 = por %p161, %p162
      %p164 = scmp.ne.s32.totalorder %s156, %s158
      %p165 = scmp.eq.s32.totalorder %s22, 1
      %p166 = por %p164, %p165
      %p167 = scmp.ne.s32.totalorder %s158, %s159
      %p168 = scmp.eq.s32.totalorder %s22, 0
      %p169 = por %p167, %p168
      %p170 = scmp.ne.s32.totalorder %s158, %s159
      %p171 = scmp.eq.s32.totalorder %s23, 1
      %p172 = por %p170, %p171
      %p174 = scmp.ne.s32.totalorder %s159, %s173
      %p175 = scmp.eq.s32.totalorder %s23, 0
      %p176 = por %p174, %p175
      %s177 = ssub.s32 %s17, %s24
      %p178 = scmp.eq.s32.totalorder %s177, 0
      %s180 = sadd.s32 %s179, 1
      %s181 = scalar_select %p178, %s179, %s180
      %p184 = pneg %p178
      %p185 = scmp.eq.s32.totalorder %s17, 1
      %p186 = por %p184, %p185
      %p187 = scmp.ne.s32.totalorder %s179, %s182
      %p188 = scmp.eq.s32.totalorder %s17, 0
      %p189 = por %p187, %p188
      %p190 = scmp.ne.s32.totalorder %s179, %s182
      %p191 = scmp.eq.s32.totalorder %s22, 1
      %p192 = por %p190, %p191
      %p193 = scmp.ne.s32.totalorder %s182, %s183
      %p194 = scmp.eq.s32.totalorder %s22, 0
      %p195 = por %p193, %p194
      %p196 = scmp.ne.s32.totalorder %s182, %s183
      %p197 = scmp.eq.s32.totalorder %s23, 1
      %p198 = por %p196, %p197
      %p200 = scmp.ne.s32.totalorder %s183, %s199
      %p201 = scmp.eq.s32.totalorder %s23, 0
      %p202 = por %p200, %p201
      %p203 = scmp.le.s32.totalorder 1, %s17
      %p204 = scmp.lt.s32.totalorder %s17, 3
      %p205 = pnand %p203, %p204
      %p206 = pneg %p205
      // Predicated region
      $region9: #{resnet_forward.6} parent=5 // pred_check
        _
      $region10: #{resnet_forward.6} parent=5 // pred_check_branch
        %208 = sbr.rel (%p205) target = $region12
      $region11: #{resnet_forward.6} parent=5 // pred_region
        %s209 = ssub.s32 %s17, 1
        // Predicated region
        $region13: #{resnet_forward.6} parent=11 // pred_check
          %p210 = pneg %p64
        $region14: #{resnet_forward.6} parent=11 // pred_check_branch
          %212 = sbr.rel (%p210) target = $region16
        $region15: #{resnet_forward.6} parent=11 // pred_region
          %214 = vsyncadd [#allocation5], 0
          %s215 = sshll.u32 %s1, 4
          %s216 = int_to_ptr.hbm [resolvable:$true] %s215
          %s217 = sshll.u32 [#allocation4], 4
          %s218 = int_to_ptr.vmem [resolvable:$true] %s217
          %223 = dma.hbm_to_vmem [thread:$0]  %s216, 12288, %s218, [#allocation5], 128, 128, 8
        $region16: #{resnet_forward.6} parent=11 // pred_fallthru
          _
        // Predicated region
        $region17: #{resnet_forward.6} parent=11 // pred_check
          %p224 = pneg %p85
        $region18: #{resnet_forward.6} parent=11 // pred_check_branch
          %226 = sbr.rel (%p224) target = $region20
        $region19: #{resnet_forward.6} parent=11 // pred_region
          %228 = vsyncadd [#allocation7], 0
          %s230 = sshll.u32 %s2, 4
          %s231 = int_to_ptr.hbm [resolvable:$true] %s230
          %s232 = sshll.u32 [#allocation6], 4
          %s233 = int_to_ptr.vmem [resolvable:$true] %s232
          %235 = dma.hbm_to_vmem [thread:$0]  %s231, 32, %s233, [#allocation7]
        $region20: #{resnet_forward.6} parent=11 // pred_fallthru
          _
        // Predicated region
        $region21: #{resnet_forward.6} parent=11 // pred_check
          %p236 = pneg %p106
        $region22: #{resnet_forward.6} parent=11 // pred_check_branch
          %238 = sbr.rel (%p236) target = $region24
        $region23: #{resnet_forward.6} parent=11 // pred_region
          %240 = vsyncadd [#allocation7], 0
          %s242 = sshll.u32 %s3, 4
          %s243 = int_to_ptr.hbm [resolvable:$true] %s242
          %s244 = sshll.u32 [#allocation8], 4
          %s245 = int_to_ptr.vmem [resolvable:$true] %s244
          %247 = dma.hbm_to_vmem [thread:$0]  %s243, 32, %s245, [#allocation7]
        $region24: #{resnet_forward.6} parent=11 // pred_fallthru
          _
        // Predicated region
        $region25: #{resnet_forward.6} parent=11 // pred_check
          %p248 = pneg %p127
        $region26: #{resnet_forward.6} parent=11 // pred_check_branch
          %250 = sbr.rel (%p248) target = $region28
        $region27: #{resnet_forward.6} parent=11 // pred_region
          %252 = vsyncadd [#allocation10], 0
          %s253 = sshll.u32 %s4, 4
          %s254 = int_to_ptr.hbm [resolvable:$true] %s253
          %s255 = sshll.u32 [#allocation9], 4
          %s256 = int_to_ptr.vmem [resolvable:$true] %s255
          %261 = dma.hbm_to_vmem [thread:$0]  %s254, 12288, %s256, [#allocation10], 128, 128, 8
        $region28: #{resnet_forward.6} parent=11 // pred_fallthru
          _
        // Predicated region
        $region29: #{resnet_forward.6} parent=11 // pred_check
          %p262 = pneg %p148
        $region30: #{resnet_forward.6} parent=11 // pred_check_branch
          %264 = sbr.rel (%p262) target = $region32
        $region31: #{resnet_forward.6} parent=11 // pred_region
          %266 = vsyncadd [#allocation10], 0
          %s268 = sshll.u32 %s5, 4
          %s269 = int_to_ptr.hbm [resolvable:$true] %s268
          %s270 = sshll.u32 [#allocation11], 4
          %s271 = int_to_ptr.vmem [resolvable:$true] %s270
          %273 = dma.hbm_to_vmem [thread:$0]  %s269, 32, %s271, [#allocation10]
        $region32: #{resnet_forward.6} parent=11 // pred_fallthru
          _
        // Predicated region
        $region33: #{resnet_forward.6} parent=11 // pred_check
          %p274 = pneg %p169
        $region34: #{resnet_forward.6} parent=11 // pred_check_branch
          %276 = sbr.rel (%p274) target = $region36
        $region35: #{resnet_forward.6} parent=11 // pred_region
          %278 = vsyncadd [#allocation13], 0
          %s280 = sshll.u32 %s6, 4
          %s281 = int_to_ptr.hbm [resolvable:$true] %s280
          %s282 = sshll.u32 [#allocation12], 4
          %s283 = int_to_ptr.vmem [resolvable:$true] %s282
          %285 = dma.hbm_to_vmem [thread:$0]  %s281, 32, %s283, [#allocation13]
        $region36: #{resnet_forward.6} parent=11 // pred_fallthru
          _
      $region12: #{resnet_forward.6} parent=5 // pred_fallthru
        _
      %p286 = scmp.lt.s32.totalorder %s17, 2
      // Predicated region
      $region37: #{resnet_forward.6} parent=5 // pred_check
        %p287 = pneg %p286
      $region38: #{resnet_forward.6} parent=5 // pred_check_branch
        %289 = sbr.rel (%p287) target = $region40
      $region39: #{resnet_forward.6} parent=5 // pred_region
        // Predicated region
        $region41: #{resnet_forward.6} parent=39 // pred_check
          %p290 = pneg %p37
        $region42: #{resnet_forward.6} parent=39 // pred_check_branch
          %292 = sbr.rel (%p290) target = $region44
        $region43: #{resnet_forward.6} parent=39 // pred_region
          %p293 = scmp.lt.s32.totalorder %s17, 1
          %s294 = scalar_select %p293, %s17, 1
          %s295 = smul.addr %s294, 4
          %s296 = smul.addr %s295, 8
          %s297 = scalar_lea.vmem %s0, %s296
        $region44: #{resnet_forward.6} parent=39 // pred_fallthru
          _
      $region40: #{resnet_forward.6} parent=5 // pred_fallthru
        _
      %p298 = scmp.le.s32.totalorder 1, %s17
      %p299 = scmp.lt.s32.totalorder %s17, 3
      %p300 = pnand %p298, %p299
      %p301 = pneg %p300
      // Predicated region
      $region45: #{resnet_forward.6} parent=5 // pred_check
        _
      $region46: #{resnet_forward.6} parent=5 // pred_check_branch
        %303 = sbr.rel (%p300) target = $region48
      $region47: #{resnet_forward.6} parent=5 // pred_region
        %s304 = ssub.s32 %s17, 1
        // Predicated region
        $region49: #{resnet_forward.6} parent=47 // pred_check
          %p305 = pneg %p64
        $region50: #{resnet_forward.6} parent=47 // pred_check_branch
          %307 = sbr.rel (%p305) target = $region52
        $region51: #{resnet_forward.6} parent=47 // pred_region
          %309 = dma.done [#allocation5], 12288
        $region52: #{resnet_forward.6} parent=47 // pred_fallthru
          _
        // Predicated region
        $region53: #{resnet_forward.6} parent=47 // pred_check
          %p310 = pneg %p85
        $region54: #{resnet_forward.6} parent=47 // pred_check_branch
          %312 = sbr.rel (%p310) target = $region56
        $region55: #{resnet_forward.6} parent=47 // pred_region
          %314 = dma.done [#allocation7], 32
        $region56: #{resnet_forward.6} parent=47 // pred_fallthru
          _
        // Predicated region
        $region57: #{resnet_forward.6} parent=47 // pred_check
          %p315 = pneg %p106
        $region58: #{resnet_forward.6} parent=47 // pred_check_branch
          %317 = sbr.rel (%p315) target = $region60
        $region59: #{resnet_forward.6} parent=47 // pred_region
          %319 = dma.done [#allocation7], 32
        $region60: #{resnet_forward.6} parent=47 // pred_fallthru
          _
        // Predicated region
        $region61: #{resnet_forward.6} parent=47 // pred_check
          %p320 = pneg %p127
        $region62: #{resnet_forward.6} parent=47 // pred_check_branch
          %322 = sbr.rel (%p320) target = $region64
        $region63: #{resnet_forward.6} parent=47 // pred_region
          %324 = dma.done [#allocation10], 12288
        $region64: #{resnet_forward.6} parent=47 // pred_fallthru
          _
        // Predicated region
        $region65: #{resnet_forward.6} parent=47 // pred_check
          %p325 = pneg %p148
        $region66: #{resnet_forward.6} parent=47 // pred_check_branch
          %327 = sbr.rel (%p325) target = $region68
        $region67: #{resnet_forward.6} parent=47 // pred_region
          %329 = dma.done [#allocation10], 32
        $region68: #{resnet_forward.6} parent=47 // pred_fallthru
          _
        // Predicated region
        $region69: #{resnet_forward.6} parent=47 // pred_check
          %p330 = pneg %p169
        $region70: #{resnet_forward.6} parent=47 // pred_check_branch
          %332 = sbr.rel (%p330) target = $region72
        $region71: #{resnet_forward.6} parent=47 // pred_region
          %334 = dma.done [#allocation13], 32
        $region72: #{resnet_forward.6} parent=47 // pred_fallthru
          _
        %p335 = scmp.lt.s32.totalorder %s22, 1
        %s336 = scalar_select %p335, %s22, 1
        %s337 = smul.addr %s336, 4
        %s338 = smul.addr %s337, 8
        %s339 = scalar_lea.vmem %s0, %s338
        %p340 = pneg %p43
        %p341 = pneg %p40
        %p342 = pneg %p64
        %p343 = pneg %p61
        %p344 = pneg %p85
        %p345 = pneg %p82
        %p346 = pneg %p106
        %p347 = pneg %p103
        %p348 = pneg %p127
        %p349 = pneg %p124
        %p350 = pneg %p148
        %p351 = pneg %p145
        %p352 = pneg %p169
        %p353 = pneg %p166
        %p354 = pneg %p195
        %p355 = pneg %p192
        %p356 = scmp.lt.s32.totalorder %s22, 1
        %s357 = scalar_select %p356, %s22, 1
        %s358 = smul.addr %s357, 4
        %s359 = smul.addr %s358, 8
        %s360 = scalar_lea.vmem %s7, %s359
        %p361 = scmp.lt.s32.totalorder %s22, 1
        %s362 = scalar_select %p361, %s22, 1
        %s363 = smul.addr %s362, 4
        %s364 = smul.addr %s363, 8
        %s365 = scalar_lea.vmem %s0, %s364
        %p366 = scmp.lt.s32.totalorder %s22, 1
        %s367 = scalar_select %p366, %s22, 1
        %s368 = smul.addr %s367, 4
        %s369 = smul.addr %s368, 8
        %s370 = scalar_lea.vmem %s7, %s369
        %372 = vst [vmem:[#allocation2] sm:$0xff] 0
        %373 = vst [vmem:[#allocation2 + $0x8] sm:$0xff] 0
        %374 = vst [vmem:[#allocation2 + $0x10] sm:$0x11] 0
        %v375 = vld [vmem:[%s365] sm:$0xff]
        %v376 = vld [vmem:[%s365 + $0x8] sm:$0xff]
        %v377 = vld [vmem:[%s365 + $0x10] sm:$0xff]
        %v378 = vld [vmem:[%s365 + $0x18] sm:$0xff]
        %v379 = vpack.c.bf16 %v376, %v375
        %v380 = vpack.c.bf16 %v378, %v377
        %vm381 = vsmask.f32 256
        %vm382 = vsmask.f32 4368
        %vm383 = vmor %vm381, %vm382
        %v385 = vshrl.u32 %v379, 16
        %v387 = vrot.slane %v385, 7
        %v388 = vshll.u32 %v379, 16
        %v390 = vor.u32 %v387, %v388
        %v391 = vrot.slane %v387, 4
        %v393 = vshrl.u32 %v380, 16
        %v395 = vrot.slane %v393, 7
        %v396 = vshll.u32 %v380, 16
        %v398 = vor.u32 %v395, %v396
        %v399 = vsel %vm383, %v391, %v398
        %v400 = vrot.slane %v395, 4
        %vm404 = vcmask 1043456
        %vm405 = vsmask.f32 7938
        %vm406 = vmand %vm404, %vm405
        %vm407 = vcmask 1047556
        %vm408 = vsmask.f32 7954
        %vm409 = vmand %vm407, %vm408
        %vm410 = vmor %vm409, %vm406
        %v411 = vld [vmem:[#allocation2] sm:$0xff]
        %v412 = vsel %vm410, %v390, %v411
        %413 = vst [vmem:[#allocation2] sm:$0xff] %v412
        %414 = vst [vmem:[#allocation2 + $0x8] sm:$0xff] %v399
        %vm415 = vcmask 1040384
        %vm416 = vmand %vm415, %vm381
        %vm417 = vcmask 1044484
        %vm418 = vsmask.f32 4352
        %vm419 = vmand %vm417, %vm418
        %vm420 = vmor %vm419, %vm416
        %v421 = vld [vmem:[#allocation2 + $0x10] sm:$0x11]
        %v422 = vsel %vm420, %v400, %v421
        %423 = vst [vmem:[#allocation2 + $0x10] sm:$0x11] %v422
        %v424 = vld [vmem:[#allocation2] sm:$0xff]
        %v425 = vld [vmem:[#allocation2 + $0x8] sm:$0xff]
        %v426 = vld [vmem:[#allocation4] sm:$0xff]
        %v427 = vld [vmem:[#allocation4 + $0x8] sm:$0xff]
        %v428 = vld [vmem:[#allocation4 + $0x10] sm:$0xff]
        %v429 = vld [vmem:[#allocation4 + $0x18] sm:$0xff]
        %v430 = vld [vmem:[#allocation4 + $0x20] sm:$0xff]
        %v431 = vld [vmem:[#allocation4 + $0x28] sm:$0xff]
        %v432 = vld [vmem:[#allocation4 + $0x30] sm:$0xff]
        %v433 = vld [vmem:[#allocation4 + $0x38] sm:$0xff]
        %v434 = vld [vmem:[#allocation4 + $0x40] sm:$0xff]
        %v435 = vld [vmem:[#allocation4 + $0x48] sm:$0xff]
        %v436 = vld [vmem:[#allocation4 + $0x50] sm:$0xff]
        %v437 = vld [vmem:[#allocation4 + $0x58] sm:$0xff]
        %v438 = vld [vmem:[#allocation4 + $0x60] sm:$0xff]
        %v439 = vld [vmem:[#allocation4 + $0x68] sm:$0xff]
        %v440 = vld [vmem:[#allocation4 + $0x70] sm:$0xff]
        %v441 = vld [vmem:[#allocation4 + $0x78] sm:$0xff]
        %v442 = vld [vmem:[#allocation4 + $0x80] sm:$0xff]
        %v443 = vld [vmem:[#allocation4 + $0x88] sm:$0xff]
        %v444 = vld [vmem:[#allocation4 + $0x90] sm:$0xff]
        %v445 = vld [vmem:[#allocation4 + $0x98] sm:$0xff]
        %v446 = vld [vmem:[#allocation4 + $0xa0] sm:$0xff]
        %v447 = vld [vmem:[#allocation4 + $0xa8] sm:$0xff]
        %v448 = vld [vmem:[#allocation4 + $0xb0] sm:$0xff]
        %v449 = vld [vmem:[#allocation4 + $0xb8] sm:$0xff]
        %v450 = vld [vmem:[#allocation4 + $0xc0] sm:$0xff]
        %v451 = vld [vmem:[#allocation4 + $0xc8] sm:$0xff]
        %v452 = vld [vmem:[#allocation4 + $0xd0] sm:$0xff]
        %v453 = vld [vmem:[#allocation4 + $0xd8] sm:$0xff]
        %v454 = vld [vmem:[#allocation4 + $0xe0] sm:$0xff]
        %v455 = vld [vmem:[#allocation4 + $0xe8] sm:$0xff]
        %v456 = vld [vmem:[#allocation4 + $0xf0] sm:$0xff]
        %v457 = vld [vmem:[#allocation4 + $0xf8] sm:$0xff]
        %v458 = vld [vmem:[#allocation2 + $0x10] sm:$0x11]
        %s459 = scalar_lea.vmem [#allocation4], 256
        %v460 = vld [vmem:[%s459] sm:$0xff]
        %v461 = vld [vmem:[%s459 + $0x8] sm:$0xff]
        %v462 = vld [vmem:[%s459 + $0x10] sm:$0xff]
        %v463 = vld [vmem:[%s459 + $0x18] sm:$0xff]
        %v464 = vld [vmem:[%s459 + $0x20] sm:$0xff]
        %v465 = vld [vmem:[%s459 + $0x28] sm:$0xff]
        %v466 = vld [vmem:[%s459 + $0x30] sm:$0xff]
        %v467 = vld [vmem:[%s459 + $0x38] sm:$0xff]
        %v468 = vld [vmem:[%s459 + $0x40] sm:$0xff]
        %v469 = vld [vmem:[%s459 + $0x48] sm:$0xff]
        %v470 = vld [vmem:[%s459 + $0x50] sm:$0xff]
        %v471 = vld [vmem:[%s459 + $0x58] sm:$0xff]
        %v472 = vld [vmem:[%s459 + $0x60] sm:$0xff]
        %v473 = vld [vmem:[%s459 + $0x68] sm:$0xff]
        %v474 = vld [vmem:[%s459 + $0x70] sm:$0xff]
        %v475 = vld [vmem:[%s459 + $0x78] sm:$0xff]
        %v476 = vld [vmem:[%s459 + $0x80] sm:$0xff]
        %v477 = vld [vmem:[%s459 + $0x88] sm:$0xff]
        %v478 = vld [vmem:[%s459 + $0x90] sm:$0xff]
        %v479 = vld [vmem:[%s459 + $0x98] sm:$0xff]
        %v480 = vld [vmem:[%s459 + $0xa0] sm:$0xff]
        %v481 = vld [vmem:[%s459 + $0xa8] sm:$0xff]
        %v482 = vld [vmem:[%s459 + $0xb0] sm:$0xff]
        %v483 = vld [vmem:[%s459 + $0xb8] sm:$0xff]
        %v484 = vld [vmem:[%s459 + $0xc0] sm:$0xff]
        %v485 = vld [vmem:[%s459 + $0xc8] sm:$0xff]
        %v486 = vld [vmem:[%s459 + $0xd0] sm:$0xff]
        %v487 = vld [vmem:[%s459 + $0xd8] sm:$0xff]
        %v488 = vld [vmem:[%s459 + $0xe0] sm:$0xff]
        %v489 = vld [vmem:[%s459 + $0xe8] sm:$0xff]
        %v490 = vld [vmem:[%s459 + $0xf0] sm:$0xff]
        %v491 = vld [vmem:[%s459 + $0xf8] sm:$0xff]
        %v495 = vunpack.c.l.b16 %v424
        %v496 = vunpack.c.h.b16 %v424
        %v497 = vunpack.c.l.b16 %v425
        %v498 = vunpack.c.h.b16 %v425
        %v499 = vunpack.c.l.b16 %v458
        %v500 = vunpack.c.h.b16 %v458
        %v501 = vpack.c.b16 %v497, %v495
        %v502 = vpack.c.b16 %v498, %v496
        %v503 = vpack.c.b16 %v499, %v499
        %v504 = vpack.c.b16 %v500, %v500
        %vm505 = vsmask.f32 7424
        %v507 = vshrl.u32 %v501, 16
        %v509 = vshll.u32 %v501, 16
        %v511 = vrot.slane %v509, 1
        %v512 = vor.u32 %v507, %v511
        %v514 = vshll.u32 %v503, 16
        %v516 = vrot.slane %v514, 1
        %v517 = vsel %vm505, %v512, %v516
        %v519 = vshrl.u32 %v502, 16
        %v521 = vshll.u32 %v502, 16
        %v523 = vrot.slane %v521, 1
        %v524 = vor.u32 %v519, %v523
        %v526 = vshll.u32 %v504, 16
        %v528 = vrot.slane %v526, 1
        %v529 = vsel %vm505, %v524, %v528
        %v564 = vunpack.c.l.b16 %v460
        %v565 = vunpack.c.h.b16 %v460
        %v566 = vunpack.c.l.b16 %v461
        %v567 = vunpack.c.h.b16 %v461
        %v568 = vunpack.c.l.b16 %v462
        %v569 = vunpack.c.h.b16 %v462
        %v570 = vunpack.c.l.b16 %v463
        %v571 = vunpack.c.h.b16 %v463
        %v572 = vunpack.c.l.b16 %v464
        %v573 = vunpack.c.h.b16 %v464
        %v574 = vunpack.c.l.b16 %v465
        %v575 = vunpack.c.h.b16 %v465
        %v576 = vunpack.c.l.b16 %v466
        %v577 = vunpack.c.h.b16 %v466
        %v578 = vunpack.c.l.b16 %v467
        %v579 = vunpack.c.h.b16 %v467
        %v580 = vunpack.c.l.b16 %v468
        %v581 = vunpack.c.h.b16 %v468
        %v582 = vunpack.c.l.b16 %v469
        %v583 = vunpack.c.h.b16 %v469
        %v584 = vunpack.c.l.b16 %v470
        %v585 = vunpack.c.h.b16 %v470
        %v586 = vunpack.c.l.b16 %v471
        %v587 = vunpack.c.h.b16 %v471
        %v588 = vunpack.c.l.b16 %v472
        %v589 = vunpack.c.h.b16 %v472
        %v590 = vunpack.c.l.b16 %v473
        %v591 = vunpack.c.h.b16 %v473
        %v592 = vunpack.c.l.b16 %v474
        %v593 = vunpack.c.h.b16 %v474
        %v594 = vunpack.c.l.b16 %v475
        %v595 = vunpack.c.h.b16 %v475
        %v596 = vunpack.c.l.b16 %v476
        %v597 = vunpack.c.h.b16 %v476
        %v598 = vunpack.c.l.b16 %v477
        %v599 = vunpack.c.h.b16 %v477
        %v600 = vunpack.c.l.b16 %v478
        %v601 = vunpack.c.h.b16 %v478
        %v602 = vunpack.c.l.b16 %v479
        %v603 = vunpack.c.h.b16 %v479
        %v604 = vunpack.c.l.b16 %v480
        %v605 = vunpack.c.h.b16 %v480
        %v606 = vunpack.c.l.b16 %v481
        %v607 = vunpack.c.h.b16 %v481
        %v608 = vunpack.c.l.b16 %v482
        %v609 = vunpack.c.h.b16 %v482
        %v610 = vunpack.c.l.b16 %v483
        %v611 = vunpack.c.h.b16 %v483
        %v612 = vunpack.c.l.b16 %v484
        %v613 = vunpack.c.h.b16 %v484
        %v614 = vunpack.c.l.b16 %v485
        %v615 = vunpack.c.h.b16 %v485
        %v616 = vunpack.c.l.b16 %v486
        %v617 = vunpack.c.h.b16 %v486
        %v618 = vunpack.c.l.b16 %v487
        %v619 = vunpack.c.h.b16 %v487
        %v620 = vunpack.c.l.b16 %v488
        %v621 = vunpack.c.h.b16 %v488
        %v622 = vunpack.c.l.b16 %v489
        %v623 = vunpack.c.h.b16 %v489
        %v624 = vunpack.c.l.b16 %v490
        %v625 = vunpack.c.h.b16 %v490
        %v626 = vunpack.c.l.b16 %v491
        %v627 = vunpack.c.h.b16 %v491
        %v628 = vpack.c.b16 %v566, %v564
        %v629 = vpack.c.b16 %v567, %v565
        %v630 = vpack.c.b16 %v570, %v568
        %v631 = vpack.c.b16 %v571, %v569
        %v632 = vpack.c.b16 %v574, %v572
        %v633 = vpack.c.b16 %v575, %v573
        %v634 = vpack.c.b16 %v578, %v576
        %v635 = vpack.c.b16 %v579, %v577
        %v636 = vpack.c.b16 %v582, %v580
        %v637 = vpack.c.b16 %v583, %v581
        %v638 = vpack.c.b16 %v586, %v584
        %v639 = vpack.c.b16 %v587, %v585
        %v640 = vpack.c.b16 %v590, %v588
        %v641 = vpack.c.b16 %v591, %v589
        %v642 = vpack.c.b16 %v594, %v592
        %v643 = vpack.c.b16 %v595, %v593
        %v644 = vpack.c.b16 %v598, %v596
        %v645 = vpack.c.b16 %v599, %v597
        %v646 = vpack.c.b16 %v602, %v600
        %v647 = vpack.c.b16 %v603, %v601
        %v648 = vpack.c.b16 %v606, %v604
        %v649 = vpack.c.b16 %v607, %v605
        %v650 = vpack.c.b16 %v610, %v608
        %v651 = vpack.c.b16 %v611, %v609
        %v652 = vpack.c.b16 %v614, %v612
        %v653 = vpack.c.b16 %v615, %v613
        %v654 = vpack.c.b16 %v618, %v616
        %v655 = vpack.c.b16 %v619, %v617
        %v656 = vpack.c.b16 %v622, %v620
        %v657 = vpack.c.b16 %v623, %v621
        %v658 = vpack.c.b16 %v626, %v624
        %v659 = vpack.c.b16 %v627, %v625
        %692 = vmatpush.bf16.msra.mxu0 %v642
        %693 = vmatpush.bf16.msra.mxu0 %v640
        %694 = vmatpush.bf16.msra.mxu0 %v638
        %695 = vmatpush.bf16.msra.mxu0 %v636
        %696 = vmatpush.bf16.msra.mxu0 %v634
        %697 = vmatpush.bf16.msra.mxu0 %v632
        %698 = vmatpush.bf16.msra.mxu0 %v630
        %699 = vmatpush.bf16.msra.mxu0 %v628
        %700 = vmatmul.bf16.gmra.mxu0 %v517
        %v701 = vpop.f32.mrf.mxu0
        %v702 = vadd.f32 0.0, %v701
        %v703 = vpop.f32.mrf.mxu0
        %v704 = vadd.f32 0.0, %v703
        %705 = vdwg.mxu0
        %706 = vmatpush.bf16.msra.mxu0 %v658
        %707 = vmatpush.bf16.msra.mxu0 %v656
        %708 = vmatpush.bf16.msra.mxu0 %v654
        %709 = vmatpush.bf16.msra.mxu0 %v652
        %710 = vmatpush.bf16.msra.mxu0 %v650
        %711 = vmatpush.bf16.msra.mxu0 %v648
        %712 = vmatpush.bf16.msra.mxu0 %v646
        %713 = vmatpush.bf16.msra.mxu0 %v644
        %714 = vmatmul.bf16.gmra.mxu0 %v529
        %v715 = vpop.f32.mrf.mxu0
        %v716 = vadd.f32 %v702, %v715
        %v717 = vpop.f32.mrf.mxu0
        %v718 = vadd.f32 %v704, %v717
        %719 = vdwg.mxu0
        %720 = vmatpush.bf16.msra.mxu0 %v643
        %721 = vmatpush.bf16.msra.mxu0 %v641
        %722 = vmatpush.bf16.msra.mxu0 %v639
        %723 = vmatpush.bf16.msra.mxu0 %v637
        %724 = vmatpush.bf16.msra.mxu0 %v635
        %725 = vmatpush.bf16.msra.mxu0 %v633
        %726 = vmatpush.bf16.msra.mxu0 %v631
        %727 = vmatpush.bf16.msra.mxu0 %v629
        %728 = vmatmul.bf16.gmra.mxu0 %v517
        %v729 = vpop.f32.mrf.mxu0
        %v730 = vadd.f32 0.0, %v729
        %v731 = vpop.f32.mrf.mxu0
        %v732 = vadd.f32 0.0, %v731
        %733 = vdwg.mxu0
        %734 = vmatpush.bf16.msra.mxu0 %v659
        %735 = vmatpush.bf16.msra.mxu0 %v657
        %736 = vmatpush.bf16.msra.mxu0 %v655
        %737 = vmatpush.bf16.msra.mxu0 %v653
        %738 = vmatpush.bf16.msra.mxu0 %v651
        %739 = vmatpush.bf16.msra.mxu0 %v649
        %740 = vmatpush.bf16.msra.mxu0 %v647
        %741 = vmatpush.bf16.msra.mxu0 %v645
        %742 = vmatmul.bf16.gmra.mxu0 %v529
        %v743 = vpop.f32.mrf.mxu0
        %v744 = vadd.f32 %v730, %v743
        %v745 = vpop.f32.mrf.mxu0
        %v746 = vadd.f32 %v732, %v745
        %747 = vdwg.mxu0
        %v782 = vunpack.c.l.b16 %v426
        %v783 = vunpack.c.h.b16 %v426
        %v784 = vunpack.c.l.b16 %v427
        %v785 = vunpack.c.h.b16 %v427
        %v786 = vunpack.c.l.b16 %v428
        %v787 = vunpack.c.h.b16 %v428
        %v788 = vunpack.c.l.b16 %v429
        %v789 = vunpack.c.h.b16 %v429
        %v790 = vunpack.c.l.b16 %v430
        %v791 = vunpack.c.h.b16 %v430
        %v792 = vunpack.c.l.b16 %v431
        %v793 = vunpack.c.h.b16 %v431
        %v794 = vunpack.c.l.b16 %v432
        %v795 = vunpack.c.h.b16 %v432
        %v796 = vunpack.c.l.b16 %v433
        %v797 = vunpack.c.h.b16 %v433
        %v798 = vunpack.c.l.b16 %v434
        %v799 = vunpack.c.h.b16 %v434
        %v800 = vunpack.c.l.b16 %v435
        %v801 = vunpack.c.h.b16 %v435
        %v802 = vunpack.c.l.b16 %v436
        %v803 = vunpack.c.h.b16 %v436
        %v804 = vunpack.c.l.b16 %v437
        %v805 = vunpack.c.h.b16 %v437
        %v806 = vunpack.c.l.b16 %v438
        %v807 = vunpack.c.h.b16 %v438
        %v808 = vunpack.c.l.b16 %v439
        %v809 = vunpack.c.h.b16 %v439
        %v810 = vunpack.c.l.b16 %v440
        %v811 = vunpack.c.h.b16 %v440
        %v812 = vunpack.c.l.b16 %v441
        %v813 = vunpack.c.h.b16 %v441
        %v814 = vunpack.c.l.b16 %v442
        %v815 = vunpack.c.h.b16 %v442
        %v816 = vunpack.c.l.b16 %v443
        %v817 = vunpack.c.h.b16 %v443
        %v818 = vunpack.c.l.b16 %v444
        %v819 = vunpack.c.h.b16 %v444
        %v820 = vunpack.c.l.b16 %v445
        %v821 = vunpack.c.h.b16 %v445
        %v822 = vunpack.c.l.b16 %v446
        %v823 = vunpack.c.h.b16 %v446
        %v824 = vunpack.c.l.b16 %v447
        %v825 = vunpack.c.h.b16 %v447
        %v826 = vunpack.c.l.b16 %v448
        %v827 = vunpack.c.h.b16 %v448
        %v828 = vunpack.c.l.b16 %v449
        %v829 = vunpack.c.h.b16 %v449
        %v830 = vunpack.c.l.b16 %v450
        %v831 = vunpack.c.h.b16 %v450
        %v832 = vunpack.c.l.b16 %v451
        %v833 = vunpack.c.h.b16 %v451
        %v834 = vunpack.c.l.b16 %v452
        %v835 = vunpack.c.h.b16 %v452
        %v836 = vunpack.c.l.b16 %v453
        %v837 = vunpack.c.h.b16 %v453
        %v838 = vunpack.c.l.b16 %v454
        %v839 = vunpack.c.h.b16 %v454
        %v840 = vunpack.c.l.b16 %v455
        %v841 = vunpack.c.h.b16 %v455
        %v842 = vunpack.c.l.b16 %v456
        %v843 = vunpack.c.h.b16 %v456
        %v844 = vunpack.c.l.b16 %v457
        %v845 = vunpack.c.h.b16 %v457
        %v846 = vpack.c.b16 %v784, %v782
        %v847 = vpack.c.b16 %v785, %v783
        %v848 = vpack.c.b16 %v788, %v786
        %v849 = vpack.c.b16 %v789, %v787
        %v850 = vpack.c.b16 %v792, %v790
        %v851 = vpack.c.b16 %v793, %v791
        %v852 = vpack.c.b16 %v796, %v794
        %v853 = vpack.c.b16 %v797, %v795
        %v854 = vpack.c.b16 %v800, %v798
        %v855 = vpack.c.b16 %v801, %v799
        %v856 = vpack.c.b16 %v804, %v802
        %v857 = vpack.c.b16 %v805, %v803
        %v858 = vpack.c.b16 %v808, %v806
        %v859 = vpack.c.b16 %v809, %v807
        %v860 = vpack.c.b16 %v812, %v810
        %v861 = vpack.c.b16 %v813, %v811
        %v862 = vpack.c.b16 %v816, %v814
        %v863 = vpack.c.b16 %v817, %v815
        %v864 = vpack.c.b16 %v820, %v818
        %v865 = vpack.c.b16 %v821, %v819
        %v866 = vpack.c.b16 %v824, %v822
        %v867 = vpack.c.b16 %v825, %v823
        %v868 = vpack.c.b16 %v828, %v826
        %v869 = vpack.c.b16 %v829, %v827
        %v870 = vpack.c.b16 %v832, %v830
        %v871 = vpack.c.b16 %v833, %v831
        %v872 = vpack.c.b16 %v836, %v834
        %v873 = vpack.c.b16 %v837, %v835
        %v874 = vpack.c.b16 %v840, %v838
        %v875 = vpack.c.b16 %v841, %v839
        %v876 = vpack.c.b16 %v844, %v842
        %v877 = vpack.c.b16 %v845, %v843
        %910 = vmatpush.bf16.msra.mxu0 %v860
        %911 = vmatpush.bf16.msra.mxu0 %v858
        %912 = vmatpush.bf16.msra.mxu0 %v856
        %913 = vmatpush.bf16.msra.mxu0 %v854
        %914 = vmatpush.bf16.msra.mxu0 %v852
        %915 = vmatpush.bf16.msra.mxu0 %v850
        %916 = vmatpush.bf16.msra.mxu0 %v848
        %917 = vmatpush.bf16.msra.mxu0 %v846
        %918 = vmatmul.bf16.gmra.mxu0 %v501
        %v919 = vpop.f32.mrf.mxu0
        %v920 = vadd.f32 %v716, %v919
        %v921 = vpop.f32.mrf.mxu0
        %v922 = vadd.f32 %v718, %v921
        %923 = vdwg.mxu0
        %924 = vmatpush.bf16.msra.mxu0 %v876
        %925 = vmatpush.bf16.msra.mxu0 %v874
        %926 = vmatpush.bf16.msra.mxu0 %v872
        %927 = vmatpush.bf16.msra.mxu0 %v870
        %928 = vmatpush.bf16.msra.mxu0 %v868
        %929 = vmatpush.bf16.msra.mxu0 %v866
        %930 = vmatpush.bf16.msra.mxu0 %v864
        %931 = vmatpush.bf16.msra.mxu0 %v862
        %932 = vmatmul.bf16.gmra.mxu0 %v502
        %v933 = vpop.f32.mrf.mxu0
        %v934 = vadd.f32 %v920, %v933
        %v935 = vpop.f32.mrf.mxu0
        %v936 = vadd.f32 %v922, %v935
        %937 = vdwg.mxu0
        %938 = vmatpush.bf16.msra.mxu0 %v861
        %939 = vmatpush.bf16.msra.mxu0 %v859
        %940 = vmatpush.bf16.msra.mxu0 %v857
        %941 = vmatpush.bf16.msra.mxu0 %v855
        %942 = vmatpush.bf16.msra.mxu0 %v853
        %943 = vmatpush.bf16.msra.mxu0 %v851
        %944 = vmatpush.bf16.msra.mxu0 %v849
        %945 = vmatpush.bf16.msra.mxu0 %v847
        %946 = vmatmul.bf16.gmra.mxu0 %v501
        %v947 = vpop.f32.mrf.mxu0
        %v948 = vadd.f32 %v744, %v947
        %v949 = vpop.f32.mrf.mxu0
        %v950 = vadd.f32 %v746, %v949
        %951 = vdwg.mxu0
        %952 = vmatpush.bf16.msra.mxu0 %v877
        %953 = vmatpush.bf16.msra.mxu0 %v875
        %954 = vmatpush.bf16.msra.mxu0 %v873
        %955 = vmatpush.bf16.msra.mxu0 %v871
        %956 = vmatpush.bf16.msra.mxu0 %v869
        %957 = vmatpush.bf16.msra.mxu0 %v867
        %958 = vmatpush.bf16.msra.mxu0 %v865
        %959 = vmatpush.bf16.msra.mxu0 %v863
        %960 = vmatmul.bf16.gmra.mxu0 %v502
        %v961 = vpop.f32.mrf.mxu0
        %v962 = vadd.f32 %v948, %v961
        %v963 = vpop.f32.mrf.mxu0
        %v964 = vadd.f32 %v950, %v963
        %965 = vdwg.mxu0
        %v966 = vld [vmem:[#allocation2] sm:$0xee]
        %s967 = scalar_lea.vmem [#allocation4], 512
        %v968 = vld [vmem:[%s967] sm:$0xff]
        %v969 = vld [vmem:[%s967 + $0x8] sm:$0xff]
        %v970 = vld [vmem:[%s967 + $0x10] sm:$0xff]
        %v971 = vld [vmem:[%s967 + $0x18] sm:$0xff]
        %v972 = vld [vmem:[%s967 + $0x20] sm:$0xff]
        %v973 = vld [vmem:[%s967 + $0x28] sm:$0xff]
        %v974 = vld [vmem:[%s967 + $0x30] sm:$0xff]
        %v975 = vld [vmem:[%s967 + $0x38] sm:$0xff]
        %v976 = vld [vmem:[%s967 + $0x40] sm:$0xff]
        %v977 = vld [vmem:[%s967 + $0x48] sm:$0xff]
        %v978 = vld [vmem:[%s967 + $0x50] sm:$0xff]
        %v979 = vld [vmem:[%s967 + $0x58] sm:$0xff]
        %v980 = vld [vmem:[%s967 + $0x60] sm:$0xff]
        %v981 = vld [vmem:[%s967 + $0x68] sm:$0xff]
        %v982 = vld [vmem:[%s967 + $0x70] sm:$0xff]
        %v983 = vld [vmem:[%s967 + $0x78] sm:$0xff]
        %v984 = vld [vmem:[%s967 + $0x80] sm:$0xff]
        %v985 = vld [vmem:[%s967 + $0x88] sm:$0xff]
        %v986 = vld [vmem:[%s967 + $0x90] sm:$0xff]
        %v987 = vld [vmem:[%s967 + $0x98] sm:$0xff]
        %v988 = vld [vmem:[%s967 + $0xa0] sm:$0xff]
        %v989 = vld [vmem:[%s967 + $0xa8] sm:$0xff]
        %v990 = vld [vmem:[%s967 + $0xb0] sm:$0xff]
        %v991 = vld [vmem:[%s967 + $0xb8] sm:$0xff]
        %v992 = vld [vmem:[%s967 + $0xc0] sm:$0xff]
        %v993 = vld [vmem:[%s967 + $0xc8] sm:$0xff]
        %v994 = vld [vmem:[%s967 + $0xd0] sm:$0xff]
        %v995 = vld [vmem:[%s967 + $0xd8] sm:$0xff]
        %v996 = vld [vmem:[%s967 + $0xe0] sm:$0xff]
        %v997 = vld [vmem:[%s967 + $0xe8] sm:$0xff]
        %v998 = vld [vmem:[%s967 + $0xf0] sm:$0xff]
        %v999 = vld [vmem:[%s967 + $0xf8] sm:$0xff]
        %v1001 = vunpack.c.l.b16 %v966
        %v1002 = vunpack.c.h.b16 %v966
        %v1003 = vpack.c.b16 %v497, %v1001
        %v1004 = vpack.c.b16 %v498, %v1002
        %vm1005 = vcmask 1046528
        %v1006 = vrot.slane %v1003, 1
        %v1007 = vrot.slane %v503, 1
        %v1008 = vsel %vm1005, %v1006, %v1007
        %v1009 = vrot.slane %v1004, 1
        %v1010 = vrot.slane %v504, 1
        %v1011 = vsel %vm1005, %v1009, %v1010
        %v1046 = vunpack.c.l.b16 %v968
        %v1047 = vunpack.c.h.b16 %v968
        %v1048 = vunpack.c.l.b16 %v969
        %v1049 = vunpack.c.h.b16 %v969
        %v1050 = vunpack.c.l.b16 %v970
        %v1051 = vunpack.c.h.b16 %v970
        %v1052 = vunpack.c.l.b16 %v971
        %v1053 = vunpack.c.h.b16 %v971
        %v1054 = vunpack.c.l.b16 %v972
        %v1055 = vunpack.c.h.b16 %v972
        %v1056 = vunpack.c.l.b16 %v973
        %v1057 = vunpack.c.h.b16 %v973
        %v1058 = vunpack.c.l.b16 %v974
        %v1059 = vunpack.c.h.b16 %v974
        %v1060 = vunpack.c.l.b16 %v975
        %v1061 = vunpack.c.h.b16 %v975
        %v1062 = vunpack.c.l.b16 %v976
        %v1063 = vunpack.c.h.b16 %v976
        %v1064 = vunpack.c.l.b16 %v977
        %v1065 = vunpack.c.h.b16 %v977
        %v1066 = vunpack.c.l.b16 %v978
        %v1067 = vunpack.c.h.b16 %v978
        %v1068 = vunpack.c.l.b16 %v979
        %v1069 = vunpack.c.h.b16 %v979
        %v1070 = vunpack.c.l.b16 %v980
        %v1071 = vunpack.c.h.b16 %v980
        %v1072 = vunpack.c.l.b16 %v981
        %v1073 = vunpack.c.h.b16 %v981
        %v1074 = vunpack.c.l.b16 %v982
        %v1075 = vunpack.c.h.b16 %v982
        %v1076 = vunpack.c.l.b16 %v983
        %v1077 = vunpack.c.h.b16 %v983
        %v1078 = vunpack.c.l.b16 %v984
        %v1079 = vunpack.c.h.b16 %v984
        %v1080 = vunpack.c.l.b16 %v985
        %v1081 = vunpack.c.h.b16 %v985
        %v1082 = vunpack.c.l.b16 %v986
        %v1083 = vunpack.c.h.b16 %v986
        %v1084 = vunpack.c.l.b16 %v987
        %v1085 = vunpack.c.h.b16 %v987
        %v1086 = vunpack.c.l.b16 %v988
        %v1087 = vunpack.c.h.b16 %v988
        %v1088 = vunpack.c.l.b16 %v989
        %v1089 = vunpack.c.h.b16 %v989
        %v1090 = vunpack.c.l.b16 %v990
        %v1091 = vunpack.c.h.b16 %v990
        %v1092 = vunpack.c.l.b16 %v991
        %v1093 = vunpack.c.h.b16 %v991
        %v1094 = vunpack.c.l.b16 %v992
        %v1095 = vunpack.c.h.b16 %v992
        %v1096 = vunpack.c.l.b16 %v993
        %v1097 = vunpack.c.h.b16 %v993
        %v1098 = vunpack.c.l.b16 %v994
        %v1099 = vunpack.c.h.b16 %v994
        %v1100 = vunpack.c.l.b16 %v995
        %v1101 = vunpack.c.h.b16 %v995
        %v1102 = vunpack.c.l.b16 %v996
        %v1103 = vunpack.c.h.b16 %v996
        %v1104 = vunpack.c.l.b16 %v997
        %v1105 = vunpack.c.h.b16 %v997
        %v1106 = vunpack.c.l.b16 %v998
        %v1107 = vunpack.c.h.b16 %v998
        %v1108 = vunpack.c.l.b16 %v999
        %v1109 = vunpack.c.h.b16 %v999
        %v1110 = vpack.c.b16 %v1048, %v1046
        %v1111 = vpack.c.b16 %v1049, %v1047
        %v1112 = vpack.c.b16 %v1052, %v1050
        %v1113 = vpack.c.b16 %v1053, %v1051
        %v1114 = vpack.c.b16 %v1056, %v1054
        %v1115 = vpack.c.b16 %v1057, %v1055
        %v1116 = vpack.c.b16 %v1060, %v1058
        %v1117 = vpack.c.b16 %v1061, %v1059
        %v1118 = vpack.c.b16 %v1064, %v1062
        %v1119 = vpack.c.b16 %v1065, %v1063
        %v1120 = vpack.c.b16 %v1068, %v1066
        %v1121 = vpack.c.b16 %v1069, %v1067
        %v1122 = vpack.c.b16 %v1072, %v1070
        %v1123 = vpack.c.b16 %v1073, %v1071
        %v1124 = vpack.c.b16 %v1076, %v1074
        %v1125 = vpack.c.b16 %v1077, %v1075
        %v1126 = vpack.c.b16 %v1080, %v1078
        %v1127 = vpack.c.b16 %v1081, %v1079
        %v1128 = vpack.c.b16 %v1084, %v1082
        %v1129 = vpack.c.b16 %v1085, %v1083
        %v1130 = vpack.c.b16 %v1088, %v1086
        %v1131 = vpack.c.b16 %v1089, %v1087
        %v1132 = vpack.c.b16 %v1092, %v1090
        %v1133 = vpack.c.b16 %v1093, %v1091
        %v1134 = vpack.c.b16 %v1096, %v1094
        %v1135 = vpack.c.b16 %v1097, %v1095
        %v1136 = vpack.c.b16 %v1100, %v1098
        %v1137 = vpack.c.b16 %v1101, %v1099
        %v1138 = vpack.c.b16 %v1104, %v1102
        %v1139 = vpack.c.b16 %v1105, %v1103
        %v1140 = vpack.c.b16 %v1108, %v1106
        %v1141 = vpack.c.b16 %v1109, %v1107
        %1174 = vmatpush.bf16.msra.mxu0 %v1124
        %1175 = vmatpush.bf16.msra.mxu0 %v1122
        %1176 = vmatpush.bf16.msra.mxu0 %v1120
        %1177 = vmatpush.bf16.msra.mxu0 %v1118
        %1178 = vmatpush.bf16.msra.mxu0 %v1116
        %1179 = vmatpush.bf16.msra.mxu0 %v1114
        %1180 = vmatpush.bf16.msra.mxu0 %v1112
        %1181 = vmatpush.bf16.msra.mxu0 %v1110
        %1182 = vmatmul.bf16.gmra.mxu0 %v1008
        %v1183 = vpop.f32.mrf.mxu0
        %v1184 = vadd.f32 0.0, %v1183
        %v1185 = vpop.f32.mrf.mxu0
        %v1186 = vadd.f32 0.0, %v1185
        %1187 = vdwg.mxu0
        %1188 = vmatpush.bf16.msra.mxu0 %v1140
        %1189 = vmatpush.bf16.msra.mxu0 %v1138
        %1190 = vmatpush.bf16.msra.mxu0 %v1136
        %1191 = vmatpush.bf16.msra.mxu0 %v1134
        %1192 = vmatpush.bf16.msra.mxu0 %v1132
        %1193 = vmatpush.bf16.msra.mxu0 %v1130
        %1194 = vmatpush.bf16.msra.mxu0 %v1128
        %1195 = vmatpush.bf16.msra.mxu0 %v1126
        %1196 = vmatmul.bf16.gmra.mxu0 %v1011
        %v1197 = vpop.f32.mrf.mxu0
        %v1198 = vadd.f32 %v1184, %v1197
        %v1199 = vpop.f32.mrf.mxu0
        %v1200 = vadd.f32 %v1186, %v1199
        %1201 = vdwg.mxu0
        %1202 = vmatpush.bf16.msra.mxu0 %v1125
        %1203 = vmatpush.bf16.msra.mxu0 %v1123
        %1204 = vmatpush.bf16.msra.mxu0 %v1121
        %1205 = vmatpush.bf16.msra.mxu0 %v1119
        %1206 = vmatpush.bf16.msra.mxu0 %v1117
        %1207 = vmatpush.bf16.msra.mxu0 %v1115
        %1208 = vmatpush.bf16.msra.mxu0 %v1113
        %1209 = vmatpush.bf16.msra.mxu0 %v1111
        %1210 = vmatmul.bf16.gmra.mxu0 %v1008
        %v1211 = vpop.f32.mrf.mxu0
        %v1212 = vadd.f32 0.0, %v1211
        %v1213 = vpop.f32.mrf.mxu0
        %v1214 = vadd.f32 0.0, %v1213
        %1215 = vdwg.mxu0
        %1216 = vmatpush.bf16.msra.mxu0 %v1141
        %1217 = vmatpush.bf16.msra.mxu0 %v1139
        %1218 = vmatpush.bf16.msra.mxu0 %v1137
        %1219 = vmatpush.bf16.msra.mxu0 %v1135
        %1220 = vmatpush.bf16.msra.mxu0 %v1133
        %1221 = vmatpush.bf16.msra.mxu0 %v1131
        %1222 = vmatpush.bf16.msra.mxu0 %v1129
        %1223 = vmatpush.bf16.msra.mxu0 %v1127
        %1224 = vmatmul.bf16.gmra.mxu0 %v1011
        %v1225 = vpop.f32.mrf.mxu0
        %v1226 = vadd.f32 %v1212, %v1225
        %v1227 = vpop.f32.mrf.mxu0
        %v1228 = vadd.f32 %v1214, %v1227
        %1229 = vdwg.mxu0
        %v1230 = vadd.f32 %v934, %v1198
        %v1231 = vadd.f32 %v962, %v1226
        %v1232 = vadd.f32 %v936, %v1200
        %v1233 = vadd.f32 %v964, %v1228
        %v1234 = vld [vmem:[#allocation6] sm:$0x3]
        %v1236 = vperm.slane %v1234, 0
        %v1237 = vperm.slane %v1234, 1
        %v1240 = vmul.f32 %v1230, %v1236
        %v1241 = vmul.f32 %v1231, %v1237
        %v1242 = vmul.f32 %v1232, %v1236
        %v1243 = vmul.f32 %v1233, %v1237
        %v1244 = vld [vmem:[#allocation8] sm:$0x3]
        %v1246 = vperm.slane %v1244, 0
        %v1247 = vperm.slane %v1244, 1
        %v1250 = vadd.f32 %v1240, %v1246
        %v1251 = vadd.f32 %v1241, %v1247
        %v1252 = vadd.f32 %v1242, %v1246
        %v1253 = vadd.f32 %v1243, %v1247
        %v1254 = vmax.f32 %v1250, 0.0
        %v1255 = vmax.f32 %v1251, 0.0
        %v1256 = vmax.f32 %v1252, 0.0
        %v1257 = vmax.f32 %v1253, 0.0
        %1258 = vst [vmem:[#allocation3] sm:$0xff] 0
        %1259 = vst [vmem:[#allocation3 + $0x8] sm:$0xff] 0
        %1260 = vst [vmem:[#allocation3 + $0x10] sm:$0x11] 0
        %v1261 = vpack.c.bf16 %v1255, %v1254
        %v1262 = vpack.c.bf16 %v1257, %v1256
        %v1264 = vshrl.u32 %v1261, 16
        %v1266 = vrot.slane %v1264, 7
        %v1267 = vshll.u32 %v1261, 16
        %v1269 = vor.u32 %v1266, %v1267
        %v1270 = vrot.slane %v1266, 4
        %v1272 = vshrl.u32 %v1262, 16
        %v1274 = vrot.slane %v1272, 7
        %v1275 = vshll.u32 %v1262, 16
        %v1277 = vor.u32 %v1274, %v1275
        %v1278 = vsel %vm383, %v1270, %v1277
        %v1279 = vrot.slane %v1274, 4
        %v1283 = vld [vmem:[#allocation3] sm:$0xff]
        %v1284 = vsel %vm410, %v1269, %v1283
        %1285 = vst [vmem:[#allocation3] sm:$0xff] %v1284
        %1286 = vst [vmem:[#allocation3 + $0x8] sm:$0xff] %v1278
        %v1287 = vld [vmem:[#allocation3 + $0x10] sm:$0x11]
        %v1288 = vsel %vm420, %v1279, %v1287
        %1289 = vst [vmem:[#allocation3 + $0x10] sm:$0x11] %v1288
        %v1290 = vld [vmem:[#allocation3] sm:$0xff]
        %v1291 = vld [vmem:[#allocation3 + $0x8] sm:$0xff]
        %v1292 = vld [vmem:[#allocation9] sm:$0xff]
        %v1293 = vld [vmem:[#allocation9 + $0x8] sm:$0xff]
        %v1294 = vld [vmem:[#allocation9 + $0x10] sm:$0xff]
        %v1295 = vld [vmem:[#allocation9 + $0x18] sm:$0xff]
        %v1296 = vld [vmem:[#allocation9 + $0x20] sm:$0xff]
        %v1297 = vld [vmem:[#allocation9 + $0x28] sm:$0xff]
        %v1298 = vld [vmem:[#allocation9 + $0x30] sm:$0xff]
        %v1299 = vld [vmem:[#allocation9 + $0x38] sm:$0xff]
        %v1300 = vld [vmem:[#allocation9 + $0x40] sm:$0xff]
        %v1301 = vld [vmem:[#allocation9 + $0x48] sm:$0xff]
        %v1302 = vld [vmem:[#allocation9 + $0x50] sm:$0xff]
        %v1303 = vld [vmem:[#allocation9 + $0x58] sm:$0xff]
        %v1304 = vld [vmem:[#allocation9 + $0x60] sm:$0xff]
        %v1305 = vld [vmem:[#allocation9 + $0x68] sm:$0xff]
        %v1306 = vld [vmem:[#allocation9 + $0x70] sm:$0xff]
        %v1307 = vld [vmem:[#allocation9 + $0x78] sm:$0xff]
        %v1308 = vld [vmem:[#allocation9 + $0x80] sm:$0xff]
        %v1309 = vld [vmem:[#allocation9 + $0x88] sm:$0xff]
        %v1310 = vld [vmem:[#allocation9 + $0x90] sm:$0xff]
        %v1311 = vld [vmem:[#allocation9 + $0x98] sm:$0xff]
        %v1312 = vld [vmem:[#allocation9 + $0xa0] sm:$0xff]
        %v1313 = vld [vmem:[#allocation9 + $0xa8] sm:$0xff]
        %v1314 = vld [vmem:[#allocation9 + $0xb0] sm:$0xff]
        %v1315 = vld [vmem:[#allocation9 + $0xb8] sm:$0xff]
        %v1316 = vld [vmem:[#allocation9 + $0xc0] sm:$0xff]
        %v1317 = vld [vmem:[#allocation9 + $0xc8] sm:$0xff]
        %v1318 = vld [vmem:[#allocation9 + $0xd0] sm:$0xff]
        %v1319 = vld [vmem:[#allocation9 + $0xd8] sm:$0xff]
        %v1320 = vld [vmem:[#allocation9 + $0xe0] sm:$0xff]
        %v1321 = vld [vmem:[#allocation9 + $0xe8] sm:$0xff]
        %v1322 = vld [vmem:[#allocation9 + $0xf0] sm:$0xff]
        %v1323 = vld [vmem:[#allocation9 + $0xf8] sm:$0xff]
        %v1324 = vld [vmem:[#allocation3 + $0x10] sm:$0x11]
        %s1325 = scalar_lea.vmem [#allocation9], 256
        %v1326 = vld [vmem:[%s1325] sm:$0xff]
        %v1327 = vld [vmem:[%s1325 + $0x8] sm:$0xff]
        %v1328 = vld [vmem:[%s1325 + $0x10] sm:$0xff]
        %v1329 = vld [vmem:[%s1325 + $0x18] sm:$0xff]
        %v1330 = vld [vmem:[%s1325 + $0x20] sm:$0xff]
        %v1331 = vld [vmem:[%s1325 + $0x28] sm:$0xff]
        %v1332 = vld [vmem:[%s1325 + $0x30] sm:$0xff]
        %v1333 = vld [vmem:[%s1325 + $0x38] sm:$0xff]
        %v1334 = vld [vmem:[%s1325 + $0x40] sm:$0xff]
        %v1335 = vld [vmem:[%s1325 + $0x48] sm:$0xff]
        %v1336 = vld [vmem:[%s1325 + $0x50] sm:$0xff]
        %v1337 = vld [vmem:[%s1325 + $0x58] sm:$0xff]
        %v1338 = vld [vmem:[%s1325 + $0x60] sm:$0xff]
        %v1339 = vld [vmem:[%s1325 + $0x68] sm:$0xff]
        %v1340 = vld [vmem:[%s1325 + $0x70] sm:$0xff]
        %v1341 = vld [vmem:[%s1325 + $0x78] sm:$0xff]
        %v1342 = vld [vmem:[%s1325 + $0x80] sm:$0xff]
        %v1343 = vld [vmem:[%s1325 + $0x88] sm:$0xff]
        %v1344 = vld [vmem:[%s1325 + $0x90] sm:$0xff]
        %v1345 = vld [vmem:[%s1325 + $0x98] sm:$0xff]
        %v1346 = vld [vmem:[%s1325 + $0xa0] sm:$0xff]
        %v1347 = vld [vmem:[%s1325 + $0xa8] sm:$0xff]
        %v1348 = vld [vmem:[%s1325 + $0xb0] sm:$0xff]
        %v1349 = vld [vmem:[%s1325 + $0xb8] sm:$0xff]
        %v1350 = vld [vmem:[%s1325 + $0xc0] sm:$0xff]
        %v1351 = vld [vmem:[%s1325 + $0xc8] sm:$0xff]
        %v1352 = vld [vmem:[%s1325 + $0xd0] sm:$0xff]
        %v1353 = vld [vmem:[%s1325 + $0xd8] sm:$0xff]
        %v1354 = vld [vmem:[%s1325 + $0xe0] sm:$0xff]
        %v1355 = vld [vmem:[%s1325 + $0xe8] sm:$0xff]
        %v1356 = vld [vmem:[%s1325 + $0xf0] sm:$0xff]
        %v1357 = vld [vmem:[%s1325 + $0xf8] sm:$0xff]
        %v1361 = vunpack.c.l.b16 %v1290
        %v1362 = vunpack.c.h.b16 %v1290
        %v1363 = vunpack.c.l.b16 %v1291
        %v1364 = vunpack.c.h.b16 %v1291
        %v1365 = vunpack.c.l.b16 %v1324
        %v1366 = vunpack.c.h.b16 %v1324
        %v1367 = vpack.c.b16 %v1363, %v1361
        %v1368 = vpack.c.b16 %v1364, %v1362
        %v1369 = vpack.c.b16 %v1365, %v1365
        %v1370 = vpack.c.b16 %v1366, %v1366
        %v1372 = vshrl.u32 %v1367, 16
        %v1374 = vshll.u32 %v1367, 16
        %v1376 = vrot.slane %v1374, 1
        %v1377 = vor.u32 %v1372, %v1376
        %v1379 = vshll.u32 %v1369, 16
        %v1381 = vrot.slane %v1379, 1
        %v1382 = vsel %vm505, %v1377, %v1381
        %v1384 = vshrl.u32 %v1368, 16
        %v1386 = vshll.u32 %v1368, 16
        %v1388 = vrot.slane %v1386, 1
        %v1389 = vor.u32 %v1384, %v1388
        %v1391 = vshll.u32 %v1370, 16
        %v1393 = vrot.slane %v1391, 1
        %v1394 = vsel %vm505, %v1389, %v1393
        %v1429 = vunpack.c.l.b16 %v1326
        %v1430 = vunpack.c.h.b16 %v1326
        %v1431 = vunpack.c.l.b16 %v1327
        %v1432 = vunpack.c.h.b16 %v1327
        %v1433 = vunpack.c.l.b16 %v1328
        %v1434 = vunpack.c.h.b16 %v1328
        %v1435 = vunpack.c.l.b16 %v1329
        %v1436 = vunpack.c.h.b16 %v1329
        %v1437 = vunpack.c.l.b16 %v1330
        %v1438 = vunpack.c.h.b16 %v1330
        %v1439 = vunpack.c.l.b16 %v1331
        %v1440 = vunpack.c.h.b16 %v1331
        %v1441 = vunpack.c.l.b16 %v1332
        %v1442 = vunpack.c.h.b16 %v1332
        %v1443 = vunpack.c.l.b16 %v1333
        %v1444 = vunpack.c.h.b16 %v1333
        %v1445 = vunpack.c.l.b16 %v1334
        %v1446 = vunpack.c.h.b16 %v1334
        %v1447 = vunpack.c.l.b16 %v1335
        %v1448 = vunpack.c.h.b16 %v1335
        %v1449 = vunpack.c.l.b16 %v1336
        %v1450 = vunpack.c.h.b16 %v1336
        %v1451 = vunpack.c.l.b16 %v1337
        %v1452 = vunpack.c.h.b16 %v1337
        %v1453 = vunpack.c.l.b16 %v1338
        %v1454 = vunpack.c.h.b16 %v1338
        %v1455 = vunpack.c.l.b16 %v1339
        %v1456 = vunpack.c.h.b16 %v1339
        %v1457 = vunpack.c.l.b16 %v1340
        %v1458 = vunpack.c.h.b16 %v1340
        %v1459 = vunpack.c.l.b16 %v1341
        %v1460 = vunpack.c.h.b16 %v1341
        %v1461 = vunpack.c.l.b16 %v1342
        %v1462 = vunpack.c.h.b16 %v1342
        %v1463 = vunpack.c.l.b16 %v1343
        %v1464 = vunpack.c.h.b16 %v1343
        %v1465 = vunpack.c.l.b16 %v1344
        %v1466 = vunpack.c.h.b16 %v1344
        %v1467 = vunpack.c.l.b16 %v1345
        %v1468 = vunpack.c.h.b16 %v1345
        %v1469 = vunpack.c.l.b16 %v1346
        %v1470 = vunpack.c.h.b16 %v1346
        %v1471 = vunpack.c.l.b16 %v1347
        %v1472 = vunpack.c.h.b16 %v1347
        %v1473 = vunpack.c.l.b16 %v1348
        %v1474 = vunpack.c.h.b16 %v1348
        %v1475 = vunpack.c.l.b16 %v1349
        %v1476 = vunpack.c.h.b16 %v1349
        %v1477 = vunpack.c.l.b16 %v1350
        %v1478 = vunpack.c.h.b16 %v1350
        %v1479 = vunpack.c.l.b16 %v1351
        %v1480 = vunpack.c.h.b16 %v1351
        %v1481 = vunpack.c.l.b16 %v1352
        %v1482 = vunpack.c.h.b16 %v1352
        %v1483 = vunpack.c.l.b16 %v1353
        %v1484 = vunpack.c.h.b16 %v1353
        %v1485 = vunpack.c.l.b16 %v1354
        %v1486 = vunpack.c.h.b16 %v1354
        %v1487 = vunpack.c.l.b16 %v1355
        %v1488 = vunpack.c.h.b16 %v1355
        %v1489 = vunpack.c.l.b16 %v1356
        %v1490 = vunpack.c.h.b16 %v1356
        %v1491 = vunpack.c.l.b16 %v1357
        %v1492 = vunpack.c.h.b16 %v1357
        %v1493 = vpack.c.b16 %v1431, %v1429
        %v1494 = vpack.c.b16 %v1432, %v1430
        %v1495 = vpack.c.b16 %v1435, %v1433
        %v1496 = vpack.c.b16 %v1436, %v1434
        %v1497 = vpack.c.b16 %v1439, %v1437
        %v1498 = vpack.c.b16 %v1440, %v1438
        %v1499 = vpack.c.b16 %v1443, %v1441
        %v1500 = vpack.c.b16 %v1444, %v1442
        %v1501 = vpack.c.b16 %v1447, %v1445
        %v1502 = vpack.c.b16 %v1448, %v1446
        %v1503 = vpack.c.b16 %v1451, %v1449
        %v1504 = vpack.c.b16 %v1452, %v1450
        %v1505 = vpack.c.b16 %v1455, %v1453
        %v1506 = vpack.c.b16 %v1456, %v1454
        %v1507 = vpack.c.b16 %v1459, %v1457
        %v1508 = vpack.c.b16 %v1460, %v1458
        %v1509 = vpack.c.b16 %v1463, %v1461
        %v1510 = vpack.c.b16 %v1464, %v1462
        %v1511 = vpack.c.b16 %v1467, %v1465
        %v1512 = vpack.c.b16 %v1468, %v1466
        %v1513 = vpack.c.b16 %v1471, %v1469
        %v1514 = vpack.c.b16 %v1472, %v1470
        %v1515 = vpack.c.b16 %v1475, %v1473
        %v1516 = vpack.c.b16 %v1476, %v1474
        %v1517 = vpack.c.b16 %v1479, %v1477
        %v1518 = vpack.c.b16 %v1480, %v1478
        %v1519 = vpack.c.b16 %v1483, %v1481
        %v1520 = vpack.c.b16 %v1484, %v1482
        %v1521 = vpack.c.b16 %v1487, %v1485
        %v1522 = vpack.c.b16 %v1488, %v1486
        %v1523 = vpack.c.b16 %v1491, %v1489
        %v1524 = vpack.c.b16 %v1492, %v1490
        %1557 = vmatpush.bf16.msra.mxu0 %v1507
        %1558 = vmatpush.bf16.msra.mxu0 %v1505
        %1559 = vmatpush.bf16.msra.mxu0 %v1503
        %1560 = vmatpush.bf16.msra.mxu0 %v1501
        %1561 = vmatpush.bf16.msra.mxu0 %v1499
        %1562 = vmatpush.bf16.msra.mxu0 %v1497
        %1563 = vmatpush.bf16.msra.mxu0 %v1495
        %1564 = vmatpush.bf16.msra.mxu0 %v1493
        %1565 = vmatmul.bf16.gmra.mxu0 %v1382
        %v1566 = vpop.f32.mrf.mxu0
        %v1567 = vadd.f32 0.0, %v1566
        %v1568 = vpop.f32.mrf.mxu0
        %v1569 = vadd.f32 0.0, %v1568
        %1570 = vdwg.mxu0
        %1571 = vmatpush.bf16.msra.mxu0 %v1523
        %1572 = vmatpush.bf16.msra.mxu0 %v1521
        %1573 = vmatpush.bf16.msra.mxu0 %v1519
        %1574 = vmatpush.bf16.msra.mxu0 %v1517
        %1575 = vmatpush.bf16.msra.mxu0 %v1515
        %1576 = vmatpush.bf16.msra.mxu0 %v1513
        %1577 = vmatpush.bf16.msra.mxu0 %v1511
        %1578 = vmatpush.bf16.msra.mxu0 %v1509
        %1579 = vmatmul.bf16.gmra.mxu0 %v1394
        %v1580 = vpop.f32.mrf.mxu0
        %v1581 = vadd.f32 %v1567, %v1580
        %v1582 = vpop.f32.mrf.mxu0
        %v1583 = vadd.f32 %v1569, %v1582
        %1584 = vdwg.mxu0
        %1585 = vmatpush.bf16.msra.mxu0 %v1508
        %1586 = vmatpush.bf16.msra.mxu0 %v1506
        %1587 = vmatpush.bf16.msra.mxu0 %v1504
        %1588 = vmatpush.bf16.msra.mxu0 %v1502
        %1589 = vmatpush.bf16.msra.mxu0 %v1500
        %1590 = vmatpush.bf16.msra.mxu0 %v1498
        %1591 = vmatpush.bf16.msra.mxu0 %v1496
        %1592 = vmatpush.bf16.msra.mxu0 %v1494
        %1593 = vmatmul.bf16.gmra.mxu0 %v1382
        %v1594 = vpop.f32.mrf.mxu0
        %v1595 = vadd.f32 0.0, %v1594
        %v1596 = vpop.f32.mrf.mxu0
        %v1597 = vadd.f32 0.0, %v1596
        %1598 = vdwg.mxu0
        %1599 = vmatpush.bf16.msra.mxu0 %v1524
        %1600 = vmatpush.bf16.msra.mxu0 %v1522
        %1601 = vmatpush.bf16.msra.mxu0 %v1520
        %1602 = vmatpush.bf16.msra.mxu0 %v1518
        %1603 = vmatpush.bf16.msra.mxu0 %v1516
        %1604 = vmatpush.bf16.msra.mxu0 %v1514
        %1605 = vmatpush.bf16.msra.mxu0 %v1512
        %1606 = vmatpush.bf16.msra.mxu0 %v1510
        %1607 = vmatmul.bf16.gmra.mxu0 %v1394
        %v1608 = vpop.f32.mrf.mxu0
        %v1609 = vadd.f32 %v1595, %v1608
        %v1610 = vpop.f32.mrf.mxu0
        %v1611 = vadd.f32 %v1597, %v1610
        %1612 = vdwg.mxu0
        %v1647 = vunpack.c.l.b16 %v1292
        %v1648 = vunpack.c.h.b16 %v1292
        %v1649 = vunpack.c.l.b16 %v1293
        %v1650 = vunpack.c.h.b16 %v1293
        %v1651 = vunpack.c.l.b16 %v1294
        %v1652 = vunpack.c.h.b16 %v1294
        %v1653 = vunpack.c.l.b16 %v1295
        %v1654 = vunpack.c.h.b16 %v1295
        %v1655 = vunpack.c.l.b16 %v1296
        %v1656 = vunpack.c.h.b16 %v1296
        %v1657 = vunpack.c.l.b16 %v1297
        %v1658 = vunpack.c.h.b16 %v1297
        %v1659 = vunpack.c.l.b16 %v1298
        %v1660 = vunpack.c.h.b16 %v1298
        %v1661 = vunpack.c.l.b16 %v1299
        %v1662 = vunpack.c.h.b16 %v1299
        %v1663 = vunpack.c.l.b16 %v1300
        %v1664 = vunpack.c.h.b16 %v1300
        %v1665 = vunpack.c.l.b16 %v1301
        %v1666 = vunpack.c.h.b16 %v1301
        %v1667 = vunpack.c.l.b16 %v1302
        %v1668 = vunpack.c.h.b16 %v1302
        %v1669 = vunpack.c.l.b16 %v1303
        %v1670 = vunpack.c.h.b16 %v1303
        %v1671 = vunpack.c.l.b16 %v1304
        %v1672 = vunpack.c.h.b16 %v1304
        %v1673 = vunpack.c.l.b16 %v1305
        %v1674 = vunpack.c.h.b16 %v1305
        %v1675 = vunpack.c.l.b16 %v1306
        %v1676 = vunpack.c.h.b16 %v1306
        %v1677 = vunpack.c.l.b16 %v1307
        %v1678 = vunpack.c.h.b16 %v1307
        %v1679 = vunpack.c.l.b16 %v1308
        %v1680 = vunpack.c.h.b16 %v1308
        %v1681 = vunpack.c.l.b16 %v1309
        %v1682 = vunpack.c.h.b16 %v1309
        %v1683 = vunpack.c.l.b16 %v1310
        %v1684 = vunpack.c.h.b16 %v1310
        %v1685 = vunpack.c.l.b16 %v1311
        %v1686 = vunpack.c.h.b16 %v1311
        %v1687 = vunpack.c.l.b16 %v1312
        %v1688 = vunpack.c.h.b16 %v1312
        %v1689 = vunpack.c.l.b16 %v1313
        %v1690 = vunpack.c.h.b16 %v1313
        %v1691 = vunpack.c.l.b16 %v1314
        %v1692 = vunpack.c.h.b16 %v1314
        %v1693 = vunpack.c.l.b16 %v1315
        %v1694 = vunpack.c.h.b16 %v1315
        %v1695 = vunpack.c.l.b16 %v1316
        %v1696 = vunpack.c.h.b16 %v1316
        %v1697 = vunpack.c.l.b16 %v1317
        %v1698 = vunpack.c.h.b16 %v1317
        %v1699 = vunpack.c.l.b16 %v1318
        %v1700 = vunpack.c.h.b16 %v1318
        %v1701 = vunpack.c.l.b16 %v1319
        %v1702 = vunpack.c.h.b16 %v1319
        %v1703 = vunpack.c.l.b16 %v1320
        %v1704 = vunpack.c.h.b16 %v1320
        %v1705 = vunpack.c.l.b16 %v1321
        %v1706 = vunpack.c.h.b16 %v1321
        %v1707 = vunpack.c.l.b16 %v1322
        %v1708 = vunpack.c.h.b16 %v1322
        %v1709 = vunpack.c.l.b16 %v1323
        %v1710 = vunpack.c.h.b16 %v1323
        %v1711 = vpack.c.b16 %v1649, %v1647
        %v1712 = vpack.c.b16 %v1650, %v1648
        %v1713 = vpack.c.b16 %v1653, %v1651
        %v1714 = vpack.c.b16 %v1654, %v1652
        %v1715 = vpack.c.b16 %v1657, %v1655
        %v1716 = vpack.c.b16 %v1658, %v1656
        %v1717 = vpack.c.b16 %v1661, %v1659
        %v1718 = vpack.c.b16 %v1662, %v1660
        %v1719 = vpack.c.b16 %v1665, %v1663
        %v1720 = vpack.c.b16 %v1666, %v1664
        %v1721 = vpack.c.b16 %v1669, %v1667
        %v1722 = vpack.c.b16 %v1670, %v1668
        %v1723 = vpack.c.b16 %v1673, %v1671
        %v1724 = vpack.c.b16 %v1674, %v1672
        %v1725 = vpack.c.b16 %v1677, %v1675
        %v1726 = vpack.c.b16 %v1678, %v1676
        %v1727 = vpack.c.b16 %v1681, %v1679
        %v1728 = vpack.c.b16 %v1682, %v1680
        %v1729 = vpack.c.b16 %v1685, %v1683
        %v1730 = vpack.c.b16 %v1686, %v1684
        %v1731 = vpack.c.b16 %v1689, %v1687
        %v1732 = vpack.c.b16 %v1690, %v1688
        %v1733 = vpack.c.b16 %v1693, %v1691
        %v1734 = vpack.c.b16 %v1694, %v1692
        %v1735 = vpack.c.b16 %v1697, %v1695
        %v1736 = vpack.c.b16 %v1698, %v1696
        %v1737 = vpack.c.b16 %v1701, %v1699
        %v1738 = vpack.c.b16 %v1702, %v1700
        %v1739 = vpack.c.b16 %v1705, %v1703
        %v1740 = vpack.c.b16 %v1706, %v1704
        %v1741 = vpack.c.b16 %v1709, %v1707
        %v1742 = vpack.c.b16 %v1710, %v1708
        %1775 = vmatpush.bf16.msra.mxu0 %v1725
        %1776 = vmatpush.bf16.msra.mxu0 %v1723
        %1777 = vmatpush.bf16.msra.mxu0 %v1721
        %1778 = vmatpush.bf16.msra.mxu0 %v1719
        %1779 = vmatpush.bf16.msra.mxu0 %v1717
        %1780 = vmatpush.bf16.msra.mxu0 %v1715
        %1781 = vmatpush.bf16.msra.mxu0 %v1713
        %1782 = vmatpush.bf16.msra.mxu0 %v1711
        %1783 = vmatmul.bf16.gmra.mxu0 %v1367
        %v1784 = vpop.f32.mrf.mxu0
        %v1785 = vadd.f32 %v1581, %v1784
        %v1786 = vpop.f32.mrf.mxu0
        %v1787 = vadd.f32 %v1583, %v1786
        %1788 = vdwg.mxu0
        %1789 = vmatpush.bf16.msra.mxu0 %v1741
        %1790 = vmatpush.bf16.msra.mxu0 %v1739
        %1791 = vmatpush.bf16.msra.mxu0 %v1737
        %1792 = vmatpush.bf16.msra.mxu0 %v1735
        %1793 = vmatpush.bf16.msra.mxu0 %v1733
        %1794 = vmatpush.bf16.msra.mxu0 %v1731
        %1795 = vmatpush.bf16.msra.mxu0 %v1729
        %1796 = vmatpush.bf16.msra.mxu0 %v1727
        %1797 = vmatmul.bf16.gmra.mxu0 %v1368
        %v1798 = vpop.f32.mrf.mxu0
        %v1799 = vadd.f32 %v1785, %v1798
        %v1800 = vpop.f32.mrf.mxu0
        %v1801 = vadd.f32 %v1787, %v1800
        %1802 = vdwg.mxu0
        %1803 = vmatpush.bf16.msra.mxu0 %v1726
        %1804 = vmatpush.bf16.msra.mxu0 %v1724
        %1805 = vmatpush.bf16.msra.mxu0 %v1722
        %1806 = vmatpush.bf16.msra.mxu0 %v1720
        %1807 = vmatpush.bf16.msra.mxu0 %v1718
        %1808 = vmatpush.bf16.msra.mxu0 %v1716
        %1809 = vmatpush.bf16.msra.mxu0 %v1714
        %1810 = vmatpush.bf16.msra.mxu0 %v1712
        %1811 = vmatmul.bf16.gmra.mxu0 %v1367
        %v1812 = vpop.f32.mrf.mxu0
        %v1813 = vadd.f32 %v1609, %v1812
        %v1814 = vpop.f32.mrf.mxu0
        %v1815 = vadd.f32 %v1611, %v1814
        %1816 = vdwg.mxu0
        %1817 = vmatpush.bf16.msra.mxu0 %v1742
        %1818 = vmatpush.bf16.msra.mxu0 %v1740
        %1819 = vmatpush.bf16.msra.mxu0 %v1738
        %1820 = vmatpush.bf16.msra.mxu0 %v1736
        %1821 = vmatpush.bf16.msra.mxu0 %v1734
        %1822 = vmatpush.bf16.msra.mxu0 %v1732
        %1823 = vmatpush.bf16.msra.mxu0 %v1730
        %1824 = vmatpush.bf16.msra.mxu0 %v1728
        %1825 = vmatmul.bf16.gmra.mxu0 %v1368
        %v1826 = vpop.f32.mrf.mxu0
        %v1827 = vadd.f32 %v1813, %v1826
        %v1828 = vpop.f32.mrf.mxu0
        %v1829 = vadd.f32 %v1815, %v1828
        %1830 = vdwg.mxu0
        %v1831 = vld [vmem:[#allocation3] sm:$0xee]
        %s1832 = scalar_lea.vmem [#allocation9], 512
        %v1833 = vld [vmem:[%s1832] sm:$0xff]
        %v1834 = vld [vmem:[%s1832 + $0x8] sm:$0xff]
        %v1835 = vld [vmem:[%s1832 + $0x10] sm:$0xff]
        %v1836 = vld [vmem:[%s1832 + $0x18] sm:$0xff]
        %v1837 = vld [vmem:[%s1832 + $0x20] sm:$0xff]
        %v1838 = vld [vmem:[%s1832 + $0x28] sm:$0xff]
        %v1839 = vld [vmem:[%s1832 + $0x30] sm:$0xff]
        %v1840 = vld [vmem:[%s1832 + $0x38] sm:$0xff]
        %v1841 = vld [vmem:[%s1832 + $0x40] sm:$0xff]
        %v1842 = vld [vmem:[%s1832 + $0x48] sm:$0xff]
        %v1843 = vld [vmem:[%s1832 + $0x50] sm:$0xff]
        %v1844 = vld [vmem:[%s1832 + $0x58] sm:$0xff]
        %v1845 = vld [vmem:[%s1832 + $0x60] sm:$0xff]
        %v1846 = vld [vmem:[%s1832 + $0x68] sm:$0xff]
        %v1847 = vld [vmem:[%s1832 + $0x70] sm:$0xff]
        %v1848 = vld [vmem:[%s1832 + $0x78] sm:$0xff]
        %v1849 = vld [vmem:[%s1832 + $0x80] sm:$0xff]
        %v1850 = vld [vmem:[%s1832 + $0x88] sm:$0xff]
        %v1851 = vld [vmem:[%s1832 + $0x90] sm:$0xff]
        %v1852 = vld [vmem:[%s1832 + $0x98] sm:$0xff]
        %v1853 = vld [vmem:[%s1832 + $0xa0] sm:$0xff]
        %v1854 = vld [vmem:[%s1832 + $0xa8] sm:$0xff]
        %v1855 = vld [vmem:[%s1832 + $0xb0] sm:$0xff]
        %v1856 = vld [vmem:[%s1832 + $0xb8] sm:$0xff]
        %v1857 = vld [vmem:[%s1832 + $0xc0] sm:$0xff]
        %v1858 = vld [vmem:[%s1832 + $0xc8] sm:$0xff]
        %v1859 = vld [vmem:[%s1832 + $0xd0] sm:$0xff]
        %v1860 = vld [vmem:[%s1832 + $0xd8] sm:$0xff]
        %v1861 = vld [vmem:[%s1832 + $0xe0] sm:$0xff]
        %v1862 = vld [vmem:[%s1832 + $0xe8] sm:$0xff]
        %v1863 = vld [vmem:[%s1832 + $0xf0] sm:$0xff]
        %v1864 = vld [vmem:[%s1832 + $0xf8] sm:$0xff]
        %v1866 = vunpack.c.l.b16 %v1831
        %v1867 = vunpack.c.h.b16 %v1831
        %v1868 = vpack.c.b16 %v1363, %v1866
        %v1869 = vpack.c.b16 %v1364, %v1867
        %v1870 = vrot.slane %v1868, 1
        %v1871 = vrot.slane %v1369, 1
        %v1872 = vsel %vm1005, %v1870, %v1871
        %v1873 = vrot.slane %v1869, 1
        %v1874 = vrot.slane %v1370, 1
        %v1875 = vsel %vm1005, %v1873, %v1874
        %v1910 = vunpack.c.l.b16 %v1833
        %v1911 = vunpack.c.h.b16 %v1833
        %v1912 = vunpack.c.l.b16 %v1834
        %v1913 = vunpack.c.h.b16 %v1834
        %v1914 = vunpack.c.l.b16 %v1835
        %v1915 = vunpack.c.h.b16 %v1835
        %v1916 = vunpack.c.l.b16 %v1836
        %v1917 = vunpack.c.h.b16 %v1836
        %v1918 = vunpack.c.l.b16 %v1837
        %v1919 = vunpack.c.h.b16 %v1837
        %v1920 = vunpack.c.l.b16 %v1838
        %v1921 = vunpack.c.h.b16 %v1838
        %v1922 = vunpack.c.l.b16 %v1839
        %v1923 = vunpack.c.h.b16 %v1839
        %v1924 = vunpack.c.l.b16 %v1840
        %v1925 = vunpack.c.h.b16 %v1840
        %v1926 = vunpack.c.l.b16 %v1841
        %v1927 = vunpack.c.h.b16 %v1841
        %v1928 = vunpack.c.l.b16 %v1842
        %v1929 = vunpack.c.h.b16 %v1842
        %v1930 = vunpack.c.l.b16 %v1843
        %v1931 = vunpack.c.h.b16 %v1843
        %v1932 = vunpack.c.l.b16 %v1844
        %v1933 = vunpack.c.h.b16 %v1844
        %v1934 = vunpack.c.l.b16 %v1845
        %v1935 = vunpack.c.h.b16 %v1845
        %v1936 = vunpack.c.l.b16 %v1846
        %v1937 = vunpack.c.h.b16 %v1846
        %v1938 = vunpack.c.l.b16 %v1847
        %v1939 = vunpack.c.h.b16 %v1847
        %v1940 = vunpack.c.l.b16 %v1848
        %v1941 = vunpack.c.h.b16 %v1848
        %v1942 = vunpack.c.l.b16 %v1849
        %v1943 = vunpack.c.h.b16 %v1849
        %v1944 = vunpack.c.l.b16 %v1850
        %v1945 = vunpack.c.h.b16 %v1850
        %v1946 = vunpack.c.l.b16 %v1851
        %v1947 = vunpack.c.h.b16 %v1851
        %v1948 = vunpack.c.l.b16 %v1852
        %v1949 = vunpack.c.h.b16 %v1852
        %v1950 = vunpack.c.l.b16 %v1853
        %v1951 = vunpack.c.h.b16 %v1853
        %v1952 = vunpack.c.l.b16 %v1854
        %v1953 = vunpack.c.h.b16 %v1854
        %v1954 = vunpack.c.l.b16 %v1855
        %v1955 = vunpack.c.h.b16 %v1855
        %v1956 = vunpack.c.l.b16 %v1856
        %v1957 = vunpack.c.h.b16 %v1856
        %v1958 = vunpack.c.l.b16 %v1857
        %v1959 = vunpack.c.h.b16 %v1857
        %v1960 = vunpack.c.l.b16 %v1858
        %v1961 = vunpack.c.h.b16 %v1858
        %v1962 = vunpack.c.l.b16 %v1859
        %v1963 = vunpack.c.h.b16 %v1859
        %v1964 = vunpack.c.l.b16 %v1860
        %v1965 = vunpack.c.h.b16 %v1860
        %v1966 = vunpack.c.l.b16 %v1861
        %v1967 = vunpack.c.h.b16 %v1861
        %v1968 = vunpack.c.l.b16 %v1862
        %v1969 = vunpack.c.h.b16 %v1862
        %v1970 = vunpack.c.l.b16 %v1863
        %v1971 = vunpack.c.h.b16 %v1863
        %v1972 = vunpack.c.l.b16 %v1864
        %v1973 = vunpack.c.h.b16 %v1864
        %v1974 = vpack.c.b16 %v1912, %v1910
        %v1975 = vpack.c.b16 %v1913, %v1911
        %v1976 = vpack.c.b16 %v1916, %v1914
        %v1977 = vpack.c.b16 %v1917, %v1915
        %v1978 = vpack.c.b16 %v1920, %v1918
        %v1979 = vpack.c.b16 %v1921, %v1919
        %v1980 = vpack.c.b16 %v1924, %v1922
        %v1981 = vpack.c.b16 %v1925, %v1923
        %v1982 = vpack.c.b16 %v1928, %v1926
        %v1983 = vpack.c.b16 %v1929, %v1927
        %v1984 = vpack.c.b16 %v1932, %v1930
        %v1985 = vpack.c.b16 %v1933, %v1931
        %v1986 = vpack.c.b16 %v1936, %v1934
        %v1987 = vpack.c.b16 %v1937, %v1935
        %v1988 = vpack.c.b16 %v1940, %v1938
        %v1989 = vpack.c.b16 %v1941, %v1939
        %v1990 = vpack.c.b16 %v1944, %v1942
        %v1991 = vpack.c.b16 %v1945, %v1943
        %v1992 = vpack.c.b16 %v1948, %v1946
        %v1993 = vpack.c.b16 %v1949, %v1947
        %v1994 = vpack.c.b16 %v1952, %v1950
        %v1995 = vpack.c.b16 %v1953, %v1951
        %v1996 = vpack.c.b16 %v1956, %v1954
        %v1997 = vpack.c.b16 %v1957, %v1955
        %v1998 = vpack.c.b16 %v1960, %v1958
        %v1999 = vpack.c.b16 %v1961, %v1959
        %v2000 = vpack.c.b16 %v1964, %v1962
        %v2001 = vpack.c.b16 %v1965, %v1963
        %v2002 = vpack.c.b16 %v1968, %v1966
        %v2003 = vpack.c.b16 %v1969, %v1967
        %v2004 = vpack.c.b16 %v1972, %v1970
        %v2005 = vpack.c.b16 %v1973, %v1971
        %2038 = vmatpush.bf16.msra.mxu0 %v1988
        %2039 = vmatpush.bf16.msra.mxu0 %v1986
        %2040 = vmatpush.bf16.msra.mxu0 %v1984
        %2041 = vmatpush.bf16.msra.mxu0 %v1982
        %2042 = vmatpush.bf16.msra.mxu0 %v1980
        %2043 = vmatpush.bf16.msra.mxu0 %v1978
        %2044 = vmatpush.bf16.msra.mxu0 %v1976
        %2045 = vmatpush.bf16.msra.mxu0 %v1974
        %2046 = vmatmul.bf16.gmra.mxu0 %v1872
        %v2047 = vpop.f32.mrf.mxu0
        %v2048 = vadd.f32 0.0, %v2047
        %v2049 = vpop.f32.mrf.mxu0
        %v2050 = vadd.f32 0.0, %v2049
        %2051 = vdwg.mxu0
        %2052 = vmatpush.bf16.msra.mxu0 %v2004
        %2053 = vmatpush.bf16.msra.mxu0 %v2002
        %2054 = vmatpush.bf16.msra.mxu0 %v2000
        %2055 = vmatpush.bf16.msra.mxu0 %v1998
        %2056 = vmatpush.bf16.msra.mxu0 %v1996
        %2057 = vmatpush.bf16.msra.mxu0 %v1994
        %2058 = vmatpush.bf16.msra.mxu0 %v1992
        %2059 = vmatpush.bf16.msra.mxu0 %v1990
        %2060 = vmatmul.bf16.gmra.mxu0 %v1875
        %v2061 = vpop.f32.mrf.mxu0
        %v2062 = vadd.f32 %v2048, %v2061
        %v2063 = vpop.f32.mrf.mxu0
        %v2064 = vadd.f32 %v2050, %v2063
        %2065 = vdwg.mxu0
        %2066 = vmatpush.bf16.msra.mxu0 %v1989
        %2067 = vmatpush.bf16.msra.mxu0 %v1987
        %2068 = vmatpush.bf16.msra.mxu0 %v1985
        %2069 = vmatpush.bf16.msra.mxu0 %v1983
        %2070 = vmatpush.bf16.msra.mxu0 %v1981
        %2071 = vmatpush.bf16.msra.mxu0 %v1979
        %2072 = vmatpush.bf16.msra.mxu0 %v1977
        %2073 = vmatpush.bf16.msra.mxu0 %v1975
        %2074 = vmatmul.bf16.gmra.mxu0 %v1872
        %v2075 = vpop.f32.mrf.mxu0
        %v2076 = vadd.f32 0.0, %v2075
        %v2077 = vpop.f32.mrf.mxu0
        %v2078 = vadd.f32 0.0, %v2077
        %2079 = vdwg.mxu0
        %2080 = vmatpush.bf16.msra.mxu0 %v2005
        %2081 = vmatpush.bf16.msra.mxu0 %v2003
        %2082 = vmatpush.bf16.msra.mxu0 %v2001
        %2083 = vmatpush.bf16.msra.mxu0 %v1999
        %2084 = vmatpush.bf16.msra.mxu0 %v1997
        %2085 = vmatpush.bf16.msra.mxu0 %v1995
        %2086 = vmatpush.bf16.msra.mxu0 %v1993
        %2087 = vmatpush.bf16.msra.mxu0 %v1991
        %2088 = vmatmul.bf16.gmra.mxu0 %v1875
        %v2089 = vpop.f32.mrf.mxu0
        %v2090 = vadd.f32 %v2076, %v2089
        %v2091 = vpop.f32.mrf.mxu0
        %v2092 = vadd.f32 %v2078, %v2091
        %2093 = vdwg.mxu0
        %v2094 = vadd.f32 %v1799, %v2062
        %v2095 = vadd.f32 %v1827, %v2090
        %v2096 = vadd.f32 %v1801, %v2064
        %v2097 = vadd.f32 %v1829, %v2092
        %v2098 = vld [vmem:[#allocation11] sm:$0x3]
        %v2100 = vperm.slane %v2098, 0
        %v2101 = vperm.slane %v2098, 1
        %v2104 = vmul.f32 %v2094, %v2100
        %v2105 = vmul.f32 %v2095, %v2101
        %v2106 = vmul.f32 %v2096, %v2100
        %v2107 = vmul.f32 %v2097, %v2101
        %v2108 = vld [vmem:[#allocation12] sm:$0x3]
        %v2110 = vperm.slane %v2108, 0
        %v2111 = vperm.slane %v2108, 1
        %v2114 = vadd.f32 %v2104, %v2110
        %v2115 = vadd.f32 %v2105, %v2111
        %v2116 = vadd.f32 %v2106, %v2110
        %v2117 = vadd.f32 %v2107, %v2111
        %v2118 = vld [vmem:[%s365] sm:$0xff]
        %v2119 = vld [vmem:[%s365 + $0x8] sm:$0xff]
        %v2120 = vld [vmem:[%s365 + $0x10] sm:$0xff]
        %v2121 = vld [vmem:[%s365 + $0x18] sm:$0xff]
        %v2122 = vadd.f32 %v2114, %v2118
        %v2123 = vadd.f32 %v2115, %v2119
        %v2124 = vadd.f32 %v2116, %v2120
        %v2125 = vadd.f32 %v2117, %v2121
        %v2126 = vmax.f32 %v2122, 0.0
        %v2127 = vmax.f32 %v2123, 0.0
        %v2128 = vmax.f32 %v2124, 0.0
        %v2129 = vmax.f32 %v2125, 0.0
        %2130 = vst [vmem:[%s370] sm:$0xff] %v2126
        %2131 = vst [vmem:[%s370 + $0x8] sm:$0xff] %v2127
        %2132 = vst [vmem:[%s370 + $0x10] sm:$0xff] %v2128
        %2133 = vst [vmem:[%s370 + $0x18] sm:$0xff] %v2129
        %p2134 = scmp.lt.s32.totalorder %s22, 1
        %s2135 = scalar_select %p2134, %s22, 1
        %s2136 = smul.addr %s2135, 4
        %s2137 = smul.addr %s2136, 8
        %s2138 = scalar_lea.vmem %s7, %s2137
        // Predicated region
        $region73: #{resnet_forward.6} parent=47 // pred_check
          %p2139 = pneg %p192
        $region74: #{resnet_forward.6} parent=47 // pred_check_branch
          %2141 = sbr.rel (%p2139) target = $region76
        $region75: #{resnet_forward.6} parent=47 // pred_region
          _
        $region76: #{resnet_forward.6} parent=47 // pred_fallthru
          _
      $region48: #{resnet_forward.6} parent=5 // pred_fallthru
        _
      %p2142 = scmp.le.s32.totalorder 2, %s17
      // Predicated region
      $region77: #{resnet_forward.6} parent=5 // pred_check
        %p2143 = pneg %p2142
      $region78: #{resnet_forward.6} parent=5 // pred_check_branch
        %2145 = sbr.rel (%p2143) target = $region80
      $region79: #{resnet_forward.6} parent=5 // pred_region
        %s2146 = ssub.s32 %s17, 2
        // Predicated region
        $region81: #{resnet_forward.6} parent=79 // pred_check
          %p2147 = pneg %p198
        $region82: #{resnet_forward.6} parent=79 // pred_check_branch
          %2149 = sbr.rel (%p2147) target = $region84
        $region83: #{resnet_forward.6} parent=79 // pred_region
          %p2150 = scmp.lt.s32.totalorder %s23, 1
          %s2151 = scalar_select %p2150, %s23, 1
          %s2152 = smul.addr %s2151, 4
          %s2153 = smul.addr %s2152, 8
          %s2154 = scalar_lea.vmem %s7, %s2153
        $region84: #{resnet_forward.6} parent=79 // pred_fallthru
          _
      $region80: #{resnet_forward.6} parent=5 // pred_fallthru
        _
    $region6: #{resnet_forward.6} parent=1 // loop_footer
      %s21 = sadd.s32 1, %s17
    $region7: #{resnet_forward.6} parent=1 // loop_footer_branch
      %16 = sbr.rel target = $region3
    $region8: #{resnet_forward.6} parent=1 // loop_exit
      _
    %2155 = vsyncpa [#allocation5], 1
    %s2156 = scalar_lea.sflag [#allocation5], 1
    %2157 = vsyncpa %s2156, 1
    %2158 = vsyncpa [#allocation7], 1
    %2159 = vsyncpa [#allocation10], 1
    %2160 = vsyncpa [#allocation13], 1

// kernel: resnet_forward.9
$region0: #{resnet_forward.9}
  #allocation0 [shape = 'u32[]', space=smem, size = 0x4, offset = 0x4, fixed_abs, tag = 'smem constant byte address 0x4 - core index']
  #allocation1 [shape = 'u32[72,128]{1,0:T(1,128)}', space=vmem, size = 0x9000, scoped, tag = 'internal scratch']
  %s0 = inlined_call_operand.vmem [shape: f32[2,4,256], index: 0, kind: input, shape index: {}]
  %s1 = inlined_call_operand.vmem [shape: f32[256,10], index: 1, kind: input, shape index: {}]
  %s2 = inlined_call_operand.vmem [shape: f32[1,10], index: 2, kind: input, shape index: {}]
  %s3 = inlined_call_operand.hbm [shape: f32[2,10], index: 3, kind: output, shape index: {}]
  %s4 = sld [smem:[#allocation0]]
  $region22: #{resnet_forward.9} parent=0
    _
  %s6 = ssub.s32 1, %s4
  %s7 = scalar_select 0, %s6, %s4
  $region1: #{resnet_forward.9} parent=0
    #allocation2 [shape = 'u8[1024]{0}', space=vmem, size = 0x400, scoped, tag = 'output window, operand 0, single buffered']
    #allocation3 [shape = 's32[1]{0}', space=sflag, size = 0x4, scoped, tag = 'scoped memory for resnet_forward.9']
    %8 = vsyncpa [#allocation3], 0
    // Predicated region
    $region2: #{resnet_forward.9} parent=1 // pred_check
      _
    $region3: #{resnet_forward.9} parent=1 // pred_check_branch
      %10 = sbr.rel (0) target = $region5
    $region4: #{resnet_forward.9} parent=1 // pred_region
      _
    $region5: #{resnet_forward.9} parent=1 // pred_fallthru
      _
    // Predicated region
    $region6: #{resnet_forward.9} parent=1 // pred_check
      _
    $region7: #{resnet_forward.9} parent=1 // pred_check_branch
      %12 = sbr.rel (0) target = $region9
    $region8: #{resnet_forward.9} parent=1 // pred_region
      _
    $region9: #{resnet_forward.9} parent=1 // pred_fallthru
      _
    // Predicated region
    $region10: #{resnet_forward.9} parent=1 // pred_check
      _
    $region11: #{resnet_forward.9} parent=1 // pred_check_branch
      %14 = sbr.rel (0) target = $region13
    $region12: #{resnet_forward.9} parent=1 // pred_region
      _
    $region13: #{resnet_forward.9} parent=1 // pred_fallthru
      _
    %v15 = vld [vmem:[%s0] sm:$0xff]
    %v16 = vld [vmem:[%s0 + $0x8] sm:$0xff]
    %19 = vst [vmem:[#allocation1] ss:$2 sm:$0xff] %v15
    %v20 = vld.sshfl [vmem:[#allocation1] sm:$0xff pattern:$0x75316420]
    %v21 = vld.sshfl [vmem:[#allocation1 + $0x8] sm:$0xff pattern:$0x75316420]
    %s22 = scalar_lea.vmem [#allocation1], 16
    %23 = vst [vmem:[%s22] ss:$2 sm:$0xff] %v16
    %v24 = vld.sshfl [vmem:[#allocation1 + $0x10] sm:$0xff pattern:$0x75316420]
    %v25 = vld.sshfl [vmem:[#allocation1 + $0x18] sm:$0xff pattern:$0x75316420]
    %vm30 = vcmask 1043456
    %v31 = vsel %vm30, %v20, 0.0
    %v32 = vrot.slane %v31, 4
    %v33 = vadd.f32 %v31, %v32
    %v34 = vrot.slane %v33, 2
    %v35 = vadd.f32 %v33, %v34
    %v36 = vrot.slane %v35, 1
    %v37 = vadd.f32 %v35, %v36
    %v38 = vsel %vm30, %v21, 0.0
    %v39 = vrot.slane %v38, 4
    %v40 = vadd.f32 %v38, %v39
    %v41 = vrot.slane %v40, 2
    %v42 = vadd.f32 %v40, %v41
    %v43 = vrot.slane %v42, 1
    %v44 = vadd.f32 %v42, %v43
    %v45 = vsel %vm30, %v24, 0.0
    %v46 = vrot.slane %v45, 4
    %v47 = vadd.f32 %v45, %v46
    %v48 = vrot.slane %v47, 2
    %v49 = vadd.f32 %v47, %v48
    %v50 = vrot.slane %v49, 1
    %v51 = vadd.f32 %v49, %v50
    %v52 = vsel %vm30, %v25, 0.0
    %v53 = vrot.slane %v52, 4
    %v54 = vadd.f32 %v52, %v53
    %v55 = vrot.slane %v54, 2
    %v56 = vadd.f32 %v54, %v55
    %v57 = vrot.slane %v56, 1
    %v58 = vadd.f32 %v56, %v57
    %v59 = vld [vmem:[%s1] sm:$0xff]
    %v60 = vld [vmem:[%s1 + $0x8] sm:$0xff]
    %v61 = vld [vmem:[%s1 + $0x10] sm:$0xff]
    %v62 = vld [vmem:[%s1 + $0x18] sm:$0xff]
    %v63 = vld [vmem:[%s1 + $0x20] sm:$0xff]
    %v64 = vld [vmem:[%s1 + $0x28] sm:$0xff]
    %v65 = vld [vmem:[%s1 + $0x30] sm:$0xff]
    %v66 = vld [vmem:[%s1 + $0x38] sm:$0xff]
    %v67 = vld [vmem:[%s1 + $0x40] sm:$0xff]
    %v68 = vld [vmem:[%s1 + $0x48] sm:$0xff]
    %v69 = vld [vmem:[%s1 + $0x50] sm:$0xff]
    %v70 = vld [vmem:[%s1 + $0x58] sm:$0xff]
    %v71 = vld [vmem:[%s1 + $0x60] sm:$0xff]
    %v72 = vld [vmem:[%s1 + $0x68] sm:$0xff]
    %v73 = vld [vmem:[%s1 + $0x70] sm:$0xff]
    %v74 = vld [vmem:[%s1 + $0x78] sm:$0xff]
    %v75 = vld [vmem:[%s1 + $0x80] sm:$0xff]
    %v76 = vld [vmem:[%s1 + $0x88] sm:$0xff]
    %v77 = vld [vmem:[%s1 + $0x90] sm:$0xff]
    %v78 = vld [vmem:[%s1 + $0x98] sm:$0xff]
    %v79 = vld [vmem:[%s1 + $0xa0] sm:$0xff]
    %v80 = vld [vmem:[%s1 + $0xa8] sm:$0xff]
    %v81 = vld [vmem:[%s1 + $0xb0] sm:$0xff]
    %v82 = vld [vmem:[%s1 + $0xb8] sm:$0xff]
    %v83 = vld [vmem:[%s1 + $0xc0] sm:$0xff]
    %v84 = vld [vmem:[%s1 + $0xc8] sm:$0xff]
    %v85 = vld [vmem:[%s1 + $0xd0] sm:$0xff]
    %v86 = vld [vmem:[%s1 + $0xd8] sm:$0xff]
    %v87 = vld [vmem:[%s1 + $0xe0] sm:$0xff]
    %v88 = vld [vmem:[%s1 + $0xe8] sm:$0xff]
    %v89 = vld [vmem:[%s1 + $0xf0] sm:$0xff]
    %v90 = vld [vmem:[%s1 + $0xf8] sm:$0xff]
    %v91 = vld [vmem:[%s2] sm:$0x1]
    %v93 = vperm.slane %v91, 0
    %vm99 = vcmask 1041409
    %v100 = vsel %vm99, %v51, %v37
    %v101 = vsel %vm99, %v58, %v44
    %104 = vmatpush.msra.mxu0 %v74
    %105 = vmatpush.msra.mxu0 %v73
    %106 = vmatpush.msra.mxu0 %v72
    %107 = vmatpush.msra.mxu0 %v71
    %108 = vmatpush.msra.mxu0 %v70
    %109 = vmatpush.msra.mxu0 %v69
    %110 = vmatpush.msra.mxu0 %v68
    %111 = vmatpush.msra.mxu0 %v67
    %112 = vmatpush.msra.mxu0 %v66
    %113 = vmatpush.msra.mxu0 %v65
    %114 = vmatpush.msra.mxu0 %v64
    %115 = vmatpush.msra.mxu0 %v63
    %116 = vmatpush.msra.mxu0 %v62
    %117 = vmatpush.msra.mxu0 %v61
    %118 = vmatpush.msra.mxu0 %v60
    %119 = vmatpush.msra.mxu0 %v59
    %120 = vmatmul.f32.gmra.mxu0 %v100
    %v121 = vpop.f32.mrf.mxu0
    %v122 = vadd.f32 %v93, %v121
    %123 = vdwg.mxu0
    %124 = vmatpush.msra.mxu0 %v90
    %125 = vmatpush.msra.mxu0 %v89
    %126 = vmatpush.msra.mxu0 %v88
    %127 = vmatpush.msra.mxu0 %v87
    %128 = vmatpush.msra.mxu0 %v86
    %129 = vmatpush.msra.mxu0 %v85
    %130 = vmatpush.msra.mxu0 %v84
    %131 = vmatpush.msra.mxu0 %v83
    %132 = vmatpush.msra.mxu0 %v82
    %133 = vmatpush.msra.mxu0 %v81
    %134 = vmatpush.msra.mxu0 %v80
    %135 = vmatpush.msra.mxu0 %v79
    %136 = vmatpush.msra.mxu0 %v78
    %137 = vmatpush.msra.mxu0 %v77
    %138 = vmatpush.msra.mxu0 %v76
    %139 = vmatpush.msra.mxu0 %v75
    %140 = vmatmul.f32.gmra.mxu0 %v101
    %v141 = vpop.f32.mrf.mxu0
    %v142 = vadd.f32 %v122, %v141
    %143 = vdwg.mxu0
    %vm144 = vcmask 74752
    %145 = vst.msk [vmem:[#allocation2] sm:$0x3] %vm144, %v142
    // Predicated region
    $region14: #{resnet_forward.9} parent=1 // pred_check
      _
    $region15: #{resnet_forward.9} parent=1 // pred_check_branch
      %147 = sbr.rel (0) target = $region17
    $region16: #{resnet_forward.9} parent=1 // pred_region
      %149 = vsyncadd [#allocation3], 0
      %s151 = sshll.u32 [#allocation2], 4
      %s152 = int_to_ptr.vmem [resolvable:$true] %s151
      %s153 = sshll.u32 %s3, 4
      %s154 = int_to_ptr.hbm [resolvable:$true] %s153
      %156 = dma.vmem_to_hbm [thread:$0]  %s152, 32, %s154, [#allocation3]
    $region17: #{resnet_forward.9} parent=1 // pred_fallthru
      _
    // Predicated region
    $region18: #{resnet_forward.9} parent=1 // pred_check
      _
    $region19: #{resnet_forward.9} parent=1 // pred_check_branch
      %158 = sbr.rel (0) target = $region21
    $region20: #{resnet_forward.9} parent=1 // pred_region
      %160 = dma.done [#allocation3], 32
    $region21: #{resnet_forward.9} parent=1 // pred_fallthru
      _
    %161 = vsyncpa [#allocation3], 1

// kernel: resnet_forward.7
$region0: #{resnet_forward.7}
  #allocation0 [shape = 'u32[]', space=smem, size = 0x4, offset = 0x4, fixed_abs, tag = 'smem constant byte address 0x4 - core index']
  #allocation1 [shape = 'u32[72,128]{1,0:T(1,128)}', space=vmem, size = 0x9000, scoped, tag = 'internal scratch']
  #allocation2 [shape = 'bf16[10,256]{1,0:T(8,128)(2,1)}', space=vmem, size = 0x2000, scoped, tag = 'scratch operand']
  %s0 = inlined_call_operand.vmem [shape: f32[2,9,256], index: 0, kind: input, shape index: {}]
  %s1 = inlined_call_operand.vmem [shape: f32[2,9,256], index: 1, kind: input, shape index: {}]
  %s2 = inlined_call_operand.hbm [shape: bf16[3,256,256], index: 2, kind: input, shape index: {}]
  %s3 = inlined_call_operand.hbm [shape: f32[1,256], index: 3, kind: input, shape index: {}]
  %s4 = inlined_call_operand.hbm [shape: f32[1,256], index: 4, kind: input, shape index: {}]
  %s5 = inlined_call_operand.hbm [shape: bf16[3,256,256], index: 5, kind: input, shape index: {}]
  %s6 = inlined_call_operand.hbm [shape: f32[1,256], index: 6, kind: input, shape index: {}]
  %s7 = inlined_call_operand.hbm [shape: f32[1,256], index: 7, kind: input, shape index: {}]
  %s8 = inlined_call_operand.hbm [shape: f32[256,256], index: 8, kind: input, shape index: {}]
  %s9 = inlined_call_operand.vmem [shape: f32[2,8,256], index: 9, kind: output, shape index: {}]
  %s10 = sld [smem:[#allocation0]]
  $region97: #{resnet_forward.7} parent=0
    _
  %s12 = ssub.s32 1, %s10
  %s13 = scalar_select 0, %s12, %s10
  $region1: #{resnet_forward.7} parent=0
    #allocation3 [shape = 'u8[393216]{0}', space=vmem, size = 0x60000, scoped, tag = 'input window, operand 2, single buffered']
    #allocation4 [shape = 's32[2]{0}', space=sflag, size = 0x8, scoped, tag = 'scoped memory for resnet_forward.7']
    #allocation5 [shape = 'u8[1024]{0}', space=vmem, size = 0x400, scoped, tag = 'input window, operand 3, single buffered']
    #allocation6 [shape = 's32[1]{0}', space=sflag, size = 0x4, scoped, tag = 'scoped memory for resnet_forward.7']
    #allocation7 [shape = 'u8[1024]{0}', space=vmem, size = 0x400, scoped, tag = 'input window, operand 4, single buffered']
    #allocation8 [shape = 'u8[393216]{0}', space=vmem, size = 0x60000, scoped, tag = 'input window, operand 5, single buffered']
    #allocation9 [shape = 's32[1]{0}', space=sflag, size = 0x4, scoped, tag = 'scoped memory for resnet_forward.7']
    #allocation10 [shape = 'u8[1024]{0}', space=vmem, size = 0x400, scoped, tag = 'input window, operand 6, single buffered']
    #allocation11 [shape = 'u8[1024]{0}', space=vmem, size = 0x400, scoped, tag = 'input window, operand 7, single buffered']
    #allocation12 [shape = 's32[1]{0}', space=sflag, size = 0x4, scoped, tag = 'scoped memory for resnet_forward.7']
    #allocation13 [shape = 'u8[262144]{0}', space=vmem, size = 0x40000, scoped, tag = 'input window, operand 8, single buffered']
    %14 = vsyncpa [#allocation4], 0
    %15 = vsyncpa [#allocation6], 0
    %16 = vsyncpa [#allocation9], 0
    %17 = vsyncpa [#allocation12], 0
    loop: start=0, step=1, limit=4
    $region2: #{resnet_forward.7} parent=1 // loop_pre_header
      _
    $region3: #{resnet_forward.7} parent=1 // loop_header
      %s19 = sphi 0, %s23
      %p20 = scmp.ge.s32.totalorder %s19, 4
      %s29 = sphi 0, %s31
      %s32 = sphi 0, %s29
      %s33 = sphi 0, %s32
      %s49 = sphi 0, %s33
      %s55 = sphi 0, %s57
      %s58 = sphi 0, %s55
      %s59 = sphi 0, %s58
      %s75 = sphi 0, %s59
      %s79 = sphi 0, %s79
      %s81 = sphi 0, %s79
      %s82 = sphi 0, %s81
      %s96 = sphi 0, %s82
      %s100 = sphi 0, %s100
      %s102 = sphi 0, %s100
      %s103 = sphi 0, %s102
      %s117 = sphi 0, %s103
      %s121 = sphi 0, %s121
      %s123 = sphi 0, %s121
      %s124 = sphi 0, %s123
      %s138 = sphi 0, %s124
      %s142 = sphi 0, %s142
      %s144 = sphi 0, %s142
      %s145 = sphi 0, %s144
      %s159 = sphi 0, %s145
      %s163 = sphi 0, %s163
      %s165 = sphi 0, %s163
      %s166 = sphi 0, %s165
      %s180 = sphi 0, %s166
      %s184 = sphi 0, %s184
      %s186 = sphi 0, %s184
      %s187 = sphi 0, %s186
      %s201 = sphi 0, %s187
      %s205 = sphi 0, %s205
      %s207 = sphi 0, %s205
      %s208 = sphi 0, %s207
      %s222 = sphi 0, %s208
      %s228 = sphi 0, %s230
      %s231 = sphi 0, %s228
      %s232 = sphi 0, %s231
      %s248 = sphi 0, %s232
    $region4: #{resnet_forward.7} parent=1 // loop_header_branch
      %22 = sbr.rel (%p20) target = $region8
    $region5: #{resnet_forward.7} parent=1 // loop_body
      %s24 = ssub.s32 %s19, 1
      %s25 = ssub.s32 %s19, 2
      %s26 = sadd.s32 %s19, 1
      %s27 = ssub.s32 %s19, %s26
      %p28 = scmp.eq.s32.totalorder %s27, 0
      %s30 = sadd.s32 %s29, 1
      %s31 = scalar_select %p28, %s29, %s30
      %p34 = pneg %p28
      %p35 = scmp.eq.s32.totalorder %s19, 1
      %p36 = por %p34, %p35
      %p37 = scmp.ne.s32.totalorder %s29, %s32
      %p38 = scmp.eq.s32.totalorder %s19, 0
      %p39 = por %p37, %p38
      %p40 = scmp.ne.s32.totalorder %s29, %s32
      %p41 = scmp.eq.s32.totalorder %s24, 1
      %p42 = por %p40, %p41
      %p43 = scmp.ne.s32.totalorder %s32, %s33
      %p44 = scmp.eq.s32.totalorder %s24, 0
      %p45 = por %p43, %p44
      %p46 = scmp.ne.s32.totalorder %s32, %s33
      %p47 = scmp.eq.s32.totalorder %s25, 1
      %p48 = por %p46, %p47
      %p50 = scmp.ne.s32.totalorder %s33, %s49
      %p51 = scmp.eq.s32.totalorder %s25, 0
      %p52 = por %p50, %p51
      %s53 = ssub.s32 %s19, %s26
      %p54 = scmp.eq.s32.totalorder %s53, 0
      %s56 = sadd.s32 %s55, 1
      %s57 = scalar_select %p54, %s55, %s56
      %p60 = pneg %p54
      %p61 = scmp.eq.s32.totalorder %s19, 1
      %p62 = por %p60, %p61
      %p63 = scmp.ne.s32.totalorder %s55, %s58
      %p64 = scmp.eq.s32.totalorder %s19, 0
      %p65 = por %p63, %p64
      %p66 = scmp.ne.s32.totalorder %s55, %s58
      %p67 = scmp.eq.s32.totalorder %s24, 1
      %p68 = por %p66, %p67
      %p69 = scmp.ne.s32.totalorder %s58, %s59
      %p70 = scmp.eq.s32.totalorder %s24, 0
      %p71 = por %p69, %p70
      %p72 = scmp.ne.s32.totalorder %s58, %s59
      %p73 = scmp.eq.s32.totalorder %s25, 1
      %p74 = por %p72, %p73
      %p76 = scmp.ne.s32.totalorder %s59, %s75
      %p77 = scmp.eq.s32.totalorder %s25, 0
      %p78 = por %p76, %p77
      %s80 = sadd.s32 %s79, 1
      %p83 = scmp.eq.s32.totalorder %s19, 1
      %p84 = scmp.ne.s32.totalorder %s79, %s81
      %p85 = scmp.eq.s32.totalorder %s19, 0
      %p86 = por %p84, %p85
      %p87 = scmp.ne.s32.totalorder %s79, %s81
      %p88 = scmp.eq.s32.totalorder %s24, 1
      %p89 = por %p87, %p88
      %p90 = scmp.ne.s32.totalorder %s81, %s82
      %p91 = scmp.eq.s32.totalorder %s24, 0
      %p92 = por %p90, %p91
      %p93 = scmp.ne.s32.totalorder %s81, %s82
      %p94 = scmp.eq.s32.totalorder %s25, 1
      %p95 = por %p93, %p94
      %p97 = scmp.ne.s32.totalorder %s82, %s96
      %p98 = scmp.eq.s32.totalorder %s25, 0
      %p99 = por %p97, %p98
      %s101 = sadd.s32 %s100, 1
      %p104 = scmp.eq.s32.totalorder %s19, 1
      %p105 = scmp.ne.s32.totalorder %s100, %s102
      %p106 = scmp.eq.s32.totalorder %s19, 0
      %p107 = por %p105, %p106
      %p108 = scmp.ne.s32.totalorder %s100, %s102
      %p109 = scmp.eq.s32.totalorder %s24, 1
      %p110 = por %p108, %p109
      %p111 = scmp.ne.s32.totalorder %s102, %s103
      %p112 = scmp.eq.s32.totalorder %s24, 0
      %p113 = por %p111, %p112
      %p114 = scmp.ne.s32.totalorder %s102, %s103
      %p115 = scmp.eq.s32.totalorder %s25, 1
      %p116 = por %p114, %p115
      %p118 = scmp.ne.s32.totalorder %s103, %s117
      %p119 = scmp.eq.s32.totalorder %s25, 0
      %p120 = por %p118, %p119
      %s122 = sadd.s32 %s121, 1
      %p125 = scmp.eq.s32.totalorder %s19, 1
      %p126 = scmp.ne.s32.totalorder %s121, %s123
      %p127 = scmp.eq.s32.totalorder %s19, 0
      %p128 = por %p126, %p127
      %p129 = scmp.ne.s32.totalorder %s121, %s123
      %p130 = scmp.eq.s32.totalorder %s24, 1
      %p131 = por %p129, %p130
      %p132 = scmp.ne.s32.totalorder %s123, %s124
      %p133 = scmp.eq.s32.totalorder %s24, 0
      %p134 = por %p132, %p133
      %p135 = scmp.ne.s32.totalorder %s123, %s124
      %p136 = scmp.eq.s32.totalorder %s25, 1
      %p137 = por %p135, %p136
      %p139 = scmp.ne.s32.totalorder %s124, %s138
      %p140 = scmp.eq.s32.totalorder %s25, 0
      %p141 = por %p139, %p140
      %s143 = sadd.s32 %s142, 1
      %p146 = scmp.eq.s32.totalorder %s19, 1
      %p147 = scmp.ne.s32.totalorder %s142, %s144
      %p148 = scmp.eq.s32.totalorder %s19, 0
      %p149 = por %p147, %p148
      %p150 = scmp.ne.s32.totalorder %s142, %s144
      %p151 = scmp.eq.s32.totalorder %s24, 1
      %p152 = por %p150, %p151
      %p153 = scmp.ne.s32.totalorder %s144, %s145
      %p154 = scmp.eq.s32.totalorder %s24, 0
      %p155 = por %p153, %p154
      %p156 = scmp.ne.s32.totalorder %s144, %s145
      %p157 = scmp.eq.s32.totalorder %s25, 1
      %p158 = por %p156, %p157
      %p160 = scmp.ne.s32.totalorder %s145, %s159
      %p161 = scmp.eq.s32.totalorder %s25, 0
      %p162 = por %p160, %p161
      %s164 = sadd.s32 %s163, 1
      %p167 = scmp.eq.s32.totalorder %s19, 1
      %p168 = scmp.ne.s32.totalorder %s163, %s165
      %p169 = scmp.eq.s32.totalorder %s19, 0
      %p170 = por %p168, %p169
      %p171 = scmp.ne.s32.totalorder %s163, %s165
      %p172 = scmp.eq.s32.totalorder %s24, 1
      %p173 = por %p171, %p172
      %p174 = scmp.ne.s32.totalorder %s165, %s166
      %p175 = scmp.eq.s32.totalorder %s24, 0
      %p176 = por %p174, %p175
      %p177 = scmp.ne.s32.totalorder %s165, %s166
      %p178 = scmp.eq.s32.totalorder %s25, 1
      %p179 = por %p177, %p178
      %p181 = scmp.ne.s32.totalorder %s166, %s180
      %p182 = scmp.eq.s32.totalorder %s25, 0
      %p183 = por %p181, %p182
      %s185 = sadd.s32 %s184, 1
      %p188 = scmp.eq.s32.totalorder %s19, 1
      %p189 = scmp.ne.s32.totalorder %s184, %s186
      %p190 = scmp.eq.s32.totalorder %s19, 0
      %p191 = por %p189, %p190
      %p192 = scmp.ne.s32.totalorder %s184, %s186
      %p193 = scmp.eq.s32.totalorder %s24, 1
      %p194 = por %p192, %p193
      %p195 = scmp.ne.s32.totalorder %s186, %s187
      %p196 = scmp.eq.s32.totalorder %s24, 0
      %p197 = por %p195, %p196
      %p198 = scmp.ne.s32.totalorder %s186, %s187
      %p199 = scmp.eq.s32.totalorder %s25, 1
      %p200 = por %p198, %p199
      %p202 = scmp.ne.s32.totalorder %s187, %s201
      %p203 = scmp.eq.s32.totalorder %s25, 0
      %p204 = por %p202, %p203
      %s206 = sadd.s32 %s205, 1
      %p209 = scmp.eq.s32.totalorder %s19, 1
      %p210 = scmp.ne.s32.totalorder %s205, %s207
      %p211 = scmp.eq.s32.totalorder %s19, 0
      %p212 = por %p210, %p211
      %p213 = scmp.ne.s32.totalorder %s205, %s207
      %p214 = scmp.eq.s32.totalorder %s24, 1
      %p215 = por %p213, %p214
      %p216 = scmp.ne.s32.totalorder %s207, %s208
      %p217 = scmp.eq.s32.totalorder %s24, 0
      %p218 = por %p216, %p217
      %p219 = scmp.ne.s32.totalorder %s207, %s208
      %p220 = scmp.eq.s32.totalorder %s25, 1
      %p221 = por %p219, %p220
      %p223 = scmp.ne.s32.totalorder %s208, %s222
      %p224 = scmp.eq.s32.totalorder %s25, 0
      %p225 = por %p223, %p224
      %s226 = ssub.s32 %s19, %s26
      %p227 = scmp.eq.s32.totalorder %s226, 0
      %s229 = sadd.s32 %s228, 1
      %s230 = scalar_select %p227, %s228, %s229
      %p233 = pneg %p227
      %p234 = scmp.eq.s32.totalorder %s19, 1
      %p235 = por %p233, %p234
      %p236 = scmp.ne.s32.totalorder %s228, %s231
      %p237 = scmp.eq.s32.totalorder %s19, 0
      %p238 = por %p236, %p237
      %p239 = scmp.ne.s32.totalorder %s228, %s231
      %p240 = scmp.eq.s32.totalorder %s24, 1
      %p241 = por %p239, %p240
      %p242 = scmp.ne.s32.totalorder %s231, %s232
      %p243 = scmp.eq.s32.totalorder %s24, 0
      %p244 = por %p242, %p243
      %p245 = scmp.ne.s32.totalorder %s231, %s232
      %p246 = scmp.eq.s32.totalorder %s25, 1
      %p247 = por %p245, %p246
      %p249 = scmp.ne.s32.totalorder %s232, %s248
      %p250 = scmp.eq.s32.totalorder %s25, 0
      %p251 = por %p249, %p250
      %p252 = scmp.le.s32.totalorder 1, %s19
      %p253 = scmp.lt.s32.totalorder %s19, 3
      %p254 = pnand %p252, %p253
      %p255 = pneg %p254
      // Predicated region
      $region9: #{resnet_forward.7} parent=5 // pred_check
        _
      $region10: #{resnet_forward.7} parent=5 // pred_check_branch
        %257 = sbr.rel (%p254) target = $region12
      $region11: #{resnet_forward.7} parent=5 // pred_region
        %s258 = ssub.s32 %s19, 1
        // Predicated region
        $region13: #{resnet_forward.7} parent=11 // pred_check
          %p259 = pneg %p92
        $region14: #{resnet_forward.7} parent=11 // pred_check_branch
          %261 = sbr.rel (%p259) target = $region16
        $region15: #{resnet_forward.7} parent=11 // pred_region
          %263 = vsyncadd [#allocation4], 0
          %s264 = sshll.u32 %s2, 4
          %s265 = int_to_ptr.hbm [resolvable:$true] %s264
          %s266 = sshll.u32 [#allocation3], 4
          %s267 = int_to_ptr.vmem [resolvable:$true] %s266
          %272 = dma.hbm_to_vmem [thread:$0]  %s265, 12288, %s267, [#allocation4], 128, 128, 8
        $region16: #{resnet_forward.7} parent=11 // pred_fallthru
          _
        // Predicated region
        $region17: #{resnet_forward.7} parent=11 // pred_check
          %p273 = pneg %p113
        $region18: #{resnet_forward.7} parent=11 // pred_check_branch
          %275 = sbr.rel (%p273) target = $region20
        $region19: #{resnet_forward.7} parent=11 // pred_region
          %277 = vsyncadd [#allocation6], 0
          %s279 = sshll.u32 %s3, 4
          %s280 = int_to_ptr.hbm [resolvable:$true] %s279
          %s281 = sshll.u32 [#allocation5], 4
          %s282 = int_to_ptr.vmem [resolvable:$true] %s281
          %284 = dma.hbm_to_vmem [thread:$0]  %s280, 32, %s282, [#allocation6]
        $region20: #{resnet_forward.7} parent=11 // pred_fallthru
          _
        // Predicated region
        $region21: #{resnet_forward.7} parent=11 // pred_check
          %p285 = pneg %p134
        $region22: #{resnet_forward.7} parent=11 // pred_check_branch
          %287 = sbr.rel (%p285) target = $region24
        $region23: #{resnet_forward.7} parent=11 // pred_region
          %289 = vsyncadd [#allocation6], 0
          %s291 = sshll.u32 %s4, 4
          %s292 = int_to_ptr.hbm [resolvable:$true] %s291
          %s293 = sshll.u32 [#allocation7], 4
          %s294 = int_to_ptr.vmem [resolvable:$true] %s293
          %296 = dma.hbm_to_vmem [thread:$0]  %s292, 32, %s294, [#allocation6]
        $region24: #{resnet_forward.7} parent=11 // pred_fallthru
          _
        // Predicated region
        $region25: #{resnet_forward.7} parent=11 // pred_check
          %p297 = pneg %p155
        $region26: #{resnet_forward.7} parent=11 // pred_check_branch
          %299 = sbr.rel (%p297) target = $region28
        $region27: #{resnet_forward.7} parent=11 // pred_region
          %301 = vsyncadd [#allocation9], 0
          %s302 = sshll.u32 %s5, 4
          %s303 = int_to_ptr.hbm [resolvable:$true] %s302
          %s304 = sshll.u32 [#allocation8], 4
          %s305 = int_to_ptr.vmem [resolvable:$true] %s304
          %310 = dma.hbm_to_vmem [thread:$0]  %s303, 12288, %s305, [#allocation9], 128, 128, 8
        $region28: #{resnet_forward.7} parent=11 // pred_fallthru
          _
        // Predicated region
        $region29: #{resnet_forward.7} parent=11 // pred_check
          %p311 = pneg %p176
        $region30: #{resnet_forward.7} parent=11 // pred_check_branch
          %313 = sbr.rel (%p311) target = $region32
        $region31: #{resnet_forward.7} parent=11 // pred_region
          %315 = vsyncadd [#allocation9], 0
          %s317 = sshll.u32 %s6, 4
          %s318 = int_to_ptr.hbm [resolvable:$true] %s317
          %s319 = sshll.u32 [#allocation10], 4
          %s320 = int_to_ptr.vmem [resolvable:$true] %s319
          %322 = dma.hbm_to_vmem [thread:$0]  %s318, 32, %s320, [#allocation9]
        $region32: #{resnet_forward.7} parent=11 // pred_fallthru
          _
        // Predicated region
        $region33: #{resnet_forward.7} parent=11 // pred_check
          %p323 = pneg %p197
        $region34: #{resnet_forward.7} parent=11 // pred_check_branch
          %325 = sbr.rel (%p323) target = $region36
        $region35: #{resnet_forward.7} parent=11 // pred_region
          %327 = vsyncadd [#allocation12], 0
          %s329 = sshll.u32 %s7, 4
          %s330 = int_to_ptr.hbm [resolvable:$true] %s329
          %s331 = sshll.u32 [#allocation11], 4
          %s332 = int_to_ptr.vmem [resolvable:$true] %s331
          %334 = dma.hbm_to_vmem [thread:$0]  %s330, 32, %s332, [#allocation12]
        $region36: #{resnet_forward.7} parent=11 // pred_fallthru
          _
        // Predicated region
        $region37: #{resnet_forward.7} parent=11 // pred_check
          %p335 = pneg %p218
        $region38: #{resnet_forward.7} parent=11 // pred_check_branch
          %337 = sbr.rel (%p335) target = $region40
        $region39: #{resnet_forward.7} parent=11 // pred_region
          %339 = vsyncadd [#allocation12], 0
          %s340 = sshll.u32 %s8, 4
          %s341 = int_to_ptr.hbm [resolvable:$true] %s340
          %s342 = sshll.u32 [#allocation13], 4
          %s343 = int_to_ptr.vmem [resolvable:$true] %s342
          %348 = dma.hbm_to_vmem [thread:$0]  %s341, 8192, %s343, [#allocation12], 256, 256, 16
        $region40: #{resnet_forward.7} parent=11 // pred_fallthru
          _
      $region12: #{resnet_forward.7} parent=5 // pred_fallthru
        _
      %p349 = scmp.lt.s32.totalorder %s19, 2
      // Predicated region
      $region41: #{resnet_forward.7} parent=5 // pred_check
        %p350 = pneg %p349
      $region42: #{resnet_forward.7} parent=5 // pred_check_branch
        %352 = sbr.rel (%p350) target = $region44
      $region43: #{resnet_forward.7} parent=5 // pred_region
        // Predicated region
        $region45: #{resnet_forward.7} parent=43 // pred_check
          %p353 = pneg %p39
        $region46: #{resnet_forward.7} parent=43 // pred_check_branch
          %355 = sbr.rel (%p353) target = $region48
        $region47: #{resnet_forward.7} parent=43 // pred_region
          %p356 = scmp.lt.s32.totalorder %s19, 1
          %s357 = scalar_select %p356, %s19, 1
          %s358 = smul.addr %s357, 4
          %s359 = smul.addr %s358, 8
          %s360 = scalar_lea.vmem %s0, %s359
        $region48: #{resnet_forward.7} parent=43 // pred_fallthru
          _
        // Predicated region
        $region49: #{resnet_forward.7} parent=43 // pred_check
          %p361 = pneg %p65
        $region50: #{resnet_forward.7} parent=43 // pred_check_branch
          %363 = sbr.rel (%p361) target = $region52
        $region51: #{resnet_forward.7} parent=43 // pred_region
          %p364 = scmp.lt.s32.totalorder %s19, 1
          %s365 = scalar_select %p364, %s19, 1
          %s366 = smul.addr %s365, 4
          %s367 = smul.addr %s366, 8
          %s368 = scalar_lea.vmem %s1, %s367
        $region52: #{resnet_forward.7} parent=43 // pred_fallthru
          _
      $region44: #{resnet_forward.7} parent=5 // pred_fallthru
        _
      %p369 = scmp.le.s32.totalorder 1, %s19
      %p370 = scmp.lt.s32.totalorder %s19, 3
      %p371 = pnand %p369, %p370
      %p372 = pneg %p371
      // Predicated region
      $region53: #{resnet_forward.7} parent=5 // pred_check
        _
      $region54: #{resnet_forward.7} parent=5 // pred_check_branch
        %374 = sbr.rel (%p371) target = $region56
      $region55: #{resnet_forward.7} parent=5 // pred_region
        %s375 = ssub.s32 %s19, 1
        // Predicated region
        $region57: #{resnet_forward.7} parent=55 // pred_check
          %p376 = pneg %p92
        $region58: #{resnet_forward.7} parent=55 // pred_check_branch
          %378 = sbr.rel (%p376) target = $region60
        $region59: #{resnet_forward.7} parent=55 // pred_region
          %380 = dma.done [#allocation4], 12288
        $region60: #{resnet_forward.7} parent=55 // pred_fallthru
          _
        // Predicated region
        $region61: #{resnet_forward.7} parent=55 // pred_check
          %p381 = pneg %p113
        $region62: #{resnet_forward.7} parent=55 // pred_check_branch
          %383 = sbr.rel (%p381) target = $region64
        $region63: #{resnet_forward.7} parent=55 // pred_region
          %385 = dma.done [#allocation6], 32
        $region64: #{resnet_forward.7} parent=55 // pred_fallthru
          _
        // Predicated region
        $region65: #{resnet_forward.7} parent=55 // pred_check
          %p386 = pneg %p134
        $region66: #{resnet_forward.7} parent=55 // pred_check_branch
          %388 = sbr.rel (%p386) target = $region68
        $region67: #{resnet_forward.7} parent=55 // pred_region
          %390 = dma.done [#allocation6], 32
        $region68: #{resnet_forward.7} parent=55 // pred_fallthru
          _
        // Predicated region
        $region69: #{resnet_forward.7} parent=55 // pred_check
          %p391 = pneg %p155
        $region70: #{resnet_forward.7} parent=55 // pred_check_branch
          %393 = sbr.rel (%p391) target = $region72
        $region71: #{resnet_forward.7} parent=55 // pred_region
          %395 = dma.done [#allocation9], 12288
        $region72: #{resnet_forward.7} parent=55 // pred_fallthru
          _
        // Predicated region
        $region73: #{resnet_forward.7} parent=55 // pred_check
          %p396 = pneg %p176
        $region74: #{resnet_forward.7} parent=55 // pred_check_branch
          %398 = sbr.rel (%p396) target = $region76
        $region75: #{resnet_forward.7} parent=55 // pred_region
          %400 = dma.done [#allocation9], 32
        $region76: #{resnet_forward.7} parent=55 // pred_fallthru
          _
        // Predicated region
        $region77: #{resnet_forward.7} parent=55 // pred_check
          %p401 = pneg %p197
        $region78: #{resnet_forward.7} parent=55 // pred_check_branch
          %403 = sbr.rel (%p401) target = $region80
        $region79: #{resnet_forward.7} parent=55 // pred_region
          %405 = dma.done [#allocation12], 32
        $region80: #{resnet_forward.7} parent=55 // pred_fallthru
          _
        // Predicated region
        $region81: #{resnet_forward.7} parent=55 // pred_check
          %p406 = pneg %p218
        $region82: #{resnet_forward.7} parent=55 // pred_check_branch
          %408 = sbr.rel (%p406) target = $region84
        $region83: #{resnet_forward.7} parent=55 // pred_region
          %410 = dma.done [#allocation12], 8192
        $region84: #{resnet_forward.7} parent=55 // pred_fallthru
          _
        %p411 = scmp.lt.s32.totalorder %s24, 1
        %s412 = scalar_select %p411, %s24, 1
        %s413 = smul.addr %s412, 4
        %s414 = smul.addr %s413, 8
        %s415 = scalar_lea.vmem %s0, %s414
        %p416 = pneg %p45
        %p417 = pneg %p42
        %p418 = scmp.lt.s32.totalorder %s24, 1
        %s419 = scalar_select %p418, %s24, 1
        %s420 = smul.addr %s419, 4
        %s421 = smul.addr %s420, 8
        %s422 = scalar_lea.vmem %s1, %s421
        %p423 = pneg %p71
        %p424 = pneg %p68
        %p425 = pneg %p92
        %p426 = pneg %p89
        %p427 = pneg %p113
        %p428 = pneg %p110
        %p429 = pneg %p134
        %p430 = pneg %p131
        %p431 = pneg %p155
        %p432 = pneg %p152
        %p433 = pneg %p176
        %p434 = pneg %p173
        %p435 = pneg %p197
        %p436 = pneg %p194
        %p437 = pneg %p218
        %p438 = pneg %p215
        %p439 = pneg %p244
        %p440 = pneg %p241
        %p441 = scmp.lt.s32.totalorder %s24, 1
        %s442 = scalar_select %p441, %s24, 1
        %s443 = smul.addr %s442, 2
        %s444 = smul.addr %s443, 8
        %s445 = scalar_lea.vmem %s9, %s444
        %p446 = scmp.lt.s32.totalorder %s24, 1
        %s447 = scalar_select %p446, %s24, 1
        %s448 = smul.addr %s447, 4
        %s449 = smul.addr %s448, 8
        %s450 = scalar_lea.vmem %s0, %s449
        %p451 = scmp.lt.s32.totalorder %s24, 1
        %s452 = scalar_select %p451, %s24, 1
        %s453 = smul.addr %s452, 4
        %s454 = smul.addr %s453, 8
        %s455 = scalar_lea.vmem %s1, %s454
        %p456 = scmp.lt.s32.totalorder %s24, 1
        %s457 = scalar_select %p456, %s24, 1
        %s458 = smul.addr %s457, 2
        %s459 = smul.addr %s458, 8
        %s460 = scalar_lea.vmem %s9, %s459
        %v462 = vld [vmem:[%s450] sm:$0xff]
        %v463 = vld [vmem:[%s450 + $0x8] sm:$0xff]
        %v464 = vld [vmem:[%s450 + $0x10] sm:$0x1]
        %v465 = vld [vmem:[%s450 + $0x18] sm:$0x1]
        %v466 = vld [vmem:[%s455] sm:$0xff]
        %v467 = vld [vmem:[%s455 + $0x8] sm:$0xff]
        %v468 = vpack.c.bf16 %v463, %v462
        %v469 = vpack.c.bf16 %v465, %v464
        %v470 = vpack.c.bf16 %v467, %v466
        %v471 = vld [vmem:[#allocation3] sm:$0xff]
        %v472 = vld [vmem:[#allocation3 + $0x8] sm:$0xff]
        %v473 = vld [vmem:[#allocation3 + $0x10] sm:$0xff]
        %v474 = vld [vmem:[#allocation3 + $0x18] sm:$0xff]
        %v475 = vld [vmem:[#allocation3 + $0x20] sm:$0xff]
        %v476 = vld [vmem:[#allocation3 + $0x28] sm:$0xff]
        %v477 = vld [vmem:[#allocation3 + $0x30] sm:$0xff]
        %v478 = vld [vmem:[#allocation3 + $0x38] sm:$0xff]
        %v479 = vld [vmem:[#allocation3 + $0x40] sm:$0xff]
        %v480 = vld [vmem:[#allocation3 + $0x48] sm:$0xff]
        %v481 = vld [vmem:[#allocation3 + $0x50] sm:$0xff]
        %v482 = vld [vmem:[#allocation3 + $0x58] sm:$0xff]
        %v483 = vld [vmem:[#allocation3 + $0x60] sm:$0xff]
        %v484 = vld [vmem:[#allocation3 + $0x68] sm:$0xff]
        %v485 = vld [vmem:[#allocation3 + $0x70] sm:$0xff]
        %v486 = vld [vmem:[#allocation3 + $0x78] sm:$0xff]
        %v487 = vld [vmem:[#allocation3 + $0x80] sm:$0xff]
        %v488 = vld [vmem:[#allocation3 + $0x88] sm:$0xff]
        %v489 = vld [vmem:[#allocation3 + $0x90] sm:$0xff]
        %v490 = vld [vmem:[#allocation3 + $0x98] sm:$0xff]
        %v491 = vld [vmem:[#allocation3 + $0xa0] sm:$0xff]
        %v492 = vld [vmem:[#allocation3 + $0xa8] sm:$0xff]
        %v493 = vld [vmem:[#allocation3 + $0xb0] sm:$0xff]
        %v494 = vld [vmem:[#allocation3 + $0xb8] sm:$0xff]
        %v495 = vld [vmem:[#allocation3 + $0xc0] sm:$0xff]
        %v496 = vld [vmem:[#allocation3 + $0xc8] sm:$0xff]
        %v497 = vld [vmem:[#allocation3 + $0xd0] sm:$0xff]
        %v498 = vld [vmem:[#allocation3 + $0xd8] sm:$0xff]
        %v499 = vld [vmem:[#allocation3 + $0xe0] sm:$0xff]
        %v500 = vld [vmem:[#allocation3 + $0xe8] sm:$0xff]
        %v501 = vld [vmem:[#allocation3 + $0xf0] sm:$0xff]
        %v502 = vld [vmem:[#allocation3 + $0xf8] sm:$0xff]
        %s503 = scalar_lea.vmem [#allocation3], 256
        %v504 = vld [vmem:[%s503] sm:$0xff]
        %v505 = vld [vmem:[%s503 + $0x8] sm:$0xff]
        %v506 = vld [vmem:[%s503 + $0x10] sm:$0xff]
        %v507 = vld [vmem:[%s503 + $0x18] sm:$0xff]
        %v508 = vld [vmem:[%s503 + $0x20] sm:$0xff]
        %v509 = vld [vmem:[%s503 + $0x28] sm:$0xff]
        %v510 = vld [vmem:[%s503 + $0x30] sm:$0xff]
        %v511 = vld [vmem:[%s503 + $0x38] sm:$0xff]
        %v512 = vld [vmem:[%s503 + $0x40] sm:$0xff]
        %v513 = vld [vmem:[%s503 + $0x48] sm:$0xff]
        %v514 = vld [vmem:[%s503 + $0x50] sm:$0xff]
        %v515 = vld [vmem:[%s503 + $0x58] sm:$0xff]
        %v516 = vld [vmem:[%s503 + $0x60] sm:$0xff]
        %v517 = vld [vmem:[%s503 + $0x68] sm:$0xff]
        %v518 = vld [vmem:[%s503 + $0x70] sm:$0xff]
        %v519 = vld [vmem:[%s503 + $0x78] sm:$0xff]
        %v520 = vld [vmem:[%s503 + $0x80] sm:$0xff]
        %v521 = vld [vmem:[%s503 + $0x88] sm:$0xff]
        %v522 = vld [vmem:[%s503 + $0x90] sm:$0xff]
        %v523 = vld [vmem:[%s503 + $0x98] sm:$0xff]
        %v524 = vld [vmem:[%s503 + $0xa0] sm:$0xff]
        %v525 = vld [vmem:[%s503 + $0xa8] sm:$0xff]
        %v526 = vld [vmem:[%s503 + $0xb0] sm:$0xff]
        %v527 = vld [vmem:[%s503 + $0xb8] sm:$0xff]
        %v528 = vld [vmem:[%s503 + $0xc0] sm:$0xff]
        %v529 = vld [vmem:[%s503 + $0xc8] sm:$0xff]
        %v530 = vld [vmem:[%s503 + $0xd0] sm:$0xff]
        %v531 = vld [vmem:[%s503 + $0xd8] sm:$0xff]
        %v532 = vld [vmem:[%s503 + $0xe0] sm:$0xff]
        %v533 = vld [vmem:[%s503 + $0xe8] sm:$0xff]
        %v534 = vld [vmem:[%s503 + $0xf0] sm:$0xff]
        %v535 = vld [vmem:[%s503 + $0xf8] sm:$0xff]
        %v537 = vunpack.c.l.b16 %v470
        %v538 = vunpack.c.h.b16 %v470
        %v539 = vpack.c.b16 %v537, %v537
        %v540 = vpack.c.b16 %v538, %v538
        %v575 = vunpack.c.l.b16 %v504
        %v576 = vunpack.c.h.b16 %v504
        %v577 = vunpack.c.l.b16 %v505
        %v578 = vunpack.c.h.b16 %v505
        %v579 = vunpack.c.l.b16 %v506
        %v580 = vunpack.c.h.b16 %v506
        %v581 = vunpack.c.l.b16 %v507
        %v582 = vunpack.c.h.b16 %v507
        %v583 = vunpack.c.l.b16 %v508
        %v584 = vunpack.c.h.b16 %v508
        %v585 = vunpack.c.l.b16 %v509
        %v586 = vunpack.c.h.b16 %v509
        %v587 = vunpack.c.l.b16 %v510
        %v588 = vunpack.c.h.b16 %v510
        %v589 = vunpack.c.l.b16 %v511
        %v590 = vunpack.c.h.b16 %v511
        %v591 = vunpack.c.l.b16 %v512
        %v592 = vunpack.c.h.b16 %v512
        %v593 = vunpack.c.l.b16 %v513
        %v594 = vunpack.c.h.b16 %v513
        %v595 = vunpack.c.l.b16 %v514
        %v596 = vunpack.c.h.b16 %v514
        %v597 = vunpack.c.l.b16 %v515
        %v598 = vunpack.c.h.b16 %v515
        %v599 = vunpack.c.l.b16 %v516
        %v600 = vunpack.c.h.b16 %v516
        %v601 = vunpack.c.l.b16 %v517
        %v602 = vunpack.c.h.b16 %v517
        %v603 = vunpack.c.l.b16 %v518
        %v604 = vunpack.c.h.b16 %v518
        %v605 = vunpack.c.l.b16 %v519
        %v606 = vunpack.c.h.b16 %v519
        %v607 = vunpack.c.l.b16 %v520
        %v608 = vunpack.c.h.b16 %v520
        %v609 = vunpack.c.l.b16 %v521
        %v610 = vunpack.c.h.b16 %v521
        %v611 = vunpack.c.l.b16 %v522
        %v612 = vunpack.c.h.b16 %v522
        %v613 = vunpack.c.l.b16 %v523
        %v614 = vunpack.c.h.b16 %v523
        %v615 = vunpack.c.l.b16 %v524
        %v616 = vunpack.c.h.b16 %v524
        %v617 = vunpack.c.l.b16 %v525
        %v618 = vunpack.c.h.b16 %v525
        %v619 = vunpack.c.l.b16 %v526
        %v620 = vunpack.c.h.b16 %v526
        %v621 = vunpack.c.l.b16 %v527
        %v622 = vunpack.c.h.b16 %v527
        %v623 = vunpack.c.l.b16 %v528
        %v624 = vunpack.c.h.b16 %v528
        %v625 = vunpack.c.l.b16 %v529
        %v626 = vunpack.c.h.b16 %v529
        %v627 = vunpack.c.l.b16 %v530
        %v628 = vunpack.c.h.b16 %v530
        %v629 = vunpack.c.l.b16 %v531
        %v630 = vunpack.c.h.b16 %v531
        %v631 = vunpack.c.l.b16 %v532
        %v632 = vunpack.c.h.b16 %v532
        %v633 = vunpack.c.l.b16 %v533
        %v634 = vunpack.c.h.b16 %v533
        %v635 = vunpack.c.l.b16 %v534
        %v636 = vunpack.c.h.b16 %v534
        %v637 = vunpack.c.l.b16 %v535
        %v638 = vunpack.c.h.b16 %v535
        %v639 = vpack.c.b16 %v577, %v575
        %v640 = vpack.c.b16 %v578, %v576
        %v641 = vpack.c.b16 %v581, %v579
        %v642 = vpack.c.b16 %v582, %v580
        %v643 = vpack.c.b16 %v585, %v583
        %v644 = vpack.c.b16 %v586, %v584
        %v645 = vpack.c.b16 %v589, %v587
        %v646 = vpack.c.b16 %v590, %v588
        %v647 = vpack.c.b16 %v593, %v591
        %v648 = vpack.c.b16 %v594, %v592
        %v649 = vpack.c.b16 %v597, %v595
        %v650 = vpack.c.b16 %v598, %v596
        %v651 = vpack.c.b16 %v601, %v599
        %v652 = vpack.c.b16 %v602, %v600
        %v653 = vpack.c.b16 %v605, %v603
        %v654 = vpack.c.b16 %v606, %v604
        %v655 = vpack.c.b16 %v609, %v607
        %v656 = vpack.c.b16 %v610, %v608
        %v657 = vpack.c.b16 %v613, %v611
        %v658 = vpack.c.b16 %v614, %v612
        %v659 = vpack.c.b16 %v617, %v615
        %v660 = vpack.c.b16 %v618, %v616
        %v661 = vpack.c.b16 %v621, %v619
        %v662 = vpack.c.b16 %v622, %v620
        %v663 = vpack.c.b16 %v625, %v623
        %v664 = vpack.c.b16 %v626, %v624
        %v665 = vpack.c.b16 %v629, %v627
        %v666 = vpack.c.b16 %v630, %v628
        %v667 = vpack.c.b16 %v633, %v631
        %v668 = vpack.c.b16 %v634, %v632
        %v669 = vpack.c.b16 %v637, %v635
        %v670 = vpack.c.b16 %v638, %v636
        %703 = vmatpush.bf16.msra.mxu0 %v653
        %704 = vmatpush.bf16.msra.mxu0 %v651
        %705 = vmatpush.bf16.msra.mxu0 %v649
        %706 = vmatpush.bf16.msra.mxu0 %v647
        %707 = vmatpush.bf16.msra.mxu0 %v645
        %708 = vmatpush.bf16.msra.mxu0 %v643
        %709 = vmatpush.bf16.msra.mxu0 %v641
        %710 = vmatpush.bf16.msra.mxu0 %v639
        %711 = vmatmul.bf16.gmra.mxu0 %v539
        %v712 = vpop.f32.mrf.mxu0
        %v713 = vadd.f32 0.0, %v712
        %v714 = vpop.f32.mrf.mxu0
        %715 = vdwg.mxu0
        %716 = vmatpush.bf16.msra.mxu0 %v669
        %717 = vmatpush.bf16.msra.mxu0 %v667
        %718 = vmatpush.bf16.msra.mxu0 %v665
        %719 = vmatpush.bf16.msra.mxu0 %v663
        %720 = vmatpush.bf16.msra.mxu0 %v661
        %721 = vmatpush.bf16.msra.mxu0 %v659
        %722 = vmatpush.bf16.msra.mxu0 %v657
        %723 = vmatpush.bf16.msra.mxu0 %v655
        %724 = vmatmul.bf16.gmra.mxu0 %v540
        %v725 = vpop.f32.mrf.mxu0
        %v726 = vadd.f32 %v713, %v725
        %v727 = vpop.f32.mrf.mxu0
        %728 = vdwg.mxu0
        %729 = vmatpush.bf16.msra.mxu0 %v654
        %730 = vmatpush.bf16.msra.mxu0 %v652
        %731 = vmatpush.bf16.msra.mxu0 %v650
        %732 = vmatpush.bf16.msra.mxu0 %v648
        %733 = vmatpush.bf16.msra.mxu0 %v646
        %734 = vmatpush.bf16.msra.mxu0 %v644
        %735 = vmatpush.bf16.msra.mxu0 %v642
        %736 = vmatpush.bf16.msra.mxu0 %v640
        %737 = vmatmul.bf16.gmra.mxu0 %v539
        %v738 = vpop.f32.mrf.mxu0
        %v739 = vadd.f32 0.0, %v738
        %v740 = vpop.f32.mrf.mxu0
        %741 = vdwg.mxu0
        %742 = vmatpush.bf16.msra.mxu0 %v670
        %743 = vmatpush.bf16.msra.mxu0 %v668
        %744 = vmatpush.bf16.msra.mxu0 %v666
        %745 = vmatpush.bf16.msra.mxu0 %v664
        %746 = vmatpush.bf16.msra.mxu0 %v662
        %747 = vmatpush.bf16.msra.mxu0 %v660
        %748 = vmatpush.bf16.msra.mxu0 %v658
        %749 = vmatpush.bf16.msra.mxu0 %v656
        %750 = vmatmul.bf16.gmra.mxu0 %v540
        %v751 = vpop.f32.mrf.mxu0
        %v752 = vadd.f32 %v739, %v751
        %v753 = vpop.f32.mrf.mxu0
        %754 = vdwg.mxu0
        %v756 = vunpack.c.l.b16 %v468
        %v757 = vunpack.c.h.b16 %v468
        %v758 = vpack.c.b16 %v756, %v756
        %v759 = vpack.c.b16 %v757, %v757
        %v794 = vunpack.c.l.b16 %v471
        %v795 = vunpack.c.h.b16 %v471
        %v796 = vunpack.c.l.b16 %v472
        %v797 = vunpack.c.h.b16 %v472
        %v798 = vunpack.c.l.b16 %v473
        %v799 = vunpack.c.h.b16 %v473
        %v800 = vunpack.c.l.b16 %v474
        %v801 = vunpack.c.h.b16 %v474
        %v802 = vunpack.c.l.b16 %v475
        %v803 = vunpack.c.h.b16 %v475
        %v804 = vunpack.c.l.b16 %v476
        %v805 = vunpack.c.h.b16 %v476
        %v806 = vunpack.c.l.b16 %v477
        %v807 = vunpack.c.h.b16 %v477
        %v808 = vunpack.c.l.b16 %v478
        %v809 = vunpack.c.h.b16 %v478
        %v810 = vunpack.c.l.b16 %v479
        %v811 = vunpack.c.h.b16 %v479
        %v812 = vunpack.c.l.b16 %v480
        %v813 = vunpack.c.h.b16 %v480
        %v814 = vunpack.c.l.b16 %v481
        %v815 = vunpack.c.h.b16 %v481
        %v816 = vunpack.c.l.b16 %v482
        %v817 = vunpack.c.h.b16 %v482
        %v818 = vunpack.c.l.b16 %v483
        %v819 = vunpack.c.h.b16 %v483
        %v820 = vunpack.c.l.b16 %v484
        %v821 = vunpack.c.h.b16 %v484
        %v822 = vunpack.c.l.b16 %v485
        %v823 = vunpack.c.h.b16 %v485
        %v824 = vunpack.c.l.b16 %v486
        %v825 = vunpack.c.h.b16 %v486
        %v826 = vunpack.c.l.b16 %v487
        %v827 = vunpack.c.h.b16 %v487
        %v828 = vunpack.c.l.b16 %v488
        %v829 = vunpack.c.h.b16 %v488
        %v830 = vunpack.c.l.b16 %v489
        %v831 = vunpack.c.h.b16 %v489
        %v832 = vunpack.c.l.b16 %v490
        %v833 = vunpack.c.h.b16 %v490
        %v834 = vunpack.c.l.b16 %v491
        %v835 = vunpack.c.h.b16 %v491
        %v836 = vunpack.c.l.b16 %v492
        %v837 = vunpack.c.h.b16 %v492
        %v838 = vunpack.c.l.b16 %v493
        %v839 = vunpack.c.h.b16 %v493
        %v840 = vunpack.c.l.b16 %v494
        %v841 = vunpack.c.h.b16 %v494
        %v842 = vunpack.c.l.b16 %v495
        %v843 = vunpack.c.h.b16 %v495
        %v844 = vunpack.c.l.b16 %v496
        %v845 = vunpack.c.h.b16 %v496
        %v846 = vunpack.c.l.b16 %v497
        %v847 = vunpack.c.h.b16 %v497
        %v848 = vunpack.c.l.b16 %v498
        %v849 = vunpack.c.h.b16 %v498
        %v850 = vunpack.c.l.b16 %v499
        %v851 = vunpack.c.h.b16 %v499
        %v852 = vunpack.c.l.b16 %v500
        %v853 = vunpack.c.h.b16 %v500
        %v854 = vunpack.c.l.b16 %v501
        %v855 = vunpack.c.h.b16 %v501
        %v856 = vunpack.c.l.b16 %v502
        %v857 = vunpack.c.h.b16 %v502
        %v858 = vpack.c.b16 %v796, %v794
        %v859 = vpack.c.b16 %v797, %v795
        %v860 = vpack.c.b16 %v800, %v798
        %v861 = vpack.c.b16 %v801, %v799
        %v862 = vpack.c.b16 %v804, %v802
        %v863 = vpack.c.b16 %v805, %v803
        %v864 = vpack.c.b16 %v808, %v806
        %v865 = vpack.c.b16 %v809, %v807
        %v866 = vpack.c.b16 %v812, %v810
        %v867 = vpack.c.b16 %v813, %v811
        %v868 = vpack.c.b16 %v816, %v814
        %v869 = vpack.c.b16 %v817, %v815
        %v870 = vpack.c.b16 %v820, %v818
        %v871 = vpack.c.b16 %v821, %v819
        %v872 = vpack.c.b16 %v824, %v822
        %v873 = vpack.c.b16 %v825, %v823
        %v874 = vpack.c.b16 %v828, %v826
        %v875 = vpack.c.b16 %v829, %v827
        %v876 = vpack.c.b16 %v832, %v830
        %v877 = vpack.c.b16 %v833, %v831
        %v878 = vpack.c.b16 %v836, %v834
        %v879 = vpack.c.b16 %v837, %v835
        %v880 = vpack.c.b16 %v840, %v838
        %v881 = vpack.c.b16 %v841, %v839
        %v882 = vpack.c.b16 %v844, %v842
        %v883 = vpack.c.b16 %v845, %v843
        %v884 = vpack.c.b16 %v848, %v846
        %v885 = vpack.c.b16 %v849, %v847
        %v886 = vpack.c.b16 %v852, %v850
        %v887 = vpack.c.b16 %v853, %v851
        %v888 = vpack.c.b16 %v856, %v854
        %v889 = vpack.c.b16 %v857, %v855
        %922 = vmatpush.bf16.msra.mxu0 %v872
        %923 = vmatpush.bf16.msra.mxu0 %v870
        %924 = vmatpush.bf16.msra.mxu0 %v868
        %925 = vmatpush.bf16.msra.mxu0 %v866
        %926 = vmatpush.bf16.msra.mxu0 %v864
        %927 = vmatpush.bf16.msra.mxu0 %v862
        %928 = vmatpush.bf16.msra.mxu0 %v860
        %929 = vmatpush.bf16.msra.mxu0 %v858
        %930 = vmatmul.bf16.gmra.mxu0 %v758
        %v931 = vpop.f32.mrf.mxu0
        %v932 = vadd.f32 %v726, %v931
        %v933 = vpop.f32.mrf.mxu0
        %934 = vdwg.mxu0
        %935 = vmatpush.bf16.msra.mxu0 %v888
        %936 = vmatpush.bf16.msra.mxu0 %v886
        %937 = vmatpush.bf16.msra.mxu0 %v884
        %938 = vmatpush.bf16.msra.mxu0 %v882
        %939 = vmatpush.bf16.msra.mxu0 %v880
        %940 = vmatpush.bf16.msra.mxu0 %v878
        %941 = vmatpush.bf16.msra.mxu0 %v876
        %942 = vmatpush.bf16.msra.mxu0 %v874
        %943 = vmatmul.bf16.gmra.mxu0 %v759
        %v944 = vpop.f32.mrf.mxu0
        %v945 = vadd.f32 %v932, %v944
        %v946 = vpop.f32.mrf.mxu0
        %947 = vdwg.mxu0
        %948 = vmatpush.bf16.msra.mxu0 %v873
        %949 = vmatpush.bf16.msra.mxu0 %v871
        %950 = vmatpush.bf16.msra.mxu0 %v869
        %951 = vmatpush.bf16.msra.mxu0 %v867
        %952 = vmatpush.bf16.msra.mxu0 %v865
        %953 = vmatpush.bf16.msra.mxu0 %v863
        %954 = vmatpush.bf16.msra.mxu0 %v861
        %955 = vmatpush.bf16.msra.mxu0 %v859
        %956 = vmatmul.bf16.gmra.mxu0 %v758
        %v957 = vpop.f32.mrf.mxu0
        %v958 = vadd.f32 %v752, %v957
        %v959 = vpop.f32.mrf.mxu0
        %960 = vdwg.mxu0
        %961 = vmatpush.bf16.msra.mxu0 %v889
        %962 = vmatpush.bf16.msra.mxu0 %v887
        %963 = vmatpush.bf16.msra.mxu0 %v885
        %964 = vmatpush.bf16.msra.mxu0 %v883
        %965 = vmatpush.bf16.msra.mxu0 %v881
        %966 = vmatpush.bf16.msra.mxu0 %v879
        %967 = vmatpush.bf16.msra.mxu0 %v877
        %968 = vmatpush.bf16.msra.mxu0 %v875
        %969 = vmatmul.bf16.gmra.mxu0 %v759
        %v970 = vpop.f32.mrf.mxu0
        %v971 = vadd.f32 %v958, %v970
        %v972 = vpop.f32.mrf.mxu0
        %973 = vdwg.mxu0
        %s974 = scalar_lea.vmem [#allocation3], 512
        %v975 = vld [vmem:[%s974] sm:$0xff]
        %v976 = vld [vmem:[%s974 + $0x8] sm:$0xff]
        %v977 = vld [vmem:[%s974 + $0x10] sm:$0xff]
        %v978 = vld [vmem:[%s974 + $0x18] sm:$0xff]
        %v979 = vld [vmem:[%s974 + $0x20] sm:$0xff]
        %v980 = vld [vmem:[%s974 + $0x28] sm:$0xff]
        %v981 = vld [vmem:[%s974 + $0x30] sm:$0xff]
        %v982 = vld [vmem:[%s974 + $0x38] sm:$0xff]
        %v983 = vld [vmem:[%s974 + $0x40] sm:$0xff]
        %v984 = vld [vmem:[%s974 + $0x48] sm:$0xff]
        %v985 = vld [vmem:[%s974 + $0x50] sm:$0xff]
        %v986 = vld [vmem:[%s974 + $0x58] sm:$0xff]
        %v987 = vld [vmem:[%s974 + $0x60] sm:$0xff]
        %v988 = vld [vmem:[%s974 + $0x68] sm:$0xff]
        %v989 = vld [vmem:[%s974 + $0x70] sm:$0xff]
        %v990 = vld [vmem:[%s974 + $0x78] sm:$0xff]
        %v991 = vld [vmem:[%s974 + $0x80] sm:$0xff]
        %v992 = vld [vmem:[%s974 + $0x88] sm:$0xff]
        %v993 = vld [vmem:[%s974 + $0x90] sm:$0xff]
        %v994 = vld [vmem:[%s974 + $0x98] sm:$0xff]
        %v995 = vld [vmem:[%s974 + $0xa0] sm:$0xff]
        %v996 = vld [vmem:[%s974 + $0xa8] sm:$0xff]
        %v997 = vld [vmem:[%s974 + $0xb0] sm:$0xff]
        %v998 = vld [vmem:[%s974 + $0xb8] sm:$0xff]
        %v999 = vld [vmem:[%s974 + $0xc0] sm:$0xff]
        %v1000 = vld [vmem:[%s974 + $0xc8] sm:$0xff]
        %v1001 = vld [vmem:[%s974 + $0xd0] sm:$0xff]
        %v1002 = vld [vmem:[%s974 + $0xd8] sm:$0xff]
        %v1003 = vld [vmem:[%s974 + $0xe0] sm:$0xff]
        %v1004 = vld [vmem:[%s974 + $0xe8] sm:$0xff]
        %v1005 = vld [vmem:[%s974 + $0xf0] sm:$0xff]
        %v1006 = vld [vmem:[%s974 + $0xf8] sm:$0xff]
        %v1008 = vunpack.c.l.b16 %v469
        %v1009 = vunpack.c.h.b16 %v469
        %v1010 = vpack.c.b16 %v1008, %v756
        %v1011 = vpack.c.b16 %v1009, %v757
        %v1013 = vshrl.u32 %v1010, 16
        %v1015 = vshll.u32 %v1010, 16
        %v1017 = vrot.slane %v1015, 1
        %v1018 = vor.u32 %v1013, %v1017
        %v1020 = vshrl.u32 %v1011, 16
        %v1022 = vshll.u32 %v1011, 16
        %v1024 = vrot.slane %v1022, 1
        %v1025 = vor.u32 %v1020, %v1024
        %v1060 = vunpack.c.l.b16 %v975
        %v1061 = vunpack.c.h.b16 %v975
        %v1062 = vunpack.c.l.b16 %v976
        %v1063 = vunpack.c.h.b16 %v976
        %v1064 = vunpack.c.l.b16 %v977
        %v1065 = vunpack.c.h.b16 %v977
        %v1066 = vunpack.c.l.b16 %v978
        %v1067 = vunpack.c.h.b16 %v978
        %v1068 = vunpack.c.l.b16 %v979
        %v1069 = vunpack.c.h.b16 %v979
        %v1070 = vunpack.c.l.b16 %v980
        %v1071 = vunpack.c.h.b16 %v980
        %v1072 = vunpack.c.l.b16 %v981
        %v1073 = vunpack.c.h.b16 %v981
        %v1074 = vunpack.c.l.b16 %v982
        %v1075 = vunpack.c.h.b16 %v982
        %v1076 = vunpack.c.l.b16 %v983
        %v1077 = vunpack.c.h.b16 %v983
        %v1078 = vunpack.c.l.b16 %v984
        %v1079 = vunpack.c.h.b16 %v984
        %v1080 = vunpack.c.l.b16 %v985
        %v1081 = vunpack.c.h.b16 %v985
        %v1082 = vunpack.c.l.b16 %v986
        %v1083 = vunpack.c.h.b16 %v986
        %v1084 = vunpack.c.l.b16 %v987
        %v1085 = vunpack.c.h.b16 %v987
        %v1086 = vunpack.c.l.b16 %v988
        %v1087 = vunpack.c.h.b16 %v988
        %v1088 = vunpack.c.l.b16 %v989
        %v1089 = vunpack.c.h.b16 %v989
        %v1090 = vunpack.c.l.b16 %v990
        %v1091 = vunpack.c.h.b16 %v990
        %v1092 = vunpack.c.l.b16 %v991
        %v1093 = vunpack.c.h.b16 %v991
        %v1094 = vunpack.c.l.b16 %v992
        %v1095 = vunpack.c.h.b16 %v992
        %v1096 = vunpack.c.l.b16 %v993
        %v1097 = vunpack.c.h.b16 %v993
        %v1098 = vunpack.c.l.b16 %v994
        %v1099 = vunpack.c.h.b16 %v994
        %v1100 = vunpack.c.l.b16 %v995
        %v1101 = vunpack.c.h.b16 %v995
        %v1102 = vunpack.c.l.b16 %v996
        %v1103 = vunpack.c.h.b16 %v996
        %v1104 = vunpack.c.l.b16 %v997
        %v1105 = vunpack.c.h.b16 %v997
        %v1106 = vunpack.c.l.b16 %v998
        %v1107 = vunpack.c.h.b16 %v998
        %v1108 = vunpack.c.l.b16 %v999
        %v1109 = vunpack.c.h.b16 %v999
        %v1110 = vunpack.c.l.b16 %v1000
        %v1111 = vunpack.c.h.b16 %v1000
        %v1112 = vunpack.c.l.b16 %v1001
        %v1113 = vunpack.c.h.b16 %v1001
        %v1114 = vunpack.c.l.b16 %v1002
        %v1115 = vunpack.c.h.b16 %v1002
        %v1116 = vunpack.c.l.b16 %v1003
        %v1117 = vunpack.c.h.b16 %v1003
        %v1118 = vunpack.c.l.b16 %v1004
        %v1119 = vunpack.c.h.b16 %v1004
        %v1120 = vunpack.c.l.b16 %v1005
        %v1121 = vunpack.c.h.b16 %v1005
        %v1122 = vunpack.c.l.b16 %v1006
        %v1123 = vunpack.c.h.b16 %v1006
        %v1124 = vpack.c.b16 %v1062, %v1060
        %v1125 = vpack.c.b16 %v1063, %v1061
        %v1126 = vpack.c.b16 %v1066, %v1064
        %v1127 = vpack.c.b16 %v1067, %v1065
        %v1128 = vpack.c.b16 %v1070, %v1068
        %v1129 = vpack.c.b16 %v1071, %v1069
        %v1130 = vpack.c.b16 %v1074, %v1072
        %v1131 = vpack.c.b16 %v1075, %v1073
        %v1132 = vpack.c.b16 %v1078, %v1076
        %v1133 = vpack.c.b16 %v1079, %v1077
        %v1134 = vpack.c.b16 %v1082, %v1080
        %v1135 = vpack.c.b16 %v1083, %v1081
        %v1136 = vpack.c.b16 %v1086, %v1084
        %v1137 = vpack.c.b16 %v1087, %v1085
        %v1138 = vpack.c.b16 %v1090, %v1088
        %v1139 = vpack.c.b16 %v1091, %v1089
        %v1140 = vpack.c.b16 %v1094, %v1092
        %v1141 = vpack.c.b16 %v1095, %v1093
        %v1142 = vpack.c.b16 %v1098, %v1096
        %v1143 = vpack.c.b16 %v1099, %v1097
        %v1144 = vpack.c.b16 %v1102, %v1100
        %v1145 = vpack.c.b16 %v1103, %v1101
        %v1146 = vpack.c.b16 %v1106, %v1104
        %v1147 = vpack.c.b16 %v1107, %v1105
        %v1148 = vpack.c.b16 %v1110, %v1108
        %v1149 = vpack.c.b16 %v1111, %v1109
        %v1150 = vpack.c.b16 %v1114, %v1112
        %v1151 = vpack.c.b16 %v1115, %v1113
        %v1152 = vpack.c.b16 %v1118, %v1116
        %v1153 = vpack.c.b16 %v1119, %v1117
        %v1154 = vpack.c.b16 %v1122, %v1120
        %v1155 = vpack.c.b16 %v1123, %v1121
        %1188 = vmatpush.bf16.msra.mxu0 %v1138
        %1189 = vmatpush.bf16.msra.mxu0 %v1136
        %1190 = vmatpush.bf16.msra.mxu0 %v1134
        %1191 = vmatpush.bf16.msra.mxu0 %v1132
        %1192 = vmatpush.bf16.msra.mxu0 %v1130
        %1193 = vmatpush.bf16.msra.mxu0 %v1128
        %1194 = vmatpush.bf16.msra.mxu0 %v1126
        %1195 = vmatpush.bf16.msra.mxu0 %v1124
        %1196 = vmatmul.bf16.gmra.mxu0 %v1018
        %v1197 = vpop.f32.mrf.mxu0
        %v1198 = vadd.f32 0.0, %v1197
        %v1199 = vpop.f32.mrf.mxu0
        %1200 = vdwg.mxu0
        %1201 = vmatpush.bf16.msra.mxu0 %v1154
        %1202 = vmatpush.bf16.msra.mxu0 %v1152
        %1203 = vmatpush.bf16.msra.mxu0 %v1150
        %1204 = vmatpush.bf16.msra.mxu0 %v1148
        %1205 = vmatpush.bf16.msra.mxu0 %v1146
        %1206 = vmatpush.bf16.msra.mxu0 %v1144
        %1207 = vmatpush.bf16.msra.mxu0 %v1142
        %1208 = vmatpush.bf16.msra.mxu0 %v1140
        %1209 = vmatmul.bf16.gmra.mxu0 %v1025
        %v1210 = vpop.f32.mrf.mxu0
        %v1211 = vadd.f32 %v1198, %v1210
        %v1212 = vpop.f32.mrf.mxu0
        %1213 = vdwg.mxu0
        %1214 = vmatpush.bf16.msra.mxu0 %v1139
        %1215 = vmatpush.bf16.msra.mxu0 %v1137
        %1216 = vmatpush.bf16.msra.mxu0 %v1135
        %1217 = vmatpush.bf16.msra.mxu0 %v1133
        %1218 = vmatpush.bf16.msra.mxu0 %v1131
        %1219 = vmatpush.bf16.msra.mxu0 %v1129
        %1220 = vmatpush.bf16.msra.mxu0 %v1127
        %1221 = vmatpush.bf16.msra.mxu0 %v1125
        %1222 = vmatmul.bf16.gmra.mxu0 %v1018
        %v1223 = vpop.f32.mrf.mxu0
        %v1224 = vadd.f32 0.0, %v1223
        %v1225 = vpop.f32.mrf.mxu0
        %1226 = vdwg.mxu0
        %1227 = vmatpush.bf16.msra.mxu0 %v1155
        %1228 = vmatpush.bf16.msra.mxu0 %v1153
        %1229 = vmatpush.bf16.msra.mxu0 %v1151
        %1230 = vmatpush.bf16.msra.mxu0 %v1149
        %1231 = vmatpush.bf16.msra.mxu0 %v1147
        %1232 = vmatpush.bf16.msra.mxu0 %v1145
        %1233 = vmatpush.bf16.msra.mxu0 %v1143
        %1234 = vmatpush.bf16.msra.mxu0 %v1141
        %1235 = vmatmul.bf16.gmra.mxu0 %v1025
        %v1236 = vpop.f32.mrf.mxu0
        %v1237 = vadd.f32 %v1224, %v1236
        %v1238 = vpop.f32.mrf.mxu0
        %1239 = vdwg.mxu0
        %v1240 = vadd.f32 %v945, %v1211
        %v1241 = vadd.f32 %v971, %v1237
        %v1242 = vld [vmem:[#allocation5] sm:$0x3]
        %v1244 = vperm.slane %v1242, 0
        %v1245 = vperm.slane %v1242, 1
        %v1248 = vmul.f32 %v1240, %v1244
        %v1249 = vmul.f32 %v1241, %v1245
        %v1250 = vld [vmem:[#allocation7] sm:$0x3]
        %v1252 = vperm.slane %v1250, 0
        %v1253 = vperm.slane %v1250, 1
        %v1256 = vadd.f32 %v1248, %v1252
        %v1257 = vadd.f32 %v1249, %v1253
        %v1258 = vmax.f32 %v1256, 0.0
        %v1259 = vmax.f32 %v1257, 0.0
        %1260 = vst [vmem:[#allocation2] sm:$0xff] 0
        %1261 = vst [vmem:[#allocation2 + $0x8] sm:$0x11] 0
        %v1262 = vpack.c.bf16 %v1259, %v1258
        %v1264 = vshrl.u32 %v1262, 16
        %v1266 = vrot.slane %v1264, 7
        %v1267 = vshll.u32 %v1262, 16
        %v1269 = vor.u32 %v1266, %v1267
        %v1270 = vrot.slane %v1266, 4
        %vm1273 = vcmask 1043456
        %vm1274 = vsmask.f32 7938
        %vm1275 = vmand %vm1273, %vm1274
        %vm1276 = vcmask 1047556
        %vm1277 = vsmask.f32 7954
        %vm1278 = vmand %vm1276, %vm1277
        %vm1279 = vmor %vm1278, %vm1275
        %v1280 = vld [vmem:[#allocation2] sm:$0xff]
        %v1281 = vsel %vm1279, %v1269, %v1280
        %1282 = vst [vmem:[#allocation2] sm:$0xff] %v1281
        %vm1283 = vcmask 1040384
        %vm1284 = vsmask.f32 256
        %vm1285 = vmand %vm1283, %vm1284
        %vm1286 = vcmask 1044484
        %vm1287 = vsmask.f32 4352
        %vm1288 = vmand %vm1286, %vm1287
        %vm1289 = vmor %vm1288, %vm1285
        %v1290 = vld [vmem:[#allocation2 + $0x8] sm:$0x11]
        %v1291 = vsel %vm1289, %v1270, %v1290
        %1292 = vst [vmem:[#allocation2 + $0x8] sm:$0x11] %v1291
        %v1293 = vld [vmem:[#allocation2] sm:$0xff]
        %v1294 = vld [vmem:[#allocation8] sm:$0xff]
        %v1295 = vld [vmem:[#allocation8 + $0x8] sm:$0xff]
        %v1296 = vld [vmem:[#allocation8 + $0x10] sm:$0xff]
        %v1297 = vld [vmem:[#allocation8 + $0x18] sm:$0xff]
        %v1298 = vld [vmem:[#allocation8 + $0x20] sm:$0xff]
        %v1299 = vld [vmem:[#allocation8 + $0x28] sm:$0xff]
        %v1300 = vld [vmem:[#allocation8 + $0x30] sm:$0xff]
        %v1301 = vld [vmem:[#allocation8 + $0x38] sm:$0xff]
        %v1302 = vld [vmem:[#allocation8 + $0x40] sm:$0xff]
        %v1303 = vld [vmem:[#allocation8 + $0x48] sm:$0xff]
        %v1304 = vld [vmem:[#allocation8 + $0x50] sm:$0xff]
        %v1305 = vld [vmem:[#allocation8 + $0x58] sm:$0xff]
        %v1306 = vld [vmem:[#allocation8 + $0x60] sm:$0xff]
        %v1307 = vld [vmem:[#allocation8 + $0x68] sm:$0xff]
        %v1308 = vld [vmem:[#allocation8 + $0x70] sm:$0xff]
        %v1309 = vld [vmem:[#allocation8 + $0x78] sm:$0xff]
        %v1310 = vld [vmem:[#allocation8 + $0x80] sm:$0xff]
        %v1311 = vld [vmem:[#allocation8 + $0x88] sm:$0xff]
        %v1312 = vld [vmem:[#allocation8 + $0x90] sm:$0xff]
        %v1313 = vld [vmem:[#allocation8 + $0x98] sm:$0xff]
        %v1314 = vld [vmem:[#allocation8 + $0xa0] sm:$0xff]
        %v1315 = vld [vmem:[#allocation8 + $0xa8] sm:$0xff]
        %v1316 = vld [vmem:[#allocation8 + $0xb0] sm:$0xff]
        %v1317 = vld [vmem:[#allocation8 + $0xb8] sm:$0xff]
        %v1318 = vld [vmem:[#allocation8 + $0xc0] sm:$0xff]
        %v1319 = vld [vmem:[#allocation8 + $0xc8] sm:$0xff]
        %v1320 = vld [vmem:[#allocation8 + $0xd0] sm:$0xff]
        %v1321 = vld [vmem:[#allocation8 + $0xd8] sm:$0xff]
        %v1322 = vld [vmem:[#allocation8 + $0xe0] sm:$0xff]
        %v1323 = vld [vmem:[#allocation8 + $0xe8] sm:$0xff]
        %v1324 = vld [vmem:[#allocation8 + $0xf0] sm:$0xff]
        %v1325 = vld [vmem:[#allocation8 + $0xf8] sm:$0xff]
        %v1326 = vld [vmem:[#allocation2 + $0x8] sm:$0x11]
        %s1327 = scalar_lea.vmem [#allocation8], 256
        %v1328 = vld [vmem:[%s1327] sm:$0xff]
        %v1329 = vld [vmem:[%s1327 + $0x8] sm:$0xff]
        %v1330 = vld [vmem:[%s1327 + $0x10] sm:$0xff]
        %v1331 = vld [vmem:[%s1327 + $0x18] sm:$0xff]
        %v1332 = vld [vmem:[%s1327 + $0x20] sm:$0xff]
        %v1333 = vld [vmem:[%s1327 + $0x28] sm:$0xff]
        %v1334 = vld [vmem:[%s1327 + $0x30] sm:$0xff]
        %v1335 = vld [vmem:[%s1327 + $0x38] sm:$0xff]
        %v1336 = vld [vmem:[%s1327 + $0x40] sm:$0xff]
        %v1337 = vld [vmem:[%s1327 + $0x48] sm:$0xff]
        %v1338 = vld [vmem:[%s1327 + $0x50] sm:$0xff]
        %v1339 = vld [vmem:[%s1327 + $0x58] sm:$0xff]
        %v1340 = vld [vmem:[%s1327 + $0x60] sm:$0xff]
        %v1341 = vld [vmem:[%s1327 + $0x68] sm:$0xff]
        %v1342 = vld [vmem:[%s1327 + $0x70] sm:$0xff]
        %v1343 = vld [vmem:[%s1327 + $0x78] sm:$0xff]
        %v1344 = vld [vmem:[%s1327 + $0x80] sm:$0xff]
        %v1345 = vld [vmem:[%s1327 + $0x88] sm:$0xff]
        %v1346 = vld [vmem:[%s1327 + $0x90] sm:$0xff]
        %v1347 = vld [vmem:[%s1327 + $0x98] sm:$0xff]
        %v1348 = vld [vmem:[%s1327 + $0xa0] sm:$0xff]
        %v1349 = vld [vmem:[%s1327 + $0xa8] sm:$0xff]
        %v1350 = vld [vmem:[%s1327 + $0xb0] sm:$0xff]
        %v1351 = vld [vmem:[%s1327 + $0xb8] sm:$0xff]
        %v1352 = vld [vmem:[%s1327 + $0xc0] sm:$0xff]
        %v1353 = vld [vmem:[%s1327 + $0xc8] sm:$0xff]
        %v1354 = vld [vmem:[%s1327 + $0xd0] sm:$0xff]
        %v1355 = vld [vmem:[%s1327 + $0xd8] sm:$0xff]
        %v1356 = vld [vmem:[%s1327 + $0xe0] sm:$0xff]
        %v1357 = vld [vmem:[%s1327 + $0xe8] sm:$0xff]
        %v1358 = vld [vmem:[%s1327 + $0xf0] sm:$0xff]
        %v1359 = vld [vmem:[%s1327 + $0xf8] sm:$0xff]
        %v1362 = vunpack.c.l.b16 %v1293
        %v1363 = vunpack.c.h.b16 %v1293
        %v1364 = vunpack.c.l.b16 %v1326
        %v1365 = vunpack.c.h.b16 %v1326
        %v1366 = vpack.c.b16 %v1364, %v1362
        %v1367 = vpack.c.b16 %v1365, %v1363
        %v1369 = vshrl.u32 %v1366, 16
        %v1371 = vshll.u32 %v1366, 16
        %v1373 = vrot.slane %v1371, 1
        %v1374 = vor.u32 %v1369, %v1373
        %v1376 = vshrl.u32 %v1367, 16
        %v1378 = vshll.u32 %v1367, 16
        %v1380 = vrot.slane %v1378, 1
        %v1381 = vor.u32 %v1376, %v1380
        %v1416 = vunpack.c.l.b16 %v1328
        %v1417 = vunpack.c.h.b16 %v1328
        %v1418 = vunpack.c.l.b16 %v1329
        %v1419 = vunpack.c.h.b16 %v1329
        %v1420 = vunpack.c.l.b16 %v1330
        %v1421 = vunpack.c.h.b16 %v1330
        %v1422 = vunpack.c.l.b16 %v1331
        %v1423 = vunpack.c.h.b16 %v1331
        %v1424 = vunpack.c.l.b16 %v1332
        %v1425 = vunpack.c.h.b16 %v1332
        %v1426 = vunpack.c.l.b16 %v1333
        %v1427 = vunpack.c.h.b16 %v1333
        %v1428 = vunpack.c.l.b16 %v1334
        %v1429 = vunpack.c.h.b16 %v1334
        %v1430 = vunpack.c.l.b16 %v1335
        %v1431 = vunpack.c.h.b16 %v1335
        %v1432 = vunpack.c.l.b16 %v1336
        %v1433 = vunpack.c.h.b16 %v1336
        %v1434 = vunpack.c.l.b16 %v1337
        %v1435 = vunpack.c.h.b16 %v1337
        %v1436 = vunpack.c.l.b16 %v1338
        %v1437 = vunpack.c.h.b16 %v1338
        %v1438 = vunpack.c.l.b16 %v1339
        %v1439 = vunpack.c.h.b16 %v1339
        %v1440 = vunpack.c.l.b16 %v1340
        %v1441 = vunpack.c.h.b16 %v1340
        %v1442 = vunpack.c.l.b16 %v1341
        %v1443 = vunpack.c.h.b16 %v1341
        %v1444 = vunpack.c.l.b16 %v1342
        %v1445 = vunpack.c.h.b16 %v1342
        %v1446 = vunpack.c.l.b16 %v1343
        %v1447 = vunpack.c.h.b16 %v1343
        %v1448 = vunpack.c.l.b16 %v1344
        %v1449 = vunpack.c.h.b16 %v1344
        %v1450 = vunpack.c.l.b16 %v1345
        %v1451 = vunpack.c.h.b16 %v1345
        %v1452 = vunpack.c.l.b16 %v1346
        %v1453 = vunpack.c.h.b16 %v1346
        %v1454 = vunpack.c.l.b16 %v1347
        %v1455 = vunpack.c.h.b16 %v1347
        %v1456 = vunpack.c.l.b16 %v1348
        %v1457 = vunpack.c.h.b16 %v1348
        %v1458 = vunpack.c.l.b16 %v1349
        %v1459 = vunpack.c.h.b16 %v1349
        %v1460 = vunpack.c.l.b16 %v1350
        %v1461 = vunpack.c.h.b16 %v1350
        %v1462 = vunpack.c.l.b16 %v1351
        %v1463 = vunpack.c.h.b16 %v1351
        %v1464 = vunpack.c.l.b16 %v1352
        %v1465 = vunpack.c.h.b16 %v1352
        %v1466 = vunpack.c.l.b16 %v1353
        %v1467 = vunpack.c.h.b16 %v1353
        %v1468 = vunpack.c.l.b16 %v1354
        %v1469 = vunpack.c.h.b16 %v1354
        %v1470 = vunpack.c.l.b16 %v1355
        %v1471 = vunpack.c.h.b16 %v1355
        %v1472 = vunpack.c.l.b16 %v1356
        %v1473 = vunpack.c.h.b16 %v1356
        %v1474 = vunpack.c.l.b16 %v1357
        %v1475 = vunpack.c.h.b16 %v1357
        %v1476 = vunpack.c.l.b16 %v1358
        %v1477 = vunpack.c.h.b16 %v1358
        %v1478 = vunpack.c.l.b16 %v1359
        %v1479 = vunpack.c.h.b16 %v1359
        %v1480 = vpack.c.b16 %v1418, %v1416
        %v1481 = vpack.c.b16 %v1419, %v1417
        %v1482 = vpack.c.b16 %v1422, %v1420
        %v1483 = vpack.c.b16 %v1423, %v1421
        %v1484 = vpack.c.b16 %v1426, %v1424
        %v1485 = vpack.c.b16 %v1427, %v1425
        %v1486 = vpack.c.b16 %v1430, %v1428
        %v1487 = vpack.c.b16 %v1431, %v1429
        %v1488 = vpack.c.b16 %v1434, %v1432
        %v1489 = vpack.c.b16 %v1435, %v1433
        %v1490 = vpack.c.b16 %v1438, %v1436
        %v1491 = vpack.c.b16 %v1439, %v1437
        %v1492 = vpack.c.b16 %v1442, %v1440
        %v1493 = vpack.c.b16 %v1443, %v1441
        %v1494 = vpack.c.b16 %v1446, %v1444
        %v1495 = vpack.c.b16 %v1447, %v1445
        %v1496 = vpack.c.b16 %v1450, %v1448
        %v1497 = vpack.c.b16 %v1451, %v1449
        %v1498 = vpack.c.b16 %v1454, %v1452
        %v1499 = vpack.c.b16 %v1455, %v1453
        %v1500 = vpack.c.b16 %v1458, %v1456
        %v1501 = vpack.c.b16 %v1459, %v1457
        %v1502 = vpack.c.b16 %v1462, %v1460
        %v1503 = vpack.c.b16 %v1463, %v1461
        %v1504 = vpack.c.b16 %v1466, %v1464
        %v1505 = vpack.c.b16 %v1467, %v1465
        %v1506 = vpack.c.b16 %v1470, %v1468
        %v1507 = vpack.c.b16 %v1471, %v1469
        %v1508 = vpack.c.b16 %v1474, %v1472
        %v1509 = vpack.c.b16 %v1475, %v1473
        %v1510 = vpack.c.b16 %v1478, %v1476
        %v1511 = vpack.c.b16 %v1479, %v1477
        %1544 = vmatpush.bf16.msra.mxu0 %v1494
        %1545 = vmatpush.bf16.msra.mxu0 %v1492
        %1546 = vmatpush.bf16.msra.mxu0 %v1490
        %1547 = vmatpush.bf16.msra.mxu0 %v1488
        %1548 = vmatpush.bf16.msra.mxu0 %v1486
        %1549 = vmatpush.bf16.msra.mxu0 %v1484
        %1550 = vmatpush.bf16.msra.mxu0 %v1482
        %1551 = vmatpush.bf16.msra.mxu0 %v1480
        %1552 = vmatmul.bf16.gmra.mxu0 %v1374
        %v1553 = vpop.f32.mrf.mxu0
        %v1554 = vadd.f32 0.0, %v1553
        %v1555 = vpop.f32.mrf.mxu0
        %1556 = vdwg.mxu0
        %1557 = vmatpush.bf16.msra.mxu0 %v1510
        %1558 = vmatpush.bf16.msra.mxu0 %v1508
        %1559 = vmatpush.bf16.msra.mxu0 %v1506
        %1560 = vmatpush.bf16.msra.mxu0 %v1504
        %1561 = vmatpush.bf16.msra.mxu0 %v1502
        %1562 = vmatpush.bf16.msra.mxu0 %v1500
        %1563 = vmatpush.bf16.msra.mxu0 %v1498
        %1564 = vmatpush.bf16.msra.mxu0 %v1496
        %1565 = vmatmul.bf16.gmra.mxu0 %v1381
        %v1566 = vpop.f32.mrf.mxu0
        %v1567 = vadd.f32 %v1554, %v1566
        %v1568 = vpop.f32.mrf.mxu0
        %1569 = vdwg.mxu0
        %1570 = vmatpush.bf16.msra.mxu0 %v1495
        %1571 = vmatpush.bf16.msra.mxu0 %v1493
        %1572 = vmatpush.bf16.msra.mxu0 %v1491
        %1573 = vmatpush.bf16.msra.mxu0 %v1489
        %1574 = vmatpush.bf16.msra.mxu0 %v1487
        %1575 = vmatpush.bf16.msra.mxu0 %v1485
        %1576 = vmatpush.bf16.msra.mxu0 %v1483
        %1577 = vmatpush.bf16.msra.mxu0 %v1481
        %1578 = vmatmul.bf16.gmra.mxu0 %v1374
        %v1579 = vpop.f32.mrf.mxu0
        %v1580 = vadd.f32 0.0, %v1579
        %v1581 = vpop.f32.mrf.mxu0
        %1582 = vdwg.mxu0
        %1583 = vmatpush.bf16.msra.mxu0 %v1511
        %1584 = vmatpush.bf16.msra.mxu0 %v1509
        %1585 = vmatpush.bf16.msra.mxu0 %v1507
        %1586 = vmatpush.bf16.msra.mxu0 %v1505
        %1587 = vmatpush.bf16.msra.mxu0 %v1503
        %1588 = vmatpush.bf16.msra.mxu0 %v1501
        %1589 = vmatpush.bf16.msra.mxu0 %v1499
        %1590 = vmatpush.bf16.msra.mxu0 %v1497
        %1591 = vmatmul.bf16.gmra.mxu0 %v1381
        %v1592 = vpop.f32.mrf.mxu0
        %v1593 = vadd.f32 %v1580, %v1592
        %v1594 = vpop.f32.mrf.mxu0
        %1595 = vdwg.mxu0
        %v1596 = vpack.c.b16 %v1362, %v1362
        %v1597 = vpack.c.b16 %v1363, %v1363
        %v1632 = vunpack.c.l.b16 %v1294
        %v1633 = vunpack.c.h.b16 %v1294
        %v1634 = vunpack.c.l.b16 %v1295
        %v1635 = vunpack.c.h.b16 %v1295
        %v1636 = vunpack.c.l.b16 %v1296
        %v1637 = vunpack.c.h.b16 %v1296
        %v1638 = vunpack.c.l.b16 %v1297
        %v1639 = vunpack.c.h.b16 %v1297
        %v1640 = vunpack.c.l.b16 %v1298
        %v1641 = vunpack.c.h.b16 %v1298
        %v1642 = vunpack.c.l.b16 %v1299
        %v1643 = vunpack.c.h.b16 %v1299
        %v1644 = vunpack.c.l.b16 %v1300
        %v1645 = vunpack.c.h.b16 %v1300
        %v1646 = vunpack.c.l.b16 %v1301
        %v1647 = vunpack.c.h.b16 %v1301
        %v1648 = vunpack.c.l.b16 %v1302
        %v1649 = vunpack.c.h.b16 %v1302
        %v1650 = vunpack.c.l.b16 %v1303
        %v1651 = vunpack.c.h.b16 %v1303
        %v1652 = vunpack.c.l.b16 %v1304
        %v1653 = vunpack.c.h.b16 %v1304
        %v1654 = vunpack.c.l.b16 %v1305
        %v1655 = vunpack.c.h.b16 %v1305
        %v1656 = vunpack.c.l.b16 %v1306
        %v1657 = vunpack.c.h.b16 %v1306
        %v1658 = vunpack.c.l.b16 %v1307
        %v1659 = vunpack.c.h.b16 %v1307
        %v1660 = vunpack.c.l.b16 %v1308
        %v1661 = vunpack.c.h.b16 %v1308
        %v1662 = vunpack.c.l.b16 %v1309
        %v1663 = vunpack.c.h.b16 %v1309
        %v1664 = vunpack.c.l.b16 %v1310
        %v1665 = vunpack.c.h.b16 %v1310
        %v1666 = vunpack.c.l.b16 %v1311
        %v1667 = vunpack.c.h.b16 %v1311
        %v1668 = vunpack.c.l.b16 %v1312
        %v1669 = vunpack.c.h.b16 %v1312
        %v1670 = vunpack.c.l.b16 %v1313
        %v1671 = vunpack.c.h.b16 %v1313
        %v1672 = vunpack.c.l.b16 %v1314
        %v1673 = vunpack.c.h.b16 %v1314
        %v1674 = vunpack.c.l.b16 %v1315
        %v1675 = vunpack.c.h.b16 %v1315
        %v1676 = vunpack.c.l.b16 %v1316
        %v1677 = vunpack.c.h.b16 %v1316
        %v1678 = vunpack.c.l.b16 %v1317
        %v1679 = vunpack.c.h.b16 %v1317
        %v1680 = vunpack.c.l.b16 %v1318
        %v1681 = vunpack.c.h.b16 %v1318
        %v1682 = vunpack.c.l.b16 %v1319
        %v1683 = vunpack.c.h.b16 %v1319
        %v1684 = vunpack.c.l.b16 %v1320
        %v1685 = vunpack.c.h.b16 %v1320
        %v1686 = vunpack.c.l.b16 %v1321
        %v1687 = vunpack.c.h.b16 %v1321
        %v1688 = vunpack.c.l.b16 %v1322
        %v1689 = vunpack.c.h.b16 %v1322
        %v1690 = vunpack.c.l.b16 %v1323
        %v1691 = vunpack.c.h.b16 %v1323
        %v1692 = vunpack.c.l.b16 %v1324
        %v1693 = vunpack.c.h.b16 %v1324
        %v1694 = vunpack.c.l.b16 %v1325
        %v1695 = vunpack.c.h.b16 %v1325
        %v1696 = vpack.c.b16 %v1634, %v1632
        %v1697 = vpack.c.b16 %v1635, %v1633
        %v1698 = vpack.c.b16 %v1638, %v1636
        %v1699 = vpack.c.b16 %v1639, %v1637
        %v1700 = vpack.c.b16 %v1642, %v1640
        %v1701 = vpack.c.b16 %v1643, %v1641
        %v1702 = vpack.c.b16 %v1646, %v1644
        %v1703 = vpack.c.b16 %v1647, %v1645
        %v1704 = vpack.c.b16 %v1650, %v1648
        %v1705 = vpack.c.b16 %v1651, %v1649
        %v1706 = vpack.c.b16 %v1654, %v1652
        %v1707 = vpack.c.b16 %v1655, %v1653
        %v1708 = vpack.c.b16 %v1658, %v1656
        %v1709 = vpack.c.b16 %v1659, %v1657
        %v1710 = vpack.c.b16 %v1662, %v1660
        %v1711 = vpack.c.b16 %v1663, %v1661
        %v1712 = vpack.c.b16 %v1666, %v1664
        %v1713 = vpack.c.b16 %v1667, %v1665
        %v1714 = vpack.c.b16 %v1670, %v1668
        %v1715 = vpack.c.b16 %v1671, %v1669
        %v1716 = vpack.c.b16 %v1674, %v1672
        %v1717 = vpack.c.b16 %v1675, %v1673
        %v1718 = vpack.c.b16 %v1678, %v1676
        %v1719 = vpack.c.b16 %v1679, %v1677
        %v1720 = vpack.c.b16 %v1682, %v1680
        %v1721 = vpack.c.b16 %v1683, %v1681
        %v1722 = vpack.c.b16 %v1686, %v1684
        %v1723 = vpack.c.b16 %v1687, %v1685
        %v1724 = vpack.c.b16 %v1690, %v1688
        %v1725 = vpack.c.b16 %v1691, %v1689
        %v1726 = vpack.c.b16 %v1694, %v1692
        %v1727 = vpack.c.b16 %v1695, %v1693
        %1760 = vmatpush.bf16.msra.mxu0 %v1710
        %1761 = vmatpush.bf16.msra.mxu0 %v1708
        %1762 = vmatpush.bf16.msra.mxu0 %v1706
        %1763 = vmatpush.bf16.msra.mxu0 %v1704
        %1764 = vmatpush.bf16.msra.mxu0 %v1702
        %1765 = vmatpush.bf16.msra.mxu0 %v1700
        %1766 = vmatpush.bf16.msra.mxu0 %v1698
        %1767 = vmatpush.bf16.msra.mxu0 %v1696
        %1768 = vmatmul.bf16.gmra.mxu0 %v1596
        %v1769 = vpop.f32.mrf.mxu0
        %v1770 = vadd.f32 %v1567, %v1769
        %v1771 = vpop.f32.mrf.mxu0
        %1772 = vdwg.mxu0
        %1773 = vmatpush.bf16.msra.mxu0 %v1726
        %1774 = vmatpush.bf16.msra.mxu0 %v1724
        %1775 = vmatpush.bf16.msra.mxu0 %v1722
        %1776 = vmatpush.bf16.msra.mxu0 %v1720
        %1777 = vmatpush.bf16.msra.mxu0 %v1718
        %1778 = vmatpush.bf16.msra.mxu0 %v1716
        %1779 = vmatpush.bf16.msra.mxu0 %v1714
        %1780 = vmatpush.bf16.msra.mxu0 %v1712
        %1781 = vmatmul.bf16.gmra.mxu0 %v1597
        %v1782 = vpop.f32.mrf.mxu0
        %v1783 = vadd.f32 %v1770, %v1782
        %v1784 = vpop.f32.mrf.mxu0
        %1785 = vdwg.mxu0
        %1786 = vmatpush.bf16.msra.mxu0 %v1711
        %1787 = vmatpush.bf16.msra.mxu0 %v1709
        %1788 = vmatpush.bf16.msra.mxu0 %v1707
        %1789 = vmatpush.bf16.msra.mxu0 %v1705
        %1790 = vmatpush.bf16.msra.mxu0 %v1703
        %1791 = vmatpush.bf16.msra.mxu0 %v1701
        %1792 = vmatpush.bf16.msra.mxu0 %v1699
        %1793 = vmatpush.bf16.msra.mxu0 %v1697
        %1794 = vmatmul.bf16.gmra.mxu0 %v1596
        %v1795 = vpop.f32.mrf.mxu0
        %v1796 = vadd.f32 %v1593, %v1795
        %v1797 = vpop.f32.mrf.mxu0
        %1798 = vdwg.mxu0
        %1799 = vmatpush.bf16.msra.mxu0 %v1727
        %1800 = vmatpush.bf16.msra.mxu0 %v1725
        %1801 = vmatpush.bf16.msra.mxu0 %v1723
        %1802 = vmatpush.bf16.msra.mxu0 %v1721
        %1803 = vmatpush.bf16.msra.mxu0 %v1719
        %1804 = vmatpush.bf16.msra.mxu0 %v1717
        %1805 = vmatpush.bf16.msra.mxu0 %v1715
        %1806 = vmatpush.bf16.msra.mxu0 %v1713
        %1807 = vmatmul.bf16.gmra.mxu0 %v1597
        %v1808 = vpop.f32.mrf.mxu0
        %v1809 = vadd.f32 %v1796, %v1808
        %v1810 = vpop.f32.mrf.mxu0
        %1811 = vdwg.mxu0
        %v1812 = vld [vmem:[#allocation2] sm:$0xee]
        %s1813 = scalar_lea.vmem [#allocation8], 512
        %v1814 = vld [vmem:[%s1813] sm:$0xff]
        %v1815 = vld [vmem:[%s1813 + $0x8] sm:$0xff]
        %v1816 = vld [vmem:[%s1813 + $0x10] sm:$0xff]
        %v1817 = vld [vmem:[%s1813 + $0x18] sm:$0xff]
        %v1818 = vld [vmem:[%s1813 + $0x20] sm:$0xff]
        %v1819 = vld [vmem:[%s1813 + $0x28] sm:$0xff]
        %v1820 = vld [vmem:[%s1813 + $0x30] sm:$0xff]
        %v1821 = vld [vmem:[%s1813 + $0x38] sm:$0xff]
        %v1822 = vld [vmem:[%s1813 + $0x40] sm:$0xff]
        %v1823 = vld [vmem:[%s1813 + $0x48] sm:$0xff]
        %v1824 = vld [vmem:[%s1813 + $0x50] sm:$0xff]
        %v1825 = vld [vmem:[%s1813 + $0x58] sm:$0xff]
        %v1826 = vld [vmem:[%s1813 + $0x60] sm:$0xff]
        %v1827 = vld [vmem:[%s1813 + $0x68] sm:$0xff]
        %v1828 = vld [vmem:[%s1813 + $0x70] sm:$0xff]
        %v1829 = vld [vmem:[%s1813 + $0x78] sm:$0xff]
        %v1830 = vld [vmem:[%s1813 + $0x80] sm:$0xff]
        %v1831 = vld [vmem:[%s1813 + $0x88] sm:$0xff]
        %v1832 = vld [vmem:[%s1813 + $0x90] sm:$0xff]
        %v1833 = vld [vmem:[%s1813 + $0x98] sm:$0xff]
        %v1834 = vld [vmem:[%s1813 + $0xa0] sm:$0xff]
        %v1835 = vld [vmem:[%s1813 + $0xa8] sm:$0xff]
        %v1836 = vld [vmem:[%s1813 + $0xb0] sm:$0xff]
        %v1837 = vld [vmem:[%s1813 + $0xb8] sm:$0xff]
        %v1838 = vld [vmem:[%s1813 + $0xc0] sm:$0xff]
        %v1839 = vld [vmem:[%s1813 + $0xc8] sm:$0xff]
        %v1840 = vld [vmem:[%s1813 + $0xd0] sm:$0xff]
        %v1841 = vld [vmem:[%s1813 + $0xd8] sm:$0xff]
        %v1842 = vld [vmem:[%s1813 + $0xe0] sm:$0xff]
        %v1843 = vld [vmem:[%s1813 + $0xe8] sm:$0xff]
        %v1844 = vld [vmem:[%s1813 + $0xf0] sm:$0xff]
        %v1845 = vld [vmem:[%s1813 + $0xf8] sm:$0xff]
        %v1847 = vunpack.c.l.b16 %v1812
        %v1848 = vunpack.c.h.b16 %v1812
        %v1849 = vpack.c.b16 %v1364, %v1847
        %v1850 = vpack.c.b16 %v1365, %v1848
        %v1851 = vrot.slane %v1849, 1
        %v1852 = vrot.slane %v1850, 1
        %v1887 = vunpack.c.l.b16 %v1814
        %v1888 = vunpack.c.h.b16 %v1814
        %v1889 = vunpack.c.l.b16 %v1815
        %v1890 = vunpack.c.h.b16 %v1815
        %v1891 = vunpack.c.l.b16 %v1816
        %v1892 = vunpack.c.h.b16 %v1816
        %v1893 = vunpack.c.l.b16 %v1817
        %v1894 = vunpack.c.h.b16 %v1817
        %v1895 = vunpack.c.l.b16 %v1818
        %v1896 = vunpack.c.h.b16 %v1818
        %v1897 = vunpack.c.l.b16 %v1819
        %v1898 = vunpack.c.h.b16 %v1819
        %v1899 = vunpack.c.l.b16 %v1820
        %v1900 = vunpack.c.h.b16 %v1820
        %v1901 = vunpack.c.l.b16 %v1821
        %v1902 = vunpack.c.h.b16 %v1821
        %v1903 = vunpack.c.l.b16 %v1822
        %v1904 = vunpack.c.h.b16 %v1822
        %v1905 = vunpack.c.l.b16 %v1823
        %v1906 = vunpack.c.h.b16 %v1823
        %v1907 = vunpack.c.l.b16 %v1824
        %v1908 = vunpack.c.h.b16 %v1824
        %v1909 = vunpack.c.l.b16 %v1825
        %v1910 = vunpack.c.h.b16 %v1825
        %v1911 = vunpack.c.l.b16 %v1826
        %v1912 = vunpack.c.h.b16 %v1826
        %v1913 = vunpack.c.l.b16 %v1827
        %v1914 = vunpack.c.h.b16 %v1827
        %v1915 = vunpack.c.l.b16 %v1828
        %v1916 = vunpack.c.h.b16 %v1828
        %v1917 = vunpack.c.l.b16 %v1829
        %v1918 = vunpack.c.h.b16 %v1829
        %v1919 = vunpack.c.l.b16 %v1830
        %v1920 = vunpack.c.h.b16 %v1830
        %v1921 = vunpack.c.l.b16 %v1831
        %v1922 = vunpack.c.h.b16 %v1831
        %v1923 = vunpack.c.l.b16 %v1832
        %v1924 = vunpack.c.h.b16 %v1832
        %v1925 = vunpack.c.l.b16 %v1833
        %v1926 = vunpack.c.h.b16 %v1833
        %v1927 = vunpack.c.l.b16 %v1834
        %v1928 = vunpack.c.h.b16 %v1834
        %v1929 = vunpack.c.l.b16 %v1835
        %v1930 = vunpack.c.h.b16 %v1835
        %v1931 = vunpack.c.l.b16 %v1836
        %v1932 = vunpack.c.h.b16 %v1836
        %v1933 = vunpack.c.l.b16 %v1837
        %v1934 = vunpack.c.h.b16 %v1837
        %v1935 = vunpack.c.l.b16 %v1838
        %v1936 = vunpack.c.h.b16 %v1838
        %v1937 = vunpack.c.l.b16 %v1839
        %v1938 = vunpack.c.h.b16 %v1839
        %v1939 = vunpack.c.l.b16 %v1840
        %v1940 = vunpack.c.h.b16 %v1840
        %v1941 = vunpack.c.l.b16 %v1841
        %v1942 = vunpack.c.h.b16 %v1841
        %v1943 = vunpack.c.l.b16 %v1842
        %v1944 = vunpack.c.h.b16 %v1842
        %v1945 = vunpack.c.l.b16 %v1843
        %v1946 = vunpack.c.h.b16 %v1843
        %v1947 = vunpack.c.l.b16 %v1844
        %v1948 = vunpack.c.h.b16 %v1844
        %v1949 = vunpack.c.l.b16 %v1845
        %v1950 = vunpack.c.h.b16 %v1845
        %v1951 = vpack.c.b16 %v1889, %v1887
        %v1952 = vpack.c.b16 %v1890, %v1888
        %v1953 = vpack.c.b16 %v1893, %v1891
        %v1954 = vpack.c.b16 %v1894, %v1892
        %v1955 = vpack.c.b16 %v1897, %v1895
        %v1956 = vpack.c.b16 %v1898, %v1896
        %v1957 = vpack.c.b16 %v1901, %v1899
        %v1958 = vpack.c.b16 %v1902, %v1900
        %v1959 = vpack.c.b16 %v1905, %v1903
        %v1960 = vpack.c.b16 %v1906, %v1904
        %v1961 = vpack.c.b16 %v1909, %v1907
        %v1962 = vpack.c.b16 %v1910, %v1908
        %v1963 = vpack.c.b16 %v1913, %v1911
        %v1964 = vpack.c.b16 %v1914, %v1912
        %v1965 = vpack.c.b16 %v1917, %v1915
        %v1966 = vpack.c.b16 %v1918, %v1916
        %v1967 = vpack.c.b16 %v1921, %v1919
        %v1968 = vpack.c.b16 %v1922, %v1920
        %v1969 = vpack.c.b16 %v1925, %v1923
        %v1970 = vpack.c.b16 %v1926, %v1924
        %v1971 = vpack.c.b16 %v1929, %v1927
        %v1972 = vpack.c.b16 %v1930, %v1928
        %v1973 = vpack.c.b16 %v1933, %v1931
        %v1974 = vpack.c.b16 %v1934, %v1932
        %v1975 = vpack.c.b16 %v1937, %v1935
        %v1976 = vpack.c.b16 %v1938, %v1936
        %v1977 = vpack.c.b16 %v1941, %v1939
        %v1978 = vpack.c.b16 %v1942, %v1940
        %v1979 = vpack.c.b16 %v1945, %v1943
        %v1980 = vpack.c.b16 %v1946, %v1944
        %v1981 = vpack.c.b16 %v1949, %v1947
        %v1982 = vpack.c.b16 %v1950, %v1948
        %2015 = vmatpush.bf16.msra.mxu0 %v1965
        %2016 = vmatpush.bf16.msra.mxu0 %v1963
        %2017 = vmatpush.bf16.msra.mxu0 %v1961
        %2018 = vmatpush.bf16.msra.mxu0 %v1959
        %2019 = vmatpush.bf16.msra.mxu0 %v1957
        %2020 = vmatpush.bf16.msra.mxu0 %v1955
        %2021 = vmatpush.bf16.msra.mxu0 %v1953
        %2022 = vmatpush.bf16.msra.mxu0 %v1951
        %2023 = vmatmul.bf16.gmra.mxu0 %v1851
        %v2024 = vpop.f32.mrf.mxu0
        %v2025 = vadd.f32 0.0, %v2024
        %v2026 = vpop.f32.mrf.mxu0
        %2027 = vdwg.mxu0
        %2028 = vmatpush.bf16.msra.mxu0 %v1981
        %2029 = vmatpush.bf16.msra.mxu0 %v1979
        %2030 = vmatpush.bf16.msra.mxu0 %v1977
        %2031 = vmatpush.bf16.msra.mxu0 %v1975
        %2032 = vmatpush.bf16.msra.mxu0 %v1973
        %2033 = vmatpush.bf16.msra.mxu0 %v1971
        %2034 = vmatpush.bf16.msra.mxu0 %v1969
        %2035 = vmatpush.bf16.msra.mxu0 %v1967
        %2036 = vmatmul.bf16.gmra.mxu0 %v1852
        %v2037 = vpop.f32.mrf.mxu0
        %v2038 = vadd.f32 %v2025, %v2037
        %v2039 = vpop.f32.mrf.mxu0
        %2040 = vdwg.mxu0
        %2041 = vmatpush.bf16.msra.mxu0 %v1966
        %2042 = vmatpush.bf16.msra.mxu0 %v1964
        %2043 = vmatpush.bf16.msra.mxu0 %v1962
        %2044 = vmatpush.bf16.msra.mxu0 %v1960
        %2045 = vmatpush.bf16.msra.mxu0 %v1958
        %2046 = vmatpush.bf16.msra.mxu0 %v1956
        %2047 = vmatpush.bf16.msra.mxu0 %v1954
        %2048 = vmatpush.bf16.msra.mxu0 %v1952
        %2049 = vmatmul.bf16.gmra.mxu0 %v1851
        %v2050 = vpop.f32.mrf.mxu0
        %v2051 = vadd.f32 0.0, %v2050
        %v2052 = vpop.f32.mrf.mxu0
        %2053 = vdwg.mxu0
        %2054 = vmatpush.bf16.msra.mxu0 %v1982
        %2055 = vmatpush.bf16.msra.mxu0 %v1980
        %2056 = vmatpush.bf16.msra.mxu0 %v1978
        %2057 = vmatpush.bf16.msra.mxu0 %v1976
        %2058 = vmatpush.bf16.msra.mxu0 %v1974
        %2059 = vmatpush.bf16.msra.mxu0 %v1972
        %2060 = vmatpush.bf16.msra.mxu0 %v1970
        %2061 = vmatpush.bf16.msra.mxu0 %v1968
        %2062 = vmatmul.bf16.gmra.mxu0 %v1852
        %v2063 = vpop.f32.mrf.mxu0
        %v2064 = vadd.f32 %v2051, %v2063
        %v2065 = vpop.f32.mrf.mxu0
        %2066 = vdwg.mxu0
        %v2067 = vadd.f32 %v1783, %v2038
        %v2068 = vadd.f32 %v1809, %v2064
        %v2069 = vld [vmem:[#allocation13] sm:$0xff]
        %v2070 = vld [vmem:[#allocation13 + $0x8] sm:$0xff]
        %v2071 = vld [vmem:[#allocation13 + $0x10] sm:$0xff]
        %v2072 = vld [vmem:[#allocation13 + $0x18] sm:$0xff]
        %v2073 = vld [vmem:[#allocation13 + $0x20] sm:$0xff]
        %v2074 = vld [vmem:[#allocation13 + $0x28] sm:$0xff]
        %v2075 = vld [vmem:[#allocation13 + $0x30] sm:$0xff]
        %v2076 = vld [vmem:[#allocation13 + $0x38] sm:$0xff]
        %v2077 = vld [vmem:[#allocation13 + $0x40] sm:$0xff]
        %v2078 = vld [vmem:[#allocation13 + $0x48] sm:$0xff]
        %v2079 = vld [vmem:[#allocation13 + $0x50] sm:$0xff]
        %v2080 = vld [vmem:[#allocation13 + $0x58] sm:$0xff]
        %v2081 = vld [vmem:[#allocation13 + $0x60] sm:$0xff]
        %v2082 = vld [vmem:[#allocation13 + $0x68] sm:$0xff]
        %v2083 = vld [vmem:[#allocation13 + $0x70] sm:$0xff]
        %v2084 = vld [vmem:[#allocation13 + $0x78] sm:$0xff]
        %v2085 = vld [vmem:[#allocation13 + $0x80] sm:$0xff]
        %v2086 = vld [vmem:[#allocation13 + $0x88] sm:$0xff]
        %v2087 = vld [vmem:[#allocation13 + $0x90] sm:$0xff]
        %v2088 = vld [vmem:[#allocation13 + $0x98] sm:$0xff]
        %v2089 = vld [vmem:[#allocation13 + $0xa0] sm:$0xff]
        %v2090 = vld [vmem:[#allocation13 + $0xa8] sm:$0xff]
        %v2091 = vld [vmem:[#allocation13 + $0xb0] sm:$0xff]
        %v2092 = vld [vmem:[#allocation13 + $0xb8] sm:$0xff]
        %v2093 = vld [vmem:[#allocation13 + $0xc0] sm:$0xff]
        %v2094 = vld [vmem:[#allocation13 + $0xc8] sm:$0xff]
        %v2095 = vld [vmem:[#allocation13 + $0xd0] sm:$0xff]
        %v2096 = vld [vmem:[#allocation13 + $0xd8] sm:$0xff]
        %v2097 = vld [vmem:[#allocation13 + $0xe0] sm:$0xff]
        %v2098 = vld [vmem:[#allocation13 + $0xe8] sm:$0xff]
        %v2099 = vld [vmem:[#allocation13 + $0xf0] sm:$0xff]
        %v2100 = vld [vmem:[#allocation13 + $0xf8] sm:$0xff]
        %v2101 = vld [vmem:[#allocation13 + $0x100] sm:$0xff]
        %v2102 = vld [vmem:[#allocation13 + $0x108] sm:$0xff]
        %v2103 = vld [vmem:[#allocation13 + $0x110] sm:$0xff]
        %v2104 = vld [vmem:[#allocation13 + $0x118] sm:$0xff]
        %v2105 = vld [vmem:[#allocation13 + $0x120] sm:$0xff]
        %v2106 = vld [vmem:[#allocation13 + $0x128] sm:$0xff]
        %v2107 = vld [vmem:[#allocation13 + $0x130] sm:$0xff]
        %v2108 = vld [vmem:[#allocation13 + $0x138] sm:$0xff]
        %v2109 = vld [vmem:[#allocation13 + $0x140] sm:$0xff]
        %v2110 = vld [vmem:[#allocation13 + $0x148] sm:$0xff]
        %v2111 = vld [vmem:[#allocation13 + $0x150] sm:$0xff]
        %v2112 = vld [vmem:[#allocation13 + $0x158] sm:$0xff]
        %v2113 = vld [vmem:[#allocation13 + $0x160] sm:$0xff]
        %v2114 = vld [vmem:[#allocation13 + $0x168] sm:$0xff]
        %v2115 = vld [vmem:[#allocation13 + $0x170] sm:$0xff]
        %v2116 = vld [vmem:[#allocation13 + $0x178] sm:$0xff]
        %v2117 = vld [vmem:[#allocation13 + $0x180] sm:$0xff]
        %v2118 = vld [vmem:[#allocation13 + $0x188] sm:$0xff]
        %v2119 = vld [vmem:[#allocation13 + $0x190] sm:$0xff]
        %v2120 = vld [vmem:[#allocation13 + $0x198] sm:$0xff]
        %v2121 = vld [vmem:[#allocation13 + $0x1a0] sm:$0xff]
        %v2122 = vld [vmem:[#allocation13 + $0x1a8] sm:$0xff]
        %v2123 = vld [vmem:[#allocation13 + $0x1b0] sm:$0xff]
        %v2124 = vld [vmem:[#allocation13 + $0x1b8] sm:$0xff]
        %v2125 = vld [vmem:[#allocation13 + $0x1c0] sm:$0xff]
        %v2126 = vld [vmem:[#allocation13 + $0x1c8] sm:$0xff]
        %v2127 = vld [vmem:[#allocation13 + $0x1d0] sm:$0xff]
        %v2128 = vld [vmem:[#allocation13 + $0x1d8] sm:$0xff]
        %v2129 = vld [vmem:[#allocation13 + $0x1e0] sm:$0xff]
        %v2130 = vld [vmem:[#allocation13 + $0x1e8] sm:$0xff]
        %v2131 = vld [vmem:[#allocation13 + $0x1f0] sm:$0xff]
        %v2132 = vld [vmem:[#allocation13 + $0x1f8] sm:$0xff]
        %2133 = vmatpush.msra.mxu0 %v2099
        %2134 = vmatpush.msra.mxu0 %v2097
        %2135 = vmatpush.msra.mxu0 %v2095
        %2136 = vmatpush.msra.mxu0 %v2093
        %2137 = vmatpush.msra.mxu0 %v2091
        %2138 = vmatpush.msra.mxu0 %v2089
        %2139 = vmatpush.msra.mxu0 %v2087
        %2140 = vmatpush.msra.mxu0 %v2085
        %2141 = vmatpush.msra.mxu0 %v2083
        %2142 = vmatpush.msra.mxu0 %v2081
        %2143 = vmatpush.msra.mxu0 %v2079
        %2144 = vmatpush.msra.mxu0 %v2077
        %2145 = vmatpush.msra.mxu0 %v2075
        %2146 = vmatpush.msra.mxu0 %v2073
        %2147 = vmatpush.msra.mxu0 %v2071
        %2148 = vmatpush.msra.mxu0 %v2069
        %2149 = vmatmul.f32.gmra.mxu0 %v466
        %v2150 = vpop.f32.mrf.mxu0
        %v2151 = vadd.f32 0.0, %v2150
        %2152 = vdwg.mxu0
        %2153 = vmatpush.msra.mxu0 %v2131
        %2154 = vmatpush.msra.mxu0 %v2129
        %2155 = vmatpush.msra.mxu0 %v2127
        %2156 = vmatpush.msra.mxu0 %v2125
        %2157 = vmatpush.msra.mxu0 %v2123
        %2158 = vmatpush.msra.mxu0 %v2121
        %2159 = vmatpush.msra.mxu0 %v2119
        %2160 = vmatpush.msra.mxu0 %v2117
        %2161 = vmatpush.msra.mxu0 %v2115
        %2162 = vmatpush.msra.mxu0 %v2113
        %2163 = vmatpush.msra.mxu0 %v2111
        %2164 = vmatpush.msra.mxu0 %v2109
        %2165 = vmatpush.msra.mxu0 %v2107
        %2166 = vmatpush.msra.mxu0 %v2105
        %2167 = vmatpush.msra.mxu0 %v2103
        %2168 = vmatpush.msra.mxu0 %v2101
        %2169 = vmatmul.f32.gmra.mxu0 %v467
        %v2170 = vpop.f32.mrf.mxu0
        %v2171 = vadd.f32 %v2151, %v2170
        %2172 = vdwg.mxu0
        %2173 = vmatpush.msra.mxu0 %v2100
        %2174 = vmatpush.msra.mxu0 %v2098
        %2175 = vmatpush.msra.mxu0 %v2096
        %2176 = vmatpush.msra.mxu0 %v2094
        %2177 = vmatpush.msra.mxu0 %v2092
        %2178 = vmatpush.msra.mxu0 %v2090
        %2179 = vmatpush.msra.mxu0 %v2088
        %2180 = vmatpush.msra.mxu0 %v2086
        %2181 = vmatpush.msra.mxu0 %v2084
        %2182 = vmatpush.msra.mxu0 %v2082
        %2183 = vmatpush.msra.mxu0 %v2080
        %2184 = vmatpush.msra.mxu0 %v2078
        %2185 = vmatpush.msra.mxu0 %v2076
        %2186 = vmatpush.msra.mxu0 %v2074
        %2187 = vmatpush.msra.mxu0 %v2072
        %2188 = vmatpush.msra.mxu0 %v2070
        %2189 = vmatmul.f32.gmra.mxu0 %v466
        %v2190 = vpop.f32.mrf.mxu0
        %v2191 = vadd.f32 0.0, %v2190
        %2192 = vdwg.mxu0
        %2193 = vmatpush.msra.mxu0 %v2132
        %2194 = vmatpush.msra.mxu0 %v2130
        %2195 = vmatpush.msra.mxu0 %v2128
        %2196 = vmatpush.msra.mxu0 %v2126
        %2197 = vmatpush.msra.mxu0 %v2124
        %2198 = vmatpush.msra.mxu0 %v2122
        %2199 = vmatpush.msra.mxu0 %v2120
        %2200 = vmatpush.msra.mxu0 %v2118
        %2201 = vmatpush.msra.mxu0 %v2116
        %2202 = vmatpush.msra.mxu0 %v2114
        %2203 = vmatpush.msra.mxu0 %v2112
        %2204 = vmatpush.msra.mxu0 %v2110
        %2205 = vmatpush.msra.mxu0 %v2108
        %2206 = vmatpush.msra.mxu0 %v2106
        %2207 = vmatpush.msra.mxu0 %v2104
        %2208 = vmatpush.msra.mxu0 %v2102
        %2209 = vmatmul.f32.gmra.mxu0 %v467
        %v2210 = vpop.f32.mrf.mxu0
        %v2211 = vadd.f32 %v2191, %v2210
        %2212 = vdwg.mxu0
        %v2213 = vld [vmem:[#allocation10] sm:$0x3]
        %v2215 = vperm.slane %v2213, 0
        %v2216 = vperm.slane %v2213, 1
        %v2219 = vmul.f32 %v2067, %v2215
        %v2220 = vmul.f32 %v2068, %v2216
        %v2221 = vld [vmem:[#allocation11] sm:$0x3]
        %v2223 = vperm.slane %v2221, 0
        %v2224 = vperm.slane %v2221, 1
        %v2227 = vadd.f32 %v2219, %v2223
        %v2228 = vadd.f32 %v2220, %v2224
        %v2229 = vadd.f32 %v2227, %v2171
        %v2230 = vadd.f32 %v2228, %v2211
        %v2231 = vmax.f32 %v2229, 0.0
        %v2232 = vmax.f32 %v2230, 0.0
        %2233 = vst [vmem:[%s460] sm:$0xff] %v2231
        %2234 = vst [vmem:[%s460 + $0x8] sm:$0xff] %v2232
        %p2235 = scmp.lt.s32.totalorder %s24, 1
        %s2236 = scalar_select %p2235, %s24, 1
        %s2237 = smul.addr %s2236, 2
        %s2238 = smul.addr %s2237, 8
        %s2239 = scalar_lea.vmem %s9, %s2238
        // Predicated region
        $region85: #{resnet_forward.7} parent=55 // pred_check
          %p2240 = pneg %p241
        $region86: #{resnet_forward.7} parent=55 // pred_check_branch
          %2242 = sbr.rel (%p2240) target = $region88
        $region87: #{resnet_forward.7} parent=55 // pred_region
          _
        $region88: #{resnet_forward.7} parent=55 // pred_fallthru
          _
      $region56: #{resnet_forward.7} parent=5 // pred_fallthru
        _
      %p2243 = scmp.le.s32.totalorder 2, %s19
      // Predicated region
      $region89: #{resnet_forward.7} parent=5 // pred_check
        %p2244 = pneg %p2243
      $region90: #{resnet_forward.7} parent=5 // pred_check_branch
        %2246 = sbr.rel (%p2244) target = $region92
      $region91: #{resnet_forward.7} parent=5 // pred_region
        %s2247 = ssub.s32 %s19, 2
        // Predicated region
        $region93: #{resnet_forward.7} parent=91 // pred_check
          %p2248 = pneg %p247
        $region94: #{resnet_forward.7} parent=91 // pred_check_branch
          %2250 = sbr.rel (%p2248) target = $region96
        $region95: #{resnet_forward.7} parent=91 // pred_region
          %p2251 = scmp.lt.s32.totalorder %s25, 1
          %s2252 = scalar_select %p2251, %s25, 1
          %s2253 = smul.addr %s2252, 2
          %s2254 = smul.addr %s2253, 8
          %s2255 = scalar_lea.vmem %s9, %s2254
        $region96: #{resnet_forward.7} parent=91 // pred_fallthru
          _
      $region92: #{resnet_forward.7} parent=5 // pred_fallthru
        _
    $region6: #{resnet_forward.7} parent=1 // loop_footer
      %s23 = sadd.s32 1, %s19
    $region7: #{resnet_forward.7} parent=1 // loop_footer_branch
      %18 = sbr.rel target = $region3
    $region8: #{resnet_forward.7} parent=1 // loop_exit
      _
    %2256 = vsyncpa [#allocation4], 1
    %s2257 = scalar_lea.sflag [#allocation4], 1
    %2258 = vsyncpa %s2257, 1
    %2259 = vsyncpa [#allocation6], 1
    %2260 = vsyncpa [#allocation9], 1
    %2261 = vsyncpa [#allocation12], 1

// kernel: resnet_forward.8
$region0: #{resnet_forward.8}
  #allocation0 [shape = 'u32[]', space=smem, size = 0x4, offset = 0x4, fixed_abs, tag = 'smem constant byte address 0x4 - core index']
  #allocation1 [shape = 'u32[72,128]{1,0:T(1,128)}', space=vmem, size = 0x9000, scoped, tag = 'internal scratch']
  #allocation2 [shape = 'bf16[6,256]{1,0:T(8,128)(2,1)}', space=vmem, size = 0x1000, scoped, tag = 'scratch operand']
  %s0 = inlined_call_operand.vmem [shape: f32[2,5,256], index: 0, kind: input, shape index: {}]
  %s1 = inlined_call_operand.vmem [shape: f32[2,5,256], index: 1, kind: input, shape index: {}]
  %s2 = inlined_call_operand.vmem [shape: bf16[3,256,256], index: 2, kind: input, shape index: {}]
  %s3 = inlined_call_operand.vmem [shape: f32[1,256], index: 3, kind: input, shape index: {}]
  %s4 = inlined_call_operand.vmem [shape: f32[1,256], index: 4, kind: input, shape index: {}]
  %s5 = inlined_call_operand.hbm [shape: bf16[3,256,256], index: 5, kind: input, shape index: {}]
  %s6 = inlined_call_operand.vmem [shape: f32[1,256], index: 6, kind: input, shape index: {}]
  %s7 = inlined_call_operand.vmem [shape: f32[1,256], index: 7, kind: input, shape index: {}]
  %s8 = inlined_call_operand.hbm [shape: f32[256,256], index: 8, kind: input, shape index: {}]
  %s9 = inlined_call_operand.vmem [shape: f32[2,4,256], index: 9, kind: output, shape index: {}]
  %s10 = sld [smem:[#allocation0]]
  $region77: #{resnet_forward.8} parent=0
    _
  %s12 = ssub.s32 1, %s10
  %s13 = scalar_select 0, %s12, %s10
  $region1: #{resnet_forward.8} parent=0
    #allocation3 [shape = 'u8[393216]{0}', space=vmem, size = 0x60000, scoped, tag = 'input window, operand 5, single buffered']
    #allocation4 [shape = 's32[2]{0}', space=sflag, size = 0x8, scoped, tag = 'scoped memory for resnet_forward.8']
    #allocation5 [shape = 'u8[262144]{0}', space=vmem, size = 0x40000, scoped, tag = 'input window, operand 8, single buffered']
    #allocation6 [shape = 's32[1]{0}', space=sflag, size = 0x4, scoped, tag = 'scoped memory for resnet_forward.8']
    %14 = vsyncpa [#allocation4], 0
    %15 = vsyncpa [#allocation6], 0
    loop: start=0, step=1, limit=4
    $region2: #{resnet_forward.8} parent=1 // loop_pre_header
      _
    $region3: #{resnet_forward.8} parent=1 // loop_header
      %s17 = sphi 0, %s21
      %p18 = scmp.ge.s32.totalorder %s17, 4
      %s27 = sphi 0, %s29
      %s30 = sphi 0, %s27
      %s31 = sphi 0, %s30
      %s47 = sphi 0, %s31
      %s53 = sphi 0, %s55
      %s56 = sphi 0, %s53
      %s57 = sphi 0, %s56
      %s73 = sphi 0, %s57
      %s77 = sphi 0, %s77
      %s79 = sphi 0, %s77
      %s80 = sphi 0, %s79
      %s94 = sphi 0, %s80
      %s98 = sphi 0, %s98
      %s100 = sphi 0, %s98
      %s101 = sphi 0, %s100
      %s115 = sphi 0, %s101
      %s119 = sphi 0, %s119
      %s121 = sphi 0, %s119
      %s122 = sphi 0, %s121
      %s136 = sphi 0, %s122
      %s140 = sphi 0, %s140
      %s142 = sphi 0, %s140
      %s143 = sphi 0, %s142
      %s157 = sphi 0, %s143
      %s161 = sphi 0, %s161
      %s163 = sphi 0, %s161
      %s164 = sphi 0, %s163
      %s178 = sphi 0, %s164
      %s182 = sphi 0, %s182
      %s184 = sphi 0, %s182
      %s185 = sphi 0, %s184
      %s199 = sphi 0, %s185
      %s203 = sphi 0, %s203
      %s205 = sphi 0, %s203
      %s206 = sphi 0, %s205
      %s220 = sphi 0, %s206
      %s226 = sphi 0, %s228
      %s229 = sphi 0, %s226
      %s230 = sphi 0, %s229
      %s246 = sphi 0, %s230
    $region4: #{resnet_forward.8} parent=1 // loop_header_branch
      %20 = sbr.rel (%p18) target = $region8
    $region5: #{resnet_forward.8} parent=1 // loop_body
      %s22 = ssub.s32 %s17, 1
      %s23 = ssub.s32 %s17, 2
      %s24 = sadd.s32 %s17, 1
      %s25 = ssub.s32 %s17, %s24
      %p26 = scmp.eq.s32.totalorder %s25, 0
      %s28 = sadd.s32 %s27, 1
      %s29 = scalar_select %p26, %s27, %s28
      %p32 = pneg %p26
      %p33 = scmp.eq.s32.totalorder %s17, 1
      %p34 = por %p32, %p33
      %p35 = scmp.ne.s32.totalorder %s27, %s30
      %p36 = scmp.eq.s32.totalorder %s17, 0
      %p37 = por %p35, %p36
      %p38 = scmp.ne.s32.totalorder %s27, %s30
      %p39 = scmp.eq.s32.totalorder %s22, 1
      %p40 = por %p38, %p39
      %p41 = scmp.ne.s32.totalorder %s30, %s31
      %p42 = scmp.eq.s32.totalorder %s22, 0
      %p43 = por %p41, %p42
      %p44 = scmp.ne.s32.totalorder %s30, %s31
      %p45 = scmp.eq.s32.totalorder %s23, 1
      %p46 = por %p44, %p45
      %p48 = scmp.ne.s32.totalorder %s31, %s47
      %p49 = scmp.eq.s32.totalorder %s23, 0
      %p50 = por %p48, %p49
      %s51 = ssub.s32 %s17, %s24
      %p52 = scmp.eq.s32.totalorder %s51, 0
      %s54 = sadd.s32 %s53, 1
      %s55 = scalar_select %p52, %s53, %s54
      %p58 = pneg %p52
      %p59 = scmp.eq.s32.totalorder %s17, 1
      %p60 = por %p58, %p59
      %p61 = scmp.ne.s32.totalorder %s53, %s56
      %p62 = scmp.eq.s32.totalorder %s17, 0
      %p63 = por %p61, %p62
      %p64 = scmp.ne.s32.totalorder %s53, %s56
      %p65 = scmp.eq.s32.totalorder %s22, 1
      %p66 = por %p64, %p65
      %p67 = scmp.ne.s32.totalorder %s56, %s57
      %p68 = scmp.eq.s32.totalorder %s22, 0
      %p69 = por %p67, %p68
      %p70 = scmp.ne.s32.totalorder %s56, %s57
      %p71 = scmp.eq.s32.totalorder %s23, 1
      %p72 = por %p70, %p71
      %p74 = scmp.ne.s32.totalorder %s57, %s73
      %p75 = scmp.eq.s32.totalorder %s23, 0
      %p76 = por %p74, %p75
      %s78 = sadd.s32 %s77, 1
      %p81 = scmp.eq.s32.totalorder %s17, 1
      %p82 = scmp.ne.s32.totalorder %s77, %s79
      %p83 = scmp.eq.s32.totalorder %s17, 0
      %p84 = por %p82, %p83
      %p85 = scmp.ne.s32.totalorder %s77, %s79
      %p86 = scmp.eq.s32.totalorder %s22, 1
      %p87 = por %p85, %p86
      %p88 = scmp.ne.s32.totalorder %s79, %s80
      %p89 = scmp.eq.s32.totalorder %s22, 0
      %p90 = por %p88, %p89
      %p91 = scmp.ne.s32.totalorder %s79, %s80
      %p92 = scmp.eq.s32.totalorder %s23, 1
      %p93 = por %p91, %p92
      %p95 = scmp.ne.s32.totalorder %s80, %s94
      %p96 = scmp.eq.s32.totalorder %s23, 0
      %p97 = por %p95, %p96
      %s99 = sadd.s32 %s98, 1
      %p102 = scmp.eq.s32.totalorder %s17, 1
      %p103 = scmp.ne.s32.totalorder %s98, %s100
      %p104 = scmp.eq.s32.totalorder %s17, 0
      %p105 = por %p103, %p104
      %p106 = scmp.ne.s32.totalorder %s98, %s100
      %p107 = scmp.eq.s32.totalorder %s22, 1
      %p108 = por %p106, %p107
      %p109 = scmp.ne.s32.totalorder %s100, %s101
      %p110 = scmp.eq.s32.totalorder %s22, 0
      %p111 = por %p109, %p110
      %p112 = scmp.ne.s32.totalorder %s100, %s101
      %p113 = scmp.eq.s32.totalorder %s23, 1
      %p114 = por %p112, %p113
      %p116 = scmp.ne.s32.totalorder %s101, %s115
      %p117 = scmp.eq.s32.totalorder %s23, 0
      %p118 = por %p116, %p117
      %s120 = sadd.s32 %s119, 1
      %p123 = scmp.eq.s32.totalorder %s17, 1
      %p124 = scmp.ne.s32.totalorder %s119, %s121
      %p125 = scmp.eq.s32.totalorder %s17, 0
      %p126 = por %p124, %p125
      %p127 = scmp.ne.s32.totalorder %s119, %s121
      %p128 = scmp.eq.s32.totalorder %s22, 1
      %p129 = por %p127, %p128
      %p130 = scmp.ne.s32.totalorder %s121, %s122
      %p131 = scmp.eq.s32.totalorder %s22, 0
      %p132 = por %p130, %p131
      %p133 = scmp.ne.s32.totalorder %s121, %s122
      %p134 = scmp.eq.s32.totalorder %s23, 1
      %p135 = por %p133, %p134
      %p137 = scmp.ne.s32.totalorder %s122, %s136
      %p138 = scmp.eq.s32.totalorder %s23, 0
      %p139 = por %p137, %p138
      %s141 = sadd.s32 %s140, 1
      %p144 = scmp.eq.s32.totalorder %s17, 1
      %p145 = scmp.ne.s32.totalorder %s140, %s142
      %p146 = scmp.eq.s32.totalorder %s17, 0
      %p147 = por %p145, %p146
      %p148 = scmp.ne.s32.totalorder %s140, %s142
      %p149 = scmp.eq.s32.totalorder %s22, 1
      %p150 = por %p148, %p149
      %p151 = scmp.ne.s32.totalorder %s142, %s143
      %p152 = scmp.eq.s32.totalorder %s22, 0
      %p153 = por %p151, %p152
      %p154 = scmp.ne.s32.totalorder %s142, %s143
      %p155 = scmp.eq.s32.totalorder %s23, 1
      %p156 = por %p154, %p155
      %p158 = scmp.ne.s32.totalorder %s143, %s157
      %p159 = scmp.eq.s32.totalorder %s23, 0
      %p160 = por %p158, %p159
      %s162 = sadd.s32 %s161, 1
      %p165 = scmp.eq.s32.totalorder %s17, 1
      %p166 = scmp.ne.s32.totalorder %s161, %s163
      %p167 = scmp.eq.s32.totalorder %s17, 0
      %p168 = por %p166, %p167
      %p169 = scmp.ne.s32.totalorder %s161, %s163
      %p170 = scmp.eq.s32.totalorder %s22, 1
      %p171 = por %p169, %p170
      %p172 = scmp.ne.s32.totalorder %s163, %s164
      %p173 = scmp.eq.s32.totalorder %s22, 0
      %p174 = por %p172, %p173
      %p175 = scmp.ne.s32.totalorder %s163, %s164
      %p176 = scmp.eq.s32.totalorder %s23, 1
      %p177 = por %p175, %p176
      %p179 = scmp.ne.s32.totalorder %s164, %s178
      %p180 = scmp.eq.s32.totalorder %s23, 0
      %p181 = por %p179, %p180
      %s183 = sadd.s32 %s182, 1
      %p186 = scmp.eq.s32.totalorder %s17, 1
      %p187 = scmp.ne.s32.totalorder %s182, %s184
      %p188 = scmp.eq.s32.totalorder %s17, 0
      %p189 = por %p187, %p188
      %p190 = scmp.ne.s32.totalorder %s182, %s184
      %p191 = scmp.eq.s32.totalorder %s22, 1
      %p192 = por %p190, %p191
      %p193 = scmp.ne.s32.totalorder %s184, %s185
      %p194 = scmp.eq.s32.totalorder %s22, 0
      %p195 = por %p193, %p194
      %p196 = scmp.ne.s32.totalorder %s184, %s185
      %p197 = scmp.eq.s32.totalorder %s23, 1
      %p198 = por %p196, %p197
      %p200 = scmp.ne.s32.totalorder %s185, %s199
      %p201 = scmp.eq.s32.totalorder %s23, 0
      %p202 = por %p200, %p201
      %s204 = sadd.s32 %s203, 1
      %p207 = scmp.eq.s32.totalorder %s17, 1
      %p208 = scmp.ne.s32.totalorder %s203, %s205
      %p209 = scmp.eq.s32.totalorder %s17, 0
      %p210 = por %p208, %p209
      %p211 = scmp.ne.s32.totalorder %s203, %s205
      %p212 = scmp.eq.s32.totalorder %s22, 1
      %p213 = por %p211, %p212
      %p214 = scmp.ne.s32.totalorder %s205, %s206
      %p215 = scmp.eq.s32.totalorder %s22, 0
      %p216 = por %p214, %p215
      %p217 = scmp.ne.s32.totalorder %s205, %s206
      %p218 = scmp.eq.s32.totalorder %s23, 1
      %p219 = por %p217, %p218
      %p221 = scmp.ne.s32.totalorder %s206, %s220
      %p222 = scmp.eq.s32.totalorder %s23, 0
      %p223 = por %p221, %p222
      %s224 = ssub.s32 %s17, %s24
      %p225 = scmp.eq.s32.totalorder %s224, 0
      %s227 = sadd.s32 %s226, 1
      %s228 = scalar_select %p225, %s226, %s227
      %p231 = pneg %p225
      %p232 = scmp.eq.s32.totalorder %s17, 1
      %p233 = por %p231, %p232
      %p234 = scmp.ne.s32.totalorder %s226, %s229
      %p235 = scmp.eq.s32.totalorder %s17, 0
      %p236 = por %p234, %p235
      %p237 = scmp.ne.s32.totalorder %s226, %s229
      %p238 = scmp.eq.s32.totalorder %s22, 1
      %p239 = por %p237, %p238
      %p240 = scmp.ne.s32.totalorder %s229, %s230
      %p241 = scmp.eq.s32.totalorder %s22, 0
      %p242 = por %p240, %p241
      %p243 = scmp.ne.s32.totalorder %s229, %s230
      %p244 = scmp.eq.s32.totalorder %s23, 1
      %p245 = por %p243, %p244
      %p247 = scmp.ne.s32.totalorder %s230, %s246
      %p248 = scmp.eq.s32.totalorder %s23, 0
      %p249 = por %p247, %p248
      %p250 = scmp.le.s32.totalorder 1, %s17
      %p251 = scmp.lt.s32.totalorder %s17, 3
      %p252 = pnand %p250, %p251
      %p253 = pneg %p252
      // Predicated region
      $region9: #{resnet_forward.8} parent=5 // pred_check
        _
      $region10: #{resnet_forward.8} parent=5 // pred_check_branch
        %255 = sbr.rel (%p252) target = $region12
      $region11: #{resnet_forward.8} parent=5 // pred_region
        %s256 = ssub.s32 %s17, 1
        // Predicated region
        $region13: #{resnet_forward.8} parent=11 // pred_check
          %p257 = pneg %p90
        $region14: #{resnet_forward.8} parent=11 // pred_check_branch
          %259 = sbr.rel (%p257) target = $region16
        $region15: #{resnet_forward.8} parent=11 // pred_region
          _
        $region16: #{resnet_forward.8} parent=11 // pred_fallthru
          _
        // Predicated region
        $region17: #{resnet_forward.8} parent=11 // pred_check
          %p260 = pneg %p111
        $region18: #{resnet_forward.8} parent=11 // pred_check_branch
          %262 = sbr.rel (%p260) target = $region20
        $region19: #{resnet_forward.8} parent=11 // pred_region
          _
        $region20: #{resnet_forward.8} parent=11 // pred_fallthru
          _
        // Predicated region
        $region21: #{resnet_forward.8} parent=11 // pred_check
          %p263 = pneg %p132
        $region22: #{resnet_forward.8} parent=11 // pred_check_branch
          %265 = sbr.rel (%p263) target = $region24
        $region23: #{resnet_forward.8} parent=11 // pred_region
          _
        $region24: #{resnet_forward.8} parent=11 // pred_fallthru
          _
        // Predicated region
        $region25: #{resnet_forward.8} parent=11 // pred_check
          %p266 = pneg %p153
        $region26: #{resnet_forward.8} parent=11 // pred_check_branch
          %268 = sbr.rel (%p266) target = $region28
        $region27: #{resnet_forward.8} parent=11 // pred_region
          %270 = vsyncadd [#allocation4], 0
          %s271 = sshll.u32 %s5, 4
          %s272 = int_to_ptr.hbm [resolvable:$true] %s271
          %s273 = sshll.u32 [#allocation3], 4
          %s274 = int_to_ptr.vmem [resolvable:$true] %s273
          %279 = dma.hbm_to_vmem [thread:$0]  %s272, 12288, %s274, [#allocation4], 128, 128, 8
        $region28: #{resnet_forward.8} parent=11 // pred_fallthru
          _
        // Predicated region
        $region29: #{resnet_forward.8} parent=11 // pred_check
          %p280 = pneg %p174
        $region30: #{resnet_forward.8} parent=11 // pred_check_branch
          %282 = sbr.rel (%p280) target = $region32
        $region31: #{resnet_forward.8} parent=11 // pred_region
          _
        $region32: #{resnet_forward.8} parent=11 // pred_fallthru
          _
        // Predicated region
        $region33: #{resnet_forward.8} parent=11 // pred_check
          %p283 = pneg %p195
        $region34: #{resnet_forward.8} parent=11 // pred_check_branch
          %285 = sbr.rel (%p283) target = $region36
        $region35: #{resnet_forward.8} parent=11 // pred_region
          _
        $region36: #{resnet_forward.8} parent=11 // pred_fallthru
          _
        // Predicated region
        $region37: #{resnet_forward.8} parent=11 // pred_check
          %p286 = pneg %p216
        $region38: #{resnet_forward.8} parent=11 // pred_check_branch
          %288 = sbr.rel (%p286) target = $region40
        $region39: #{resnet_forward.8} parent=11 // pred_region
          %290 = vsyncadd [#allocation6], 0
          %s291 = sshll.u32 %s8, 4
          %s292 = int_to_ptr.hbm [resolvable:$true] %s291
          %s293 = sshll.u32 [#allocation5], 4
          %s294 = int_to_ptr.vmem [resolvable:$true] %s293
          %299 = dma.hbm_to_vmem [thread:$0]  %s292, 8192, %s294, [#allocation6], 256, 256, 16
        $region40: #{resnet_forward.8} parent=11 // pred_fallthru
          _
      $region12: #{resnet_forward.8} parent=5 // pred_fallthru
        _
      %p300 = scmp.lt.s32.totalorder %s17, 2
      // Predicated region
      $region41: #{resnet_forward.8} parent=5 // pred_check
        %p301 = pneg %p300
      $region42: #{resnet_forward.8} parent=5 // pred_check_branch
        %303 = sbr.rel (%p301) target = $region44
      $region43: #{resnet_forward.8} parent=5 // pred_region
        // Predicated region
        $region45: #{resnet_forward.8} parent=43 // pred_check
          %p304 = pneg %p37
        $region46: #{resnet_forward.8} parent=43 // pred_check_branch
          %306 = sbr.rel (%p304) target = $region48
        $region47: #{resnet_forward.8} parent=43 // pred_region
          %p307 = scmp.lt.s32.totalorder %s17, 1
          %s308 = scalar_select %p307, %s17, 1
          %s309 = smul.addr %s308, 2
          %s310 = smul.addr %s309, 8
          %s311 = scalar_lea.vmem %s0, %s310
        $region48: #{resnet_forward.8} parent=43 // pred_fallthru
          _
        // Predicated region
        $region49: #{resnet_forward.8} parent=43 // pred_check
          %p312 = pneg %p63
        $region50: #{resnet_forward.8} parent=43 // pred_check_branch
          %314 = sbr.rel (%p312) target = $region52
        $region51: #{resnet_forward.8} parent=43 // pred_region
          %p315 = scmp.lt.s32.totalorder %s17, 1
          %s316 = scalar_select %p315, %s17, 1
          %s317 = smul.addr %s316, 2
          %s318 = smul.addr %s317, 8
          %s319 = scalar_lea.vmem %s1, %s318
        $region52: #{resnet_forward.8} parent=43 // pred_fallthru
          _
      $region44: #{resnet_forward.8} parent=5 // pred_fallthru
        _
      %p320 = scmp.le.s32.totalorder 1, %s17
      %p321 = scmp.lt.s32.totalorder %s17, 3
      %p322 = pnand %p320, %p321
      %p323 = pneg %p322
      // Predicated region
      $region53: #{resnet_forward.8} parent=5 // pred_check
        _
      $region54: #{resnet_forward.8} parent=5 // pred_check_branch
        %325 = sbr.rel (%p322) target = $region56
      $region55: #{resnet_forward.8} parent=5 // pred_region
        %s326 = ssub.s32 %s17, 1
        // Predicated region
        $region57: #{resnet_forward.8} parent=55 // pred_check
          %p327 = pneg %p153
        $region58: #{resnet_forward.8} parent=55 // pred_check_branch
          %329 = sbr.rel (%p327) target = $region60
        $region59: #{resnet_forward.8} parent=55 // pred_region
          %331 = dma.done [#allocation4], 12288
        $region60: #{resnet_forward.8} parent=55 // pred_fallthru
          _
        // Predicated region
        $region61: #{resnet_forward.8} parent=55 // pred_check
          %p332 = pneg %p216
        $region62: #{resnet_forward.8} parent=55 // pred_check_branch
          %334 = sbr.rel (%p332) target = $region64
        $region63: #{resnet_forward.8} parent=55 // pred_region
          %336 = dma.done [#allocation6], 8192
        $region64: #{resnet_forward.8} parent=55 // pred_fallthru
          _
        %p337 = scmp.lt.s32.totalorder %s22, 1
        %s338 = scalar_select %p337, %s22, 1
        %s339 = smul.addr %s338, 2
        %s340 = smul.addr %s339, 8
        %s341 = scalar_lea.vmem %s0, %s340
        %p342 = pneg %p43
        %p343 = pneg %p40
        %p344 = scmp.lt.s32.totalorder %s22, 1
        %s345 = scalar_select %p344, %s22, 1
        %s346 = smul.addr %s345, 2
        %s347 = smul.addr %s346, 8
        %s348 = scalar_lea.vmem %s1, %s347
        %p349 = pneg %p69
        %p350 = pneg %p66
        %p351 = pneg %p90
        %p352 = pneg %p87
        %p353 = pneg %p111
        %p354 = pneg %p108
        %p355 = pneg %p132
        %p356 = pneg %p129
        %p357 = pneg %p153
        %p358 = pneg %p150
        %p359 = pneg %p174
        %p360 = pneg %p171
        %p361 = pneg %p195
        %p362 = pneg %p192
        %p363 = pneg %p216
        %p364 = pneg %p213
        %p365 = pneg %p242
        %p366 = pneg %p239
        %p367 = scmp.lt.s32.totalorder %s22, 1
        %s368 = scalar_select %p367, %s22, 1
        %s369 = smul.addr %s368, 2
        %s370 = smul.addr %s369, 4
        %s371 = scalar_lea.vmem %s9, %s370
        %p372 = scmp.lt.s32.totalorder %s22, 1
        %s373 = scalar_select %p372, %s22, 1
        %s374 = smul.addr %s373, 2
        %s375 = smul.addr %s374, 8
        %s376 = scalar_lea.vmem %s0, %s375
        %p377 = scmp.lt.s32.totalorder %s22, 1
        %s378 = scalar_select %p377, %s22, 1
        %s379 = smul.addr %s378, 2
        %s380 = smul.addr %s379, 8
        %s381 = scalar_lea.vmem %s1, %s380
        %p382 = scmp.lt.s32.totalorder %s22, 1
        %s383 = scalar_select %p382, %s22, 1
        %s384 = smul.addr %s383, 2
        %s385 = smul.addr %s384, 4
        %s386 = scalar_lea.vmem %s9, %s385
        %v388 = vld [vmem:[%s376] sm:$0x1f]
        %v389 = vld [vmem:[%s376 + $0x8] sm:$0x1f]
        %v390 = vld [vmem:[%s381] sm:$0x1f]
        %v391 = vld [vmem:[%s381 + $0x8] sm:$0x1f]
        %v392 = vpack.c.bf16 %v389, %v388
        %v393 = vpack.c.bf16 %v391, %v390
        %v394 = vld [vmem:[%s2] sm:$0xff]
        %v395 = vld [vmem:[%s2 + $0x8] sm:$0xff]
        %v396 = vld [vmem:[%s2 + $0x10] sm:$0xff]
        %v397 = vld [vmem:[%s2 + $0x18] sm:$0xff]
        %v398 = vld [vmem:[%s2 + $0x20] sm:$0xff]
        %v399 = vld [vmem:[%s2 + $0x28] sm:$0xff]
        %v400 = vld [vmem:[%s2 + $0x30] sm:$0xff]
        %v401 = vld [vmem:[%s2 + $0x38] sm:$0xff]
        %v402 = vld [vmem:[%s2 + $0x40] sm:$0xff]
        %v403 = vld [vmem:[%s2 + $0x48] sm:$0xff]
        %v404 = vld [vmem:[%s2 + $0x50] sm:$0xff]
        %v405 = vld [vmem:[%s2 + $0x58] sm:$0xff]
        %v406 = vld [vmem:[%s2 + $0x60] sm:$0xff]
        %v407 = vld [vmem:[%s2 + $0x68] sm:$0xff]
        %v408 = vld [vmem:[%s2 + $0x70] sm:$0xff]
        %v409 = vld [vmem:[%s2 + $0x78] sm:$0xff]
        %v410 = vld [vmem:[%s2 + $0x80] sm:$0xff]
        %v411 = vld [vmem:[%s2 + $0x88] sm:$0xff]
        %v412 = vld [vmem:[%s2 + $0x90] sm:$0xff]
        %v413 = vld [vmem:[%s2 + $0x98] sm:$0xff]
        %v414 = vld [vmem:[%s2 + $0xa0] sm:$0xff]
        %v415 = vld [vmem:[%s2 + $0xa8] sm:$0xff]
        %v416 = vld [vmem:[%s2 + $0xb0] sm:$0xff]
        %v417 = vld [vmem:[%s2 + $0xb8] sm:$0xff]
        %v418 = vld [vmem:[%s2 + $0xc0] sm:$0xff]
        %v419 = vld [vmem:[%s2 + $0xc8] sm:$0xff]
        %v420 = vld [vmem:[%s2 + $0xd0] sm:$0xff]
        %v421 = vld [vmem:[%s2 + $0xd8] sm:$0xff]
        %v422 = vld [vmem:[%s2 + $0xe0] sm:$0xff]
        %v423 = vld [vmem:[%s2 + $0xe8] sm:$0xff]
        %v424 = vld [vmem:[%s2 + $0xf0] sm:$0xff]
        %v425 = vld [vmem:[%s2 + $0xf8] sm:$0xff]
        %s426 = scalar_lea.vmem %s2, 256
        %v427 = vld [vmem:[%s426] sm:$0xff]
        %v428 = vld [vmem:[%s426 + $0x8] sm:$0xff]
        %v429 = vld [vmem:[%s426 + $0x10] sm:$0xff]
        %v430 = vld [vmem:[%s426 + $0x18] sm:$0xff]
        %v431 = vld [vmem:[%s426 + $0x20] sm:$0xff]
        %v432 = vld [vmem:[%s426 + $0x28] sm:$0xff]
        %v433 = vld [vmem:[%s426 + $0x30] sm:$0xff]
        %v434 = vld [vmem:[%s426 + $0x38] sm:$0xff]
        %v435 = vld [vmem:[%s426 + $0x40] sm:$0xff]
        %v436 = vld [vmem:[%s426 + $0x48] sm:$0xff]
        %v437 = vld [vmem:[%s426 + $0x50] sm:$0xff]
        %v438 = vld [vmem:[%s426 + $0x58] sm:$0xff]
        %v439 = vld [vmem:[%s426 + $0x60] sm:$0xff]
        %v440 = vld [vmem:[%s426 + $0x68] sm:$0xff]
        %v441 = vld [vmem:[%s426 + $0x70] sm:$0xff]
        %v442 = vld [vmem:[%s426 + $0x78] sm:$0xff]
        %v443 = vld [vmem:[%s426 + $0x80] sm:$0xff]
        %v444 = vld [vmem:[%s426 + $0x88] sm:$0xff]
        %v445 = vld [vmem:[%s426 + $0x90] sm:$0xff]
        %v446 = vld [vmem:[%s426 + $0x98] sm:$0xff]
        %v447 = vld [vmem:[%s426 + $0xa0] sm:$0xff]
        %v448 = vld [vmem:[%s426 + $0xa8] sm:$0xff]
        %v449 = vld [vmem:[%s426 + $0xb0] sm:$0xff]
        %v450 = vld [vmem:[%s426 + $0xb8] sm:$0xff]
        %v451 = vld [vmem:[%s426 + $0xc0] sm:$0xff]
        %v452 = vld [vmem:[%s426 + $0xc8] sm:$0xff]
        %v453 = vld [vmem:[%s426 + $0xd0] sm:$0xff]
        %v454 = vld [vmem:[%s426 + $0xd8] sm:$0xff]
        %v455 = vld [vmem:[%s426 + $0xe0] sm:$0xff]
        %v456 = vld [vmem:[%s426 + $0xe8] sm:$0xff]
        %v457 = vld [vmem:[%s426 + $0xf0] sm:$0xff]
        %v458 = vld [vmem:[%s426 + $0xf8] sm:$0xff]
        %v460 = vunpack.c.l.b16 %v393
        %v461 = vunpack.c.h.b16 %v393
        %v462 = vpack.c.b16 %v460, %v460
        %v463 = vpack.c.b16 %v461, %v461
        %v498 = vunpack.c.l.b16 %v427
        %v499 = vunpack.c.h.b16 %v427
        %v500 = vunpack.c.l.b16 %v428
        %v501 = vunpack.c.h.b16 %v428
        %v502 = vunpack.c.l.b16 %v429
        %v503 = vunpack.c.h.b16 %v429
        %v504 = vunpack.c.l.b16 %v430
        %v505 = vunpack.c.h.b16 %v430
        %v506 = vunpack.c.l.b16 %v431
        %v507 = vunpack.c.h.b16 %v431
        %v508 = vunpack.c.l.b16 %v432
        %v509 = vunpack.c.h.b16 %v432
        %v510 = vunpack.c.l.b16 %v433
        %v511 = vunpack.c.h.b16 %v433
        %v512 = vunpack.c.l.b16 %v434
        %v513 = vunpack.c.h.b16 %v434
        %v514 = vunpack.c.l.b16 %v435
        %v515 = vunpack.c.h.b16 %v435
        %v516 = vunpack.c.l.b16 %v436
        %v517 = vunpack.c.h.b16 %v436
        %v518 = vunpack.c.l.b16 %v437
        %v519 = vunpack.c.h.b16 %v437
        %v520 = vunpack.c.l.b16 %v438
        %v521 = vunpack.c.h.b16 %v438
        %v522 = vunpack.c.l.b16 %v439
        %v523 = vunpack.c.h.b16 %v439
        %v524 = vunpack.c.l.b16 %v440
        %v525 = vunpack.c.h.b16 %v440
        %v526 = vunpack.c.l.b16 %v441
        %v527 = vunpack.c.h.b16 %v441
        %v528 = vunpack.c.l.b16 %v442
        %v529 = vunpack.c.h.b16 %v442
        %v530 = vunpack.c.l.b16 %v443
        %v531 = vunpack.c.h.b16 %v443
        %v532 = vunpack.c.l.b16 %v444
        %v533 = vunpack.c.h.b16 %v444
        %v534 = vunpack.c.l.b16 %v445
        %v535 = vunpack.c.h.b16 %v445
        %v536 = vunpack.c.l.b16 %v446
        %v537 = vunpack.c.h.b16 %v446
        %v538 = vunpack.c.l.b16 %v447
        %v539 = vunpack.c.h.b16 %v447
        %v540 = vunpack.c.l.b16 %v448
        %v541 = vunpack.c.h.b16 %v448
        %v542 = vunpack.c.l.b16 %v449
        %v543 = vunpack.c.h.b16 %v449
        %v544 = vunpack.c.l.b16 %v450
        %v545 = vunpack.c.h.b16 %v450
        %v546 = vunpack.c.l.b16 %v451
        %v547 = vunpack.c.h.b16 %v451
        %v548 = vunpack.c.l.b16 %v452
        %v549 = vunpack.c.h.b16 %v452
        %v550 = vunpack.c.l.b16 %v453
        %v551 = vunpack.c.h.b16 %v453
        %v552 = vunpack.c.l.b16 %v454
        %v553 = vunpack.c.h.b16 %v454
        %v554 = vunpack.c.l.b16 %v455
        %v555 = vunpack.c.h.b16 %v455
        %v556 = vunpack.c.l.b16 %v456
        %v557 = vunpack.c.h.b16 %v456
        %v558 = vunpack.c.l.b16 %v457
        %v559 = vunpack.c.h.b16 %v457
        %v560 = vunpack.c.l.b16 %v458
        %v561 = vunpack.c.h.b16 %v458
        %v562 = vpack.c.b16 %v500, %v498
        %v563 = vpack.c.b16 %v501, %v499
        %v564 = vpack.c.b16 %v504, %v502
        %v565 = vpack.c.b16 %v505, %v503
        %v566 = vpack.c.b16 %v508, %v506
        %v567 = vpack.c.b16 %v509, %v507
        %v568 = vpack.c.b16 %v512, %v510
        %v569 = vpack.c.b16 %v513, %v511
        %v570 = vpack.c.b16 %v516, %v514
        %v571 = vpack.c.b16 %v517, %v515
        %v572 = vpack.c.b16 %v520, %v518
        %v573 = vpack.c.b16 %v521, %v519
        %v574 = vpack.c.b16 %v524, %v522
        %v575 = vpack.c.b16 %v525, %v523
        %v576 = vpack.c.b16 %v528, %v526
        %v577 = vpack.c.b16 %v529, %v527
        %v578 = vpack.c.b16 %v532, %v530
        %v579 = vpack.c.b16 %v533, %v531
        %v580 = vpack.c.b16 %v536, %v534
        %v581 = vpack.c.b16 %v537, %v535
        %v582 = vpack.c.b16 %v540, %v538
        %v583 = vpack.c.b16 %v541, %v539
        %v584 = vpack.c.b16 %v544, %v542
        %v585 = vpack.c.b16 %v545, %v543
        %v586 = vpack.c.b16 %v548, %v546
        %v587 = vpack.c.b16 %v549, %v547
        %v588 = vpack.c.b16 %v552, %v550
        %v589 = vpack.c.b16 %v553, %v551
        %v590 = vpack.c.b16 %v556, %v554
        %v591 = vpack.c.b16 %v557, %v555
        %v592 = vpack.c.b16 %v560, %v558
        %v593 = vpack.c.b16 %v561, %v559
        %626 = vmatpush.bf16.msra.mxu0 %v576
        %627 = vmatpush.bf16.msra.mxu0 %v574
        %628 = vmatpush.bf16.msra.mxu0 %v572
        %629 = vmatpush.bf16.msra.mxu0 %v570
        %630 = vmatpush.bf16.msra.mxu0 %v568
        %631 = vmatpush.bf16.msra.mxu0 %v566
        %632 = vmatpush.bf16.msra.mxu0 %v564
        %633 = vmatpush.bf16.msra.mxu0 %v562
        %634 = vmatmul.bf16.gmra.mxu0 %v462
        %v635 = vpop.f32.mrf.mxu0
        %v636 = vadd.f32 0.0, %v635
        %v637 = vpop.f32.mrf.mxu0
        %638 = vdwg.mxu0
        %639 = vmatpush.bf16.msra.mxu0 %v592
        %640 = vmatpush.bf16.msra.mxu0 %v590
        %641 = vmatpush.bf16.msra.mxu0 %v588
        %642 = vmatpush.bf16.msra.mxu0 %v586
        %643 = vmatpush.bf16.msra.mxu0 %v584
        %644 = vmatpush.bf16.msra.mxu0 %v582
        %645 = vmatpush.bf16.msra.mxu0 %v580
        %646 = vmatpush.bf16.msra.mxu0 %v578
        %647 = vmatmul.bf16.gmra.mxu0 %v463
        %v648 = vpop.f32.mrf.mxu0
        %v649 = vadd.f32 %v636, %v648
        %v650 = vpop.f32.mrf.mxu0
        %651 = vdwg.mxu0
        %652 = vmatpush.bf16.msra.mxu0 %v577
        %653 = vmatpush.bf16.msra.mxu0 %v575
        %654 = vmatpush.bf16.msra.mxu0 %v573
        %655 = vmatpush.bf16.msra.mxu0 %v571
        %656 = vmatpush.bf16.msra.mxu0 %v569
        %657 = vmatpush.bf16.msra.mxu0 %v567
        %658 = vmatpush.bf16.msra.mxu0 %v565
        %659 = vmatpush.bf16.msra.mxu0 %v563
        %660 = vmatmul.bf16.gmra.mxu0 %v462
        %v661 = vpop.f32.mrf.mxu0
        %v662 = vadd.f32 0.0, %v661
        %v663 = vpop.f32.mrf.mxu0
        %664 = vdwg.mxu0
        %665 = vmatpush.bf16.msra.mxu0 %v593
        %666 = vmatpush.bf16.msra.mxu0 %v591
        %667 = vmatpush.bf16.msra.mxu0 %v589
        %668 = vmatpush.bf16.msra.mxu0 %v587
        %669 = vmatpush.bf16.msra.mxu0 %v585
        %670 = vmatpush.bf16.msra.mxu0 %v583
        %671 = vmatpush.bf16.msra.mxu0 %v581
        %672 = vmatpush.bf16.msra.mxu0 %v579
        %673 = vmatmul.bf16.gmra.mxu0 %v463
        %v674 = vpop.f32.mrf.mxu0
        %v675 = vadd.f32 %v662, %v674
        %v676 = vpop.f32.mrf.mxu0
        %677 = vdwg.mxu0
        %v679 = vunpack.c.l.b16 %v392
        %v680 = vunpack.c.h.b16 %v392
        %v681 = vpack.c.b16 %v679, %v679
        %v682 = vpack.c.b16 %v680, %v680
        %v717 = vunpack.c.l.b16 %v394
        %v718 = vunpack.c.h.b16 %v394
        %v719 = vunpack.c.l.b16 %v395
        %v720 = vunpack.c.h.b16 %v395
        %v721 = vunpack.c.l.b16 %v396
        %v722 = vunpack.c.h.b16 %v396
        %v723 = vunpack.c.l.b16 %v397
        %v724 = vunpack.c.h.b16 %v397
        %v725 = vunpack.c.l.b16 %v398
        %v726 = vunpack.c.h.b16 %v398
        %v727 = vunpack.c.l.b16 %v399
        %v728 = vunpack.c.h.b16 %v399
        %v729 = vunpack.c.l.b16 %v400
        %v730 = vunpack.c.h.b16 %v400
        %v731 = vunpack.c.l.b16 %v401
        %v732 = vunpack.c.h.b16 %v401
        %v733 = vunpack.c.l.b16 %v402
        %v734 = vunpack.c.h.b16 %v402
        %v735 = vunpack.c.l.b16 %v403
        %v736 = vunpack.c.h.b16 %v403
        %v737 = vunpack.c.l.b16 %v404
        %v738 = vunpack.c.h.b16 %v404
        %v739 = vunpack.c.l.b16 %v405
        %v740 = vunpack.c.h.b16 %v405
        %v741 = vunpack.c.l.b16 %v406
        %v742 = vunpack.c.h.b16 %v406
        %v743 = vunpack.c.l.b16 %v407
        %v744 = vunpack.c.h.b16 %v407
        %v745 = vunpack.c.l.b16 %v408
        %v746 = vunpack.c.h.b16 %v408
        %v747 = vunpack.c.l.b16 %v409
        %v748 = vunpack.c.h.b16 %v409
        %v749 = vunpack.c.l.b16 %v410
        %v750 = vunpack.c.h.b16 %v410
        %v751 = vunpack.c.l.b16 %v411
        %v752 = vunpack.c.h.b16 %v411
        %v753 = vunpack.c.l.b16 %v412
        %v754 = vunpack.c.h.b16 %v412
        %v755 = vunpack.c.l.b16 %v413
        %v756 = vunpack.c.h.b16 %v413
        %v757 = vunpack.c.l.b16 %v414
        %v758 = vunpack.c.h.b16 %v414
        %v759 = vunpack.c.l.b16 %v415
        %v760 = vunpack.c.h.b16 %v415
        %v761 = vunpack.c.l.b16 %v416
        %v762 = vunpack.c.h.b16 %v416
        %v763 = vunpack.c.l.b16 %v417
        %v764 = vunpack.c.h.b16 %v417
        %v765 = vunpack.c.l.b16 %v418
        %v766 = vunpack.c.h.b16 %v418
        %v767 = vunpack.c.l.b16 %v419
        %v768 = vunpack.c.h.b16 %v419
        %v769 = vunpack.c.l.b16 %v420
        %v770 = vunpack.c.h.b16 %v420
        %v771 = vunpack.c.l.b16 %v421
        %v772 = vunpack.c.h.b16 %v421
        %v773 = vunpack.c.l.b16 %v422
        %v774 = vunpack.c.h.b16 %v422
        %v775 = vunpack.c.l.b16 %v423
        %v776 = vunpack.c.h.b16 %v423
        %v777 = vunpack.c.l.b16 %v424
        %v778 = vunpack.c.h.b16 %v424
        %v779 = vunpack.c.l.b16 %v425
        %v780 = vunpack.c.h.b16 %v425
        %v781 = vpack.c.b16 %v719, %v717
        %v782 = vpack.c.b16 %v720, %v718
        %v783 = vpack.c.b16 %v723, %v721
        %v784 = vpack.c.b16 %v724, %v722
        %v785 = vpack.c.b16 %v727, %v725
        %v786 = vpack.c.b16 %v728, %v726
        %v787 = vpack.c.b16 %v731, %v729
        %v788 = vpack.c.b16 %v732, %v730
        %v789 = vpack.c.b16 %v735, %v733
        %v790 = vpack.c.b16 %v736, %v734
        %v791 = vpack.c.b16 %v739, %v737
        %v792 = vpack.c.b16 %v740, %v738
        %v793 = vpack.c.b16 %v743, %v741
        %v794 = vpack.c.b16 %v744, %v742
        %v795 = vpack.c.b16 %v747, %v745
        %v796 = vpack.c.b16 %v748, %v746
        %v797 = vpack.c.b16 %v751, %v749
        %v798 = vpack.c.b16 %v752, %v750
        %v799 = vpack.c.b16 %v755, %v753
        %v800 = vpack.c.b16 %v756, %v754
        %v801 = vpack.c.b16 %v759, %v757
        %v802 = vpack.c.b16 %v760, %v758
        %v803 = vpack.c.b16 %v763, %v761
        %v804 = vpack.c.b16 %v764, %v762
        %v805 = vpack.c.b16 %v767, %v765
        %v806 = vpack.c.b16 %v768, %v766
        %v807 = vpack.c.b16 %v771, %v769
        %v808 = vpack.c.b16 %v772, %v770
        %v809 = vpack.c.b16 %v775, %v773
        %v810 = vpack.c.b16 %v776, %v774
        %v811 = vpack.c.b16 %v779, %v777
        %v812 = vpack.c.b16 %v780, %v778
        %845 = vmatpush.bf16.msra.mxu0 %v795
        %846 = vmatpush.bf16.msra.mxu0 %v793
        %847 = vmatpush.bf16.msra.mxu0 %v791
        %848 = vmatpush.bf16.msra.mxu0 %v789
        %849 = vmatpush.bf16.msra.mxu0 %v787
        %850 = vmatpush.bf16.msra.mxu0 %v785
        %851 = vmatpush.bf16.msra.mxu0 %v783
        %852 = vmatpush.bf16.msra.mxu0 %v781
        %853 = vmatmul.bf16.gmra.mxu0 %v681
        %v854 = vpop.f32.mrf.mxu0
        %v855 = vadd.f32 %v649, %v854
        %v856 = vpop.f32.mrf.mxu0
        %857 = vdwg.mxu0
        %858 = vmatpush.bf16.msra.mxu0 %v811
        %859 = vmatpush.bf16.msra.mxu0 %v809
        %860 = vmatpush.bf16.msra.mxu0 %v807
        %861 = vmatpush.bf16.msra.mxu0 %v805
        %862 = vmatpush.bf16.msra.mxu0 %v803
        %863 = vmatpush.bf16.msra.mxu0 %v801
        %864 = vmatpush.bf16.msra.mxu0 %v799
        %865 = vmatpush.bf16.msra.mxu0 %v797
        %866 = vmatmul.bf16.gmra.mxu0 %v682
        %v867 = vpop.f32.mrf.mxu0
        %v868 = vadd.f32 %v855, %v867
        %v869 = vpop.f32.mrf.mxu0
        %870 = vdwg.mxu0
        %871 = vmatpush.bf16.msra.mxu0 %v796
        %872 = vmatpush.bf16.msra.mxu0 %v794
        %873 = vmatpush.bf16.msra.mxu0 %v792
        %874 = vmatpush.bf16.msra.mxu0 %v790
        %875 = vmatpush.bf16.msra.mxu0 %v788
        %876 = vmatpush.bf16.msra.mxu0 %v786
        %877 = vmatpush.bf16.msra.mxu0 %v784
        %878 = vmatpush.bf16.msra.mxu0 %v782
        %879 = vmatmul.bf16.gmra.mxu0 %v681
        %v880 = vpop.f32.mrf.mxu0
        %v881 = vadd.f32 %v675, %v880
        %v882 = vpop.f32.mrf.mxu0
        %883 = vdwg.mxu0
        %884 = vmatpush.bf16.msra.mxu0 %v812
        %885 = vmatpush.bf16.msra.mxu0 %v810
        %886 = vmatpush.bf16.msra.mxu0 %v808
        %887 = vmatpush.bf16.msra.mxu0 %v806
        %888 = vmatpush.bf16.msra.mxu0 %v804
        %889 = vmatpush.bf16.msra.mxu0 %v802
        %890 = vmatpush.bf16.msra.mxu0 %v800
        %891 = vmatpush.bf16.msra.mxu0 %v798
        %892 = vmatmul.bf16.gmra.mxu0 %v682
        %v893 = vpop.f32.mrf.mxu0
        %v894 = vadd.f32 %v881, %v893
        %v895 = vpop.f32.mrf.mxu0
        %896 = vdwg.mxu0
        %s897 = scalar_lea.vmem %s2, 512
        %v898 = vld [vmem:[%s897] sm:$0xff]
        %v899 = vld [vmem:[%s897 + $0x8] sm:$0xff]
        %v900 = vld [vmem:[%s897 + $0x10] sm:$0xff]
        %v901 = vld [vmem:[%s897 + $0x18] sm:$0xff]
        %v902 = vld [vmem:[%s897 + $0x20] sm:$0xff]
        %v903 = vld [vmem:[%s897 + $0x28] sm:$0xff]
        %v904 = vld [vmem:[%s897 + $0x30] sm:$0xff]
        %v905 = vld [vmem:[%s897 + $0x38] sm:$0xff]
        %v906 = vld [vmem:[%s897 + $0x40] sm:$0xff]
        %v907 = vld [vmem:[%s897 + $0x48] sm:$0xff]
        %v908 = vld [vmem:[%s897 + $0x50] sm:$0xff]
        %v909 = vld [vmem:[%s897 + $0x58] sm:$0xff]
        %v910 = vld [vmem:[%s897 + $0x60] sm:$0xff]
        %v911 = vld [vmem:[%s897 + $0x68] sm:$0xff]
        %v912 = vld [vmem:[%s897 + $0x70] sm:$0xff]
        %v913 = vld [vmem:[%s897 + $0x78] sm:$0xff]
        %v914 = vld [vmem:[%s897 + $0x80] sm:$0xff]
        %v915 = vld [vmem:[%s897 + $0x88] sm:$0xff]
        %v916 = vld [vmem:[%s897 + $0x90] sm:$0xff]
        %v917 = vld [vmem:[%s897 + $0x98] sm:$0xff]
        %v918 = vld [vmem:[%s897 + $0xa0] sm:$0xff]
        %v919 = vld [vmem:[%s897 + $0xa8] sm:$0xff]
        %v920 = vld [vmem:[%s897 + $0xb0] sm:$0xff]
        %v921 = vld [vmem:[%s897 + $0xb8] sm:$0xff]
        %v922 = vld [vmem:[%s897 + $0xc0] sm:$0xff]
        %v923 = vld [vmem:[%s897 + $0xc8] sm:$0xff]
        %v924 = vld [vmem:[%s897 + $0xd0] sm:$0xff]
        %v925 = vld [vmem:[%s897 + $0xd8] sm:$0xff]
        %v926 = vld [vmem:[%s897 + $0xe0] sm:$0xff]
        %v927 = vld [vmem:[%s897 + $0xe8] sm:$0xff]
        %v928 = vld [vmem:[%s897 + $0xf0] sm:$0xff]
        %v929 = vld [vmem:[%s897 + $0xf8] sm:$0xff]
        %v931 = vshrl.u32 %v681, 16
        %v933 = vshll.u32 %v681, 16
        %v935 = vrot.slane %v933, 1
        %v936 = vor.u32 %v931, %v935
        %v938 = vshrl.u32 %v682, 16
        %v940 = vshll.u32 %v682, 16
        %v942 = vrot.slane %v940, 1
        %v943 = vor.u32 %v938, %v942
        %v978 = vunpack.c.l.b16 %v898
        %v979 = vunpack.c.h.b16 %v898
        %v980 = vunpack.c.l.b16 %v899
        %v981 = vunpack.c.h.b16 %v899
        %v982 = vunpack.c.l.b16 %v900
        %v983 = vunpack.c.h.b16 %v900
        %v984 = vunpack.c.l.b16 %v901
        %v985 = vunpack.c.h.b16 %v901
        %v986 = vunpack.c.l.b16 %v902
        %v987 = vunpack.c.h.b16 %v902
        %v988 = vunpack.c.l.b16 %v903
        %v989 = vunpack.c.h.b16 %v903
        %v990 = vunpack.c.l.b16 %v904
        %v991 = vunpack.c.h.b16 %v904
        %v992 = vunpack.c.l.b16 %v905
        %v993 = vunpack.c.h.b16 %v905
        %v994 = vunpack.c.l.b16 %v906
        %v995 = vunpack.c.h.b16 %v906
        %v996 = vunpack.c.l.b16 %v907
        %v997 = vunpack.c.h.b16 %v907
        %v998 = vunpack.c.l.b16 %v908
        %v999 = vunpack.c.h.b16 %v908
        %v1000 = vunpack.c.l.b16 %v909
        %v1001 = vunpack.c.h.b16 %v909
        %v1002 = vunpack.c.l.b16 %v910
        %v1003 = vunpack.c.h.b16 %v910
        %v1004 = vunpack.c.l.b16 %v911
        %v1005 = vunpack.c.h.b16 %v911
        %v1006 = vunpack.c.l.b16 %v912
        %v1007 = vunpack.c.h.b16 %v912
        %v1008 = vunpack.c.l.b16 %v913
        %v1009 = vunpack.c.h.b16 %v913
        %v1010 = vunpack.c.l.b16 %v914
        %v1011 = vunpack.c.h.b16 %v914
        %v1012 = vunpack.c.l.b16 %v915
        %v1013 = vunpack.c.h.b16 %v915
        %v1014 = vunpack.c.l.b16 %v916
        %v1015 = vunpack.c.h.b16 %v916
        %v1016 = vunpack.c.l.b16 %v917
        %v1017 = vunpack.c.h.b16 %v917
        %v1018 = vunpack.c.l.b16 %v918
        %v1019 = vunpack.c.h.b16 %v918
        %v1020 = vunpack.c.l.b16 %v919
        %v1021 = vunpack.c.h.b16 %v919
        %v1022 = vunpack.c.l.b16 %v920
        %v1023 = vunpack.c.h.b16 %v920
        %v1024 = vunpack.c.l.b16 %v921
        %v1025 = vunpack.c.h.b16 %v921
        %v1026 = vunpack.c.l.b16 %v922
        %v1027 = vunpack.c.h.b16 %v922
        %v1028 = vunpack.c.l.b16 %v923
        %v1029 = vunpack.c.h.b16 %v923
        %v1030 = vunpack.c.l.b16 %v924
        %v1031 = vunpack.c.h.b16 %v924
        %v1032 = vunpack.c.l.b16 %v925
        %v1033 = vunpack.c.h.b16 %v925
        %v1034 = vunpack.c.l.b16 %v926
        %v1035 = vunpack.c.h.b16 %v926
        %v1036 = vunpack.c.l.b16 %v927
        %v1037 = vunpack.c.h.b16 %v927
        %v1038 = vunpack.c.l.b16 %v928
        %v1039 = vunpack.c.h.b16 %v928
        %v1040 = vunpack.c.l.b16 %v929
        %v1041 = vunpack.c.h.b16 %v929
        %v1042 = vpack.c.b16 %v980, %v978
        %v1043 = vpack.c.b16 %v981, %v979
        %v1044 = vpack.c.b16 %v984, %v982
        %v1045 = vpack.c.b16 %v985, %v983
        %v1046 = vpack.c.b16 %v988, %v986
        %v1047 = vpack.c.b16 %v989, %v987
        %v1048 = vpack.c.b16 %v992, %v990
        %v1049 = vpack.c.b16 %v993, %v991
        %v1050 = vpack.c.b16 %v996, %v994
        %v1051 = vpack.c.b16 %v997, %v995
        %v1052 = vpack.c.b16 %v1000, %v998
        %v1053 = vpack.c.b16 %v1001, %v999
        %v1054 = vpack.c.b16 %v1004, %v1002
        %v1055 = vpack.c.b16 %v1005, %v1003
        %v1056 = vpack.c.b16 %v1008, %v1006
        %v1057 = vpack.c.b16 %v1009, %v1007
        %v1058 = vpack.c.b16 %v1012, %v1010
        %v1059 = vpack.c.b16 %v1013, %v1011
        %v1060 = vpack.c.b16 %v1016, %v1014
        %v1061 = vpack.c.b16 %v1017, %v1015
        %v1062 = vpack.c.b16 %v1020, %v1018
        %v1063 = vpack.c.b16 %v1021, %v1019
        %v1064 = vpack.c.b16 %v1024, %v1022
        %v1065 = vpack.c.b16 %v1025, %v1023
        %v1066 = vpack.c.b16 %v1028, %v1026
        %v1067 = vpack.c.b16 %v1029, %v1027
        %v1068 = vpack.c.b16 %v1032, %v1030
        %v1069 = vpack.c.b16 %v1033, %v1031
        %v1070 = vpack.c.b16 %v1036, %v1034
        %v1071 = vpack.c.b16 %v1037, %v1035
        %v1072 = vpack.c.b16 %v1040, %v1038
        %v1073 = vpack.c.b16 %v1041, %v1039
        %1106 = vmatpush.bf16.msra.mxu0 %v1056
        %1107 = vmatpush.bf16.msra.mxu0 %v1054
        %1108 = vmatpush.bf16.msra.mxu0 %v1052
        %1109 = vmatpush.bf16.msra.mxu0 %v1050
        %1110 = vmatpush.bf16.msra.mxu0 %v1048
        %1111 = vmatpush.bf16.msra.mxu0 %v1046
        %1112 = vmatpush.bf16.msra.mxu0 %v1044
        %1113 = vmatpush.bf16.msra.mxu0 %v1042
        %1114 = vmatmul.bf16.gmra.mxu0 %v936
        %v1115 = vpop.f32.mrf.mxu0
        %v1116 = vadd.f32 0.0, %v1115
        %v1117 = vpop.f32.mrf.mxu0
        %1118 = vdwg.mxu0
        %1119 = vmatpush.bf16.msra.mxu0 %v1072
        %1120 = vmatpush.bf16.msra.mxu0 %v1070
        %1121 = vmatpush.bf16.msra.mxu0 %v1068
        %1122 = vmatpush.bf16.msra.mxu0 %v1066
        %1123 = vmatpush.bf16.msra.mxu0 %v1064
        %1124 = vmatpush.bf16.msra.mxu0 %v1062
        %1125 = vmatpush.bf16.msra.mxu0 %v1060
        %1126 = vmatpush.bf16.msra.mxu0 %v1058
        %1127 = vmatmul.bf16.gmra.mxu0 %v943
        %v1128 = vpop.f32.mrf.mxu0
        %v1129 = vadd.f32 %v1116, %v1128
        %v1130 = vpop.f32.mrf.mxu0
        %1131 = vdwg.mxu0
        %1132 = vmatpush.bf16.msra.mxu0 %v1057
        %1133 = vmatpush.bf16.msra.mxu0 %v1055
        %1134 = vmatpush.bf16.msra.mxu0 %v1053
        %1135 = vmatpush.bf16.msra.mxu0 %v1051
        %1136 = vmatpush.bf16.msra.mxu0 %v1049
        %1137 = vmatpush.bf16.msra.mxu0 %v1047
        %1138 = vmatpush.bf16.msra.mxu0 %v1045
        %1139 = vmatpush.bf16.msra.mxu0 %v1043
        %1140 = vmatmul.bf16.gmra.mxu0 %v936
        %v1141 = vpop.f32.mrf.mxu0
        %v1142 = vadd.f32 0.0, %v1141
        %v1143 = vpop.f32.mrf.mxu0
        %1144 = vdwg.mxu0
        %1145 = vmatpush.bf16.msra.mxu0 %v1073
        %1146 = vmatpush.bf16.msra.mxu0 %v1071
        %1147 = vmatpush.bf16.msra.mxu0 %v1069
        %1148 = vmatpush.bf16.msra.mxu0 %v1067
        %1149 = vmatpush.bf16.msra.mxu0 %v1065
        %1150 = vmatpush.bf16.msra.mxu0 %v1063
        %1151 = vmatpush.bf16.msra.mxu0 %v1061
        %1152 = vmatpush.bf16.msra.mxu0 %v1059
        %1153 = vmatmul.bf16.gmra.mxu0 %v943
        %v1154 = vpop.f32.mrf.mxu0
        %v1155 = vadd.f32 %v1142, %v1154
        %v1156 = vpop.f32.mrf.mxu0
        %1157 = vdwg.mxu0
        %v1158 = vadd.f32 %v868, %v1129
        %v1159 = vadd.f32 %v894, %v1155
        %v1160 = vld [vmem:[%s3] sm:$0x3]
        %v1162 = vperm.slane %v1160, 0
        %v1163 = vperm.slane %v1160, 1
        %v1166 = vmul.f32 %v1158, %v1162
        %v1167 = vmul.f32 %v1159, %v1163
        %v1168 = vld [vmem:[%s4] sm:$0x3]
        %v1170 = vperm.slane %v1168, 0
        %v1171 = vperm.slane %v1168, 1
        %v1174 = vadd.f32 %v1166, %v1170
        %v1175 = vadd.f32 %v1167, %v1171
        %v1176 = vmax.f32 %v1174, 0.0
        %v1177 = vmax.f32 %v1175, 0.0
        %1178 = vst [vmem:[#allocation2] sm:$0x77] 0
        %v1179 = vpack.c.bf16 %v1177, %v1176
        %v1181 = vshrl.u32 %v1179, 16
        %v1183 = vrot.slane %v1181, 7
        %v1184 = vshll.u32 %v1179, 16
        %v1186 = vor.u32 %v1183, %v1184
        %vm1188 = vcmask 1042432
        %vm1189 = vsmask.f32 2306
        %vm1190 = vmand %vm1188, %vm1189
        %vm1191 = vcmask 1046532
        %vm1192 = vsmask.f32 6418
        %vm1193 = vmand %vm1191, %vm1192
        %vm1194 = vmor %vm1193, %vm1190
        %v1195 = vld [vmem:[#allocation2] sm:$0x77]
        %v1196 = vsel %vm1194, %v1186, %v1195
        %1197 = vst [vmem:[#allocation2] sm:$0x77] %v1196
        %v1198 = vld [vmem:[#allocation2] sm:$0x33]
        %v1199 = vld [vmem:[#allocation3] sm:$0xff]
        %v1200 = vld [vmem:[#allocation3 + $0x8] sm:$0xff]
        %v1201 = vld [vmem:[#allocation3 + $0x10] sm:$0xff]
        %v1202 = vld [vmem:[#allocation3 + $0x18] sm:$0xff]
        %v1203 = vld [vmem:[#allocation3 + $0x20] sm:$0xff]
        %v1204 = vld [vmem:[#allocation3 + $0x28] sm:$0xff]
        %v1205 = vld [vmem:[#allocation3 + $0x30] sm:$0xff]
        %v1206 = vld [vmem:[#allocation3 + $0x38] sm:$0xff]
        %v1207 = vld [vmem:[#allocation3 + $0x40] sm:$0xff]
        %v1208 = vld [vmem:[#allocation3 + $0x48] sm:$0xff]
        %v1209 = vld [vmem:[#allocation3 + $0x50] sm:$0xff]
        %v1210 = vld [vmem:[#allocation3 + $0x58] sm:$0xff]
        %v1211 = vld [vmem:[#allocation3 + $0x60] sm:$0xff]
        %v1212 = vld [vmem:[#allocation3 + $0x68] sm:$0xff]
        %v1213 = vld [vmem:[#allocation3 + $0x70] sm:$0xff]
        %v1214 = vld [vmem:[#allocation3 + $0x78] sm:$0xff]
        %v1215 = vld [vmem:[#allocation3 + $0x80] sm:$0xff]
        %v1216 = vld [vmem:[#allocation3 + $0x88] sm:$0xff]
        %v1217 = vld [vmem:[#allocation3 + $0x90] sm:$0xff]
        %v1218 = vld [vmem:[#allocation3 + $0x98] sm:$0xff]
        %v1219 = vld [vmem:[#allocation3 + $0xa0] sm:$0xff]
        %v1220 = vld [vmem:[#allocation3 + $0xa8] sm:$0xff]
        %v1221 = vld [vmem:[#allocation3 + $0xb0] sm:$0xff]
        %v1222 = vld [vmem:[#allocation3 + $0xb8] sm:$0xff]
        %v1223 = vld [vmem:[#allocation3 + $0xc0] sm:$0xff]
        %v1224 = vld [vmem:[#allocation3 + $0xc8] sm:$0xff]
        %v1225 = vld [vmem:[#allocation3 + $0xd0] sm:$0xff]
        %v1226 = vld [vmem:[#allocation3 + $0xd8] sm:$0xff]
        %v1227 = vld [vmem:[#allocation3 + $0xe0] sm:$0xff]
        %v1228 = vld [vmem:[#allocation3 + $0xe8] sm:$0xff]
        %v1229 = vld [vmem:[#allocation3 + $0xf0] sm:$0xff]
        %v1230 = vld [vmem:[#allocation3 + $0xf8] sm:$0xff]
        %v1231 = vld [vmem:[#allocation2] sm:$0x77]
        %s1232 = scalar_lea.vmem [#allocation3], 256
        %v1233 = vld [vmem:[%s1232] sm:$0xff]
        %v1234 = vld [vmem:[%s1232 + $0x8] sm:$0xff]
        %v1235 = vld [vmem:[%s1232 + $0x10] sm:$0xff]
        %v1236 = vld [vmem:[%s1232 + $0x18] sm:$0xff]
        %v1237 = vld [vmem:[%s1232 + $0x20] sm:$0xff]
        %v1238 = vld [vmem:[%s1232 + $0x28] sm:$0xff]
        %v1239 = vld [vmem:[%s1232 + $0x30] sm:$0xff]
        %v1240 = vld [vmem:[%s1232 + $0x38] sm:$0xff]
        %v1241 = vld [vmem:[%s1232 + $0x40] sm:$0xff]
        %v1242 = vld [vmem:[%s1232 + $0x48] sm:$0xff]
        %v1243 = vld [vmem:[%s1232 + $0x50] sm:$0xff]
        %v1244 = vld [vmem:[%s1232 + $0x58] sm:$0xff]
        %v1245 = vld [vmem:[%s1232 + $0x60] sm:$0xff]
        %v1246 = vld [vmem:[%s1232 + $0x68] sm:$0xff]
        %v1247 = vld [vmem:[%s1232 + $0x70] sm:$0xff]
        %v1248 = vld [vmem:[%s1232 + $0x78] sm:$0xff]
        %v1249 = vld [vmem:[%s1232 + $0x80] sm:$0xff]
        %v1250 = vld [vmem:[%s1232 + $0x88] sm:$0xff]
        %v1251 = vld [vmem:[%s1232 + $0x90] sm:$0xff]
        %v1252 = vld [vmem:[%s1232 + $0x98] sm:$0xff]
        %v1253 = vld [vmem:[%s1232 + $0xa0] sm:$0xff]
        %v1254 = vld [vmem:[%s1232 + $0xa8] sm:$0xff]
        %v1255 = vld [vmem:[%s1232 + $0xb0] sm:$0xff]
        %v1256 = vld [vmem:[%s1232 + $0xb8] sm:$0xff]
        %v1257 = vld [vmem:[%s1232 + $0xc0] sm:$0xff]
        %v1258 = vld [vmem:[%s1232 + $0xc8] sm:$0xff]
        %v1259 = vld [vmem:[%s1232 + $0xd0] sm:$0xff]
        %v1260 = vld [vmem:[%s1232 + $0xd8] sm:$0xff]
        %v1261 = vld [vmem:[%s1232 + $0xe0] sm:$0xff]
        %v1262 = vld [vmem:[%s1232 + $0xe8] sm:$0xff]
        %v1263 = vld [vmem:[%s1232 + $0xf0] sm:$0xff]
        %v1264 = vld [vmem:[%s1232 + $0xf8] sm:$0xff]
        %v1266 = vunpack.c.l.b16 %v1231
        %v1267 = vunpack.c.h.b16 %v1231
        %v1268 = vpack.c.b16 %v1266, %v1266
        %v1269 = vpack.c.b16 %v1267, %v1267
        %v1271 = vshrl.u32 %v1268, 16
        %v1273 = vshll.u32 %v1268, 16
        %v1275 = vrot.slane %v1273, 1
        %v1276 = vor.u32 %v1271, %v1275
        %v1278 = vshrl.u32 %v1269, 16
        %v1280 = vshll.u32 %v1269, 16
        %v1282 = vrot.slane %v1280, 1
        %v1283 = vor.u32 %v1278, %v1282
        %v1318 = vunpack.c.l.b16 %v1233
        %v1319 = vunpack.c.h.b16 %v1233
        %v1320 = vunpack.c.l.b16 %v1234
        %v1321 = vunpack.c.h.b16 %v1234
        %v1322 = vunpack.c.l.b16 %v1235
        %v1323 = vunpack.c.h.b16 %v1235
        %v1324 = vunpack.c.l.b16 %v1236
        %v1325 = vunpack.c.h.b16 %v1236
        %v1326 = vunpack.c.l.b16 %v1237
        %v1327 = vunpack.c.h.b16 %v1237
        %v1328 = vunpack.c.l.b16 %v1238
        %v1329 = vunpack.c.h.b16 %v1238
        %v1330 = vunpack.c.l.b16 %v1239
        %v1331 = vunpack.c.h.b16 %v1239
        %v1332 = vunpack.c.l.b16 %v1240
        %v1333 = vunpack.c.h.b16 %v1240
        %v1334 = vunpack.c.l.b16 %v1241
        %v1335 = vunpack.c.h.b16 %v1241
        %v1336 = vunpack.c.l.b16 %v1242
        %v1337 = vunpack.c.h.b16 %v1242
        %v1338 = vunpack.c.l.b16 %v1243
        %v1339 = vunpack.c.h.b16 %v1243
        %v1340 = vunpack.c.l.b16 %v1244
        %v1341 = vunpack.c.h.b16 %v1244
        %v1342 = vunpack.c.l.b16 %v1245
        %v1343 = vunpack.c.h.b16 %v1245
        %v1344 = vunpack.c.l.b16 %v1246
        %v1345 = vunpack.c.h.b16 %v1246
        %v1346 = vunpack.c.l.b16 %v1247
        %v1347 = vunpack.c.h.b16 %v1247
        %v1348 = vunpack.c.l.b16 %v1248
        %v1349 = vunpack.c.h.b16 %v1248
        %v1350 = vunpack.c.l.b16 %v1249
        %v1351 = vunpack.c.h.b16 %v1249
        %v1352 = vunpack.c.l.b16 %v1250
        %v1353 = vunpack.c.h.b16 %v1250
        %v1354 = vunpack.c.l.b16 %v1251
        %v1355 = vunpack.c.h.b16 %v1251
        %v1356 = vunpack.c.l.b16 %v1252
        %v1357 = vunpack.c.h.b16 %v1252
        %v1358 = vunpack.c.l.b16 %v1253
        %v1359 = vunpack.c.h.b16 %v1253
        %v1360 = vunpack.c.l.b16 %v1254
        %v1361 = vunpack.c.h.b16 %v1254
        %v1362 = vunpack.c.l.b16 %v1255
        %v1363 = vunpack.c.h.b16 %v1255
        %v1364 = vunpack.c.l.b16 %v1256
        %v1365 = vunpack.c.h.b16 %v1256
        %v1366 = vunpack.c.l.b16 %v1257
        %v1367 = vunpack.c.h.b16 %v1257
        %v1368 = vunpack.c.l.b16 %v1258
        %v1369 = vunpack.c.h.b16 %v1258
        %v1370 = vunpack.c.l.b16 %v1259
        %v1371 = vunpack.c.h.b16 %v1259
        %v1372 = vunpack.c.l.b16 %v1260
        %v1373 = vunpack.c.h.b16 %v1260
        %v1374 = vunpack.c.l.b16 %v1261
        %v1375 = vunpack.c.h.b16 %v1261
        %v1376 = vunpack.c.l.b16 %v1262
        %v1377 = vunpack.c.h.b16 %v1262
        %v1378 = vunpack.c.l.b16 %v1263
        %v1379 = vunpack.c.h.b16 %v1263
        %v1380 = vunpack.c.l.b16 %v1264
        %v1381 = vunpack.c.h.b16 %v1264
        %v1382 = vpack.c.b16 %v1320, %v1318
        %v1383 = vpack.c.b16 %v1321, %v1319
        %v1384 = vpack.c.b16 %v1324, %v1322
        %v1385 = vpack.c.b16 %v1325, %v1323
        %v1386 = vpack.c.b16 %v1328, %v1326
        %v1387 = vpack.c.b16 %v1329, %v1327
        %v1388 = vpack.c.b16 %v1332, %v1330
        %v1389 = vpack.c.b16 %v1333, %v1331
        %v1390 = vpack.c.b16 %v1336, %v1334
        %v1391 = vpack.c.b16 %v1337, %v1335
        %v1392 = vpack.c.b16 %v1340, %v1338
        %v1393 = vpack.c.b16 %v1341, %v1339
        %v1394 = vpack.c.b16 %v1344, %v1342
        %v1395 = vpack.c.b16 %v1345, %v1343
        %v1396 = vpack.c.b16 %v1348, %v1346
        %v1397 = vpack.c.b16 %v1349, %v1347
        %v1398 = vpack.c.b16 %v1352, %v1350
        %v1399 = vpack.c.b16 %v1353, %v1351
        %v1400 = vpack.c.b16 %v1356, %v1354
        %v1401 = vpack.c.b16 %v1357, %v1355
        %v1402 = vpack.c.b16 %v1360, %v1358
        %v1403 = vpack.c.b16 %v1361, %v1359
        %v1404 = vpack.c.b16 %v1364, %v1362
        %v1405 = vpack.c.b16 %v1365, %v1363
        %v1406 = vpack.c.b16 %v1368, %v1366
        %v1407 = vpack.c.b16 %v1369, %v1367
        %v1408 = vpack.c.b16 %v1372, %v1370
        %v1409 = vpack.c.b16 %v1373, %v1371
        %v1410 = vpack.c.b16 %v1376, %v1374
        %v1411 = vpack.c.b16 %v1377, %v1375
        %v1412 = vpack.c.b16 %v1380, %v1378
        %v1413 = vpack.c.b16 %v1381, %v1379
        %1446 = vmatpush.bf16.msra.mxu0 %v1396
        %1447 = vmatpush.bf16.msra.mxu0 %v1394
        %1448 = vmatpush.bf16.msra.mxu0 %v1392
        %1449 = vmatpush.bf16.msra.mxu0 %v1390
        %1450 = vmatpush.bf16.msra.mxu0 %v1388
        %1451 = vmatpush.bf16.msra.mxu0 %v1386
        %1452 = vmatpush.bf16.msra.mxu0 %v1384
        %1453 = vmatpush.bf16.msra.mxu0 %v1382
        %1454 = vmatmul.bf16.gmra.mxu0 %v1276
        %v1455 = vpop.f32.mrf.mxu0
        %v1456 = vadd.f32 0.0, %v1455
        %v1457 = vpop.f32.mrf.mxu0
        %1458 = vdwg.mxu0
        %1459 = vmatpush.bf16.msra.mxu0 %v1412
        %1460 = vmatpush.bf16.msra.mxu0 %v1410
        %1461 = vmatpush.bf16.msra.mxu0 %v1408
        %1462 = vmatpush.bf16.msra.mxu0 %v1406
        %1463 = vmatpush.bf16.msra.mxu0 %v1404
        %1464 = vmatpush.bf16.msra.mxu0 %v1402
        %1465 = vmatpush.bf16.msra.mxu0 %v1400
        %1466 = vmatpush.bf16.msra.mxu0 %v1398
        %1467 = vmatmul.bf16.gmra.mxu0 %v1283
        %v1468 = vpop.f32.mrf.mxu0
        %v1469 = vadd.f32 %v1456, %v1468
        %v1470 = vpop.f32.mrf.mxu0
        %1471 = vdwg.mxu0
        %1472 = vmatpush.bf16.msra.mxu0 %v1397
        %1473 = vmatpush.bf16.msra.mxu0 %v1395
        %1474 = vmatpush.bf16.msra.mxu0 %v1393
        %1475 = vmatpush.bf16.msra.mxu0 %v1391
        %1476 = vmatpush.bf16.msra.mxu0 %v1389
        %1477 = vmatpush.bf16.msra.mxu0 %v1387
        %1478 = vmatpush.bf16.msra.mxu0 %v1385
        %1479 = vmatpush.bf16.msra.mxu0 %v1383
        %1480 = vmatmul.bf16.gmra.mxu0 %v1276
        %v1481 = vpop.f32.mrf.mxu0
        %v1482 = vadd.f32 0.0, %v1481
        %v1483 = vpop.f32.mrf.mxu0
        %1484 = vdwg.mxu0
        %1485 = vmatpush.bf16.msra.mxu0 %v1413
        %1486 = vmatpush.bf16.msra.mxu0 %v1411
        %1487 = vmatpush.bf16.msra.mxu0 %v1409
        %1488 = vmatpush.bf16.msra.mxu0 %v1407
        %1489 = vmatpush.bf16.msra.mxu0 %v1405
        %1490 = vmatpush.bf16.msra.mxu0 %v1403
        %1491 = vmatpush.bf16.msra.mxu0 %v1401
        %1492 = vmatpush.bf16.msra.mxu0 %v1399
        %1493 = vmatmul.bf16.gmra.mxu0 %v1283
        %v1494 = vpop.f32.mrf.mxu0
        %v1495 = vadd.f32 %v1482, %v1494
        %v1496 = vpop.f32.mrf.mxu0
        %1497 = vdwg.mxu0
        %v1499 = vunpack.c.l.b16 %v1198
        %v1500 = vunpack.c.h.b16 %v1198
        %v1501 = vpack.c.b16 %v1499, %v1499
        %v1502 = vpack.c.b16 %v1500, %v1500
        %v1537 = vunpack.c.l.b16 %v1199
        %v1538 = vunpack.c.h.b16 %v1199
        %v1539 = vunpack.c.l.b16 %v1200
        %v1540 = vunpack.c.h.b16 %v1200
        %v1541 = vunpack.c.l.b16 %v1201
        %v1542 = vunpack.c.h.b16 %v1201
        %v1543 = vunpack.c.l.b16 %v1202
        %v1544 = vunpack.c.h.b16 %v1202
        %v1545 = vunpack.c.l.b16 %v1203
        %v1546 = vunpack.c.h.b16 %v1203
        %v1547 = vunpack.c.l.b16 %v1204
        %v1548 = vunpack.c.h.b16 %v1204
        %v1549 = vunpack.c.l.b16 %v1205
        %v1550 = vunpack.c.h.b16 %v1205
        %v1551 = vunpack.c.l.b16 %v1206
        %v1552 = vunpack.c.h.b16 %v1206
        %v1553 = vunpack.c.l.b16 %v1207
        %v1554 = vunpack.c.h.b16 %v1207
        %v1555 = vunpack.c.l.b16 %v1208
        %v1556 = vunpack.c.h.b16 %v1208
        %v1557 = vunpack.c.l.b16 %v1209
        %v1558 = vunpack.c.h.b16 %v1209
        %v1559 = vunpack.c.l.b16 %v1210
        %v1560 = vunpack.c.h.b16 %v1210
        %v1561 = vunpack.c.l.b16 %v1211
        %v1562 = vunpack.c.h.b16 %v1211
        %v1563 = vunpack.c.l.b16 %v1212
        %v1564 = vunpack.c.h.b16 %v1212
        %v1565 = vunpack.c.l.b16 %v1213
        %v1566 = vunpack.c.h.b16 %v1213
        %v1567 = vunpack.c.l.b16 %v1214
        %v1568 = vunpack.c.h.b16 %v1214
        %v1569 = vunpack.c.l.b16 %v1215
        %v1570 = vunpack.c.h.b16 %v1215
        %v1571 = vunpack.c.l.b16 %v1216
        %v1572 = vunpack.c.h.b16 %v1216
        %v1573 = vunpack.c.l.b16 %v1217
        %v1574 = vunpack.c.h.b16 %v1217
        %v1575 = vunpack.c.l.b16 %v1218
        %v1576 = vunpack.c.h.b16 %v1218
        %v1577 = vunpack.c.l.b16 %v1219
        %v1578 = vunpack.c.h.b16 %v1219
        %v1579 = vunpack.c.l.b16 %v1220
        %v1580 = vunpack.c.h.b16 %v1220
        %v1581 = vunpack.c.l.b16 %v1221
        %v1582 = vunpack.c.h.b16 %v1221
        %v1583 = vunpack.c.l.b16 %v1222
        %v1584 = vunpack.c.h.b16 %v1222
        %v1585 = vunpack.c.l.b16 %v1223
        %v1586 = vunpack.c.h.b16 %v1223
        %v1587 = vunpack.c.l.b16 %v1224
        %v1588 = vunpack.c.h.b16 %v1224
        %v1589 = vunpack.c.l.b16 %v1225
        %v1590 = vunpack.c.h.b16 %v1225
        %v1591 = vunpack.c.l.b16 %v1226
        %v1592 = vunpack.c.h.b16 %v1226
        %v1593 = vunpack.c.l.b16 %v1227
        %v1594 = vunpack.c.h.b16 %v1227
        %v1595 = vunpack.c.l.b16 %v1228
        %v1596 = vunpack.c.h.b16 %v1228
        %v1597 = vunpack.c.l.b16 %v1229
        %v1598 = vunpack.c.h.b16 %v1229
        %v1599 = vunpack.c.l.b16 %v1230
        %v1600 = vunpack.c.h.b16 %v1230
        %v1601 = vpack.c.b16 %v1539, %v1537
        %v1602 = vpack.c.b16 %v1540, %v1538
        %v1603 = vpack.c.b16 %v1543, %v1541
        %v1604 = vpack.c.b16 %v1544, %v1542
        %v1605 = vpack.c.b16 %v1547, %v1545
        %v1606 = vpack.c.b16 %v1548, %v1546
        %v1607 = vpack.c.b16 %v1551, %v1549
        %v1608 = vpack.c.b16 %v1552, %v1550
        %v1609 = vpack.c.b16 %v1555, %v1553
        %v1610 = vpack.c.b16 %v1556, %v1554
        %v1611 = vpack.c.b16 %v1559, %v1557
        %v1612 = vpack.c.b16 %v1560, %v1558
        %v1613 = vpack.c.b16 %v1563, %v1561
        %v1614 = vpack.c.b16 %v1564, %v1562
        %v1615 = vpack.c.b16 %v1567, %v1565
        %v1616 = vpack.c.b16 %v1568, %v1566
        %v1617 = vpack.c.b16 %v1571, %v1569
        %v1618 = vpack.c.b16 %v1572, %v1570
        %v1619 = vpack.c.b16 %v1575, %v1573
        %v1620 = vpack.c.b16 %v1576, %v1574
        %v1621 = vpack.c.b16 %v1579, %v1577
        %v1622 = vpack.c.b16 %v1580, %v1578
        %v1623 = vpack.c.b16 %v1583, %v1581
        %v1624 = vpack.c.b16 %v1584, %v1582
        %v1625 = vpack.c.b16 %v1587, %v1585
        %v1626 = vpack.c.b16 %v1588, %v1586
        %v1627 = vpack.c.b16 %v1591, %v1589
        %v1628 = vpack.c.b16 %v1592, %v1590
        %v1629 = vpack.c.b16 %v1595, %v1593
        %v1630 = vpack.c.b16 %v1596, %v1594
        %v1631 = vpack.c.b16 %v1599, %v1597
        %v1632 = vpack.c.b16 %v1600, %v1598
        %1665 = vmatpush.bf16.msra.mxu0 %v1615
        %1666 = vmatpush.bf16.msra.mxu0 %v1613
        %1667 = vmatpush.bf16.msra.mxu0 %v1611
        %1668 = vmatpush.bf16.msra.mxu0 %v1609
        %1669 = vmatpush.bf16.msra.mxu0 %v1607
        %1670 = vmatpush.bf16.msra.mxu0 %v1605
        %1671 = vmatpush.bf16.msra.mxu0 %v1603
        %1672 = vmatpush.bf16.msra.mxu0 %v1601
        %1673 = vmatmul.bf16.gmra.mxu0 %v1501
        %v1674 = vpop.f32.mrf.mxu0
        %v1675 = vadd.f32 %v1469, %v1674
        %v1676 = vpop.f32.mrf.mxu0
        %1677 = vdwg.mxu0
        %1678 = vmatpush.bf16.msra.mxu0 %v1631
        %1679 = vmatpush.bf16.msra.mxu0 %v1629
        %1680 = vmatpush.bf16.msra.mxu0 %v1627
        %1681 = vmatpush.bf16.msra.mxu0 %v1625
        %1682 = vmatpush.bf16.msra.mxu0 %v1623
        %1683 = vmatpush.bf16.msra.mxu0 %v1621
        %1684 = vmatpush.bf16.msra.mxu0 %v1619
        %1685 = vmatpush.bf16.msra.mxu0 %v1617
        %1686 = vmatmul.bf16.gmra.mxu0 %v1502
        %v1687 = vpop.f32.mrf.mxu0
        %v1688 = vadd.f32 %v1675, %v1687
        %v1689 = vpop.f32.mrf.mxu0
        %1690 = vdwg.mxu0
        %1691 = vmatpush.bf16.msra.mxu0 %v1616
        %1692 = vmatpush.bf16.msra.mxu0 %v1614
        %1693 = vmatpush.bf16.msra.mxu0 %v1612
        %1694 = vmatpush.bf16.msra.mxu0 %v1610
        %1695 = vmatpush.bf16.msra.mxu0 %v1608
        %1696 = vmatpush.bf16.msra.mxu0 %v1606
        %1697 = vmatpush.bf16.msra.mxu0 %v1604
        %1698 = vmatpush.bf16.msra.mxu0 %v1602
        %1699 = vmatmul.bf16.gmra.mxu0 %v1501
        %v1700 = vpop.f32.mrf.mxu0
        %v1701 = vadd.f32 %v1495, %v1700
        %v1702 = vpop.f32.mrf.mxu0
        %1703 = vdwg.mxu0
        %1704 = vmatpush.bf16.msra.mxu0 %v1632
        %1705 = vmatpush.bf16.msra.mxu0 %v1630
        %1706 = vmatpush.bf16.msra.mxu0 %v1628
        %1707 = vmatpush.bf16.msra.mxu0 %v1626
        %1708 = vmatpush.bf16.msra.mxu0 %v1624
        %1709 = vmatpush.bf16.msra.mxu0 %v1622
        %1710 = vmatpush.bf16.msra.mxu0 %v1620
        %1711 = vmatpush.bf16.msra.mxu0 %v1618
        %1712 = vmatmul.bf16.gmra.mxu0 %v1502
        %v1713 = vpop.f32.mrf.mxu0
        %v1714 = vadd.f32 %v1701, %v1713
        %v1715 = vpop.f32.mrf.mxu0
        %1716 = vdwg.mxu0
        %v1717 = vld [vmem:[#allocation2] sm:$0x66]
        %s1718 = scalar_lea.vmem [#allocation3], 512
        %v1719 = vld [vmem:[%s1718] sm:$0xff]
        %v1720 = vld [vmem:[%s1718 + $0x8] sm:$0xff]
        %v1721 = vld [vmem:[%s1718 + $0x10] sm:$0xff]
        %v1722 = vld [vmem:[%s1718 + $0x18] sm:$0xff]
        %v1723 = vld [vmem:[%s1718 + $0x20] sm:$0xff]
        %v1724 = vld [vmem:[%s1718 + $0x28] sm:$0xff]
        %v1725 = vld [vmem:[%s1718 + $0x30] sm:$0xff]
        %v1726 = vld [vmem:[%s1718 + $0x38] sm:$0xff]
        %v1727 = vld [vmem:[%s1718 + $0x40] sm:$0xff]
        %v1728 = vld [vmem:[%s1718 + $0x48] sm:$0xff]
        %v1729 = vld [vmem:[%s1718 + $0x50] sm:$0xff]
        %v1730 = vld [vmem:[%s1718 + $0x58] sm:$0xff]
        %v1731 = vld [vmem:[%s1718 + $0x60] sm:$0xff]
        %v1732 = vld [vmem:[%s1718 + $0x68] sm:$0xff]
        %v1733 = vld [vmem:[%s1718 + $0x70] sm:$0xff]
        %v1734 = vld [vmem:[%s1718 + $0x78] sm:$0xff]
        %v1735 = vld [vmem:[%s1718 + $0x80] sm:$0xff]
        %v1736 = vld [vmem:[%s1718 + $0x88] sm:$0xff]
        %v1737 = vld [vmem:[%s1718 + $0x90] sm:$0xff]
        %v1738 = vld [vmem:[%s1718 + $0x98] sm:$0xff]
        %v1739 = vld [vmem:[%s1718 + $0xa0] sm:$0xff]
        %v1740 = vld [vmem:[%s1718 + $0xa8] sm:$0xff]
        %v1741 = vld [vmem:[%s1718 + $0xb0] sm:$0xff]
        %v1742 = vld [vmem:[%s1718 + $0xb8] sm:$0xff]
        %v1743 = vld [vmem:[%s1718 + $0xc0] sm:$0xff]
        %v1744 = vld [vmem:[%s1718 + $0xc8] sm:$0xff]
        %v1745 = vld [vmem:[%s1718 + $0xd0] sm:$0xff]
        %v1746 = vld [vmem:[%s1718 + $0xd8] sm:$0xff]
        %v1747 = vld [vmem:[%s1718 + $0xe0] sm:$0xff]
        %v1748 = vld [vmem:[%s1718 + $0xe8] sm:$0xff]
        %v1749 = vld [vmem:[%s1718 + $0xf0] sm:$0xff]
        %v1750 = vld [vmem:[%s1718 + $0xf8] sm:$0xff]
        %v1752 = vunpack.c.l.b16 %v1717
        %v1753 = vunpack.c.h.b16 %v1717
        %v1754 = vpack.c.b16 %v1752, %v1752
        %v1755 = vpack.c.b16 %v1753, %v1753
        %v1756 = vrot.slane %v1754, 1
        %v1757 = vrot.slane %v1755, 1
        %v1792 = vunpack.c.l.b16 %v1719
        %v1793 = vunpack.c.h.b16 %v1719
        %v1794 = vunpack.c.l.b16 %v1720
        %v1795 = vunpack.c.h.b16 %v1720
        %v1796 = vunpack.c.l.b16 %v1721
        %v1797 = vunpack.c.h.b16 %v1721
        %v1798 = vunpack.c.l.b16 %v1722
        %v1799 = vunpack.c.h.b16 %v1722
        %v1800 = vunpack.c.l.b16 %v1723
        %v1801 = vunpack.c.h.b16 %v1723
        %v1802 = vunpack.c.l.b16 %v1724
        %v1803 = vunpack.c.h.b16 %v1724
        %v1804 = vunpack.c.l.b16 %v1725
        %v1805 = vunpack.c.h.b16 %v1725
        %v1806 = vunpack.c.l.b16 %v1726
        %v1807 = vunpack.c.h.b16 %v1726
        %v1808 = vunpack.c.l.b16 %v1727
        %v1809 = vunpack.c.h.b16 %v1727
        %v1810 = vunpack.c.l.b16 %v1728
        %v1811 = vunpack.c.h.b16 %v1728
        %v1812 = vunpack.c.l.b16 %v1729
        %v1813 = vunpack.c.h.b16 %v1729
        %v1814 = vunpack.c.l.b16 %v1730
        %v1815 = vunpack.c.h.b16 %v1730
        %v1816 = vunpack.c.l.b16 %v1731
        %v1817 = vunpack.c.h.b16 %v1731
        %v1818 = vunpack.c.l.b16 %v1732
        %v1819 = vunpack.c.h.b16 %v1732
        %v1820 = vunpack.c.l.b16 %v1733
        %v1821 = vunpack.c.h.b16 %v1733
        %v1822 = vunpack.c.l.b16 %v1734
        %v1823 = vunpack.c.h.b16 %v1734
        %v1824 = vunpack.c.l.b16 %v1735
        %v1825 = vunpack.c.h.b16 %v1735
        %v1826 = vunpack.c.l.b16 %v1736
        %v1827 = vunpack.c.h.b16 %v1736
        %v1828 = vunpack.c.l.b16 %v1737
        %v1829 = vunpack.c.h.b16 %v1737
        %v1830 = vunpack.c.l.b16 %v1738
        %v1831 = vunpack.c.h.b16 %v1738
        %v1832 = vunpack.c.l.b16 %v1739
        %v1833 = vunpack.c.h.b16 %v1739
        %v1834 = vunpack.c.l.b16 %v1740
        %v1835 = vunpack.c.h.b16 %v1740
        %v1836 = vunpack.c.l.b16 %v1741
        %v1837 = vunpack.c.h.b16 %v1741
        %v1838 = vunpack.c.l.b16 %v1742
        %v1839 = vunpack.c.h.b16 %v1742
        %v1840 = vunpack.c.l.b16 %v1743
        %v1841 = vunpack.c.h.b16 %v1743
        %v1842 = vunpack.c.l.b16 %v1744
        %v1843 = vunpack.c.h.b16 %v1744
        %v1844 = vunpack.c.l.b16 %v1745
        %v1845 = vunpack.c.h.b16 %v1745
        %v1846 = vunpack.c.l.b16 %v1746
        %v1847 = vunpack.c.h.b16 %v1746
        %v1848 = vunpack.c.l.b16 %v1747
        %v1849 = vunpack.c.h.b16 %v1747
        %v1850 = vunpack.c.l.b16 %v1748
        %v1851 = vunpack.c.h.b16 %v1748
        %v1852 = vunpack.c.l.b16 %v1749
        %v1853 = vunpack.c.h.b16 %v1749
        %v1854 = vunpack.c.l.b16 %v1750
        %v1855 = vunpack.c.h.b16 %v1750
        %v1856 = vpack.c.b16 %v1794, %v1792
        %v1857 = vpack.c.b16 %v1795, %v1793
        %v1858 = vpack.c.b16 %v1798, %v1796
        %v1859 = vpack.c.b16 %v1799, %v1797
        %v1860 = vpack.c.b16 %v1802, %v1800
        %v1861 = vpack.c.b16 %v1803, %v1801
        %v1862 = vpack.c.b16 %v1806, %v1804
        %v1863 = vpack.c.b16 %v1807, %v1805
        %v1864 = vpack.c.b16 %v1810, %v1808
        %v1865 = vpack.c.b16 %v1811, %v1809
        %v1866 = vpack.c.b16 %v1814, %v1812
        %v1867 = vpack.c.b16 %v1815, %v1813
        %v1868 = vpack.c.b16 %v1818, %v1816
        %v1869 = vpack.c.b16 %v1819, %v1817
        %v1870 = vpack.c.b16 %v1822, %v1820
        %v1871 = vpack.c.b16 %v1823, %v1821
        %v1872 = vpack.c.b16 %v1826, %v1824
        %v1873 = vpack.c.b16 %v1827, %v1825
        %v1874 = vpack.c.b16 %v1830, %v1828
        %v1875 = vpack.c.b16 %v1831, %v1829
        %v1876 = vpack.c.b16 %v1834, %v1832
        %v1877 = vpack.c.b16 %v1835, %v1833
        %v1878 = vpack.c.b16 %v1838, %v1836
        %v1879 = vpack.c.b16 %v1839, %v1837
        %v1880 = vpack.c.b16 %v1842, %v1840
        %v1881 = vpack.c.b16 %v1843, %v1841
        %v1882 = vpack.c.b16 %v1846, %v1844
        %v1883 = vpack.c.b16 %v1847, %v1845
        %v1884 = vpack.c.b16 %v1850, %v1848
        %v1885 = vpack.c.b16 %v1851, %v1849
        %v1886 = vpack.c.b16 %v1854, %v1852
        %v1887 = vpack.c.b16 %v1855, %v1853
        %1920 = vmatpush.bf16.msra.mxu0 %v1870
        %1921 = vmatpush.bf16.msra.mxu0 %v1868
        %1922 = vmatpush.bf16.msra.mxu0 %v1866
        %1923 = vmatpush.bf16.msra.mxu0 %v1864
        %1924 = vmatpush.bf16.msra.mxu0 %v1862
        %1925 = vmatpush.bf16.msra.mxu0 %v1860
        %1926 = vmatpush.bf16.msra.mxu0 %v1858
        %1927 = vmatpush.bf16.msra.mxu0 %v1856
        %1928 = vmatmul.bf16.gmra.mxu0 %v1756
        %v1929 = vpop.f32.mrf.mxu0
        %v1930 = vadd.f32 0.0, %v1929
        %v1931 = vpop.f32.mrf.mxu0
        %1932 = vdwg.mxu0
        %1933 = vmatpush.bf16.msra.mxu0 %v1886
        %1934 = vmatpush.bf16.msra.mxu0 %v1884
        %1935 = vmatpush.bf16.msra.mxu0 %v1882
        %1936 = vmatpush.bf16.msra.mxu0 %v1880
        %1937 = vmatpush.bf16.msra.mxu0 %v1878
        %1938 = vmatpush.bf16.msra.mxu0 %v1876
        %1939 = vmatpush.bf16.msra.mxu0 %v1874
        %1940 = vmatpush.bf16.msra.mxu0 %v1872
        %1941 = vmatmul.bf16.gmra.mxu0 %v1757
        %v1942 = vpop.f32.mrf.mxu0
        %v1943 = vadd.f32 %v1930, %v1942
        %v1944 = vpop.f32.mrf.mxu0
        %1945 = vdwg.mxu0
        %1946 = vmatpush.bf16.msra.mxu0 %v1871
        %1947 = vmatpush.bf16.msra.mxu0 %v1869
        %1948 = vmatpush.bf16.msra.mxu0 %v1867
        %1949 = vmatpush.bf16.msra.mxu0 %v1865
        %1950 = vmatpush.bf16.msra.mxu0 %v1863
        %1951 = vmatpush.bf16.msra.mxu0 %v1861
        %1952 = vmatpush.bf16.msra.mxu0 %v1859
        %1953 = vmatpush.bf16.msra.mxu0 %v1857
        %1954 = vmatmul.bf16.gmra.mxu0 %v1756
        %v1955 = vpop.f32.mrf.mxu0
        %v1956 = vadd.f32 0.0, %v1955
        %v1957 = vpop.f32.mrf.mxu0
        %1958 = vdwg.mxu0
        %1959 = vmatpush.bf16.msra.mxu0 %v1887
        %1960 = vmatpush.bf16.msra.mxu0 %v1885
        %1961 = vmatpush.bf16.msra.mxu0 %v1883
        %1962 = vmatpush.bf16.msra.mxu0 %v1881
        %1963 = vmatpush.bf16.msra.mxu0 %v1879
        %1964 = vmatpush.bf16.msra.mxu0 %v1877
        %1965 = vmatpush.bf16.msra.mxu0 %v1875
        %1966 = vmatpush.bf16.msra.mxu0 %v1873
        %1967 = vmatmul.bf16.gmra.mxu0 %v1757
        %v1968 = vpop.f32.mrf.mxu0
        %v1969 = vadd.f32 %v1956, %v1968
        %v1970 = vpop.f32.mrf.mxu0
        %1971 = vdwg.mxu0
        %v1972 = vadd.f32 %v1688, %v1943
        %v1973 = vadd.f32 %v1714, %v1969
        %v1974 = vld [vmem:[#allocation5] sm:$0xff]
        %v1975 = vld [vmem:[#allocation5 + $0x8] sm:$0xff]
        %v1976 = vld [vmem:[#allocation5 + $0x10] sm:$0xff]
        %v1977 = vld [vmem:[#allocation5 + $0x18] sm:$0xff]
        %v1978 = vld [vmem:[#allocation5 + $0x20] sm:$0xff]
        %v1979 = vld [vmem:[#allocation5 + $0x28] sm:$0xff]
        %v1980 = vld [vmem:[#allocation5 + $0x30] sm:$0xff]
        %v1981 = vld [vmem:[#allocation5 + $0x38] sm:$0xff]
        %v1982 = vld [vmem:[#allocation5 + $0x40] sm:$0xff]
        %v1983 = vld [vmem:[#allocation5 + $0x48] sm:$0xff]
        %v1984 = vld [vmem:[#allocation5 + $0x50] sm:$0xff]
        %v1985 = vld [vmem:[#allocation5 + $0x58] sm:$0xff]
        %v1986 = vld [vmem:[#allocation5 + $0x60] sm:$0xff]
        %v1987 = vld [vmem:[#allocation5 + $0x68] sm:$0xff]
        %v1988 = vld [vmem:[#allocation5 + $0x70] sm:$0xff]
        %v1989 = vld [vmem:[#allocation5 + $0x78] sm:$0xff]
        %v1990 = vld [vmem:[#allocation5 + $0x80] sm:$0xff]
        %v1991 = vld [vmem:[#allocation5 + $0x88] sm:$0xff]
        %v1992 = vld [vmem:[#allocation5 + $0x90] sm:$0xff]
        %v1993 = vld [vmem:[#allocation5 + $0x98] sm:$0xff]
        %v1994 = vld [vmem:[#allocation5 + $0xa0] sm:$0xff]
        %v1995 = vld [vmem:[#allocation5 + $0xa8] sm:$0xff]
        %v1996 = vld [vmem:[#allocation5 + $0xb0] sm:$0xff]
        %v1997 = vld [vmem:[#allocation5 + $0xb8] sm:$0xff]
        %v1998 = vld [vmem:[#allocation5 + $0xc0] sm:$0xff]
        %v1999 = vld [vmem:[#allocation5 + $0xc8] sm:$0xff]
        %v2000 = vld [vmem:[#allocation5 + $0xd0] sm:$0xff]
        %v2001 = vld [vmem:[#allocation5 + $0xd8] sm:$0xff]
        %v2002 = vld [vmem:[#allocation5 + $0xe0] sm:$0xff]
        %v2003 = vld [vmem:[#allocation5 + $0xe8] sm:$0xff]
        %v2004 = vld [vmem:[#allocation5 + $0xf0] sm:$0xff]
        %v2005 = vld [vmem:[#allocation5 + $0xf8] sm:$0xff]
        %v2006 = vld [vmem:[#allocation5 + $0x100] sm:$0xff]
        %v2007 = vld [vmem:[#allocation5 + $0x108] sm:$0xff]
        %v2008 = vld [vmem:[#allocation5 + $0x110] sm:$0xff]
        %v2009 = vld [vmem:[#allocation5 + $0x118] sm:$0xff]
        %v2010 = vld [vmem:[#allocation5 + $0x120] sm:$0xff]
        %v2011 = vld [vmem:[#allocation5 + $0x128] sm:$0xff]
        %v2012 = vld [vmem:[#allocation5 + $0x130] sm:$0xff]
        %v2013 = vld [vmem:[#allocation5 + $0x138] sm:$0xff]
        %v2014 = vld [vmem:[#allocation5 + $0x140] sm:$0xff]
        %v2015 = vld [vmem:[#allocation5 + $0x148] sm:$0xff]
        %v2016 = vld [vmem:[#allocation5 + $0x150] sm:$0xff]
        %v2017 = vld [vmem:[#allocation5 + $0x158] sm:$0xff]
        %v2018 = vld [vmem:[#allocation5 + $0x160] sm:$0xff]
        %v2019 = vld [vmem:[#allocation5 + $0x168] sm:$0xff]
        %v2020 = vld [vmem:[#allocation5 + $0x170] sm:$0xff]
        %v2021 = vld [vmem:[#allocation5 + $0x178] sm:$0xff]
        %v2022 = vld [vmem:[#allocation5 + $0x180] sm:$0xff]
        %v2023 = vld [vmem:[#allocation5 + $0x188] sm:$0xff]
        %v2024 = vld [vmem:[#allocation5 + $0x190] sm:$0xff]
        %v2025 = vld [vmem:[#allocation5 + $0x198] sm:$0xff]
        %v2026 = vld [vmem:[#allocation5 + $0x1a0] sm:$0xff]
        %v2027 = vld [vmem:[#allocation5 + $0x1a8] sm:$0xff]
        %v2028 = vld [vmem:[#allocation5 + $0x1b0] sm:$0xff]
        %v2029 = vld [vmem:[#allocation5 + $0x1b8] sm:$0xff]
        %v2030 = vld [vmem:[#allocation5 + $0x1c0] sm:$0xff]
        %v2031 = vld [vmem:[#allocation5 + $0x1c8] sm:$0xff]
        %v2032 = vld [vmem:[#allocation5 + $0x1d0] sm:$0xff]
        %v2033 = vld [vmem:[#allocation5 + $0x1d8] sm:$0xff]
        %v2034 = vld [vmem:[#allocation5 + $0x1e0] sm:$0xff]
        %v2035 = vld [vmem:[#allocation5 + $0x1e8] sm:$0xff]
        %v2036 = vld [vmem:[#allocation5 + $0x1f0] sm:$0xff]
        %v2037 = vld [vmem:[#allocation5 + $0x1f8] sm:$0xff]
        %2038 = vmatpush.msra.mxu0 %v2004
        %2039 = vmatpush.msra.mxu0 %v2002
        %2040 = vmatpush.msra.mxu0 %v2000
        %2041 = vmatpush.msra.mxu0 %v1998
        %2042 = vmatpush.msra.mxu0 %v1996
        %2043 = vmatpush.msra.mxu0 %v1994
        %2044 = vmatpush.msra.mxu0 %v1992
        %2045 = vmatpush.msra.mxu0 %v1990
        %2046 = vmatpush.msra.mxu0 %v1988
        %2047 = vmatpush.msra.mxu0 %v1986
        %2048 = vmatpush.msra.mxu0 %v1984
        %2049 = vmatpush.msra.mxu0 %v1982
        %2050 = vmatpush.msra.mxu0 %v1980
        %2051 = vmatpush.msra.mxu0 %v1978
        %2052 = vmatpush.msra.mxu0 %v1976
        %2053 = vmatpush.msra.mxu0 %v1974
        %2054 = vmatmul.f32.gmra.mxu0 %v390
        %v2055 = vpop.f32.mrf.mxu0
        %v2056 = vadd.f32 0.0, %v2055
        %2057 = vdwg.mxu0
        %2058 = vmatpush.msra.mxu0 %v2036
        %2059 = vmatpush.msra.mxu0 %v2034
        %2060 = vmatpush.msra.mxu0 %v2032
        %2061 = vmatpush.msra.mxu0 %v2030
        %2062 = vmatpush.msra.mxu0 %v2028
        %2063 = vmatpush.msra.mxu0 %v2026
        %2064 = vmatpush.msra.mxu0 %v2024
        %2065 = vmatpush.msra.mxu0 %v2022
        %2066 = vmatpush.msra.mxu0 %v2020
        %2067 = vmatpush.msra.mxu0 %v2018
        %2068 = vmatpush.msra.mxu0 %v2016
        %2069 = vmatpush.msra.mxu0 %v2014
        %2070 = vmatpush.msra.mxu0 %v2012
        %2071 = vmatpush.msra.mxu0 %v2010
        %2072 = vmatpush.msra.mxu0 %v2008
        %2073 = vmatpush.msra.mxu0 %v2006
        %2074 = vmatmul.f32.gmra.mxu0 %v391
        %v2075 = vpop.f32.mrf.mxu0
        %v2076 = vadd.f32 %v2056, %v2075
        %2077 = vdwg.mxu0
        %2078 = vmatpush.msra.mxu0 %v2005
        %2079 = vmatpush.msra.mxu0 %v2003
        %2080 = vmatpush.msra.mxu0 %v2001
        %2081 = vmatpush.msra.mxu0 %v1999
        %2082 = vmatpush.msra.mxu0 %v1997
        %2083 = vmatpush.msra.mxu0 %v1995
        %2084 = vmatpush.msra.mxu0 %v1993
        %2085 = vmatpush.msra.mxu0 %v1991
        %2086 = vmatpush.msra.mxu0 %v1989
        %2087 = vmatpush.msra.mxu0 %v1987
        %2088 = vmatpush.msra.mxu0 %v1985
        %2089 = vmatpush.msra.mxu0 %v1983
        %2090 = vmatpush.msra.mxu0 %v1981
        %2091 = vmatpush.msra.mxu0 %v1979
        %2092 = vmatpush.msra.mxu0 %v1977
        %2093 = vmatpush.msra.mxu0 %v1975
        %2094 = vmatmul.f32.gmra.mxu0 %v390
        %v2095 = vpop.f32.mrf.mxu0
        %v2096 = vadd.f32 0.0, %v2095
        %2097 = vdwg.mxu0
        %2098 = vmatpush.msra.mxu0 %v2037
        %2099 = vmatpush.msra.mxu0 %v2035
        %2100 = vmatpush.msra.mxu0 %v2033
        %2101 = vmatpush.msra.mxu0 %v2031
        %2102 = vmatpush.msra.mxu0 %v2029
        %2103 = vmatpush.msra.mxu0 %v2027
        %2104 = vmatpush.msra.mxu0 %v2025
        %2105 = vmatpush.msra.mxu0 %v2023
        %2106 = vmatpush.msra.mxu0 %v2021
        %2107 = vmatpush.msra.mxu0 %v2019
        %2108 = vmatpush.msra.mxu0 %v2017
        %2109 = vmatpush.msra.mxu0 %v2015
        %2110 = vmatpush.msra.mxu0 %v2013
        %2111 = vmatpush.msra.mxu0 %v2011
        %2112 = vmatpush.msra.mxu0 %v2009
        %2113 = vmatpush.msra.mxu0 %v2007
        %2114 = vmatmul.f32.gmra.mxu0 %v391
        %v2115 = vpop.f32.mrf.mxu0
        %v2116 = vadd.f32 %v2096, %v2115
        %2117 = vdwg.mxu0
        %v2118 = vld [vmem:[%s6] sm:$0x3]
        %v2120 = vperm.slane %v2118, 0
        %v2121 = vperm.slane %v2118, 1
        %v2124 = vmul.f32 %v1972, %v2120
        %v2125 = vmul.f32 %v1973, %v2121
        %v2126 = vld [vmem:[%s7] sm:$0x3]
        %v2128 = vperm.slane %v2126, 0
        %v2129 = vperm.slane %v2126, 1
        %v2132 = vadd.f32 %v2124, %v2128
        %v2133 = vadd.f32 %v2125, %v2129
        %v2134 = vadd.f32 %v2132, %v2076
        %v2135 = vadd.f32 %v2133, %v2116
        %v2136 = vmax.f32 %v2134, 0.0
        %v2137 = vmax.f32 %v2135, 0.0
        %v2140 = vrot.slane %v2137, 4
        %vm2141 = vcmask 1043456
        %v2142 = vsel %vm2141, %v2136, %v2140
        %2144 = vst [vmem:[%s386] sm:$0xff] %v2142
        %p2145 = scmp.lt.s32.totalorder %s22, 1
        %s2146 = scalar_select %p2145, %s22, 1
        %s2147 = smul.addr %s2146, 2
        %s2148 = smul.addr %s2147, 4
        %s2149 = scalar_lea.vmem %s9, %s2148
        // Predicated region
        $region65: #{resnet_forward.8} parent=55 // pred_check
          %p2150 = pneg %p239
        $region66: #{resnet_forward.8} parent=55 // pred_check_branch
          %2152 = sbr.rel (%p2150) target = $region68
        $region67: #{resnet_forward.8} parent=55 // pred_region
          _
        $region68: #{resnet_forward.8} parent=55 // pred_fallthru
          _
      $region56: #{resnet_forward.8} parent=5 // pred_fallthru
        _
      %p2153 = scmp.le.s32.totalorder 2, %s17
      // Predicated region
      $region69: #{resnet_forward.8} parent=5 // pred_check
        %p2154 = pneg %p2153
      $region70: #{resnet_forward.8} parent=5 // pred_check_branch
        %2156 = sbr.rel (%p2154) target = $region72
      $region71: #{resnet_forward.8} parent=5 // pred_region
        %s2157 = ssub.s32 %s17, 2
        // Predicated region
        $region73: #{resnet_forward.8} parent=71 // pred_check
          %p2158 = pneg %p245
        $region74: #{resnet_forward.8} parent=71 // pred_check_branch
          %2160 = sbr.rel (%p2158) target = $region76
        $region75: #{resnet_forward.8} parent=71 // pred_region
          %p2161 = scmp.lt.s32.totalorder %s23, 1
          %s2162 = scalar_select %p2161, %s23, 1
          %s2163 = smul.addr %s2162, 2
          %s2164 = smul.addr %s2163, 4
          %s2165 = scalar_lea.vmem %s9, %s2164
        $region76: #{resnet_forward.8} parent=71 // pred_fallthru
          _
      $region72: #{resnet_forward.8} parent=5 // pred_fallthru
        _
    $region6: #{resnet_forward.8} parent=1 // loop_footer
      %s21 = sadd.s32 1, %s17
    $region7: #{resnet_forward.8} parent=1 // loop_footer_branch
      %16 = sbr.rel target = $region3
    $region8: #{resnet_forward.8} parent=1 // loop_exit
      _
    %2166 = vsyncpa [#allocation4], 1
    %s2167 = scalar_lea.sflag [#allocation4], 1
    %2168 = vsyncpa %s2167, 1
    %2169 = vsyncpa [#allocation6], 1

</llo_original>
